<compile_context>
chip_gen: v7x
topology: tpu7x:2x2x1
jax: 0.10.0
libtpu: 0.0.40
codegen_flags: <defaults>
</compile_context>

<pallas_src>
import functools
import math

import jax
import jax.numpy as jnp
from jax.experimental import pallas as pl
from jax.experimental.pallas import tpu as pltpu


# --------------------------------------------------------------------------
# small helpers
# --------------------------------------------------------------------------
def _round_up(x, m):
    return ((x + m - 1) // m) * m


def _pad_rows(x, rows):
    if x.shape[0] == rows:
        return x
    pad = jnp.zeros((rows - x.shape[0],) + x.shape[1:], x.dtype)
    return jnp.concatenate([x, pad], axis=0)


def _pad_axis1(x, rows):
    if x.shape[1] == rows:
        return x
    pad = jnp.zeros((x.shape[0], rows - x.shape[1]) + x.shape[2:], x.dtype)
    return jnp.concatenate([x, pad], axis=1)


def _vmem_limit_bytes():
    """Per-generation VMEM limit: ~3/4 of physical, capped at 96 MiB
    (v5e/v6e: 128 MiB physical, v7x: 64 MiB); safe 48 MiB fallback."""
    try:
        cap = int(pltpu.get_tpu_info().vmem_capacity_bytes)
    except Exception:
        cap = 64 * 1024 * 1024
    return max(32 * 1024 * 1024, min(cap * 3 // 4, 96 * 1024 * 1024))


def _largest_divisor_tile(R, cap):
    """Largest multiple-of-8 divisor of R that is <= cap (None if none)."""
    cap = max(8, min(cap, R))
    for t in range((cap // 8) * 8, 7, -8):
        if R % t == 0:
            return t
    return None


def _pick_ffn_tile(R, bytes_per_row, budget_bytes, max_tile=2048):
    """Row tile for the FFN kernel: divides R (no pad/slice HBM copies), fits a
    per-generation VMEM budget, and leaves >= 2 grid steps (v7x megacore)."""
    if R <= 8:
        return R, False
    cap = max(8, min(max_tile, budget_bytes // max(bytes_per_row, 1)))
    if R >= 16:
        cap = min(cap, R // 2)
    t = _largest_divisor_tile(R, cap)
    if t is not None:
        return t, False
    # fallback: pad rows (wasted compute on padded rows is sliced away after)
    return max(8, (min(cap, R) // 8) * 8), True


def _pick_mix_tile(R1, R2):
    """Row tile for the spectral-mix kernel: divides both branch row counts so
    a tile never straddles the branch boundary; >= 4 row steps when possible."""
    g = math.gcd(R1, R2)
    cap = max(8, min(512, g // 2 if g >= 16 else g))
    t = _largest_divisor_tile(g, cap)
    return t if t is not None else 8


# --------------------------------------------------------------------------
# Truncated real DFT / IDFT matrices ('ortho' norm), K kept modes only.
# Replaces rfft -> slice -> mix -> zero-pad -> irfft; matches numpy/torch
# irfft semantics (imag part of the DC/Nyquist bins does not contribute).
# --------------------------------------------------------------------------
def dft_matrices(L, K, dtype=jnp.float32):
    n = jnp.arange(L, dtype=jnp.float32)[:, None]          # (L, 1)
    k = jnp.arange(K, dtype=jnp.float32)[None, :]          # (1, K)
    ang = 2.0 * jnp.pi * n * k / L
    scale = 1.0 / jnp.sqrt(jnp.float32(L))                 # 'ortho'
    cos = jnp.cos(ang) * scale                              # (L, K)
    sin = jnp.sin(ang) * scale
    # forward: Xr_k = sum_n x_n cos, Xi_k = -sum_n x_n sin
    fwd = jnp.stack([cos, -sin], axis=-1)                   # (L, K, 2)
    # inverse with hermitian completion (imag of DC / Nyquist discarded)
    kk = jnp.arange(K)
    nyq = L // 2 if L % 2 == 0 else -1
    edge = (kk == 0) | (kk == nyq)
    c = jnp.where(edge, 1.0, 2.0)[:, None]
    d = jnp.where(edge, 0.0, 2.0)[:, None]
    inv = jnp.stack([c * cos.T, -d * sin.T], axis=1)         # (K, 2, L)
    return fwd.astype(dtype), inv.astype(dtype)


def pack_mode_weights(w, dtype):
    """w: (I, O, K, 2) -> (K, 2I, 2O) real blocks [[wr, wi], [-wi, wr]] so that
    [Xr | Xi] @ block = [Re | Im] of the complex per-mode channel mixing."""
    wr = jnp.transpose(w[..., 0], (2, 0, 1))    # (K, I, O)
    wi = jnp.transpose(w[..., 1], (2, 0, 1))
    top = jnp.concatenate([wr, wi], axis=-1)    # (K, I, 2O)
    bot = jnp.concatenate([-wi, wr], axis=-1)
    return jnp.concatenate([top, bot], axis=1).astype(dtype)   # (K, 2I, 2O)


# --------------------------------------------------------------------------
# Pallas kernel 1: per-mode spectral channel mixing (both branches fused).
# --------------------------------------------------------------------------
def _spectral_mix_kernel(x_ref, w_ref, o_ref, *, precision):
    # x_ref: (1, tile, 2I)   w_ref: (1, 1, 2I, 2O)   o_ref: (1, tile, 2O)
    o_ref[0] = jnp.dot(x_ref[0], w_ref[0, 0], precision=precision,
                       preferred_element_type=jnp.float32).astype(o_ref.dtype)


def spectral_mix(xp_all, w_all, steps1, tile, precision):
    """xp_all: (K, Rtot, 2I) packed-real DFT coeffs (branch-0 rows first).
    w_all : (2, K, 2I, 2O) per-branch, per-mode weight blocks.
    grid  = (row tiles ['parallel'], modes ['arbitrary']); the weight BlockSpec
    index_map selects (branch, mode) per step."""
    K, Rtot, I2 = xp_all.shape
    O2 = w_all.shape[-1]

    def w_index(r, k):
        return (r >= steps1).astype(jnp.int32), k, 0, 0

    return pl.pallas_call(
        functools.partial(_spectral_mix_kernel, precision=precision),
        out_shape=jax.ShapeDtypeStruct((K, Rtot, O2), jnp.float32),
        grid=(Rtot // tile, K),
        in_specs=[pl.BlockSpec((1, tile, I2), lambda r, k: (k, r, 0)),
                  pl.BlockSpec((1, 1, I2, O2), w_index)],
        out_specs=pl.BlockSpec((1, tile, O2), lambda r, k: (k, r, 0)),
        compiler_params=pltpu.CompilerParams(
            dimension_semantics=("parallel", "arbitrary"),
            vmem_limit_bytes=_vmem_limit_bytes()),
    )(xp_all, w_all)


# --------------------------------------------------------------------------
# forward_fourier (mode='full'): truncated DFT -> Pallas mixing -> truncated
# IDFT.  Returns the two spectral branches; their sum is fused into the FFN.
# --------------------------------------------------------------------------
def forward_fourier(x, w0, w1, n_modes, compute_dtype):
    B, M, N, I = x.shape
    K = n_modes
    O = w0.shape[1]
    hi = jax.lax.Precision.HIGHEST

    fwd_n, inv_n = dft_matrices(N, K)
    fwd_m, inv_m = dft_matrices(M, K)

    xr = x.astype(jnp.float32)
    # truncated DFT over the K kept modes only (small packed-real tensors)
    xy_modes = jnp.einsum('bmni,nkp->kbmpi', xr, fwd_n, precision=hi)
    xx_modes = jnp.einsum('bmni,mkp->kbnpi', xr, fwd_m, precision=hi)
    R1, R2 = B * M, B * N
    xy_modes = xy_modes.reshape(K, R1, 2 * I)
    xx_modes = xx_modes.reshape(K, R2, 2 * I)

    # both branches through ONE Pallas mixing call
    tile = _pick_mix_tile(R1, R2)
    R1p, R2p = _round_up(R1, tile), _round_up(R2, tile)
    xp_all = jnp.concatenate([_pad_axis1(xy_modes, R1p),
                              _pad_axis1(xx_modes, R2p)],
                             axis=1).astype(compute_dtype)
    w_all = jnp.stack([pack_mode_weights(w0, compute_dtype),
                       pack_mode_weights(w1, compute_dtype)], axis=0)
    precision = hi if jnp.dtype(compute_dtype) == jnp.float32 else None
    y = spectral_mix(xp_all, w_all, steps1=R1p // tile, tile=tile,
                     precision=precision)                     # (K, Rtot, 2O) f32

    y_y = y[:, :R1, :].reshape(K, B, M, 2, O)
    y_x = y[:, R1p:R1p + R2, :].reshape(K, B, N, 2, O)
    # truncated IDFT straight from the mixed modes (no zero-padded spectrum)
    xy = jnp.einsum('kbmpo,kpn->bmno', y_y, inv_n, precision=hi)
    xx = jnp.einsum('kbnpo,kpm->bmno', y_x, inv_m, precision=hi)
    return xx, xy


# --------------------------------------------------------------------------
# Pallas kernel 2: fused (xx + xy) add + backcast FFN + forecast FFN.
# FeedForward(dim, factor, n_layers=2, layer_norm=False, dropout=0, eval):
#   Linear -> ReLU -> Linear.
# --------------------------------------------------------------------------
def _dual_ffn_kernel(xa_ref, xb_ref, w1c_ref, b1c_ref, wb2_ref, bb2_ref,
                     wf2_ref, bf2_ref, o_ref, *, hidden, precision):
    x = xa_ref[...] + xb_ref[...]
    # single first matmul with concatenated (C, 2H) weights -> lane-dense hidden
    h = jnp.dot(x, w1c_ref[...], precision=precision,
                preferred_element_type=jnp.float32) + b1c_ref[...]
    h = jnp.maximum(h, 0.0).astype(wb2_ref.dtype)
    yb = jnp.dot(h[:, :hidden], wb2_ref[...], precision=precision,
                 preferred_element_type=jnp.float32) + bb2_ref[...]
    yf = jnp.dot(h[:, hidden:], wf2_ref[...], precision=precision,
                 preferred_element_type=jnp.float32) + bf2_ref[...]
    # single lane-dense (tile, 2O) output slab; split outside the kernel
    o_ref[...] = jnp.concatenate([yb, yf], axis=-1).astype(o_ref.dtype)


def _single_ffn_kernel(xa_ref, xb_ref, w1_ref, b1_ref, w2_ref, b2_ref, o_ref,
                       *, precision):
    x = xa_ref[...] + xb_ref[...]
    h = jnp.dot(x, w1_ref[...], precision=precision,
                preferred_element_type=jnp.float32) + b1_ref[...]
    h = jnp.maximum(h, 0.0).astype(w2_ref.dtype)
    o_ref[...] = (jnp.dot(h, w2_ref[...], precision=precision,
                          preferred_element_type=jnp.float32)
                  + b2_ref[...]).astype(o_ref.dtype)


def _full_spec(a):
    return pl.BlockSpec(a.shape, lambda i: (0,) * a.ndim)


def dual_feedforward(xa, xb, pb, pf, compute_dtype):
    R, C = xa.shape
    H = pb["w1"].shape[1]
    O = pb["w2"].shape[1]
    cd = compute_dtype
    w1c = jnp.concatenate([pb["w1"], pf["w1"]], axis=1).astype(cd)   # (C, 2H)
    b1c = jnp.concatenate([pb["b1"], pf["b1"]], axis=1).astype(cd)   # (1, 2H)
    wb2, bb2 = pb["w2"].astype(cd), pb["b2"].astype(cd)
    wf2, bf2 = pf["w2"].astype(cd), pf["b2"].astype(cd)

    esz = jnp.dtype(cd).itemsize
    bytes_per_row = (2 * 2 * C * esz          # two input streams, double-buffered
                     + 2 * (2 * O) * 4        # combined output, double-buffered
                     + (2 * H) * 4 + C * 4)   # hidden + summed activation (f32)
    limit = _vmem_limit_bytes()
    tile, needs_pad = _pick_ffn_tile(R, bytes_per_row, limit // 2)
    Rp = _round_up(R, tile) if needs_pad else R
    xa_p, xb_p = _pad_rows(xa, Rp), _pad_rows(xb, Rp)

    precision = (jax.lax.Precision.HIGHEST
                 if jnp.dtype(cd) == jnp.float32 else None)
    x_spec = pl.BlockSpec((tile, C), lambda i: (i, 0))
    out = pl.pallas_call(
        functools.partial(_dual_ffn_kernel, hidden=H, precision=precision),
        out_shape=jax.ShapeDtypeStruct((Rp, 2 * O), jnp.float32),
        grid=(Rp // tile,),
        in_specs=[x_spec, x_spec, _full_spec(w1c), _full_spec(b1c),
                  _full_spec(wb2), _full_spec(bb2),
                  _full_spec(wf2), _full_spec(bf2)],
        out_specs=pl.BlockSpec((tile, 2 * O), lambda i: (i, 0)),
        compiler_params=pltpu.CompilerParams(
            dimension_semantics=("parallel",),
            vmem_limit_bytes=limit),
    )(xa_p, xb_p, w1c, b1c, wb2, bb2, wf2, bf2)
    if needs_pad:
        out = out[:R]
    return out[:, :O], out[:, O:]


def single_feedforward(xa, xb, p, compute_dtype):
    R, C = xa.shape
    H = p["w1"].shape[1]
    O = p["w2"].shape[1]
    cd = compute_dtype
    w1, b1 = p["w1"].astype(cd), p["b1"].astype(cd)
    w2, b2 = p["w2"].astype(cd), p["b2"].astype(cd)
    esz = jnp.dtype(cd).itemsize
    bytes_per_row = 2 * 2 * C * esz + 2 * O * 4 + H * 4 + C * 4
    limit = _vmem_limit_bytes()
    tile, needs_pad = _pick_ffn_tile(R, bytes_per_row, limit // 2)
    Rp = _round_up(R, tile) if needs_pad else R
    xa_p, xb_p = _pad_rows(xa, Rp), _pad_rows(xb, Rp)
    precision = (jax.lax.Precision.HIGHEST
                 if jnp.dtype(cd) == jnp.float32 else None)
    x_spec = pl.BlockSpec((tile, C), lambda i: (i, 0))
    out = pl.pallas_call(
        functools.partial(_single_ffn_kernel, precision=precision),
        out_shape=jax.ShapeDtypeStruct((Rp, O), jnp.float32),
        grid=(Rp // tile,),
        in_specs=[x_spec, x_spec, _full_spec(w1), _full_spec(b1),
                  _full_spec(w2), _full_spec(b2)],
        out_specs=pl.BlockSpec((tile, O), lambda i: (i, 0)),
        compiler_params=pltpu.CompilerParams(
            dimension_semantics=("parallel",),
            vmem_limit_bytes=limit),
    )(xa_p, xb_p, w1, b1, w2, b2)
    return out[:R] if needs_pad else out


# --------------------------------------------------------------------------
# full forward
# --------------------------------------------------------------------------
def spectral_conv2d_forward(x, params, n_modes, mode="full", use_fork=True,
                            compute_dtype=jnp.float32):
    assert mode == "full", "only mode='full' is implemented (kernel path)"
    B, M, N, _ = x.shape
    xx, xy = forward_fourier(x, params["w0"], params["w1"], n_modes,
                             compute_dtype)
    O = xx.shape[-1]
    xa = xx.reshape(B * M * N, O).astype(compute_dtype)
    xb = xy.reshape(B * M * N, O).astype(compute_dtype)
    if use_fork:
        b2d, f2d = dual_feedforward(xa, xb, params["backcast"],
                                    params["forecast"], compute_dtype)
        return b2d.reshape(B, M, N, -1), f2d.reshape(B, M, N, -1)
    b2d = single_feedforward(xa, xb, params["backcast"], compute_dtype)
    return b2d.reshape(B, M, N, -1), None


# --------------------------------------------------------------------------
# Pure-JAX reference (correctness check only); mirrors the torch module.
# --------------------------------------------------------------------------
def _ffn_ref(x, p):
    h = jnp.maximum(x @ p["w1"] + p["b1"], 0.0)
    return h @ p["w2"] + p["b2"]


def _ref_forward(x, params, n_modes, use_fork=True):
    B, M, N, I = x.shape
    O = params["w0"].shape[1]
    w0c = params["w0"][..., 0] + 1j * params["w0"][..., 1]     # (I, O, K)
    w1c = params["w1"][..., 0] + 1j * params["w1"][..., 1]
    x_fty = jnp.fft.rfft(x, axis=2, norm="ortho")
    out_ft = jnp.zeros((B, M, N // 2 + 1, O), dtype=x_fty.dtype)
    out_ft = out_ft.at[:, :, :n_modes, :].set(
        jnp.einsum("bmyi,ioy->bmyo", x_fty[:, :, :n_modes, :], w0c))
    xy = jnp.fft.irfft(out_ft, n=N, axis=2, norm="ortho")
    x_ftx = jnp.fft.rfft(x, axis=1, norm="ortho")
    out_ft = jnp.zeros((B, M // 2 + 1, N, O), dtype=x_ftx.dtype)
    out_ft = out_ft.at[:, :n_modes, :, :].set(
        jnp.einsum("bxni,iox->bxno", x_ftx[:, :n_modes, :, :], w1c))
    xx = jnp.fft.irfft(out_ft, n=M, axis=1, norm="ortho")
    h = xx + xy
    b = _ffn_ref(h, params["backcast"])
    f = _ffn_ref(h, params["forecast"]) if use_fork else None
    return b, f


# --------------------------------------------------------------------------
# Deterministic parameter construction (mirrors the torch __init__ shapes).
# --------------------------------------------------------------------------
def make_params(key, in_dim, out_dim, n_modes, factor):
    ks = jax.random.split(key, 10)
    fan_in = out_dim * n_modes * 2
    fan_out = in_dim * n_modes * 2
    std = (2.0 / (fan_in + fan_out)) ** 0.5
    w0 = std * jax.random.normal(ks[0], (in_dim, out_dim, n_modes, 2), jnp.float32)
    w1 = std * jax.random.normal(ks[1], (in_dim, out_dim, n_modes, 2), jnp.float32)

    hidden = out_dim * factor

    def ffn_params(k1, k2, k3, k4):
        return {
            "w1": jax.random.normal(k1, (out_dim, hidden), jnp.float32) / (out_dim ** 0.5),
            "b1": 0.01 * jax.random.normal(k2, (1, hidden), jnp.float32),
            "w2": jax.random.normal(k3, (hidden, out_dim), jnp.float32) / (hidden ** 0.5),
            "b2": 0.01 * jax.random.normal(k4, (1, out_dim), jnp.float32),
        }

    return {
        "w0": w0,
        "w1": w1,
        "backcast": ffn_params(ks[2], ks[3], ks[4], ks[5]),
        "forecast": ffn_params(ks[6], ks[7], ks[8], ks[9]),
    }


if __name__ == "__main__":
    # Full-precision f32 matmuls everywhere (reference + kernels) so the tight
    # f32 check is meaningful; bf16 operands are the recommended perf path.
    jax.config.update("jax_default_matmul_precision", "highest")

    # module config: in_dim=out_dim=4, n_modes=4, factor=2, n_ff_layers=2,
    # layer_norm=False, dropout=0.0 (eval), mode='full', use_fork=True
    B, M, N, C = 2, 16, 16, 4
    n_modes, factor = 4, 2

    key = jax.random.PRNGKey(0)
    kx, kp = jax.random.split(key)
    x = jax.random.normal(kx, (B, M, N, C), jnp.float32)   # layout 'b m n i'
    params = make_params(kp, C, C, n_modes, factor)

    b_ref, f_ref = _ref_forward(x, params, n_modes, use_fork=True)

    # f32 MXU operands: tight correctness check.
    fwd_f32 = jax.jit(functools.partial(
        spectral_conv2d_forward, n_modes=n_modes, mode="full", use_fork=True,
        compute_dtype=jnp.float32))
    b_out, f_out = fwd_f32(x, params)
    jax.block_until_ready((b_out, f_out))
    assert b_out.shape == b_ref.shape and f_out.shape == f_ref.shape
    assert jnp.allclose(b_out, b_ref, atol=2e-4, rtol=2e-4), "backcast mismatch (f32)"
    assert jnp.allclose(f_out, f_ref, atol=2e-4, rtol=2e-4), "forecast mismatch (f32)"

    # bf16 MXU operands (recommended on v5e/v6e/v7x), f32 accumulation: loose check.
    # NOTE: error grows with factor / hidden width (post-ReLU activations are bf16).
    fwd_bf16 = jax.jit(functools.partial(
        spectral_conv2d_forward, n_modes=n_modes, mode="full", use_fork=True,
        compute_dtype=jnp.bfloat16))
    b_bf, f_bf = fwd_bf16(x, params)
    jax.block_until_ready((b_bf, f_bf))
    assert jnp.allclose(b_bf, b_ref, atol=1.5e-1, rtol=1.5e-1), "backcast mismatch (bf16)"
    assert jnp.allclose(f_bf, f_ref, atol=1.5e-1, rtol=1.5e-1), "forecast mismatch (bf16)"

    print("KERNEL_OK")
</pallas_src>

<mosaic_0001>
module attributes {stable_mosaic.version = 11 : i64} {
  func.func @_spectral_mix_kernel(%arg0: i32, %arg1: i32, %arg2: memref<1x16x8xf32, #tpu.memory_space<vmem>>, %arg3: memref<1x1x8x8xf32, #tpu.memory_space<vmem>>, %arg4: memref<1x16x8xf32, #tpu.memory_space<vmem>>) attributes {dimension_semantics = [#tpu.dimension_semantics<parallel>, #tpu.dimension_semantics<arbitrary>], iteration_bounds = array<i64: 4, 4>, scalar_prefetch = 0 : i64, scratch_operands = 0 : i64, tpu.core_type = #tpu.core_type<tc>, window_params = [{transform_indices = @transform_0, window_bounds = array<i64: 1, 16, 8>}, {transform_indices = @transform_1, window_bounds = array<i64: 1, 1, 8, 8>}, {transform_indices = @transform_2, window_bounds = array<i64: 1, 16, 8>}]} {
    %c0 = arith.constant 0 : index
    %c0_0 = arith.constant 0 : index
    %c0_1 = arith.constant 0 : index
    %0 = vector.load %arg2[%c0, %c0_0, %c0_1] : memref<1x16x8xf32, #tpu.memory_space<vmem>>, vector<1x16x8xf32>
    %1 = vector.shape_cast %0 : vector<1x16x8xf32> to vector<16x8xf32>
    %c0_2 = arith.constant 0 : index
    %c0_3 = arith.constant 0 : index
    %c0_4 = arith.constant 0 : index
    %c0_5 = arith.constant 0 : index
    %2 = vector.load %arg3[%c0_2, %c0_3, %c0_4, %c0_5] : memref<1x1x8x8xf32, #tpu.memory_space<vmem>>, vector<1x1x8x8xf32>
    %3 = vector.shape_cast %2 : vector<1x1x8x8xf32> to vector<8x8xf32>
    %cst = arith.constant dense<0.000000e+00> : vector<16x8xf32>
    %4 = tpu.matmul %1, %3, %cst {dimension_numbers = #tpu.dot_dimension_numbers<[1], [0], [0], [1], [0, 0, 1, 1], [], []>, precision = #tpu.contract_precision<fp32>} : vector<16x8xf32>, vector<8x8xf32>, vector<16x8xf32> -> vector<16x8xf32>
    %c0_6 = arith.constant 0 : index
    %c0_7 = arith.constant 0 : index
    %c0_8 = arith.constant 0 : index
    %5 = vector.load %arg4[%c0_6, %c0_7, %c0_8] : memref<1x16x8xf32, #tpu.memory_space<vmem>>, vector<1x16x8xf32>
    %6 = vector.shape_cast %5 : vector<1x16x8xf32> to vector<16x8xf32>
    %7 = vector.shape_cast %4 : vector<16x8xf32> to vector<1x16x8xf32>
    tpu.vector_store %arg4[%c0_6, %c0_7, %c0_8], %7 {strides = array<i32>} : memref<1x16x8xf32, #tpu.memory_space<vmem>>, vector<1x16x8xf32>,
    return
  }
  func.func @transform_0(%arg0: i32, %arg1: i32) -> (i32, i32, i32) {
    %c0_i32 = arith.constant 0 : i32
    %c0_i32_0 = arith.constant 0 : i32
    return %arg1, %arg0, %c0_i32 : i32, i32, i32
  }
  func.func @transform_1(%arg0: i32, %arg1: i32) -> (i32, i32, i32, i32) {
    %c2_i32 = arith.constant 2 : i32
    %0 = arith.cmpi sge, %arg0, %c2_i32 : i32
    %1 = arith.extui %0 : i1 to i32
    %c0_i32 = arith.constant 0 : i32
    %c0_i32_0 = arith.constant 0 : i32
    %c0_i32_1 = arith.constant 0 : i32
    return %1, %arg1, %c0_i32, %c0_i32_0 : i32, i32, i32, i32
  }
  func.func @transform_2(%arg0: i32, %arg1: i32) -> (i32, i32, i32) {
    %c0_i32 = arith.constant 0 : i32
    %c0_i32_0 = arith.constant 0 : i32
    return %arg1, %arg0, %c0_i32 : i32, i32, i32
  }
}

module attributes {stable_mosaic.version = 11 : i64} {
  func.func @_dual_ffn_kernel(%arg0: i32, %arg1: memref<256x4xf32, #tpu.memory_space<vmem>>, %arg2: memref<256x4xf32, #tpu.memory_space<vmem>>, %arg3: memref<4x16xf32, #tpu.memory_space<vmem>>, %arg4: memref<1x16xf32, #tpu.memory_space<vmem>>, %arg5: memref<8x4xf32, #tpu.memory_space<vmem>>, %arg6: memref<1x4xf32, #tpu.memory_space<vmem>>, %arg7: memref<8x4xf32, #tpu.memory_space<vmem>>, %arg8: memref<1x4xf32, #tpu.memory_space<vmem>>, %arg9: memref<256x8xf32, #tpu.memory_space<vmem>>) attributes {dimension_semantics = [#tpu.dimension_semantics<parallel>], iteration_bounds = array<i64: 2>, scalar_prefetch = 0 : i64, scratch_operands = 0 : i64, tpu.core_type = #tpu.core_type<tc>, window_params = [{transform_indices = @transform_0, window_bounds = array<i64: 256, 4>}, {transform_indices = @transform_1, window_bounds = array<i64: 256, 4>}, {pipeline_mode = #tpu.pipeline_mode<synchronous>, transform_indices = @transform_2, window_bounds = array<i64: 4, 16>}, {pipeline_mode = #tpu.pipeline_mode<synchronous>, transform_indices = @transform_3, window_bounds = array<i64: 1, 16>}, {pipeline_mode = #tpu.pipeline_mode<synchronous>, transform_indices = @transform_4, window_bounds = array<i64: 8, 4>}, {pipeline_mode = #tpu.pipeline_mode<synchronous>, transform_indices = @transform_5, window_bounds = array<i64: 1, 4>}, {pipeline_mode = #tpu.pipeline_mode<synchronous>, transform_indices = @transform_6, window_bounds = array<i64: 8, 4>}, {pipeline_mode = #tpu.pipeline_mode<synchronous>, transform_indices = @transform_7, window_bounds = array<i64: 1, 4>}, {transform_indices = @transform_8, window_bounds = array<i64: 256, 8>}]} {
    %c0 = arith.constant 0 : index
    %c0_0 = arith.constant 0 : index
    %0 = vector.load %arg1[%c0, %c0_0] : memref<256x4xf32, #tpu.memory_space<vmem>>, vector<256x4xf32>
    %c0_1 = arith.constant 0 : index
    %c0_2 = arith.constant 0 : index
    %1 = vector.load %arg2[%c0_1, %c0_2] : memref<256x4xf32, #tpu.memory_space<vmem>>, vector<256x4xf32>
    %2 = arith.addf %0, %1 : vector<256x4xf32>
    %c0_3 = arith.constant 0 : index
    %c0_4 = arith.constant 0 : index
    %3 = vector.load %arg3[%c0_3, %c0_4] : memref<4x16xf32, #tpu.memory_space<vmem>>, vector<4x16xf32>
    %cst = arith.constant dense<0.000000e+00> : vector<256x16xf32>
    %4 = tpu.matmul %2, %3, %cst {dimension_numbers = #tpu.dot_dimension_numbers<[1], [0], [0], [1], [0, 0, 1, 1], [], []>, precision = #tpu.contract_precision<fp32>} : vector<256x4xf32>, vector<4x16xf32>, vector<256x16xf32> -> vector<256x16xf32>
    %c0_5 = arith.constant 0 : index
    %c0_6 = arith.constant 0 : index
    %5 = vector.load %arg4[%c0_5, %c0_6] : memref<1x16xf32, #tpu.memory_space<vmem>>, vector<1x16xf32>
    %6 = vector.broadcast %5 : vector<1x16xf32> to vector<256x16xf32>
    %7 = arith.addf %4, %6 : vector<256x16xf32>
    %cst_7 = arith.constant 0.000000e+00 : f32
    %8 = vector.broadcast %cst_7 : f32 to vector<256x16xf32>
    %9 = arith.maximumf %7, %8 : vector<256x16xf32>
    %10 = vector.extract_strided_slice %9 {offsets = [0, 0], sizes = [256, 8], strides = [1, 1]} : vector<256x16xf32> to vector<256x8xf32>
    %c0_8 = arith.constant 0 : index
    %c0_9 = arith.constant 0 : index
    %11 = vector.load %arg5[%c0_8, %c0_9] : memref<8x4xf32, #tpu.memory_space<vmem>>, vector<8x4xf32>
    %cst_10 = arith.constant dense<0.000000e+00> : vector<256x4xf32>
    %12 = tpu.matmul %10, %11, %cst_10 {dimension_numbers = #tpu.dot_dimension_numbers<[1], [0], [0], [1], [0, 0, 1, 1], [], []>, precision = #tpu.contract_precision<fp32>} : vector<256x8xf32>, vector<8x4xf32>, vector<256x4xf32> -> vector<256x4xf32>
    %c0_11 = arith.constant 0 : index
    %c0_12 = arith.constant 0 : index
    %13 = vector.load %arg6[%c0_11, %c0_12] : memref<1x4xf32, #tpu.memory_space<vmem>>, vector<1x4xf32>
    %14 = vector.broadcast %13 : vector<1x4xf32> to vector<256x4xf32>
    %15 = arith.addf %12, %14 : vector<256x4xf32>
    %16 = vector.extract_strided_slice %9 {offsets = [0, 8], sizes = [256, 8], strides = [1, 1]} : vector<256x16xf32> to vector<256x8xf32>
    %c0_13 = arith.constant 0 : index
    %c0_14 = arith.constant 0 : index
    %17 = vector.load %arg7[%c0_13, %c0_14] : memref<8x4xf32, #tpu.memory_space<vmem>>, vector<8x4xf32>
    %cst_15 = arith.constant dense<0.000000e+00> : vector<256x4xf32>
    %18 = tpu.matmul %16, %17, %cst_15 {dimension_numbers = #tpu.dot_dimension_numbers<[1], [0], [0], [1], [0, 0, 1, 1], [], []>, precision = #tpu.contract_precision<fp32>} : vector<256x8xf32>, vector<8x4xf32>, vector<256x4xf32> -> vector<256x4xf32>
    %c0_16 = arith.constant 0 : index
    %c0_17 = arith.constant 0 : index
    %19 = vector.load %arg8[%c0_16, %c0_17] : memref<1x4xf32, #tpu.memory_space<vmem>>, vector<1x4xf32>
    %20 = vector.broadcast %19 : vector<1x4xf32> to vector<256x4xf32>
    %21 = arith.addf %18, %20 : vector<256x4xf32>
    %22 = tpu.concatenate %15, %21 in 1 : vector<256x4xf32>, vector<256x4xf32> -> vector<256x8xf32>
    %c0_18 = arith.constant 0 : index
    %c0_19 = arith.constant 0 : index
    %23 = vector.load %arg9[%c0_18, %c0_19] : memref<256x8xf32, #tpu.memory_space<vmem>>, vector<256x8xf32>
    tpu.vector_store %arg9[%c0_18, %c0_19], %22 {strides = array<i32>} : memref<256x8xf32, #tpu.memory_space<vmem>>, vector<256x8xf32>,
    return
  }
  func.func @transform_0(%arg0: i32) -> (i32, i32) {
    %c0_i32 = arith.constant 0 : i32
    %c0_i32_0 = arith.constant 0 : i32
    return %arg0, %c0_i32 : i32, i32
  }
  func.func @transform_1(%arg0: i32) -> (i32, i32) {
    %c0_i32 = arith.constant 0 : i32
    %c0_i32_0 = arith.constant 0 : i32
    return %arg0, %c0_i32 : i32, i32
  }
  func.func @transform_2(%arg0: i32) -> (i32, i32) {
    %c0_i32 = arith.constant 0 : i32
    %c0_i32_0 = arith.constant 0 : i32
    %c0_i32_1 = arith.constant 0 : i32
    return %c0_i32, %c0_i32_0 : i32, i32
  }
  func.func @transform_3(%arg0: i32) -> (i32, i32) {
    %c0_i32 = arith.constant 0 : i32
    %c0_i32_0 = arith.constant 0 : i32
    %c0_i32_1 = arith.constant 0 : i32
    return %c0_i32, %c0_i32_0 : i32, i32
  }
  func.func @transform_4(%arg0: i32) -> (i32, i32) {
    %c0_i32 = arith.constant 0 : i32
    %c0_i32_0 = arith.constant 0 : i32
    %c0_i32_1 = arith.constant 0 : i32
    return %c0_i32, %c0_i32_0 : i32, i32
  }
  func.func @transform_5(%arg0: i32) -> (i32, i32) {
    %c0_i32 = arith.constant 0 : i32
    %c0_i32_0 = arith.constant 0 : i32
    %c0_i32_1 = arith.constant 0 : i32
    return %c0_i32, %c0_i32_0 : i32, i32
  }
  func.func @transform_6(%arg0: i32) -> (i32, i32) {
    %c0_i32 = arith.constant 0 : i32
    %c0_i32_0 = arith.constant 0 : i32
    %c0_i32_1 = arith.constant 0 : i32
    return %c0_i32, %c0_i32_0 : i32, i32
  }
  func.func @transform_7(%arg0: i32) -> (i32, i32) {
    %c0_i32 = arith.constant 0 : i32
    %c0_i32_0 = arith.constant 0 : i32
    %c0_i32_1 = arith.constant 0 : i32
    return %c0_i32, %c0_i32_0 : i32, i32
  }
  func.func @transform_8(%arg0: i32) -> (i32, i32) {
    %c0_i32 = arith.constant 0 : i32
    %c0_i32_0 = arith.constant 0 : i32
    return %arg0, %c0_i32 : i32, i32
  }
}

</mosaic_0001>

<llo_original>
// kernel: spectral_conv2d_forward.2
$region0: #{spectral_conv2d_forward.2}
  #allocation0 [shape = 'u32[]', space=smem, size = 0x4, offset = 0x4, fixed_abs, tag = 'smem constant byte address 0x4 - core index']
  #allocation1 [shape = 'u32[144,128]{1,0:T(1,128)}', space=vmem, size = 0x12000, scoped, tag = 'internal scratch']
  %s0 = inlined_call_operand.vmem [shape: f32[4,64,8], index: 0, kind: input, shape index: {}]
  %s1 = inlined_call_operand.vmem [shape: f32[2,4,8,8], index: 1, kind: input, shape index: {}]
  %s2 = inlined_call_operand.vmem [shape: f32[4,64,8], index: 2, kind: output, shape index: {}]
  %s3 = sld [smem:[#allocation0]]
  $region41: #{spectral_conv2d_forward.2} parent=0
    _
  %s5 = ssub.s32 1, %s3
  %s6 = scalar_select 0, %s5, %s3
  loop: start=0, step=1, limit=18
  $region2: #{spectral_conv2d_forward.2} parent=0 // loop_pre_header
    _
  $region3: #{spectral_conv2d_forward.2} parent=0 // loop_header
    %s8 = sphi 0, %s12
    %p9 = scmp.ge.s32.totalorder %s8, 18
    %s15 = sphi 0, %s27
    %s16 = sphi 0, %s23
    %s17 = sphi 0, %s15
    %s18 = sphi 0, %s16
    %s19 = sphi 0, %s17
    %s20 = sphi 0, %s18
    %s32 = sphi 0, %s34
    %s35 = sphi 0, %s32
    %s36 = sphi 0, %s35
    %s52 = sphi 0, %s36
    %s64 = sphi 0, %s66
    %s67 = sphi 0, %s64
    %s68 = sphi 0, %s67
    %s84 = sphi 0, %s68
    %s92 = sphi 0, %s94
    %s95 = sphi 0, %s92
    %s96 = sphi 0, %s95
    %s112 = sphi 0, %s96
  $region4: #{spectral_conv2d_forward.2} parent=0 // loop_header_branch
    %11 = sbr.rel (%p9) target = $region8
  $region5: #{spectral_conv2d_forward.2} parent=0 // loop_body
    %s13 = ssub.s32 %s8, 1
    %s14 = ssub.s32 %s8, 2
    %s21 = sadd.s32 1, %s16
    %p22 = scmp.ge.s32.totalorder %s21, 4
    %s23 = scalar_select %p22, 0, %s21
    %s24 = sadd.s32 1, %s15
    %s25 = scalar_select %p22, %s24, %s15
    %p26 = scmp.ge.s32.totalorder %s25, 4
    %s27 = scalar_select %p26, 0, %s25
    %s28 = ssub.s32 %s16, %s23
    %s29 = ssub.s32 %s15, %s27
    %s30 = sor.u32 %s28, %s29
    %p31 = scmp.eq.s32.totalorder %s30, 0
    %s33 = sadd.s32 %s32, 1
    %s34 = scalar_select %p31, %s32, %s33
    %p37 = pneg %p31
    %p38 = scmp.eq.s32.totalorder %s8, 15
    %p39 = por %p37, %p38
    %p40 = scmp.ne.s32.totalorder %s32, %s35
    %p41 = scmp.eq.s32.totalorder %s8, 0
    %p42 = por %p40, %p41
    %p43 = scmp.ne.s32.totalorder %s32, %s35
    %p44 = scmp.eq.s32.totalorder %s13, 15
    %p45 = por %p43, %p44
    %p46 = scmp.ne.s32.totalorder %s35, %s36
    %p47 = scmp.eq.s32.totalorder %s13, 0
    %p48 = por %p46, %p47
    %p49 = scmp.ne.s32.totalorder %s35, %s36
    %p50 = scmp.eq.s32.totalorder %s14, 15
    %p51 = por %p49, %p50
    %p53 = scmp.ne.s32.totalorder %s36, %s52
    %p54 = scmp.eq.s32.totalorder %s14, 0
    %p55 = por %p53, %p54
    %p56 = scmp.ge.s32.totalorder %s15, 2
    %s57 = scalar_select %p56, 1, 0
    %p58 = scmp.ge.s32.totalorder %s27, 2
    %s59 = scalar_select %p58, 1, 0
    %s60 = ssub.s32 %s57, %s59
    %s61 = ssub.s32 %s16, %s23
    %s62 = sor.u32 %s60, %s61
    %p63 = scmp.eq.s32.totalorder %s62, 0
    %s65 = sadd.s32 %s64, 1
    %s66 = scalar_select %p63, %s64, %s65
    %p69 = pneg %p63
    %p70 = scmp.eq.s32.totalorder %s8, 15
    %p71 = por %p69, %p70
    %p72 = scmp.ne.s32.totalorder %s64, %s67
    %p73 = scmp.eq.s32.totalorder %s8, 0
    %p74 = por %p72, %p73
    %p75 = scmp.ne.s32.totalorder %s64, %s67
    %p76 = scmp.eq.s32.totalorder %s13, 15
    %p77 = por %p75, %p76
    %p78 = scmp.ne.s32.totalorder %s67, %s68
    %p79 = scmp.eq.s32.totalorder %s13, 0
    %p80 = por %p78, %p79
    %p81 = scmp.ne.s32.totalorder %s67, %s68
    %p82 = scmp.eq.s32.totalorder %s14, 15
    %p83 = por %p81, %p82
    %p85 = scmp.ne.s32.totalorder %s68, %s84
    %p86 = scmp.eq.s32.totalorder %s14, 0
    %p87 = por %p85, %p86
    %s88 = ssub.s32 %s16, %s23
    %s89 = ssub.s32 %s15, %s27
    %s90 = sor.u32 %s88, %s89
    %p91 = scmp.eq.s32.totalorder %s90, 0
    %s93 = sadd.s32 %s92, 1
    %s94 = scalar_select %p91, %s92, %s93
    %p97 = pneg %p91
    %p98 = scmp.eq.s32.totalorder %s8, 15
    %p99 = por %p97, %p98
    %p100 = scmp.ne.s32.totalorder %s92, %s95
    %p101 = scmp.eq.s32.totalorder %s8, 0
    %p102 = por %p100, %p101
    %p103 = scmp.ne.s32.totalorder %s92, %s95
    %p104 = scmp.eq.s32.totalorder %s13, 15
    %p105 = por %p103, %p104
    %p106 = scmp.ne.s32.totalorder %s95, %s96
    %p107 = scmp.eq.s32.totalorder %s13, 0
    %p108 = por %p106, %p107
    %p109 = scmp.ne.s32.totalorder %s95, %s96
    %p110 = scmp.eq.s32.totalorder %s14, 15
    %p111 = por %p109, %p110
    %p113 = scmp.ne.s32.totalorder %s96, %s112
    %p114 = scmp.eq.s32.totalorder %s14, 0
    %p115 = por %p113, %p114
    %p116 = scmp.le.s32.totalorder 1, %s8
    %p117 = scmp.lt.s32.totalorder %s8, 17
    %p118 = pnand %p116, %p117
    %p119 = pneg %p118
    // Predicated region
    $region9: #{spectral_conv2d_forward.2} parent=5 // pred_check
      _
    $region10: #{spectral_conv2d_forward.2} parent=5 // pred_check_branch
      %121 = sbr.rel (%p118) target = $region12
    $region11: #{spectral_conv2d_forward.2} parent=5 // pred_region
      %s122 = ssub.s32 %s8, 1
    $region12: #{spectral_conv2d_forward.2} parent=5 // pred_fallthru
      _
    %p123 = scmp.lt.s32.totalorder %s8, 16
    // Predicated region
    $region13: #{spectral_conv2d_forward.2} parent=5 // pred_check
      %p124 = pneg %p123
    $region14: #{spectral_conv2d_forward.2} parent=5 // pred_check_branch
      %126 = sbr.rel (%p124) target = $region16
    $region15: #{spectral_conv2d_forward.2} parent=5 // pred_region
      // Predicated region
      $region17: #{spectral_conv2d_forward.2} parent=15 // pred_check
        %p127 = pneg %p42
      $region18: #{spectral_conv2d_forward.2} parent=15 // pred_check_branch
        %129 = sbr.rel (%p127) target = $region20
      $region19: #{spectral_conv2d_forward.2} parent=15 // pred_region
        %s130 = smul.u32 2, %s15
        %p131 = scmp.lt.s32.totalorder %s16, 3
        %s132 = scalar_select %p131, %s16, 3
        %p133 = scmp.lt.s32.totalorder %s130, 7
        %s134 = scalar_select %p133, %s130, 7
        %s135 = smul.addr %s132, 8
        %s136 = sadd.s32 %s134, %s135
        %s137 = smul.addr %s136, 8
        %s138 = scalar_lea.vmem %s0, %s137
        %s139 = smul.u32 2, %s15
      $region20: #{spectral_conv2d_forward.2} parent=15 // pred_fallthru
        _
      // Predicated region
      $region21: #{spectral_conv2d_forward.2} parent=15 // pred_check
        %p140 = pneg %p74
      $region22: #{spectral_conv2d_forward.2} parent=15 // pred_check_branch
        %142 = sbr.rel (%p140) target = $region24
      $region23: #{spectral_conv2d_forward.2} parent=15 // pred_region
        %p143 = scmp.ge.s32.totalorder %s15, 2
        %s144 = scalar_select %p143, 1, 0
        %p145 = scmp.lt.s32.totalorder %s144, 1
        %s146 = scalar_select %p145, %s144, 1
        %p147 = scmp.lt.s32.totalorder %s16, 3
        %s148 = scalar_select %p147, %s16, 3
        %s149 = smul.addr %s146, 4
        %s150 = sadd.s32 %s148, %s149
        %s151 = smul.addr %s150, 8
        %s152 = scalar_lea.vmem %s1, %s151
        %p153 = scmp.ge.s32.totalorder %s15, 2
        %s154 = scalar_select %p153, 1, 0
      $region24: #{spectral_conv2d_forward.2} parent=15 // pred_fallthru
        _
    $region16: #{spectral_conv2d_forward.2} parent=5 // pred_fallthru
      _
    %p155 = scmp.le.s32.totalorder 1, %s8
    %p156 = scmp.lt.s32.totalorder %s8, 17
    %p157 = pnand %p155, %p156
    %p158 = pneg %p157
    // Predicated region
    $region25: #{spectral_conv2d_forward.2} parent=5 // pred_check
      _
    $region26: #{spectral_conv2d_forward.2} parent=5 // pred_check_branch
      %160 = sbr.rel (%p157) target = $region28
    $region27: #{spectral_conv2d_forward.2} parent=5 // pred_region
      %s161 = ssub.s32 %s8, 1
      %s162 = smul.u32 2, %s17
      %p163 = scmp.lt.s32.totalorder %s18, 3
      %s164 = scalar_select %p163, %s18, 3
      %p165 = scmp.lt.s32.totalorder %s162, 7
      %s166 = scalar_select %p165, %s162, 7
      %s167 = smul.addr %s164, 8
      %s168 = sadd.s32 %s166, %s167
      %s169 = smul.addr %s168, 8
      %s170 = scalar_lea.vmem %s0, %s169
      %p171 = pneg %p48
      %p172 = pneg %p45
      %p173 = scmp.ge.s32.totalorder %s17, 2
      %s174 = scalar_select %p173, 1, 0
      %p175 = scmp.lt.s32.totalorder %s174, 1
      %s176 = scalar_select %p175, %s174, 1
      %p177 = scmp.lt.s32.totalorder %s18, 3
      %s178 = scalar_select %p177, %s18, 3
      %s179 = smul.addr %s176, 4
      %s180 = sadd.s32 %s178, %s179
      %s181 = smul.addr %s180, 8
      %s182 = scalar_lea.vmem %s1, %s181
      %p183 = pneg %p80
      %p184 = pneg %p77
      %p185 = pneg %p108
      %p186 = pneg %p105
      %s187 = smul.u32 2, %s17
      %p188 = scmp.lt.s32.totalorder %s18, 3
      %s189 = scalar_select %p188, %s18, 3
      %p190 = scmp.lt.s32.totalorder %s187, 7
      %s191 = scalar_select %p190, %s187, 7
      %s192 = smul.addr %s189, 8
      %s193 = sadd.s32 %s191, %s192
      %s194 = smul.addr %s193, 8
      %s195 = scalar_lea.vmem %s2, %s194
      %s196 = smul.u32 2, %s17
      %p197 = scmp.lt.s32.totalorder %s18, 3
      %s198 = scalar_select %p197, %s18, 3
      %p199 = scmp.lt.s32.totalorder %s196, 7
      %s200 = scalar_select %p199, %s196, 7
      %s201 = smul.addr %s198, 8
      %s202 = sadd.s32 %s200, %s201
      %s203 = smul.addr %s202, 8
      %s204 = scalar_lea.vmem %s0, %s203
      %s205 = smul.u32 2, %s17
      %p206 = scmp.ge.s32.totalorder %s17, 2
      %s207 = scalar_select %p206, 1, 0
      %p208 = scmp.lt.s32.totalorder %s207, 1
      %s209 = scalar_select %p208, %s207, 1
      %p210 = scmp.lt.s32.totalorder %s18, 3
      %s211 = scalar_select %p210, %s18, 3
      %s212 = smul.addr %s209, 4
      %s213 = sadd.s32 %s211, %s212
      %s214 = smul.addr %s213, 8
      %s215 = scalar_lea.vmem %s1, %s214
      %p216 = scmp.ge.s32.totalorder %s17, 2
      %s217 = scalar_select %p216, 1, 0
      %s218 = smul.u32 2, %s17
      %p219 = scmp.lt.s32.totalorder %s18, 3
      %s220 = scalar_select %p219, %s18, 3
      %p221 = scmp.lt.s32.totalorder %s218, 7
      %s222 = scalar_select %p221, %s218, 7
      %s223 = smul.addr %s220, 8
      %s224 = sadd.s32 %s222, %s223
      %s225 = smul.addr %s224, 8
      %s226 = scalar_lea.vmem %s2, %s225
      %s227 = smul.u32 2, %s17
      %v228 = vld [vmem:[%s204] sm:$0xff]
      %v229 = vld [vmem:[%s204 + $0x8] sm:$0xff]
      %v230 = vld [vmem:[%s215] sm:$0xff]
      %vm231 = vcmask 64512
      %v233 = vsel %vm231, %v228, 0
      %v236 = vsel %vm231, %v229, 0
      %238 = vmatprep.subr.mxu0 0.0
      %v239 = vand.u32 %v230, 4294901760
      %240 = vmatpush1.msra.mxu0 %v239
      %241 = vmatprep.subr.mxu0 0.0
      %242 = vmatpush1.msra.mxu0 0.0
      %243 = vmatprep.subr.mxu0 0.0
      %244 = vmatpush1.msra.mxu0 0.0
      %245 = vmatprep.subr.mxu0 0.0
      %246 = vmatpush1.msra.mxu0 0.0
      %247 = vmatprep.subr.mxu0 0.0
      %248 = vmatpush1.msra.mxu0 0.0
      %249 = vmatprep.subr.mxu0 0.0
      %250 = vmatpush1.msra.mxu0 0.0
      %251 = vmatprep.subr.mxu0 0.0
      %252 = vmatpush1.msra.mxu0 0.0
      %253 = vmatprep.subr.mxu0 0.0
      %254 = vmatpush1.msra.mxu0 0.0
      %255 = vmatprep.subr.mxu0 0.0
      %256 = vmatpush1.msra.mxu0 0.0
      %257 = vmatprep.subr.mxu0 0.0
      %258 = vmatpush1.msra.mxu0 0.0
      %259 = vmatprep.subr.mxu0 0.0
      %260 = vmatpush1.msra.mxu0 0.0
      %261 = vmatprep.subr.mxu0 0.0
      %262 = vmatpush1.msra.mxu0 0.0
      %263 = vmatprep.subr.mxu0 0.0
      %264 = vmatpush1.msra.mxu0 0.0
      %265 = vmatprep.subr.mxu0 0.0
      %266 = vmatpush1.msra.mxu0 0.0
      %267 = vmatprep.subr.mxu0 0.0
      %268 = vmatpush1.msra.mxu0 0.0
      %269 = vmatprep.subr.mxu0 0.0
      %270 = vmatpush1.msra.mxu0 0.0
      %271 = vmatprep.subr.mxu0 0.0
      %272 = vmatpush1.msra.mxu0 0.0
      %273 = vmatprep.subr.mxu0 0.0
      %274 = vmatpush1.msra.mxu0 0.0
      %275 = vmatprep.subr.mxu0 0.0
      %276 = vmatpush1.msra.mxu0 0.0
      %277 = vmatprep.subr.mxu0 0.0
      %278 = vmatpush1.msra.mxu0 0.0
      %279 = vmatprep.subr.mxu0 0.0
      %280 = vmatpush1.msra.mxu0 0.0
      %281 = vmatprep.subr.mxu0 0.0
      %282 = vmatpush1.msra.mxu0 0.0
      %283 = vmatprep.subr.mxu0 0.0
      %284 = vmatpush1.msra.mxu0 0.0
      %285 = vmatprep.subr.mxu0 0.0
      %286 = vmatpush1.msra.mxu0 0.0
      %287 = vmatprep.subr.mxu0 0.0
      %288 = vmatpush1.msra.mxu0 0.0
      %289 = vmatprep.subr.mxu0 0.0
      %290 = vmatpush1.msra.mxu0 0.0
      %291 = vmatprep.subr.mxu0 0.0
      %292 = vmatpush1.msra.mxu0 0.0
      %293 = vmatprep.subr.mxu0 0.0
      %294 = vmatpush1.msra.mxu0 0.0
      %295 = vmatprep.subr.mxu0 0.0
      %296 = vmatpush1.msra.mxu0 0.0
      %297 = vmatprep.subr.mxu0 0.0
      %298 = vmatpush1.msra.mxu0 0.0
      %299 = vmatprep.subr.mxu0 0.0
      %300 = vmatpush1.msra.mxu0 0.0
      %301 = vmatprep.subr.mxu0 0.0
      %302 = vmatpush1.msra.mxu0 0.0
      %303 = vmatprep.mubr.f32.mxu0 0.0
      %v304 = vand.u32 %v233, 4294901760
      %v305 = vsub.f32 %v233, %v304
      %v306 = vand.u32 %v305, 4294901760
      %v307 = vsub.f32 %v305, %v306
      %v308 = vand.u32 %v307, 4294901760
      %309 = vmatmul.mubr.f32.gmra.mrb[0].mxu0 %v308
      %v310 = vpop.f32.mrb[0].mxu0
      %v311 = vadd.f32 0.0, %v310
      %v312 = vpop.f32.mrb[0].mxu0
      %313 = vmatprep.mubr.f32.mxu0 0.0
      %v314 = vand.u32 %v236, 4294901760
      %v315 = vsub.f32 %v236, %v314
      %v316 = vand.u32 %v315, 4294901760
      %v317 = vsub.f32 %v315, %v316
      %v318 = vand.u32 %v317, 4294901760
      %319 = vmatmul.mubr.f32.gmra.mrb[0].mxu0 %v318
      %v320 = vpop.f32.mrb[0].mxu0
      %v321 = vadd.f32 0.0, %v320
      %v322 = vpop.f32.mrb[0].mxu0
      %323 = vdwg.mxu0
      %324 = vmatprep.subr.mxu0 0.0
      %v325 = vand.u32 %v230, 4294901760
      %v326 = vsub.f32 %v230, %v325
      %v327 = vand.u32 %v326, 4294901760
      %v328 = vsub.f32 %v326, %v327
      %v329 = vand.u32 %v328, 4294901760
      %330 = vmatpush1.msra.mxu0 %v329
      %331 = vmatprep.subr.mxu0 0.0
      %332 = vmatpush1.msra.mxu0 0.0
      %333 = vmatprep.subr.mxu0 0.0
      %334 = vmatpush1.msra.mxu0 0.0
      %335 = vmatprep.subr.mxu0 0.0
      %336 = vmatpush1.msra.mxu0 0.0
      %337 = vmatprep.subr.mxu0 0.0
      %338 = vmatpush1.msra.mxu0 0.0
      %339 = vmatprep.subr.mxu0 0.0
      %340 = vmatpush1.msra.mxu0 0.0
      %341 = vmatprep.subr.mxu0 0.0
      %342 = vmatpush1.msra.mxu0 0.0
      %343 = vmatprep.subr.mxu0 0.0
      %344 = vmatpush1.msra.mxu0 0.0
      %345 = vmatprep.subr.mxu0 0.0
      %346 = vmatpush1.msra.mxu0 0.0
      %347 = vmatprep.subr.mxu0 0.0
      %348 = vmatpush1.msra.mxu0 0.0
      %349 = vmatprep.subr.mxu0 0.0
      %350 = vmatpush1.msra.mxu0 0.0
      %351 = vmatprep.subr.mxu0 0.0
      %352 = vmatpush1.msra.mxu0 0.0
      %353 = vmatprep.subr.mxu0 0.0
      %354 = vmatpush1.msra.mxu0 0.0
      %355 = vmatprep.subr.mxu0 0.0
      %356 = vmatpush1.msra.mxu0 0.0
      %357 = vmatprep.subr.mxu0 0.0
      %358 = vmatpush1.msra.mxu0 0.0
      %359 = vmatprep.subr.mxu0 0.0
      %360 = vmatpush1.msra.mxu0 0.0
      %361 = vmatprep.subr.mxu0 0.0
      %362 = vmatpush1.msra.mxu0 0.0
      %363 = vmatprep.subr.mxu0 0.0
      %364 = vmatpush1.msra.mxu0 0.0
      %365 = vmatprep.subr.mxu0 0.0
      %366 = vmatpush1.msra.mxu0 0.0
      %367 = vmatprep.subr.mxu0 0.0
      %368 = vmatpush1.msra.mxu0 0.0
      %369 = vmatprep.subr.mxu0 0.0
      %370 = vmatpush1.msra.mxu0 0.0
      %371 = vmatprep.subr.mxu0 0.0
      %372 = vmatpush1.msra.mxu0 0.0
      %373 = vmatprep.subr.mxu0 0.0
      %374 = vmatpush1.msra.mxu0 0.0
      %375 = vmatprep.subr.mxu0 0.0
      %376 = vmatpush1.msra.mxu0 0.0
      %377 = vmatprep.subr.mxu0 0.0
      %378 = vmatpush1.msra.mxu0 0.0
      %379 = vmatprep.subr.mxu0 0.0
      %380 = vmatpush1.msra.mxu0 0.0
      %381 = vmatprep.subr.mxu0 0.0
      %382 = vmatpush1.msra.mxu0 0.0
      %383 = vmatprep.subr.mxu0 0.0
      %384 = vmatpush1.msra.mxu0 0.0
      %385 = vmatprep.subr.mxu0 0.0
      %386 = vmatpush1.msra.mxu0 0.0
      %387 = vmatprep.subr.mxu0 0.0
      %388 = vmatpush1.msra.mxu0 0.0
      %389 = vmatprep.subr.mxu0 0.0
      %390 = vmatpush1.msra.mxu0 0.0
      %391 = vmatprep.subr.mxu0 0.0
      %392 = vmatpush1.msra.mxu0 0.0
      %393 = vmatprep.mubr.f32.mxu0 0.0
      %v394 = vand.u32 %v233, 4294901760
      %395 = vmatmul.mubr.f32.gmra.mrb[0].mxu0 %v394
      %v396 = vpop.f32.mrb[0].mxu0
      %v397 = vadd.f32 %v311, %v396
      %v398 = vpop.f32.mrb[0].mxu0
      %399 = vmatprep.mubr.f32.mxu0 0.0
      %v400 = vand.u32 %v236, 4294901760
      %401 = vmatmul.mubr.f32.gmra.mrb[0].mxu0 %v400
      %v402 = vpop.f32.mrb[0].mxu0
      %v403 = vadd.f32 %v321, %v402
      %v404 = vpop.f32.mrb[0].mxu0
      %405 = vdwg.mxu0
      %406 = vmatprep.subr.mxu0 0.0
      %v407 = vand.u32 %v230, 4294901760
      %v408 = vsub.f32 %v230, %v407
      %409 = vmatpush1.msra.mxu0 %v408
      %410 = vmatprep.subr.mxu0 0.0
      %411 = vmatpush1.msra.mxu0 0.0
      %412 = vmatprep.subr.mxu0 0.0
      %413 = vmatpush1.msra.mxu0 0.0
      %414 = vmatprep.subr.mxu0 0.0
      %415 = vmatpush1.msra.mxu0 0.0
      %416 = vmatprep.subr.mxu0 0.0
      %417 = vmatpush1.msra.mxu0 0.0
      %418 = vmatprep.subr.mxu0 0.0
      %419 = vmatpush1.msra.mxu0 0.0
      %420 = vmatprep.subr.mxu0 0.0
      %421 = vmatpush1.msra.mxu0 0.0
      %422 = vmatprep.subr.mxu0 0.0
      %423 = vmatpush1.msra.mxu0 0.0
      %424 = vmatprep.subr.mxu0 0.0
      %425 = vmatpush1.msra.mxu0 0.0
      %426 = vmatprep.subr.mxu0 0.0
      %427 = vmatpush1.msra.mxu0 0.0
      %428 = vmatprep.subr.mxu0 0.0
      %429 = vmatpush1.msra.mxu0 0.0
      %430 = vmatprep.subr.mxu0 0.0
      %431 = vmatpush1.msra.mxu0 0.0
      %432 = vmatprep.subr.mxu0 0.0
      %433 = vmatpush1.msra.mxu0 0.0
      %434 = vmatprep.subr.mxu0 0.0
      %435 = vmatpush1.msra.mxu0 0.0
      %436 = vmatprep.subr.mxu0 0.0
      %437 = vmatpush1.msra.mxu0 0.0
      %438 = vmatprep.subr.mxu0 0.0
      %439 = vmatpush1.msra.mxu0 0.0
      %440 = vmatprep.subr.mxu0 0.0
      %441 = vmatpush1.msra.mxu0 0.0
      %442 = vmatprep.subr.mxu0 0.0
      %443 = vmatpush1.msra.mxu0 0.0
      %444 = vmatprep.subr.mxu0 0.0
      %445 = vmatpush1.msra.mxu0 0.0
      %446 = vmatprep.subr.mxu0 0.0
      %447 = vmatpush1.msra.mxu0 0.0
      %448 = vmatprep.subr.mxu0 0.0
      %449 = vmatpush1.msra.mxu0 0.0
      %450 = vmatprep.subr.mxu0 0.0
      %451 = vmatpush1.msra.mxu0 0.0
      %452 = vmatprep.subr.mxu0 0.0
      %453 = vmatpush1.msra.mxu0 0.0
      %454 = vmatprep.subr.mxu0 0.0
      %455 = vmatpush1.msra.mxu0 0.0
      %456 = vmatprep.subr.mxu0 0.0
      %457 = vmatpush1.msra.mxu0 0.0
      %458 = vmatprep.subr.mxu0 0.0
      %459 = vmatpush1.msra.mxu0 0.0
      %460 = vmatprep.subr.mxu0 0.0
      %461 = vmatpush1.msra.mxu0 0.0
      %462 = vmatprep.subr.mxu0 0.0
      %463 = vmatpush1.msra.mxu0 0.0
      %464 = vmatprep.subr.mxu0 0.0
      %465 = vmatpush1.msra.mxu0 0.0
      %466 = vmatprep.subr.mxu0 0.0
      %467 = vmatpush1.msra.mxu0 0.0
      %468 = vmatprep.subr.mxu0 0.0
      %469 = vmatpush1.msra.mxu0 0.0
      %470 = vmatprep.subr.mxu0 0.0
      %471 = vmatpush1.msra.mxu0 0.0
      %472 = vmatprep.mubr.f32.mxu0 0.0
      %v473 = vand.u32 %v233, 4294901760
      %v474 = vsub.f32 %v233, %v473
      %475 = vmatmul.mubr.f32.gmra.mrb[0].mxu0 %v474
      %v476 = vpop.f32.mrb[0].mxu0
      %v477 = vadd.f32 %v397, %v476
      %v478 = vpop.f32.mrb[0].mxu0
      %479 = vmatprep.mubr.f32.mxu0 0.0
      %v480 = vand.u32 %v236, 4294901760
      %v481 = vsub.f32 %v236, %v480
      %482 = vmatmul.mubr.f32.gmra.mrb[0].mxu0 %v481
      %v483 = vpop.f32.mrb[0].mxu0
      %v484 = vadd.f32 %v403, %v483
      %v485 = vpop.f32.mrb[0].mxu0
      %486 = vdwg.mxu0
      %487 = vmatprep.subr.mxu0 0.0
      %v488 = vand.u32 %v230, 4294901760
      %489 = vmatpush1.msra.mxu0 %v488
      %490 = vmatprep.subr.mxu0 0.0
      %491 = vmatpush1.msra.mxu0 0.0
      %492 = vmatprep.subr.mxu0 0.0
      %493 = vmatpush1.msra.mxu0 0.0
      %494 = vmatprep.subr.mxu0 0.0
      %495 = vmatpush1.msra.mxu0 0.0
      %496 = vmatprep.subr.mxu0 0.0
      %497 = vmatpush1.msra.mxu0 0.0
      %498 = vmatprep.subr.mxu0 0.0
      %499 = vmatpush1.msra.mxu0 0.0
      %500 = vmatprep.subr.mxu0 0.0
      %501 = vmatpush1.msra.mxu0 0.0
      %502 = vmatprep.subr.mxu0 0.0
      %503 = vmatpush1.msra.mxu0 0.0
      %504 = vmatprep.subr.mxu0 0.0
      %505 = vmatpush1.msra.mxu0 0.0
      %506 = vmatprep.subr.mxu0 0.0
      %507 = vmatpush1.msra.mxu0 0.0
      %508 = vmatprep.subr.mxu0 0.0
      %509 = vmatpush1.msra.mxu0 0.0
      %510 = vmatprep.subr.mxu0 0.0
      %511 = vmatpush1.msra.mxu0 0.0
      %512 = vmatprep.subr.mxu0 0.0
      %513 = vmatpush1.msra.mxu0 0.0
      %514 = vmatprep.subr.mxu0 0.0
      %515 = vmatpush1.msra.mxu0 0.0
      %516 = vmatprep.subr.mxu0 0.0
      %517 = vmatpush1.msra.mxu0 0.0
      %518 = vmatprep.subr.mxu0 0.0
      %519 = vmatpush1.msra.mxu0 0.0
      %520 = vmatprep.subr.mxu0 0.0
      %521 = vmatpush1.msra.mxu0 0.0
      %522 = vmatprep.subr.mxu0 0.0
      %523 = vmatpush1.msra.mxu0 0.0
      %524 = vmatprep.subr.mxu0 0.0
      %525 = vmatpush1.msra.mxu0 0.0
      %526 = vmatprep.subr.mxu0 0.0
      %527 = vmatpush1.msra.mxu0 0.0
      %528 = vmatprep.subr.mxu0 0.0
      %529 = vmatpush1.msra.mxu0 0.0
      %530 = vmatprep.subr.mxu0 0.0
      %531 = vmatpush1.msra.mxu0 0.0
      %532 = vmatprep.subr.mxu0 0.0
      %533 = vmatpush1.msra.mxu0 0.0
      %534 = vmatprep.subr.mxu0 0.0
      %535 = vmatpush1.msra.mxu0 0.0
      %536 = vmatprep.subr.mxu0 0.0
      %537 = vmatpush1.msra.mxu0 0.0
      %538 = vmatprep.subr.mxu0 0.0
      %539 = vmatpush1.msra.mxu0 0.0
      %540 = vmatprep.subr.mxu0 0.0
      %541 = vmatpush1.msra.mxu0 0.0
      %542 = vmatprep.subr.mxu0 0.0
      %543 = vmatpush1.msra.mxu0 0.0
      %544 = vmatprep.subr.mxu0 0.0
      %545 = vmatpush1.msra.mxu0 0.0
      %546 = vmatprep.subr.mxu0 0.0
      %547 = vmatpush1.msra.mxu0 0.0
      %548 = vmatprep.subr.mxu0 0.0
      %549 = vmatpush1.msra.mxu0 0.0
      %550 = vmatprep.subr.mxu0 0.0
      %551 = vmatpush1.msra.mxu0 0.0
      %552 = vmatprep.mubr.f32.mxu0 0.0
      %v553 = vand.u32 %v233, 4294901760
      %v554 = vsub.f32 %v233, %v553
      %v555 = vand.u32 %v554, 4294901760
      %556 = vmatmul.mubr.f32.gmra.mrb[0].mxu0 %v555
      %v557 = vpop.f32.mrb[0].mxu0
      %v558 = vadd.f32 %v477, %v557
      %v559 = vpop.f32.mrb[0].mxu0
      %560 = vmatprep.mubr.f32.mxu0 0.0
      %v561 = vand.u32 %v236, 4294901760
      %v562 = vsub.f32 %v236, %v561
      %v563 = vand.u32 %v562, 4294901760
      %564 = vmatmul.mubr.f32.gmra.mrb[0].mxu0 %v563
      %v565 = vpop.f32.mrb[0].mxu0
      %v566 = vadd.f32 %v484, %v565
      %v567 = vpop.f32.mrb[0].mxu0
      %568 = vdwg.mxu0
      %569 = vmatprep.subr.mxu0 0.0
      %v570 = vand.u32 %v230, 4294901760
      %v571 = vsub.f32 %v230, %v570
      %v572 = vand.u32 %v571, 4294901760
      %573 = vmatpush1.msra.mxu0 %v572
      %574 = vmatprep.subr.mxu0 0.0
      %575 = vmatpush1.msra.mxu0 0.0
      %576 = vmatprep.subr.mxu0 0.0
      %577 = vmatpush1.msra.mxu0 0.0
      %578 = vmatprep.subr.mxu0 0.0
      %579 = vmatpush1.msra.mxu0 0.0
      %580 = vmatprep.subr.mxu0 0.0
      %581 = vmatpush1.msra.mxu0 0.0
      %582 = vmatprep.subr.mxu0 0.0
      %583 = vmatpush1.msra.mxu0 0.0
      %584 = vmatprep.subr.mxu0 0.0
      %585 = vmatpush1.msra.mxu0 0.0
      %586 = vmatprep.subr.mxu0 0.0
      %587 = vmatpush1.msra.mxu0 0.0
      %588 = vmatprep.subr.mxu0 0.0
      %589 = vmatpush1.msra.mxu0 0.0
      %590 = vmatprep.subr.mxu0 0.0
      %591 = vmatpush1.msra.mxu0 0.0
      %592 = vmatprep.subr.mxu0 0.0
      %593 = vmatpush1.msra.mxu0 0.0
      %594 = vmatprep.subr.mxu0 0.0
      %595 = vmatpush1.msra.mxu0 0.0
      %596 = vmatprep.subr.mxu0 0.0
      %597 = vmatpush1.msra.mxu0 0.0
      %598 = vmatprep.subr.mxu0 0.0
      %599 = vmatpush1.msra.mxu0 0.0
      %600 = vmatprep.subr.mxu0 0.0
      %601 = vmatpush1.msra.mxu0 0.0
      %602 = vmatprep.subr.mxu0 0.0
      %603 = vmatpush1.msra.mxu0 0.0
      %604 = vmatprep.subr.mxu0 0.0
      %605 = vmatpush1.msra.mxu0 0.0
      %606 = vmatprep.subr.mxu0 0.0
      %607 = vmatpush1.msra.mxu0 0.0
      %608 = vmatprep.subr.mxu0 0.0
      %609 = vmatpush1.msra.mxu0 0.0
      %610 = vmatprep.subr.mxu0 0.0
      %611 = vmatpush1.msra.mxu0 0.0
      %612 = vmatprep.subr.mxu0 0.0
      %613 = vmatpush1.msra.mxu0 0.0
      %614 = vmatprep.subr.mxu0 0.0
      %615 = vmatpush1.msra.mxu0 0.0
      %616 = vmatprep.subr.mxu0 0.0
      %617 = vmatpush1.msra.mxu0 0.0
      %618 = vmatprep.subr.mxu0 0.0
      %619 = vmatpush1.msra.mxu0 0.0
      %620 = vmatprep.subr.mxu0 0.0
      %621 = vmatpush1.msra.mxu0 0.0
      %622 = vmatprep.subr.mxu0 0.0
      %623 = vmatpush1.msra.mxu0 0.0
      %624 = vmatprep.subr.mxu0 0.0
      %625 = vmatpush1.msra.mxu0 0.0
      %626 = vmatprep.subr.mxu0 0.0
      %627 = vmatpush1.msra.mxu0 0.0
      %628 = vmatprep.subr.mxu0 0.0
      %629 = vmatpush1.msra.mxu0 0.0
      %630 = vmatprep.subr.mxu0 0.0
      %631 = vmatpush1.msra.mxu0 0.0
      %632 = vmatprep.subr.mxu0 0.0
      %633 = vmatpush1.msra.mxu0 0.0
      %634 = vmatprep.subr.mxu0 0.0
      %635 = vmatpush1.msra.mxu0 0.0
      %636 = vmatprep.mubr.f32.mxu0 0.0
      %v637 = vand.u32 %v233, 4294901760
      %638 = vmatmul.mubr.f32.gmra.mrb[0].mxu0 %v637
      %v639 = vpop.f32.mrb[0].mxu0
      %v640 = vadd.f32 %v558, %v639
      %v641 = vpop.f32.mrb[0].mxu0
      %642 = vmatprep.mubr.f32.mxu0 0.0
      %v643 = vand.u32 %v236, 4294901760
      %644 = vmatmul.mubr.f32.gmra.mrb[0].mxu0 %v643
      %v645 = vpop.f32.mrb[0].mxu0
      %v646 = vadd.f32 %v566, %v645
      %v647 = vpop.f32.mrb[0].mxu0
      %648 = vdwg.mxu0
      %649 = vmatprep.subr.mxu0 0.0
      %v650 = vand.u32 %v230, 4294901760
      %651 = vmatpush1.msra.mxu0 %v650
      %652 = vmatprep.subr.mxu0 0.0
      %653 = vmatpush1.msra.mxu0 0.0
      %654 = vmatprep.subr.mxu0 0.0
      %655 = vmatpush1.msra.mxu0 0.0
      %656 = vmatprep.subr.mxu0 0.0
      %657 = vmatpush1.msra.mxu0 0.0
      %658 = vmatprep.subr.mxu0 0.0
      %659 = vmatpush1.msra.mxu0 0.0
      %660 = vmatprep.subr.mxu0 0.0
      %661 = vmatpush1.msra.mxu0 0.0
      %662 = vmatprep.subr.mxu0 0.0
      %663 = vmatpush1.msra.mxu0 0.0
      %664 = vmatprep.subr.mxu0 0.0
      %665 = vmatpush1.msra.mxu0 0.0
      %666 = vmatprep.subr.mxu0 0.0
      %667 = vmatpush1.msra.mxu0 0.0
      %668 = vmatprep.subr.mxu0 0.0
      %669 = vmatpush1.msra.mxu0 0.0
      %670 = vmatprep.subr.mxu0 0.0
      %671 = vmatpush1.msra.mxu0 0.0
      %672 = vmatprep.subr.mxu0 0.0
      %673 = vmatpush1.msra.mxu0 0.0
      %674 = vmatprep.subr.mxu0 0.0
      %675 = vmatpush1.msra.mxu0 0.0
      %676 = vmatprep.subr.mxu0 0.0
      %677 = vmatpush1.msra.mxu0 0.0
      %678 = vmatprep.subr.mxu0 0.0
      %679 = vmatpush1.msra.mxu0 0.0
      %680 = vmatprep.subr.mxu0 0.0
      %681 = vmatpush1.msra.mxu0 0.0
      %682 = vmatprep.subr.mxu0 0.0
      %683 = vmatpush1.msra.mxu0 0.0
      %684 = vmatprep.subr.mxu0 0.0
      %685 = vmatpush1.msra.mxu0 0.0
      %686 = vmatprep.subr.mxu0 0.0
      %687 = vmatpush1.msra.mxu0 0.0
      %688 = vmatprep.subr.mxu0 0.0
      %689 = vmatpush1.msra.mxu0 0.0
      %690 = vmatprep.subr.mxu0 0.0
      %691 = vmatpush1.msra.mxu0 0.0
      %692 = vmatprep.subr.mxu0 0.0
      %693 = vmatpush1.msra.mxu0 0.0
      %694 = vmatprep.subr.mxu0 0.0
      %695 = vmatpush1.msra.mxu0 0.0
      %696 = vmatprep.subr.mxu0 0.0
      %697 = vmatpush1.msra.mxu0 0.0
      %698 = vmatprep.subr.mxu0 0.0
      %699 = vmatpush1.msra.mxu0 0.0
      %700 = vmatprep.subr.mxu0 0.0
      %701 = vmatpush1.msra.mxu0 0.0
      %702 = vmatprep.subr.mxu0 0.0
      %703 = vmatpush1.msra.mxu0 0.0
      %704 = vmatprep.subr.mxu0 0.0
      %705 = vmatpush1.msra.mxu0 0.0
      %706 = vmatprep.subr.mxu0 0.0
      %707 = vmatpush1.msra.mxu0 0.0
      %708 = vmatprep.subr.mxu0 0.0
      %709 = vmatpush1.msra.mxu0 0.0
      %710 = vmatprep.subr.mxu0 0.0
      %711 = vmatpush1.msra.mxu0 0.0
      %712 = vmatprep.subr.mxu0 0.0
      %713 = vmatpush1.msra.mxu0 0.0
      %714 = vmatprep.mubr.f32.mxu0 0.0
      %v715 = vand.u32 %v233, 4294901760
      %716 = vmatmul.mubr.f32.gmra.mrb[0].mxu0 %v715
      %v717 = vpop.f32.mrb[0].mxu0
      %v718 = vadd.f32 %v640, %v717
      %v719 = vpop.f32.mrb[0].mxu0
      %720 = vmatprep.mubr.f32.mxu0 0.0
      %v721 = vand.u32 %v236, 4294901760
      %722 = vmatmul.mubr.f32.gmra.mrb[0].mxu0 %v721
      %v723 = vpop.f32.mrb[0].mxu0
      %v724 = vadd.f32 %v646, %v723
      %v725 = vpop.f32.mrb[0].mxu0
      %726 = vdwg.mxu0
      %727 = vst.msk [vmem:[%s226] sm:$0xff] %vm231, %v718
      %728 = vst.msk [vmem:[%s226 + $0x8] sm:$0xff] %vm231, %v724
      %s729 = smul.u32 2, %s17
      %p730 = scmp.lt.s32.totalorder %s18, 3
      %s731 = scalar_select %p730, %s18, 3
      %p732 = scmp.lt.s32.totalorder %s729, 7
      %s733 = scalar_select %p732, %s729, 7
      %s734 = smul.addr %s731, 8
      %s735 = sadd.s32 %s733, %s734
      %s736 = smul.addr %s735, 8
      %s737 = scalar_lea.vmem %s2, %s736
      // Predicated region
      $region29: #{spectral_conv2d_forward.2} parent=27 // pred_check
        %p738 = pneg %p105
      $region30: #{spectral_conv2d_forward.2} parent=27 // pred_check_branch
        %740 = sbr.rel (%p738) target = $region32
      $region31: #{spectral_conv2d_forward.2} parent=27 // pred_region
        %s741 = smul.u32 2, %s17
      $region32: #{spectral_conv2d_forward.2} parent=27 // pred_fallthru
        _
    $region28: #{spectral_conv2d_forward.2} parent=5 // pred_fallthru
      _
    %p742 = scmp.le.s32.totalorder 2, %s8
    // Predicated region
    $region33: #{spectral_conv2d_forward.2} parent=5 // pred_check
      %p743 = pneg %p742
    $region34: #{spectral_conv2d_forward.2} parent=5 // pred_check_branch
      %745 = sbr.rel (%p743) target = $region36
    $region35: #{spectral_conv2d_forward.2} parent=5 // pred_region
      %s746 = ssub.s32 %s8, 2
      // Predicated region
      $region37: #{spectral_conv2d_forward.2} parent=35 // pred_check
        %p747 = pneg %p111
      $region38: #{spectral_conv2d_forward.2} parent=35 // pred_check_branch
        %749 = sbr.rel (%p747) target = $region40
      $region39: #{spectral_conv2d_forward.2} parent=35 // pred_region
        %s750 = smul.u32 2, %s19
        %p751 = scmp.lt.s32.totalorder %s20, 3
        %s752 = scalar_select %p751, %s20, 3
        %p753 = scmp.lt.s32.totalorder %s750, 7
        %s754 = scalar_select %p753, %s750, 7
        %s755 = smul.addr %s752, 8
        %s756 = sadd.s32 %s754, %s755
        %s757 = smul.addr %s756, 8
        %s758 = scalar_lea.vmem %s2, %s757
      $region40: #{spectral_conv2d_forward.2} parent=35 // pred_fallthru
        _
    $region36: #{spectral_conv2d_forward.2} parent=5 // pred_fallthru
      _
  $region6: #{spectral_conv2d_forward.2} parent=0 // loop_footer
    %s12 = sadd.s32 1, %s8
  $region7: #{spectral_conv2d_forward.2} parent=0 // loop_footer_branch
    %7 = sbr.rel target = $region3
  $region8: #{spectral_conv2d_forward.2} parent=0 // loop_exit
    _

// kernel: spectral_conv2d_forward.3
$region0: #{spectral_conv2d_forward.3}
  #allocation0 [shape = 'u32[]', space=smem, size = 0x4, offset = 0x4, fixed_abs, tag = 'smem constant byte address 0x4 - core index']
  #allocation1 [shape = 'u32[144,128]{1,0:T(1,128)}', space=vmem, size = 0x12000, scoped, tag = 'internal scratch']
  %s0 = inlined_call_operand.vmem [shape: f32[512,4], index: 0, kind: input, shape index: {}]
  %s1 = inlined_call_operand.vmem [shape: f32[512,4], index: 1, kind: input, shape index: {}]
  %s2 = inlined_call_operand.vmem [shape: f32[4,16], index: 2, kind: input, shape index: {}]
  %s3 = inlined_call_operand.vmem [shape: f32[1,16], index: 3, kind: input, shape index: {}]
  %s4 = inlined_call_operand.vmem [shape: f32[8,4], index: 4, kind: input, shape index: {}]
  %s5 = inlined_call_operand.vmem [shape: f32[1,4], index: 5, kind: input, shape index: {}]
  %s6 = inlined_call_operand.vmem [shape: f32[8,4], index: 6, kind: input, shape index: {}]
  %s7 = inlined_call_operand.vmem [shape: f32[1,4], index: 7, kind: input, shape index: {}]
  %s8 = inlined_call_operand.vmem [shape: f32[512,8], index: 8, kind: output, shape index: {}]
  %s9 = sld [smem:[#allocation0]]
  $region65: #{spectral_conv2d_forward.3} parent=0
    _
  %s11 = ssub.s32 1, %s9
  %s12 = scalar_select 0, %s11, %s9
  loop: start=0, step=1, limit=4
  $region2: #{spectral_conv2d_forward.3} parent=0 // loop_pre_header
    _
  $region3: #{spectral_conv2d_forward.3} parent=0 // loop_header
    %s14 = sphi 0, %s18
    %p15 = scmp.ge.s32.totalorder %s14, 4
    %s24 = sphi 0, %s26
    %s27 = sphi 0, %s24
    %s28 = sphi 0, %s27
    %s44 = sphi 0, %s28
    %s50 = sphi 0, %s52
    %s53 = sphi 0, %s50
    %s54 = sphi 0, %s53
    %s70 = sphi 0, %s54
    %s74 = sphi 0, %s74
    %s76 = sphi 0, %s74
    %s77 = sphi 0, %s76
    %s91 = sphi 0, %s77
    %s95 = sphi 0, %s95
    %s97 = sphi 0, %s95
    %s98 = sphi 0, %s97
    %s112 = sphi 0, %s98
    %s116 = sphi 0, %s116
    %s118 = sphi 0, %s116
    %s119 = sphi 0, %s118
    %s133 = sphi 0, %s119
    %s137 = sphi 0, %s137
    %s139 = sphi 0, %s137
    %s140 = sphi 0, %s139
    %s154 = sphi 0, %s140
    %s158 = sphi 0, %s158
    %s160 = sphi 0, %s158
    %s161 = sphi 0, %s160
    %s175 = sphi 0, %s161
    %s179 = sphi 0, %s179
    %s181 = sphi 0, %s179
    %s182 = sphi 0, %s181
    %s196 = sphi 0, %s182
    %s202 = sphi 0, %s204
    %s205 = sphi 0, %s202
    %s206 = sphi 0, %s205
    %s222 = sphi 0, %s206
  $region4: #{spectral_conv2d_forward.3} parent=0 // loop_header_branch
    %17 = sbr.rel (%p15) target = $region8
  $region5: #{spectral_conv2d_forward.3} parent=0 // loop_body
    %s19 = ssub.s32 %s14, 1
    %s20 = ssub.s32 %s14, 2
    %s21 = sadd.s32 %s14, 1
    %s22 = ssub.s32 %s14, %s21
    %p23 = scmp.eq.s32.totalorder %s22, 0
    %s25 = sadd.s32 %s24, 1
    %s26 = scalar_select %p23, %s24, %s25
    %p29 = pneg %p23
    %p30 = scmp.eq.s32.totalorder %s14, 1
    %p31 = por %p29, %p30
    %p32 = scmp.ne.s32.totalorder %s24, %s27
    %p33 = scmp.eq.s32.totalorder %s14, 0
    %p34 = por %p32, %p33
    %p35 = scmp.ne.s32.totalorder %s24, %s27
    %p36 = scmp.eq.s32.totalorder %s19, 1
    %p37 = por %p35, %p36
    %p38 = scmp.ne.s32.totalorder %s27, %s28
    %p39 = scmp.eq.s32.totalorder %s19, 0
    %p40 = por %p38, %p39
    %p41 = scmp.ne.s32.totalorder %s27, %s28
    %p42 = scmp.eq.s32.totalorder %s20, 1
    %p43 = por %p41, %p42
    %p45 = scmp.ne.s32.totalorder %s28, %s44
    %p46 = scmp.eq.s32.totalorder %s20, 0
    %p47 = por %p45, %p46
    %s48 = ssub.s32 %s14, %s21
    %p49 = scmp.eq.s32.totalorder %s48, 0
    %s51 = sadd.s32 %s50, 1
    %s52 = scalar_select %p49, %s50, %s51
    %p55 = pneg %p49
    %p56 = scmp.eq.s32.totalorder %s14, 1
    %p57 = por %p55, %p56
    %p58 = scmp.ne.s32.totalorder %s50, %s53
    %p59 = scmp.eq.s32.totalorder %s14, 0
    %p60 = por %p58, %p59
    %p61 = scmp.ne.s32.totalorder %s50, %s53
    %p62 = scmp.eq.s32.totalorder %s19, 1
    %p63 = por %p61, %p62
    %p64 = scmp.ne.s32.totalorder %s53, %s54
    %p65 = scmp.eq.s32.totalorder %s19, 0
    %p66 = por %p64, %p65
    %p67 = scmp.ne.s32.totalorder %s53, %s54
    %p68 = scmp.eq.s32.totalorder %s20, 1
    %p69 = por %p67, %p68
    %p71 = scmp.ne.s32.totalorder %s54, %s70
    %p72 = scmp.eq.s32.totalorder %s20, 0
    %p73 = por %p71, %p72
    %s75 = sadd.s32 %s74, 1
    %p78 = scmp.eq.s32.totalorder %s14, 1
    %p79 = scmp.ne.s32.totalorder %s74, %s76
    %p80 = scmp.eq.s32.totalorder %s14, 0
    %p81 = por %p79, %p80
    %p82 = scmp.ne.s32.totalorder %s74, %s76
    %p83 = scmp.eq.s32.totalorder %s19, 1
    %p84 = por %p82, %p83
    %p85 = scmp.ne.s32.totalorder %s76, %s77
    %p86 = scmp.eq.s32.totalorder %s19, 0
    %p87 = por %p85, %p86
    %p88 = scmp.ne.s32.totalorder %s76, %s77
    %p89 = scmp.eq.s32.totalorder %s20, 1
    %p90 = por %p88, %p89
    %p92 = scmp.ne.s32.totalorder %s77, %s91
    %p93 = scmp.eq.s32.totalorder %s20, 0
    %p94 = por %p92, %p93
    %s96 = sadd.s32 %s95, 1
    %p99 = scmp.eq.s32.totalorder %s14, 1
    %p100 = scmp.ne.s32.totalorder %s95, %s97
    %p101 = scmp.eq.s32.totalorder %s14, 0
    %p102 = por %p100, %p101
    %p103 = scmp.ne.s32.totalorder %s95, %s97
    %p104 = scmp.eq.s32.totalorder %s19, 1
    %p105 = por %p103, %p104
    %p106 = scmp.ne.s32.totalorder %s97, %s98
    %p107 = scmp.eq.s32.totalorder %s19, 0
    %p108 = por %p106, %p107
    %p109 = scmp.ne.s32.totalorder %s97, %s98
    %p110 = scmp.eq.s32.totalorder %s20, 1
    %p111 = por %p109, %p110
    %p113 = scmp.ne.s32.totalorder %s98, %s112
    %p114 = scmp.eq.s32.totalorder %s20, 0
    %p115 = por %p113, %p114
    %s117 = sadd.s32 %s116, 1
    %p120 = scmp.eq.s32.totalorder %s14, 1
    %p121 = scmp.ne.s32.totalorder %s116, %s118
    %p122 = scmp.eq.s32.totalorder %s14, 0
    %p123 = por %p121, %p122
    %p124 = scmp.ne.s32.totalorder %s116, %s118
    %p125 = scmp.eq.s32.totalorder %s19, 1
    %p126 = por %p124, %p125
    %p127 = scmp.ne.s32.totalorder %s118, %s119
    %p128 = scmp.eq.s32.totalorder %s19, 0
    %p129 = por %p127, %p128
    %p130 = scmp.ne.s32.totalorder %s118, %s119
    %p131 = scmp.eq.s32.totalorder %s20, 1
    %p132 = por %p130, %p131
    %p134 = scmp.ne.s32.totalorder %s119, %s133
    %p135 = scmp.eq.s32.totalorder %s20, 0
    %p136 = por %p134, %p135
    %s138 = sadd.s32 %s137, 1
    %p141 = scmp.eq.s32.totalorder %s14, 1
    %p142 = scmp.ne.s32.totalorder %s137, %s139
    %p143 = scmp.eq.s32.totalorder %s14, 0
    %p144 = por %p142, %p143
    %p145 = scmp.ne.s32.totalorder %s137, %s139
    %p146 = scmp.eq.s32.totalorder %s19, 1
    %p147 = por %p145, %p146
    %p148 = scmp.ne.s32.totalorder %s139, %s140
    %p149 = scmp.eq.s32.totalorder %s19, 0
    %p150 = por %p148, %p149
    %p151 = scmp.ne.s32.totalorder %s139, %s140
    %p152 = scmp.eq.s32.totalorder %s20, 1
    %p153 = por %p151, %p152
    %p155 = scmp.ne.s32.totalorder %s140, %s154
    %p156 = scmp.eq.s32.totalorder %s20, 0
    %p157 = por %p155, %p156
    %s159 = sadd.s32 %s158, 1
    %p162 = scmp.eq.s32.totalorder %s14, 1
    %p163 = scmp.ne.s32.totalorder %s158, %s160
    %p164 = scmp.eq.s32.totalorder %s14, 0
    %p165 = por %p163, %p164
    %p166 = scmp.ne.s32.totalorder %s158, %s160
    %p167 = scmp.eq.s32.totalorder %s19, 1
    %p168 = por %p166, %p167
    %p169 = scmp.ne.s32.totalorder %s160, %s161
    %p170 = scmp.eq.s32.totalorder %s19, 0
    %p171 = por %p169, %p170
    %p172 = scmp.ne.s32.totalorder %s160, %s161
    %p173 = scmp.eq.s32.totalorder %s20, 1
    %p174 = por %p172, %p173
    %p176 = scmp.ne.s32.totalorder %s161, %s175
    %p177 = scmp.eq.s32.totalorder %s20, 0
    %p178 = por %p176, %p177
    %s180 = sadd.s32 %s179, 1
    %p183 = scmp.eq.s32.totalorder %s14, 1
    %p184 = scmp.ne.s32.totalorder %s179, %s181
    %p185 = scmp.eq.s32.totalorder %s14, 0
    %p186 = por %p184, %p185
    %p187 = scmp.ne.s32.totalorder %s179, %s181
    %p188 = scmp.eq.s32.totalorder %s19, 1
    %p189 = por %p187, %p188
    %p190 = scmp.ne.s32.totalorder %s181, %s182
    %p191 = scmp.eq.s32.totalorder %s19, 0
    %p192 = por %p190, %p191
    %p193 = scmp.ne.s32.totalorder %s181, %s182
    %p194 = scmp.eq.s32.totalorder %s20, 1
    %p195 = por %p193, %p194
    %p197 = scmp.ne.s32.totalorder %s182, %s196
    %p198 = scmp.eq.s32.totalorder %s20, 0
    %p199 = por %p197, %p198
    %s200 = ssub.s32 %s14, %s21
    %p201 = scmp.eq.s32.totalorder %s200, 0
    %s203 = sadd.s32 %s202, 1
    %s204 = scalar_select %p201, %s202, %s203
    %p207 = pneg %p201
    %p208 = scmp.eq.s32.totalorder %s14, 1
    %p209 = por %p207, %p208
    %p210 = scmp.ne.s32.totalorder %s202, %s205
    %p211 = scmp.eq.s32.totalorder %s14, 0
    %p212 = por %p210, %p211
    %p213 = scmp.ne.s32.totalorder %s202, %s205
    %p214 = scmp.eq.s32.totalorder %s19, 1
    %p215 = por %p213, %p214
    %p216 = scmp.ne.s32.totalorder %s205, %s206
    %p217 = scmp.eq.s32.totalorder %s19, 0
    %p218 = por %p216, %p217
    %p219 = scmp.ne.s32.totalorder %s205, %s206
    %p220 = scmp.eq.s32.totalorder %s20, 1
    %p221 = por %p219, %p220
    %p223 = scmp.ne.s32.totalorder %s206, %s222
    %p224 = scmp.eq.s32.totalorder %s20, 0
    %p225 = por %p223, %p224
    %p226 = scmp.le.s32.totalorder 1, %s14
    %p227 = scmp.lt.s32.totalorder %s14, 3
    %p228 = pnand %p226, %p227
    %p229 = pneg %p228
    // Predicated region
    $region9: #{spectral_conv2d_forward.3} parent=5 // pred_check
      _
    $region10: #{spectral_conv2d_forward.3} parent=5 // pred_check_branch
      %231 = sbr.rel (%p228) target = $region12
    $region11: #{spectral_conv2d_forward.3} parent=5 // pred_region
      %s232 = ssub.s32 %s14, 1
      // Predicated region
      $region13: #{spectral_conv2d_forward.3} parent=11 // pred_check
        %p233 = pneg %p87
      $region14: #{spectral_conv2d_forward.3} parent=11 // pred_check_branch
        %235 = sbr.rel (%p233) target = $region16
      $region15: #{spectral_conv2d_forward.3} parent=11 // pred_region
        _
      $region16: #{spectral_conv2d_forward.3} parent=11 // pred_fallthru
        _
      // Predicated region
      $region17: #{spectral_conv2d_forward.3} parent=11 // pred_check
        %p236 = pneg %p108
      $region18: #{spectral_conv2d_forward.3} parent=11 // pred_check_branch
        %238 = sbr.rel (%p236) target = $region20
      $region19: #{spectral_conv2d_forward.3} parent=11 // pred_region
        _
      $region20: #{spectral_conv2d_forward.3} parent=11 // pred_fallthru
        _
      // Predicated region
      $region21: #{spectral_conv2d_forward.3} parent=11 // pred_check
        %p239 = pneg %p129
      $region22: #{spectral_conv2d_forward.3} parent=11 // pred_check_branch
        %241 = sbr.rel (%p239) target = $region24
      $region23: #{spectral_conv2d_forward.3} parent=11 // pred_region
        _
      $region24: #{spectral_conv2d_forward.3} parent=11 // pred_fallthru
        _
      // Predicated region
      $region25: #{spectral_conv2d_forward.3} parent=11 // pred_check
        %p242 = pneg %p150
      $region26: #{spectral_conv2d_forward.3} parent=11 // pred_check_branch
        %244 = sbr.rel (%p242) target = $region28
      $region27: #{spectral_conv2d_forward.3} parent=11 // pred_region
        _
      $region28: #{spectral_conv2d_forward.3} parent=11 // pred_fallthru
        _
      // Predicated region
      $region29: #{spectral_conv2d_forward.3} parent=11 // pred_check
        %p245 = pneg %p171
      $region30: #{spectral_conv2d_forward.3} parent=11 // pred_check_branch
        %247 = sbr.rel (%p245) target = $region32
      $region31: #{spectral_conv2d_forward.3} parent=11 // pred_region
        _
      $region32: #{spectral_conv2d_forward.3} parent=11 // pred_fallthru
        _
      // Predicated region
      $region33: #{spectral_conv2d_forward.3} parent=11 // pred_check
        %p248 = pneg %p192
      $region34: #{spectral_conv2d_forward.3} parent=11 // pred_check_branch
        %250 = sbr.rel (%p248) target = $region36
      $region35: #{spectral_conv2d_forward.3} parent=11 // pred_region
        _
      $region36: #{spectral_conv2d_forward.3} parent=11 // pred_fallthru
        _
    $region12: #{spectral_conv2d_forward.3} parent=5 // pred_fallthru
      _
    %p251 = scmp.lt.s32.totalorder %s14, 2
    // Predicated region
    $region37: #{spectral_conv2d_forward.3} parent=5 // pred_check
      %p252 = pneg %p251
    $region38: #{spectral_conv2d_forward.3} parent=5 // pred_check_branch
      %254 = sbr.rel (%p252) target = $region40
    $region39: #{spectral_conv2d_forward.3} parent=5 // pred_region
      // Predicated region
      $region41: #{spectral_conv2d_forward.3} parent=39 // pred_check
        %p255 = pneg %p34
      $region42: #{spectral_conv2d_forward.3} parent=39 // pred_check_branch
        %257 = sbr.rel (%p255) target = $region44
      $region43: #{spectral_conv2d_forward.3} parent=39 // pred_region
        %s258 = smul.u32 32, %s14
        %p259 = scmp.lt.s32.totalorder %s258, 63
        %s260 = scalar_select %p259, %s258, 63
        %s261 = smul.addr %s260, 8
        %s262 = scalar_lea.vmem %s0, %s261
        %s263 = smul.u32 32, %s14
      $region44: #{spectral_conv2d_forward.3} parent=39 // pred_fallthru
        _
      // Predicated region
      $region45: #{spectral_conv2d_forward.3} parent=39 // pred_check
        %p264 = pneg %p60
      $region46: #{spectral_conv2d_forward.3} parent=39 // pred_check_branch
        %266 = sbr.rel (%p264) target = $region48
      $region47: #{spectral_conv2d_forward.3} parent=39 // pred_region
        %s267 = smul.u32 32, %s14
        %p268 = scmp.lt.s32.totalorder %s267, 63
        %s269 = scalar_select %p268, %s267, 63
        %s270 = smul.addr %s269, 8
        %s271 = scalar_lea.vmem %s1, %s270
        %s272 = smul.u32 32, %s14
      $region48: #{spectral_conv2d_forward.3} parent=39 // pred_fallthru
        _
    $region40: #{spectral_conv2d_forward.3} parent=5 // pred_fallthru
      _
    %p273 = scmp.le.s32.totalorder 1, %s14
    %p274 = scmp.lt.s32.totalorder %s14, 3
    %p275 = pnand %p273, %p274
    %p276 = pneg %p275
    // Predicated region
    $region49: #{spectral_conv2d_forward.3} parent=5 // pred_check
      _
    $region50: #{spectral_conv2d_forward.3} parent=5 // pred_check_branch
      %278 = sbr.rel (%p275) target = $region52
    $region51: #{spectral_conv2d_forward.3} parent=5 // pred_region
      %s279 = ssub.s32 %s14, 1
      %s280 = smul.u32 32, %s19
      %p281 = scmp.lt.s32.totalorder %s280, 63
      %s282 = scalar_select %p281, %s280, 63
      %s283 = smul.addr %s282, 8
      %s284 = scalar_lea.vmem %s0, %s283
      %p285 = pneg %p40
      %p286 = pneg %p37
      %s287 = smul.u32 32, %s19
      %p288 = scmp.lt.s32.totalorder %s287, 63
      %s289 = scalar_select %p288, %s287, 63
      %s290 = smul.addr %s289, 8
      %s291 = scalar_lea.vmem %s1, %s290
      %p292 = pneg %p66
      %p293 = pneg %p63
      %p294 = pneg %p87
      %p295 = pneg %p84
      %p296 = pneg %p108
      %p297 = pneg %p105
      %p298 = pneg %p129
      %p299 = pneg %p126
      %p300 = pneg %p150
      %p301 = pneg %p147
      %p302 = pneg %p171
      %p303 = pneg %p168
      %p304 = pneg %p192
      %p305 = pneg %p189
      %p306 = pneg %p218
      %p307 = pneg %p215
      %s308 = smul.u32 32, %s19
      %p309 = scmp.lt.s32.totalorder %s308, 63
      %s310 = scalar_select %p309, %s308, 63
      %s311 = smul.addr %s310, 8
      %s312 = scalar_lea.vmem %s8, %s311
      %s313 = smul.u32 32, %s19
      %p314 = scmp.lt.s32.totalorder %s313, 63
      %s315 = scalar_select %p314, %s313, 63
      %s316 = smul.addr %s315, 8
      %s317 = scalar_lea.vmem %s0, %s316
      %s318 = smul.u32 32, %s19
      %s319 = smul.u32 32, %s19
      %p320 = scmp.lt.s32.totalorder %s319, 63
      %s321 = scalar_select %p320, %s319, 63
      %s322 = smul.addr %s321, 8
      %s323 = scalar_lea.vmem %s1, %s322
      %s324 = smul.u32 32, %s19
      %s325 = smul.u32 32, %s19
      %p326 = scmp.lt.s32.totalorder %s325, 63
      %s327 = scalar_select %p326, %s325, 63
      %s328 = smul.addr %s327, 8
      %s329 = scalar_lea.vmem %s8, %s328
      %s330 = smul.u32 32, %s19
      %v331 = vld [vmem:[%s317] sm:$0xff]
      %v332 = vld [vmem:[%s317 + $0x8] sm:$0xff]
      %v333 = vld [vmem:[%s317 + $0x10] sm:$0xff]
      %v334 = vld [vmem:[%s317 + $0x18] sm:$0xff]
      %v335 = vld [vmem:[%s317 + $0x20] sm:$0xff]
      %v336 = vld [vmem:[%s317 + $0x28] sm:$0xff]
      %v337 = vld [vmem:[%s317 + $0x30] sm:$0xff]
      %v338 = vld [vmem:[%s317 + $0x38] sm:$0xff]
      %v339 = vld [vmem:[%s317 + $0x40] sm:$0xff]
      %v340 = vld [vmem:[%s317 + $0x48] sm:$0xff]
      %v341 = vld [vmem:[%s317 + $0x50] sm:$0xff]
      %v342 = vld [vmem:[%s317 + $0x58] sm:$0xff]
      %v343 = vld [vmem:[%s317 + $0x60] sm:$0xff]
      %v344 = vld [vmem:[%s317 + $0x68] sm:$0xff]
      %v345 = vld [vmem:[%s317 + $0x70] sm:$0xff]
      %v346 = vld [vmem:[%s317 + $0x78] sm:$0xff]
      %v347 = vld [vmem:[%s317 + $0x80] sm:$0xff]
      %v348 = vld [vmem:[%s317 + $0x88] sm:$0xff]
      %v349 = vld [vmem:[%s317 + $0x90] sm:$0xff]
      %v350 = vld [vmem:[%s317 + $0x98] sm:$0xff]
      %v351 = vld [vmem:[%s317 + $0xa0] sm:$0xff]
      %v352 = vld [vmem:[%s317 + $0xa8] sm:$0xff]
      %v353 = vld [vmem:[%s317 + $0xb0] sm:$0xff]
      %v354 = vld [vmem:[%s317 + $0xb8] sm:$0xff]
      %v355 = vld [vmem:[%s317 + $0xc0] sm:$0xff]
      %v356 = vld [vmem:[%s317 + $0xc8] sm:$0xff]
      %v357 = vld [vmem:[%s317 + $0xd0] sm:$0xff]
      %v358 = vld [vmem:[%s317 + $0xd8] sm:$0xff]
      %v359 = vld [vmem:[%s317 + $0xe0] sm:$0xff]
      %v360 = vld [vmem:[%s317 + $0xe8] sm:$0xff]
      %v361 = vld [vmem:[%s317 + $0xf0] sm:$0xff]
      %v362 = vld [vmem:[%s317 + $0xf8] sm:$0xff]
      %v363 = vld [vmem:[%s323] sm:$0xff]
      %v364 = vld [vmem:[%s323 + $0x8] sm:$0xff]
      %v365 = vld [vmem:[%s323 + $0x10] sm:$0xff]
      %v366 = vld [vmem:[%s323 + $0x18] sm:$0xff]
      %v367 = vld [vmem:[%s323 + $0x20] sm:$0xff]
      %v368 = vld [vmem:[%s323 + $0x28] sm:$0xff]
      %v369 = vld [vmem:[%s323 + $0x30] sm:$0xff]
      %v370 = vld [vmem:[%s323 + $0x38] sm:$0xff]
      %v371 = vld [vmem:[%s323 + $0x40] sm:$0xff]
      %v372 = vld [vmem:[%s323 + $0x48] sm:$0xff]
      %v373 = vld [vmem:[%s323 + $0x50] sm:$0xff]
      %v374 = vld [vmem:[%s323 + $0x58] sm:$0xff]
      %v375 = vld [vmem:[%s323 + $0x60] sm:$0xff]
      %v376 = vld [vmem:[%s323 + $0x68] sm:$0xff]
      %v377 = vld [vmem:[%s323 + $0x70] sm:$0xff]
      %v378 = vld [vmem:[%s323 + $0x78] sm:$0xff]
      %v379 = vld [vmem:[%s323 + $0x80] sm:$0xff]
      %v380 = vld [vmem:[%s323 + $0x88] sm:$0xff]
      %v381 = vld [vmem:[%s323 + $0x90] sm:$0xff]
      %v382 = vld [vmem:[%s323 + $0x98] sm:$0xff]
      %v383 = vld [vmem:[%s323 + $0xa0] sm:$0xff]
      %v384 = vld [vmem:[%s323 + $0xa8] sm:$0xff]
      %v385 = vld [vmem:[%s323 + $0xb0] sm:$0xff]
      %v386 = vld [vmem:[%s323 + $0xb8] sm:$0xff]
      %v387 = vld [vmem:[%s323 + $0xc0] sm:$0xff]
      %v388 = vld [vmem:[%s323 + $0xc8] sm:$0xff]
      %v389 = vld [vmem:[%s323 + $0xd0] sm:$0xff]
      %v390 = vld [vmem:[%s323 + $0xd8] sm:$0xff]
      %v391 = vld [vmem:[%s323 + $0xe0] sm:$0xff]
      %v392 = vld [vmem:[%s323 + $0xe8] sm:$0xff]
      %v393 = vld [vmem:[%s323 + $0xf0] sm:$0xff]
      %v394 = vld [vmem:[%s323 + $0xf8] sm:$0xff]
      %v395 = vadd.f32 %v331, %v363
      %v396 = vadd.f32 %v332, %v364
      %v397 = vadd.f32 %v333, %v365
      %v398 = vadd.f32 %v334, %v366
      %v399 = vadd.f32 %v335, %v367
      %v400 = vadd.f32 %v336, %v368
      %v401 = vadd.f32 %v337, %v369
      %v402 = vadd.f32 %v338, %v370
      %v403 = vadd.f32 %v339, %v371
      %v404 = vadd.f32 %v340, %v372
      %v405 = vadd.f32 %v341, %v373
      %v406 = vadd.f32 %v342, %v374
      %v407 = vadd.f32 %v343, %v375
      %v408 = vadd.f32 %v344, %v376
      %v409 = vadd.f32 %v345, %v377
      %v410 = vadd.f32 %v346, %v378
      %v411 = vadd.f32 %v347, %v379
      %v412 = vadd.f32 %v348, %v380
      %v413 = vadd.f32 %v349, %v381
      %v414 = vadd.f32 %v350, %v382
      %v415 = vadd.f32 %v351, %v383
      %v416 = vadd.f32 %v352, %v384
      %v417 = vadd.f32 %v353, %v385
      %v418 = vadd.f32 %v354, %v386
      %v419 = vadd.f32 %v355, %v387
      %v420 = vadd.f32 %v356, %v388
      %v421 = vadd.f32 %v357, %v389
      %v422 = vadd.f32 %v358, %v390
      %v423 = vadd.f32 %v359, %v391
      %v424 = vadd.f32 %v360, %v392
      %v425 = vadd.f32 %v361, %v393
      %v426 = vadd.f32 %v362, %v394
      %v427 = vld [vmem:[%s2] sm:$0xf]
      %v428 = vld [vmem:[%s3] sm:$0x1]
      %v430 = vlaneseq
      %v431 = vshrl.u32 %v430, 7
      %v432 = vsub.s32 0, %v431
      %v433 = vrot.slane %v428, %v432
      %vm435 = vcmask 31744
      %v437 = vsel %vm435, %v395, 0
      %v440 = vsel %vm435, %v396, 0
      %v443 = vsel %vm435, %v397, 0
      %v446 = vsel %vm435, %v398, 0
      %v449 = vsel %vm435, %v399, 0
      %v452 = vsel %vm435, %v400, 0
      %v455 = vsel %vm435, %v401, 0
      %v458 = vsel %vm435, %v402, 0
      %v461 = vsel %vm435, %v403, 0
      %v464 = vsel %vm435, %v404, 0
      %v467 = vsel %vm435, %v405, 0
      %v470 = vsel %vm435, %v406, 0
      %v473 = vsel %vm435, %v407, 0
      %v476 = vsel %vm435, %v408, 0
      %v479 = vsel %vm435, %v409, 0
      %v482 = vsel %vm435, %v410, 0
      %v485 = vsel %vm435, %v411, 0
      %v488 = vsel %vm435, %v412, 0
      %v491 = vsel %vm435, %v413, 0
      %v494 = vsel %vm435, %v414, 0
      %v497 = vsel %vm435, %v415, 0
      %v500 = vsel %vm435, %v416, 0
      %v503 = vsel %vm435, %v417, 0
      %v506 = vsel %vm435, %v418, 0
      %v509 = vsel %vm435, %v419, 0
      %v512 = vsel %vm435, %v420, 0
      %v515 = vsel %vm435, %v421, 0
      %v518 = vsel %vm435, %v422, 0
      %v521 = vsel %vm435, %v423, 0
      %v524 = vsel %vm435, %v424, 0
      %v527 = vsel %vm435, %v425, 0
      %v530 = vsel %vm435, %v426, 0
      %vm532 = vcmask 1043456
      %v534 = vsel %vm532, %v427, 0
      %536 = vmatprep.subr.mxu0 0.0
      %v537 = vand.u32 %v534, 4294901760
      %538 = vmatpush1.msra.mxu0 %v537
      %539 = vmatprep.subr.mxu0 0.0
      %540 = vmatpush1.msra.mxu0 0.0
      %541 = vmatprep.subr.mxu0 0.0
      %542 = vmatpush1.msra.mxu0 0.0
      %543 = vmatprep.subr.mxu0 0.0
      %544 = vmatpush1.msra.mxu0 0.0
      %545 = vmatprep.subr.mxu0 0.0
      %546 = vmatpush1.msra.mxu0 0.0
      %547 = vmatprep.subr.mxu0 0.0
      %548 = vmatpush1.msra.mxu0 0.0
      %549 = vmatprep.subr.mxu0 0.0
      %550 = vmatpush1.msra.mxu0 0.0
      %551 = vmatprep.subr.mxu0 0.0
      %552 = vmatpush1.msra.mxu0 0.0
      %553 = vmatprep.subr.mxu0 0.0
      %554 = vmatpush1.msra.mxu0 0.0
      %555 = vmatprep.subr.mxu0 0.0
      %556 = vmatpush1.msra.mxu0 0.0
      %557 = vmatprep.subr.mxu0 0.0
      %558 = vmatpush1.msra.mxu0 0.0
      %559 = vmatprep.subr.mxu0 0.0
      %560 = vmatpush1.msra.mxu0 0.0
      %561 = vmatprep.subr.mxu0 0.0
      %562 = vmatpush1.msra.mxu0 0.0
      %563 = vmatprep.subr.mxu0 0.0
      %564 = vmatpush1.msra.mxu0 0.0
      %565 = vmatprep.subr.mxu0 0.0
      %566 = vmatpush1.msra.mxu0 0.0
      %567 = vmatprep.subr.mxu0 0.0
      %568 = vmatpush1.msra.mxu0 0.0
      %569 = vmatprep.subr.mxu0 0.0
      %570 = vmatpush1.msra.mxu0 0.0
      %571 = vmatprep.subr.mxu0 0.0
      %572 = vmatpush1.msra.mxu0 0.0
      %573 = vmatprep.subr.mxu0 0.0
      %574 = vmatpush1.msra.mxu0 0.0
      %575 = vmatprep.subr.mxu0 0.0
      %576 = vmatpush1.msra.mxu0 0.0
      %577 = vmatprep.subr.mxu0 0.0
      %578 = vmatpush1.msra.mxu0 0.0
      %579 = vmatprep.subr.mxu0 0.0
      %580 = vmatpush1.msra.mxu0 0.0
      %581 = vmatprep.subr.mxu0 0.0
      %582 = vmatpush1.msra.mxu0 0.0
      %583 = vmatprep.subr.mxu0 0.0
      %584 = vmatpush1.msra.mxu0 0.0
      %585 = vmatprep.subr.mxu0 0.0
      %586 = vmatpush1.msra.mxu0 0.0
      %587 = vmatprep.subr.mxu0 0.0
      %588 = vmatpush1.msra.mxu0 0.0
      %589 = vmatprep.subr.mxu0 0.0
      %590 = vmatpush1.msra.mxu0 0.0
      %591 = vmatprep.subr.mxu0 0.0
      %592 = vmatpush1.msra.mxu0 0.0
      %593 = vmatprep.subr.mxu0 0.0
      %594 = vmatpush1.msra.mxu0 0.0
      %595 = vmatprep.subr.mxu0 0.0
      %596 = vmatpush1.msra.mxu0 0.0
      %597 = vmatprep.subr.mxu0 0.0
      %598 = vmatpush1.msra.mxu0 0.0
      %599 = vmatprep.subr.mxu0 0.0
      %600 = vmatpush1.msra.mxu0 0.0
      %601 = vmatprep.mubr.f32.mxu0 0.0
      %v602 = vand.u32 %v437, 4294901760
      %v603 = vsub.f32 %v437, %v602
      %v604 = vand.u32 %v603, 4294901760
      %v605 = vsub.f32 %v603, %v604
      %v606 = vand.u32 %v605, 4294901760
      %607 = vmatmul.mubr.f32.gmra.mrb[0].mxu0 %v606
      %v608 = vpop.f32.mrb[0].mxu0
      %v609 = vadd.f32 %v433, %v608
      %v610 = vpop.f32.mrb[0].mxu0
      %611 = vmatprep.mubr.f32.mxu0 0.0
      %v612 = vand.u32 %v440, 4294901760
      %v613 = vsub.f32 %v440, %v612
      %v614 = vand.u32 %v613, 4294901760
      %v615 = vsub.f32 %v613, %v614
      %v616 = vand.u32 %v615, 4294901760
      %617 = vmatmul.mubr.f32.gmra.mrb[0].mxu0 %v616
      %v618 = vpop.f32.mrb[0].mxu0
      %v619 = vadd.f32 %v433, %v618
      %v620 = vpop.f32.mrb[0].mxu0
      %621 = vmatprep.mubr.f32.mxu0 0.0
      %v622 = vand.u32 %v443, 4294901760
      %v623 = vsub.f32 %v443, %v622
      %v624 = vand.u32 %v623, 4294901760
      %v625 = vsub.f32 %v623, %v624
      %v626 = vand.u32 %v625, 4294901760
      %627 = vmatmul.mubr.f32.gmra.mrb[0].mxu0 %v626
      %v628 = vpop.f32.mrb[0].mxu0
      %v629 = vadd.f32 %v433, %v628
      %v630 = vpop.f32.mrb[0].mxu0
      %631 = vmatprep.mubr.f32.mxu0 0.0
      %v632 = vand.u32 %v446, 4294901760
      %v633 = vsub.f32 %v446, %v632
      %v634 = vand.u32 %v633, 4294901760
      %v635 = vsub.f32 %v633, %v634
      %v636 = vand.u32 %v635, 4294901760
      %637 = vmatmul.mubr.f32.gmra.mrb[0].mxu0 %v636
      %v638 = vpop.f32.mrb[0].mxu0
      %v639 = vadd.f32 %v433, %v638
      %v640 = vpop.f32.mrb[0].mxu0
      %641 = vmatprep.mubr.f32.mxu0 0.0
      %v642 = vand.u32 %v449, 4294901760
      %v643 = vsub.f32 %v449, %v642
      %v644 = vand.u32 %v643, 4294901760
      %v645 = vsub.f32 %v643, %v644
      %v646 = vand.u32 %v645, 4294901760
      %647 = vmatmul.mubr.f32.gmra.mrb[0].mxu0 %v646
      %v648 = vpop.f32.mrb[0].mxu0
      %v649 = vadd.f32 %v433, %v648
      %v650 = vpop.f32.mrb[0].mxu0
      %651 = vmatprep.mubr.f32.mxu0 0.0
      %v652 = vand.u32 %v452, 4294901760
      %v653 = vsub.f32 %v452, %v652
      %v654 = vand.u32 %v653, 4294901760
      %v655 = vsub.f32 %v653, %v654
      %v656 = vand.u32 %v655, 4294901760
      %657 = vmatmul.mubr.f32.gmra.mrb[0].mxu0 %v656
      %v658 = vpop.f32.mrb[0].mxu0
      %v659 = vadd.f32 %v433, %v658
      %v660 = vpop.f32.mrb[0].mxu0
      %661 = vmatprep.mubr.f32.mxu0 0.0
      %v662 = vand.u32 %v455, 4294901760
      %v663 = vsub.f32 %v455, %v662
      %v664 = vand.u32 %v663, 4294901760
      %v665 = vsub.f32 %v663, %v664
      %v666 = vand.u32 %v665, 4294901760
      %667 = vmatmul.mubr.f32.gmra.mrb[0].mxu0 %v666
      %v668 = vpop.f32.mrb[0].mxu0
      %v669 = vadd.f32 %v433, %v668
      %v670 = vpop.f32.mrb[0].mxu0
      %671 = vmatprep.mubr.f32.mxu0 0.0
      %v672 = vand.u32 %v458, 4294901760
      %v673 = vsub.f32 %v458, %v672
      %v674 = vand.u32 %v673, 4294901760
      %v675 = vsub.f32 %v673, %v674
      %v676 = vand.u32 %v675, 4294901760
      %677 = vmatmul.mubr.f32.gmra.mrb[0].mxu0 %v676
      %v678 = vpop.f32.mrb[0].mxu0
      %v679 = vadd.f32 %v433, %v678
      %v680 = vpop.f32.mrb[0].mxu0
      %681 = vmatprep.mubr.f32.mxu0 0.0
      %v682 = vand.u32 %v461, 4294901760
      %v683 = vsub.f32 %v461, %v682
      %v684 = vand.u32 %v683, 4294901760
      %v685 = vsub.f32 %v683, %v684
      %v686 = vand.u32 %v685, 4294901760
      %687 = vmatmul.mubr.f32.gmra.mrb[0].mxu0 %v686
      %v688 = vpop.f32.mrb[0].mxu0
      %v689 = vadd.f32 %v433, %v688
      %v690 = vpop.f32.mrb[0].mxu0
      %691 = vmatprep.mubr.f32.mxu0 0.0
      %v692 = vand.u32 %v464, 4294901760
      %v693 = vsub.f32 %v464, %v692
      %v694 = vand.u32 %v693, 4294901760
      %v695 = vsub.f32 %v693, %v694
      %v696 = vand.u32 %v695, 4294901760
      %697 = vmatmul.mubr.f32.gmra.mrb[0].mxu0 %v696
      %v698 = vpop.f32.mrb[0].mxu0
      %v699 = vadd.f32 %v433, %v698
      %v700 = vpop.f32.mrb[0].mxu0
      %701 = vmatprep.mubr.f32.mxu0 0.0
      %v702 = vand.u32 %v467, 4294901760
      %v703 = vsub.f32 %v467, %v702
      %v704 = vand.u32 %v703, 4294901760
      %v705 = vsub.f32 %v703, %v704
      %v706 = vand.u32 %v705, 4294901760
      %707 = vmatmul.mubr.f32.gmra.mrb[0].mxu0 %v706
      %v708 = vpop.f32.mrb[0].mxu0
      %v709 = vadd.f32 %v433, %v708
      %v710 = vpop.f32.mrb[0].mxu0
      %711 = vmatprep.mubr.f32.mxu0 0.0
      %v712 = vand.u32 %v470, 4294901760
      %v713 = vsub.f32 %v470, %v712
      %v714 = vand.u32 %v713, 4294901760
      %v715 = vsub.f32 %v713, %v714
      %v716 = vand.u32 %v715, 4294901760
      %717 = vmatmul.mubr.f32.gmra.mrb[0].mxu0 %v716
      %v718 = vpop.f32.mrb[0].mxu0
      %v719 = vadd.f32 %v433, %v718
      %v720 = vpop.f32.mrb[0].mxu0
      %721 = vmatprep.mubr.f32.mxu0 0.0
      %v722 = vand.u32 %v473, 4294901760
      %v723 = vsub.f32 %v473, %v722
      %v724 = vand.u32 %v723, 4294901760
      %v725 = vsub.f32 %v723, %v724
      %v726 = vand.u32 %v725, 4294901760
      %727 = vmatmul.mubr.f32.gmra.mrb[0].mxu0 %v726
      %v728 = vpop.f32.mrb[0].mxu0
      %v729 = vadd.f32 %v433, %v728
      %v730 = vpop.f32.mrb[0].mxu0
      %731 = vmatprep.mubr.f32.mxu0 0.0
      %v732 = vand.u32 %v476, 4294901760
      %v733 = vsub.f32 %v476, %v732
      %v734 = vand.u32 %v733, 4294901760
      %v735 = vsub.f32 %v733, %v734
      %v736 = vand.u32 %v735, 4294901760
      %737 = vmatmul.mubr.f32.gmra.mrb[0].mxu0 %v736
      %v738 = vpop.f32.mrb[0].mxu0
      %v739 = vadd.f32 %v433, %v738
      %v740 = vpop.f32.mrb[0].mxu0
      %741 = vmatprep.mubr.f32.mxu0 0.0
      %v742 = vand.u32 %v479, 4294901760
      %v743 = vsub.f32 %v479, %v742
      %v744 = vand.u32 %v743, 4294901760
      %v745 = vsub.f32 %v743, %v744
      %v746 = vand.u32 %v745, 4294901760
      %747 = vmatmul.mubr.f32.gmra.mrb[0].mxu0 %v746
      %v748 = vpop.f32.mrb[0].mxu0
      %v749 = vadd.f32 %v433, %v748
      %v750 = vpop.f32.mrb[0].mxu0
      %751 = vmatprep.mubr.f32.mxu0 0.0
      %v752 = vand.u32 %v482, 4294901760
      %v753 = vsub.f32 %v482, %v752
      %v754 = vand.u32 %v753, 4294901760
      %v755 = vsub.f32 %v753, %v754
      %v756 = vand.u32 %v755, 4294901760
      %757 = vmatmul.mubr.f32.gmra.mrb[0].mxu0 %v756
      %v758 = vpop.f32.mrb[0].mxu0
      %v759 = vadd.f32 %v433, %v758
      %v760 = vpop.f32.mrb[0].mxu0
      %761 = vmatprep.mubr.f32.mxu0 0.0
      %v762 = vand.u32 %v485, 4294901760
      %v763 = vsub.f32 %v485, %v762
      %v764 = vand.u32 %v763, 4294901760
      %v765 = vsub.f32 %v763, %v764
      %v766 = vand.u32 %v765, 4294901760
      %767 = vmatmul.mubr.f32.gmra.mrb[0].mxu0 %v766
      %v768 = vpop.f32.mrb[0].mxu0
      %v769 = vadd.f32 %v433, %v768
      %v770 = vpop.f32.mrb[0].mxu0
      %771 = vmatprep.mubr.f32.mxu0 0.0
      %v772 = vand.u32 %v488, 4294901760
      %v773 = vsub.f32 %v488, %v772
      %v774 = vand.u32 %v773, 4294901760
      %v775 = vsub.f32 %v773, %v774
      %v776 = vand.u32 %v775, 4294901760
      %777 = vmatmul.mubr.f32.gmra.mrb[0].mxu0 %v776
      %v778 = vpop.f32.mrb[0].mxu0
      %v779 = vadd.f32 %v433, %v778
      %v780 = vpop.f32.mrb[0].mxu0
      %781 = vmatprep.mubr.f32.mxu0 0.0
      %v782 = vand.u32 %v491, 4294901760
      %v783 = vsub.f32 %v491, %v782
      %v784 = vand.u32 %v783, 4294901760
      %v785 = vsub.f32 %v783, %v784
      %v786 = vand.u32 %v785, 4294901760
      %787 = vmatmul.mubr.f32.gmra.mrb[0].mxu0 %v786
      %v788 = vpop.f32.mrb[0].mxu0
      %v789 = vadd.f32 %v433, %v788
      %v790 = vpop.f32.mrb[0].mxu0
      %791 = vmatprep.mubr.f32.mxu0 0.0
      %v792 = vand.u32 %v494, 4294901760
      %v793 = vsub.f32 %v494, %v792
      %v794 = vand.u32 %v793, 4294901760
      %v795 = vsub.f32 %v793, %v794
      %v796 = vand.u32 %v795, 4294901760
      %797 = vmatmul.mubr.f32.gmra.mrb[0].mxu0 %v796
      %v798 = vpop.f32.mrb[0].mxu0
      %v799 = vadd.f32 %v433, %v798
      %v800 = vpop.f32.mrb[0].mxu0
      %801 = vmatprep.mubr.f32.mxu0 0.0
      %v802 = vand.u32 %v497, 4294901760
      %v803 = vsub.f32 %v497, %v802
      %v804 = vand.u32 %v803, 4294901760
      %v805 = vsub.f32 %v803, %v804
      %v806 = vand.u32 %v805, 4294901760
      %807 = vmatmul.mubr.f32.gmra.mrb[0].mxu0 %v806
      %v808 = vpop.f32.mrb[0].mxu0
      %v809 = vadd.f32 %v433, %v808
      %v810 = vpop.f32.mrb[0].mxu0
      %811 = vmatprep.mubr.f32.mxu0 0.0
      %v812 = vand.u32 %v500, 4294901760
      %v813 = vsub.f32 %v500, %v812
      %v814 = vand.u32 %v813, 4294901760
      %v815 = vsub.f32 %v813, %v814
      %v816 = vand.u32 %v815, 4294901760
      %817 = vmatmul.mubr.f32.gmra.mrb[0].mxu0 %v816
      %v818 = vpop.f32.mrb[0].mxu0
      %v819 = vadd.f32 %v433, %v818
      %v820 = vpop.f32.mrb[0].mxu0
      %821 = vmatprep.mubr.f32.mxu0 0.0
      %v822 = vand.u32 %v503, 4294901760
      %v823 = vsub.f32 %v503, %v822
      %v824 = vand.u32 %v823, 4294901760
      %v825 = vsub.f32 %v823, %v824
      %v826 = vand.u32 %v825, 4294901760
      %827 = vmatmul.mubr.f32.gmra.mrb[0].mxu0 %v826
      %v828 = vpop.f32.mrb[0].mxu0
      %v829 = vadd.f32 %v433, %v828
      %v830 = vpop.f32.mrb[0].mxu0
      %831 = vmatprep.mubr.f32.mxu0 0.0
      %v832 = vand.u32 %v506, 4294901760
      %v833 = vsub.f32 %v506, %v832
      %v834 = vand.u32 %v833, 4294901760
      %v835 = vsub.f32 %v833, %v834
      %v836 = vand.u32 %v835, 4294901760
      %837 = vmatmul.mubr.f32.gmra.mrb[0].mxu0 %v836
      %v838 = vpop.f32.mrb[0].mxu0
      %v839 = vadd.f32 %v433, %v838
      %v840 = vpop.f32.mrb[0].mxu0
      %841 = vmatprep.mubr.f32.mxu0 0.0
      %v842 = vand.u32 %v509, 4294901760
      %v843 = vsub.f32 %v509, %v842
      %v844 = vand.u32 %v843, 4294901760
      %v845 = vsub.f32 %v843, %v844
      %v846 = vand.u32 %v845, 4294901760
      %847 = vmatmul.mubr.f32.gmra.mrb[0].mxu0 %v846
      %v848 = vpop.f32.mrb[0].mxu0
      %v849 = vadd.f32 %v433, %v848
      %v850 = vpop.f32.mrb[0].mxu0
      %851 = vmatprep.mubr.f32.mxu0 0.0
      %v852 = vand.u32 %v512, 4294901760
      %v853 = vsub.f32 %v512, %v852
      %v854 = vand.u32 %v853, 4294901760
      %v855 = vsub.f32 %v853, %v854
      %v856 = vand.u32 %v855, 4294901760
      %857 = vmatmul.mubr.f32.gmra.mrb[0].mxu0 %v856
      %v858 = vpop.f32.mrb[0].mxu0
      %v859 = vadd.f32 %v433, %v858
      %v860 = vpop.f32.mrb[0].mxu0
      %861 = vmatprep.mubr.f32.mxu0 0.0
      %v862 = vand.u32 %v515, 4294901760
      %v863 = vsub.f32 %v515, %v862
      %v864 = vand.u32 %v863, 4294901760
      %v865 = vsub.f32 %v863, %v864
      %v866 = vand.u32 %v865, 4294901760
      %867 = vmatmul.mubr.f32.gmra.mrb[0].mxu0 %v866
      %v868 = vpop.f32.mrb[0].mxu0
      %v869 = vadd.f32 %v433, %v868
      %v870 = vpop.f32.mrb[0].mxu0
      %871 = vmatprep.mubr.f32.mxu0 0.0
      %v872 = vand.u32 %v518, 4294901760
      %v873 = vsub.f32 %v518, %v872
      %v874 = vand.u32 %v873, 4294901760
      %v875 = vsub.f32 %v873, %v874
      %v876 = vand.u32 %v875, 4294901760
      %877 = vmatmul.mubr.f32.gmra.mrb[0].mxu0 %v876
      %v878 = vpop.f32.mrb[0].mxu0
      %v879 = vadd.f32 %v433, %v878
      %v880 = vpop.f32.mrb[0].mxu0
      %881 = vmatprep.mubr.f32.mxu0 0.0
      %v882 = vand.u32 %v521, 4294901760
      %v883 = vsub.f32 %v521, %v882
      %v884 = vand.u32 %v883, 4294901760
      %v885 = vsub.f32 %v883, %v884
      %v886 = vand.u32 %v885, 4294901760
      %887 = vmatmul.mubr.f32.gmra.mrb[0].mxu0 %v886
      %v888 = vpop.f32.mrb[0].mxu0
      %v889 = vadd.f32 %v433, %v888
      %v890 = vpop.f32.mrb[0].mxu0
      %891 = vmatprep.mubr.f32.mxu0 0.0
      %v892 = vand.u32 %v524, 4294901760
      %v893 = vsub.f32 %v524, %v892
      %v894 = vand.u32 %v893, 4294901760
      %v895 = vsub.f32 %v893, %v894
      %v896 = vand.u32 %v895, 4294901760
      %897 = vmatmul.mubr.f32.gmra.mrb[0].mxu0 %v896
      %v898 = vpop.f32.mrb[0].mxu0
      %v899 = vadd.f32 %v433, %v898
      %v900 = vpop.f32.mrb[0].mxu0
      %901 = vmatprep.mubr.f32.mxu0 0.0
      %v902 = vand.u32 %v527, 4294901760
      %v903 = vsub.f32 %v527, %v902
      %v904 = vand.u32 %v903, 4294901760
      %v905 = vsub.f32 %v903, %v904
      %v906 = vand.u32 %v905, 4294901760
      %907 = vmatmul.mubr.f32.gmra.mrb[0].mxu0 %v906
      %v908 = vpop.f32.mrb[0].mxu0
      %v909 = vadd.f32 %v433, %v908
      %v910 = vpop.f32.mrb[0].mxu0
      %911 = vmatprep.mubr.f32.mxu0 0.0
      %v912 = vand.u32 %v530, 4294901760
      %v913 = vsub.f32 %v530, %v912
      %v914 = vand.u32 %v913, 4294901760
      %v915 = vsub.f32 %v913, %v914
      %v916 = vand.u32 %v915, 4294901760
      %917 = vmatmul.mubr.f32.gmra.mrb[0].mxu0 %v916
      %v918 = vpop.f32.mrb[0].mxu0
      %v919 = vadd.f32 %v433, %v918
      %v920 = vpop.f32.mrb[0].mxu0
      %921 = vdwg.mxu0
      %922 = vmatprep.subr.mxu0 0.0
      %v923 = vand.u32 %v534, 4294901760
      %v924 = vsub.f32 %v534, %v923
      %v925 = vand.u32 %v924, 4294901760
      %v926 = vsub.f32 %v924, %v925
      %v927 = vand.u32 %v926, 4294901760
      %928 = vmatpush1.msra.mxu0 %v927
      %929 = vmatprep.subr.mxu0 0.0
      %930 = vmatpush1.msra.mxu0 0.0
      %931 = vmatprep.subr.mxu0 0.0
      %932 = vmatpush1.msra.mxu0 0.0
      %933 = vmatprep.subr.mxu0 0.0
      %934 = vmatpush1.msra.mxu0 0.0
      %935 = vmatprep.subr.mxu0 0.0
      %936 = vmatpush1.msra.mxu0 0.0
      %937 = vmatprep.subr.mxu0 0.0
      %938 = vmatpush1.msra.mxu0 0.0
      %939 = vmatprep.subr.mxu0 0.0
      %940 = vmatpush1.msra.mxu0 0.0
      %941 = vmatprep.subr.mxu0 0.0
      %942 = vmatpush1.msra.mxu0 0.0
      %943 = vmatprep.subr.mxu0 0.0
      %944 = vmatpush1.msra.mxu0 0.0
      %945 = vmatprep.subr.mxu0 0.0
      %946 = vmatpush1.msra.mxu0 0.0
      %947 = vmatprep.subr.mxu0 0.0
      %948 = vmatpush1.msra.mxu0 0.0
      %949 = vmatprep.subr.mxu0 0.0
      %950 = vmatpush1.msra.mxu0 0.0
      %951 = vmatprep.subr.mxu0 0.0
      %952 = vmatpush1.msra.mxu0 0.0
      %953 = vmatprep.subr.mxu0 0.0
      %954 = vmatpush1.msra.mxu0 0.0
      %955 = vmatprep.subr.mxu0 0.0
      %956 = vmatpush1.msra.mxu0 0.0
      %957 = vmatprep.subr.mxu0 0.0
      %958 = vmatpush1.msra.mxu0 0.0
      %959 = vmatprep.subr.mxu0 0.0
      %960 = vmatpush1.msra.mxu0 0.0
      %961 = vmatprep.subr.mxu0 0.0
      %962 = vmatpush1.msra.mxu0 0.0
      %963 = vmatprep.subr.mxu0 0.0
      %964 = vmatpush1.msra.mxu0 0.0
      %965 = vmatprep.subr.mxu0 0.0
      %966 = vmatpush1.msra.mxu0 0.0
      %967 = vmatprep.subr.mxu0 0.0
      %968 = vmatpush1.msra.mxu0 0.0
      %969 = vmatprep.subr.mxu0 0.0
      %970 = vmatpush1.msra.mxu0 0.0
      %971 = vmatprep.subr.mxu0 0.0
      %972 = vmatpush1.msra.mxu0 0.0
      %973 = vmatprep.subr.mxu0 0.0
      %974 = vmatpush1.msra.mxu0 0.0
      %975 = vmatprep.subr.mxu0 0.0
      %976 = vmatpush1.msra.mxu0 0.0
      %977 = vmatprep.subr.mxu0 0.0
      %978 = vmatpush1.msra.mxu0 0.0
      %979 = vmatprep.subr.mxu0 0.0
      %980 = vmatpush1.msra.mxu0 0.0
      %981 = vmatprep.subr.mxu0 0.0
      %982 = vmatpush1.msra.mxu0 0.0
      %983 = vmatprep.subr.mxu0 0.0
      %984 = vmatpush1.msra.mxu0 0.0
      %985 = vmatprep.subr.mxu0 0.0
      %986 = vmatpush1.msra.mxu0 0.0
      %987 = vmatprep.subr.mxu0 0.0
      %988 = vmatpush1.msra.mxu0 0.0
      %989 = vmatprep.subr.mxu0 0.0
      %990 = vmatpush1.msra.mxu0 0.0
      %991 = vmatprep.mubr.f32.mxu0 0.0
      %v992 = vand.u32 %v437, 4294901760
      %993 = vmatmul.mubr.f32.gmra.mrb[0].mxu0 %v992
      %v994 = vpop.f32.mrb[0].mxu0
      %v995 = vadd.f32 %v609, %v994
      %v996 = vpop.f32.mrb[0].mxu0
      %997 = vmatprep.mubr.f32.mxu0 0.0
      %v998 = vand.u32 %v440, 4294901760
      %999 = vmatmul.mubr.f32.gmra.mrb[0].mxu0 %v998
      %v1000 = vpop.f32.mrb[0].mxu0
      %v1001 = vadd.f32 %v619, %v1000
      %v1002 = vpop.f32.mrb[0].mxu0
      %1003 = vmatprep.mubr.f32.mxu0 0.0
      %v1004 = vand.u32 %v443, 4294901760
      %1005 = vmatmul.mubr.f32.gmra.mrb[0].mxu0 %v1004
      %v1006 = vpop.f32.mrb[0].mxu0
      %v1007 = vadd.f32 %v629, %v1006
      %v1008 = vpop.f32.mrb[0].mxu0
      %1009 = vmatprep.mubr.f32.mxu0 0.0
      %v1010 = vand.u32 %v446, 4294901760
      %1011 = vmatmul.mubr.f32.gmra.mrb[0].mxu0 %v1010
      %v1012 = vpop.f32.mrb[0].mxu0
      %v1013 = vadd.f32 %v639, %v1012
      %v1014 = vpop.f32.mrb[0].mxu0
      %1015 = vmatprep.mubr.f32.mxu0 0.0
      %v1016 = vand.u32 %v449, 4294901760
      %1017 = vmatmul.mubr.f32.gmra.mrb[0].mxu0 %v1016
      %v1018 = vpop.f32.mrb[0].mxu0
      %v1019 = vadd.f32 %v649, %v1018
      %v1020 = vpop.f32.mrb[0].mxu0
      %1021 = vmatprep.mubr.f32.mxu0 0.0
      %v1022 = vand.u32 %v452, 4294901760
      %1023 = vmatmul.mubr.f32.gmra.mrb[0].mxu0 %v1022
      %v1024 = vpop.f32.mrb[0].mxu0
      %v1025 = vadd.f32 %v659, %v1024
      %v1026 = vpop.f32.mrb[0].mxu0
      %1027 = vmatprep.mubr.f32.mxu0 0.0
      %v1028 = vand.u32 %v455, 4294901760
      %1029 = vmatmul.mubr.f32.gmra.mrb[0].mxu0 %v1028
      %v1030 = vpop.f32.mrb[0].mxu0
      %v1031 = vadd.f32 %v669, %v1030
      %v1032 = vpop.f32.mrb[0].mxu0
      %1033 = vmatprep.mubr.f32.mxu0 0.0
      %v1034 = vand.u32 %v458, 4294901760
      %1035 = vmatmul.mubr.f32.gmra.mrb[0].mxu0 %v1034
      %v1036 = vpop.f32.mrb[0].mxu0
      %v1037 = vadd.f32 %v679, %v1036
      %v1038 = vpop.f32.mrb[0].mxu0
      %1039 = vmatprep.mubr.f32.mxu0 0.0
      %v1040 = vand.u32 %v461, 4294901760
      %1041 = vmatmul.mubr.f32.gmra.mrb[0].mxu0 %v1040
      %v1042 = vpop.f32.mrb[0].mxu0
      %v1043 = vadd.f32 %v689, %v1042
      %v1044 = vpop.f32.mrb[0].mxu0
      %1045 = vmatprep.mubr.f32.mxu0 0.0
      %v1046 = vand.u32 %v464, 4294901760
      %1047 = vmatmul.mubr.f32.gmra.mrb[0].mxu0 %v1046
      %v1048 = vpop.f32.mrb[0].mxu0
      %v1049 = vadd.f32 %v699, %v1048
      %v1050 = vpop.f32.mrb[0].mxu0
      %1051 = vmatprep.mubr.f32.mxu0 0.0
      %v1052 = vand.u32 %v467, 4294901760
      %1053 = vmatmul.mubr.f32.gmra.mrb[0].mxu0 %v1052
      %v1054 = vpop.f32.mrb[0].mxu0
      %v1055 = vadd.f32 %v709, %v1054
      %v1056 = vpop.f32.mrb[0].mxu0
      %1057 = vmatprep.mubr.f32.mxu0 0.0
      %v1058 = vand.u32 %v470, 4294901760
      %1059 = vmatmul.mubr.f32.gmra.mrb[0].mxu0 %v1058
      %v1060 = vpop.f32.mrb[0].mxu0
      %v1061 = vadd.f32 %v719, %v1060
      %v1062 = vpop.f32.mrb[0].mxu0
      %1063 = vmatprep.mubr.f32.mxu0 0.0
      %v1064 = vand.u32 %v473, 4294901760
      %1065 = vmatmul.mubr.f32.gmra.mrb[0].mxu0 %v1064
      %v1066 = vpop.f32.mrb[0].mxu0
      %v1067 = vadd.f32 %v729, %v1066
      %v1068 = vpop.f32.mrb[0].mxu0
      %1069 = vmatprep.mubr.f32.mxu0 0.0
      %v1070 = vand.u32 %v476, 4294901760
      %1071 = vmatmul.mubr.f32.gmra.mrb[0].mxu0 %v1070
      %v1072 = vpop.f32.mrb[0].mxu0
      %v1073 = vadd.f32 %v739, %v1072
      %v1074 = vpop.f32.mrb[0].mxu0
      %1075 = vmatprep.mubr.f32.mxu0 0.0
      %v1076 = vand.u32 %v479, 4294901760
      %1077 = vmatmul.mubr.f32.gmra.mrb[0].mxu0 %v1076
      %v1078 = vpop.f32.mrb[0].mxu0
      %v1079 = vadd.f32 %v749, %v1078
      %v1080 = vpop.f32.mrb[0].mxu0
      %1081 = vmatprep.mubr.f32.mxu0 0.0
      %v1082 = vand.u32 %v482, 4294901760
      %1083 = vmatmul.mubr.f32.gmra.mrb[0].mxu0 %v1082
      %v1084 = vpop.f32.mrb[0].mxu0
      %v1085 = vadd.f32 %v759, %v1084
      %v1086 = vpop.f32.mrb[0].mxu0
      %1087 = vmatprep.mubr.f32.mxu0 0.0
      %v1088 = vand.u32 %v485, 4294901760
      %1089 = vmatmul.mubr.f32.gmra.mrb[0].mxu0 %v1088
      %v1090 = vpop.f32.mrb[0].mxu0
      %v1091 = vadd.f32 %v769, %v1090
      %v1092 = vpop.f32.mrb[0].mxu0
      %1093 = vmatprep.mubr.f32.mxu0 0.0
      %v1094 = vand.u32 %v488, 4294901760
      %1095 = vmatmul.mubr.f32.gmra.mrb[0].mxu0 %v1094
      %v1096 = vpop.f32.mrb[0].mxu0
      %v1097 = vadd.f32 %v779, %v1096
      %v1098 = vpop.f32.mrb[0].mxu0
      %1099 = vmatprep.mubr.f32.mxu0 0.0
      %v1100 = vand.u32 %v491, 4294901760
      %1101 = vmatmul.mubr.f32.gmra.mrb[0].mxu0 %v1100
      %v1102 = vpop.f32.mrb[0].mxu0
      %v1103 = vadd.f32 %v789, %v1102
      %v1104 = vpop.f32.mrb[0].mxu0
      %1105 = vmatprep.mubr.f32.mxu0 0.0
      %v1106 = vand.u32 %v494, 4294901760
      %1107 = vmatmul.mubr.f32.gmra.mrb[0].mxu0 %v1106
      %v1108 = vpop.f32.mrb[0].mxu0
      %v1109 = vadd.f32 %v799, %v1108
      %v1110 = vpop.f32.mrb[0].mxu0
      %1111 = vmatprep.mubr.f32.mxu0 0.0
      %v1112 = vand.u32 %v497, 4294901760
      %1113 = vmatmul.mubr.f32.gmra.mrb[0].mxu0 %v1112
      %v1114 = vpop.f32.mrb[0].mxu0
      %v1115 = vadd.f32 %v809, %v1114
      %v1116 = vpop.f32.mrb[0].mxu0
      %1117 = vmatprep.mubr.f32.mxu0 0.0
      %v1118 = vand.u32 %v500, 4294901760
      %1119 = vmatmul.mubr.f32.gmra.mrb[0].mxu0 %v1118
      %v1120 = vpop.f32.mrb[0].mxu0
      %v1121 = vadd.f32 %v819, %v1120
      %v1122 = vpop.f32.mrb[0].mxu0
      %1123 = vmatprep.mubr.f32.mxu0 0.0
      %v1124 = vand.u32 %v503, 4294901760
      %1125 = vmatmul.mubr.f32.gmra.mrb[0].mxu0 %v1124
      %v1126 = vpop.f32.mrb[0].mxu0
      %v1127 = vadd.f32 %v829, %v1126
      %v1128 = vpop.f32.mrb[0].mxu0
      %1129 = vmatprep.mubr.f32.mxu0 0.0
      %v1130 = vand.u32 %v506, 4294901760
      %1131 = vmatmul.mubr.f32.gmra.mrb[0].mxu0 %v1130
      %v1132 = vpop.f32.mrb[0].mxu0
      %v1133 = vadd.f32 %v839, %v1132
      %v1134 = vpop.f32.mrb[0].mxu0
      %1135 = vmatprep.mubr.f32.mxu0 0.0
      %v1136 = vand.u32 %v509, 4294901760
      %1137 = vmatmul.mubr.f32.gmra.mrb[0].mxu0 %v1136
      %v1138 = vpop.f32.mrb[0].mxu0
      %v1139 = vadd.f32 %v849, %v1138
      %v1140 = vpop.f32.mrb[0].mxu0
      %1141 = vmatprep.mubr.f32.mxu0 0.0
      %v1142 = vand.u32 %v512, 4294901760
      %1143 = vmatmul.mubr.f32.gmra.mrb[0].mxu0 %v1142
      %v1144 = vpop.f32.mrb[0].mxu0
      %v1145 = vadd.f32 %v859, %v1144
      %v1146 = vpop.f32.mrb[0].mxu0
      %1147 = vmatprep.mubr.f32.mxu0 0.0
      %v1148 = vand.u32 %v515, 4294901760
      %1149 = vmatmul.mubr.f32.gmra.mrb[0].mxu0 %v1148
      %v1150 = vpop.f32.mrb[0].mxu0
      %v1151 = vadd.f32 %v869, %v1150
      %v1152 = vpop.f32.mrb[0].mxu0
      %1153 = vmatprep.mubr.f32.mxu0 0.0
      %v1154 = vand.u32 %v518, 4294901760
      %1155 = vmatmul.mubr.f32.gmra.mrb[0].mxu0 %v1154
      %v1156 = vpop.f32.mrb[0].mxu0
      %v1157 = vadd.f32 %v879, %v1156
      %v1158 = vpop.f32.mrb[0].mxu0
      %1159 = vmatprep.mubr.f32.mxu0 0.0
      %v1160 = vand.u32 %v521, 4294901760
      %1161 = vmatmul.mubr.f32.gmra.mrb[0].mxu0 %v1160
      %v1162 = vpop.f32.mrb[0].mxu0
      %v1163 = vadd.f32 %v889, %v1162
      %v1164 = vpop.f32.mrb[0].mxu0
      %1165 = vmatprep.mubr.f32.mxu0 0.0
      %v1166 = vand.u32 %v524, 4294901760
      %1167 = vmatmul.mubr.f32.gmra.mrb[0].mxu0 %v1166
      %v1168 = vpop.f32.mrb[0].mxu0
      %v1169 = vadd.f32 %v899, %v1168
      %v1170 = vpop.f32.mrb[0].mxu0
      %1171 = vmatprep.mubr.f32.mxu0 0.0
      %v1172 = vand.u32 %v527, 4294901760
      %1173 = vmatmul.mubr.f32.gmra.mrb[0].mxu0 %v1172
      %v1174 = vpop.f32.mrb[0].mxu0
      %v1175 = vadd.f32 %v909, %v1174
      %v1176 = vpop.f32.mrb[0].mxu0
      %1177 = vmatprep.mubr.f32.mxu0 0.0
      %v1178 = vand.u32 %v530, 4294901760
      %1179 = vmatmul.mubr.f32.gmra.mrb[0].mxu0 %v1178
      %v1180 = vpop.f32.mrb[0].mxu0
      %v1181 = vadd.f32 %v919, %v1180
      %v1182 = vpop.f32.mrb[0].mxu0
      %1183 = vdwg.mxu0
      %1184 = vmatprep.subr.mxu0 0.0
      %v1185 = vand.u32 %v534, 4294901760
      %v1186 = vsub.f32 %v534, %v1185
      %1187 = vmatpush1.msra.mxu0 %v1186
      %1188 = vmatprep.subr.mxu0 0.0
      %1189 = vmatpush1.msra.mxu0 0.0
      %1190 = vmatprep.subr.mxu0 0.0
      %1191 = vmatpush1.msra.mxu0 0.0
      %1192 = vmatprep.subr.mxu0 0.0
      %1193 = vmatpush1.msra.mxu0 0.0
      %1194 = vmatprep.subr.mxu0 0.0
      %1195 = vmatpush1.msra.mxu0 0.0
      %1196 = vmatprep.subr.mxu0 0.0
      %1197 = vmatpush1.msra.mxu0 0.0
      %1198 = vmatprep.subr.mxu0 0.0
      %1199 = vmatpush1.msra.mxu0 0.0
      %1200 = vmatprep.subr.mxu0 0.0
      %1201 = vmatpush1.msra.mxu0 0.0
      %1202 = vmatprep.subr.mxu0 0.0
      %1203 = vmatpush1.msra.mxu0 0.0
      %1204 = vmatprep.subr.mxu0 0.0
      %1205 = vmatpush1.msra.mxu0 0.0
      %1206 = vmatprep.subr.mxu0 0.0
      %1207 = vmatpush1.msra.mxu0 0.0
      %1208 = vmatprep.subr.mxu0 0.0
      %1209 = vmatpush1.msra.mxu0 0.0
      %1210 = vmatprep.subr.mxu0 0.0
      %1211 = vmatpush1.msra.mxu0 0.0
      %1212 = vmatprep.subr.mxu0 0.0
      %1213 = vmatpush1.msra.mxu0 0.0
      %1214 = vmatprep.subr.mxu0 0.0
      %1215 = vmatpush1.msra.mxu0 0.0
      %1216 = vmatprep.subr.mxu0 0.0
      %1217 = vmatpush1.msra.mxu0 0.0
      %1218 = vmatprep.subr.mxu0 0.0
      %1219 = vmatpush1.msra.mxu0 0.0
      %1220 = vmatprep.subr.mxu0 0.0
      %1221 = vmatpush1.msra.mxu0 0.0
      %1222 = vmatprep.subr.mxu0 0.0
      %1223 = vmatpush1.msra.mxu0 0.0
      %1224 = vmatprep.subr.mxu0 0.0
      %1225 = vmatpush1.msra.mxu0 0.0
      %1226 = vmatprep.subr.mxu0 0.0
      %1227 = vmatpush1.msra.mxu0 0.0
      %1228 = vmatprep.subr.mxu0 0.0
      %1229 = vmatpush1.msra.mxu0 0.0
      %1230 = vmatprep.subr.mxu0 0.0
      %1231 = vmatpush1.msra.mxu0 0.0
      %1232 = vmatprep.subr.mxu0 0.0
      %1233 = vmatpush1.msra.mxu0 0.0
      %1234 = vmatprep.subr.mxu0 0.0
      %1235 = vmatpush1.msra.mxu0 0.0
      %1236 = vmatprep.subr.mxu0 0.0
      %1237 = vmatpush1.msra.mxu0 0.0
      %1238 = vmatprep.subr.mxu0 0.0
      %1239 = vmatpush1.msra.mxu0 0.0
      %1240 = vmatprep.subr.mxu0 0.0
      %1241 = vmatpush1.msra.mxu0 0.0
      %1242 = vmatprep.subr.mxu0 0.0
      %1243 = vmatpush1.msra.mxu0 0.0
      %1244 = vmatprep.subr.mxu0 0.0
      %1245 = vmatpush1.msra.mxu0 0.0
      %1246 = vmatprep.subr.mxu0 0.0
      %1247 = vmatpush1.msra.mxu0 0.0
      %1248 = vmatprep.subr.mxu0 0.0
      %1249 = vmatpush1.msra.mxu0 0.0
      %1250 = vmatprep.mubr.f32.mxu0 0.0
      %v1251 = vand.u32 %v437, 4294901760
      %v1252 = vsub.f32 %v437, %v1251
      %1253 = vmatmul.mubr.f32.gmra.mrb[0].mxu0 %v1252
      %v1254 = vpop.f32.mrb[0].mxu0
      %v1255 = vadd.f32 %v995, %v1254
      %v1256 = vpop.f32.mrb[0].mxu0
      %1257 = vmatprep.mubr.f32.mxu0 0.0
      %v1258 = vand.u32 %v440, 4294901760
      %v1259 = vsub.f32 %v440, %v1258
      %1260 = vmatmul.mubr.f32.gmra.mrb[0].mxu0 %v1259
      %v1261 = vpop.f32.mrb[0].mxu0
      %v1262 = vadd.f32 %v1001, %v1261
      %v1263 = vpop.f32.mrb[0].mxu0
      %1264 = vmatprep.mubr.f32.mxu0 0.0
      %v1265 = vand.u32 %v443, 4294901760
      %v1266 = vsub.f32 %v443, %v1265
      %1267 = vmatmul.mubr.f32.gmra.mrb[0].mxu0 %v1266
      %v1268 = vpop.f32.mrb[0].mxu0
      %v1269 = vadd.f32 %v1007, %v1268
      %v1270 = vpop.f32.mrb[0].mxu0
      %1271 = vmatprep.mubr.f32.mxu0 0.0
      %v1272 = vand.u32 %v446, 4294901760
      %v1273 = vsub.f32 %v446, %v1272
      %1274 = vmatmul.mubr.f32.gmra.mrb[0].mxu0 %v1273
      %v1275 = vpop.f32.mrb[0].mxu0
      %v1276 = vadd.f32 %v1013, %v1275
      %v1277 = vpop.f32.mrb[0].mxu0
      %1278 = vmatprep.mubr.f32.mxu0 0.0
      %v1279 = vand.u32 %v449, 4294901760
      %v1280 = vsub.f32 %v449, %v1279
      %1281 = vmatmul.mubr.f32.gmra.mrb[0].mxu0 %v1280
      %v1282 = vpop.f32.mrb[0].mxu0
      %v1283 = vadd.f32 %v1019, %v1282
      %v1284 = vpop.f32.mrb[0].mxu0
      %1285 = vmatprep.mubr.f32.mxu0 0.0
      %v1286 = vand.u32 %v452, 4294901760
      %v1287 = vsub.f32 %v452, %v1286
      %1288 = vmatmul.mubr.f32.gmra.mrb[0].mxu0 %v1287
      %v1289 = vpop.f32.mrb[0].mxu0
      %v1290 = vadd.f32 %v1025, %v1289
      %v1291 = vpop.f32.mrb[0].mxu0
      %1292 = vmatprep.mubr.f32.mxu0 0.0
      %v1293 = vand.u32 %v455, 4294901760
      %v1294 = vsub.f32 %v455, %v1293
      %1295 = vmatmul.mubr.f32.gmra.mrb[0].mxu0 %v1294
      %v1296 = vpop.f32.mrb[0].mxu0
      %v1297 = vadd.f32 %v1031, %v1296
      %v1298 = vpop.f32.mrb[0].mxu0
      %1299 = vmatprep.mubr.f32.mxu0 0.0
      %v1300 = vand.u32 %v458, 4294901760
      %v1301 = vsub.f32 %v458, %v1300
      %1302 = vmatmul.mubr.f32.gmra.mrb[0].mxu0 %v1301
      %v1303 = vpop.f32.mrb[0].mxu0
      %v1304 = vadd.f32 %v1037, %v1303
      %v1305 = vpop.f32.mrb[0].mxu0
      %1306 = vmatprep.mubr.f32.mxu0 0.0
      %v1307 = vand.u32 %v461, 4294901760
      %v1308 = vsub.f32 %v461, %v1307
      %1309 = vmatmul.mubr.f32.gmra.mrb[0].mxu0 %v1308
      %v1310 = vpop.f32.mrb[0].mxu0
      %v1311 = vadd.f32 %v1043, %v1310
      %v1312 = vpop.f32.mrb[0].mxu0
      %1313 = vmatprep.mubr.f32.mxu0 0.0
      %v1314 = vand.u32 %v464, 4294901760
      %v1315 = vsub.f32 %v464, %v1314
      %1316 = vmatmul.mubr.f32.gmra.mrb[0].mxu0 %v1315
      %v1317 = vpop.f32.mrb[0].mxu0
      %v1318 = vadd.f32 %v1049, %v1317
      %v1319 = vpop.f32.mrb[0].mxu0
      %1320 = vmatprep.mubr.f32.mxu0 0.0
      %v1321 = vand.u32 %v467, 4294901760
      %v1322 = vsub.f32 %v467, %v1321
      %1323 = vmatmul.mubr.f32.gmra.mrb[0].mxu0 %v1322
      %v1324 = vpop.f32.mrb[0].mxu0
      %v1325 = vadd.f32 %v1055, %v1324
      %v1326 = vpop.f32.mrb[0].mxu0
      %1327 = vmatprep.mubr.f32.mxu0 0.0
      %v1328 = vand.u32 %v470, 4294901760
      %v1329 = vsub.f32 %v470, %v1328
      %1330 = vmatmul.mubr.f32.gmra.mrb[0].mxu0 %v1329
      %v1331 = vpop.f32.mrb[0].mxu0
      %v1332 = vadd.f32 %v1061, %v1331
      %v1333 = vpop.f32.mrb[0].mxu0
      %1334 = vmatprep.mubr.f32.mxu0 0.0
      %v1335 = vand.u32 %v473, 4294901760
      %v1336 = vsub.f32 %v473, %v1335
      %1337 = vmatmul.mubr.f32.gmra.mrb[0].mxu0 %v1336
      %v1338 = vpop.f32.mrb[0].mxu0
      %v1339 = vadd.f32 %v1067, %v1338
      %v1340 = vpop.f32.mrb[0].mxu0
      %1341 = vmatprep.mubr.f32.mxu0 0.0
      %v1342 = vand.u32 %v476, 4294901760
      %v1343 = vsub.f32 %v476, %v1342
      %1344 = vmatmul.mubr.f32.gmra.mrb[0].mxu0 %v1343
      %v1345 = vpop.f32.mrb[0].mxu0
      %v1346 = vadd.f32 %v1073, %v1345
      %v1347 = vpop.f32.mrb[0].mxu0
      %1348 = vmatprep.mubr.f32.mxu0 0.0
      %v1349 = vand.u32 %v479, 4294901760
      %v1350 = vsub.f32 %v479, %v1349
      %1351 = vmatmul.mubr.f32.gmra.mrb[0].mxu0 %v1350
      %v1352 = vpop.f32.mrb[0].mxu0
      %v1353 = vadd.f32 %v1079, %v1352
      %v1354 = vpop.f32.mrb[0].mxu0
      %1355 = vmatprep.mubr.f32.mxu0 0.0
      %v1356 = vand.u32 %v482, 4294901760
      %v1357 = vsub.f32 %v482, %v1356
      %1358 = vmatmul.mubr.f32.gmra.mrb[0].mxu0 %v1357
      %v1359 = vpop.f32.mrb[0].mxu0
      %v1360 = vadd.f32 %v1085, %v1359
      %v1361 = vpop.f32.mrb[0].mxu0
      %1362 = vmatprep.mubr.f32.mxu0 0.0
      %v1363 = vand.u32 %v485, 4294901760
      %v1364 = vsub.f32 %v485, %v1363
      %1365 = vmatmul.mubr.f32.gmra.mrb[0].mxu0 %v1364
      %v1366 = vpop.f32.mrb[0].mxu0
      %v1367 = vadd.f32 %v1091, %v1366
      %v1368 = vpop.f32.mrb[0].mxu0
      %1369 = vmatprep.mubr.f32.mxu0 0.0
      %v1370 = vand.u32 %v488, 4294901760
      %v1371 = vsub.f32 %v488, %v1370
      %1372 = vmatmul.mubr.f32.gmra.mrb[0].mxu0 %v1371
      %v1373 = vpop.f32.mrb[0].mxu0
      %v1374 = vadd.f32 %v1097, %v1373
      %v1375 = vpop.f32.mrb[0].mxu0
      %1376 = vmatprep.mubr.f32.mxu0 0.0
      %v1377 = vand.u32 %v491, 4294901760
      %v1378 = vsub.f32 %v491, %v1377
      %1379 = vmatmul.mubr.f32.gmra.mrb[0].mxu0 %v1378
      %v1380 = vpop.f32.mrb[0].mxu0
      %v1381 = vadd.f32 %v1103, %v1380
      %v1382 = vpop.f32.mrb[0].mxu0
      %1383 = vmatprep.mubr.f32.mxu0 0.0
      %v1384 = vand.u32 %v494, 4294901760
      %v1385 = vsub.f32 %v494, %v1384
      %1386 = vmatmul.mubr.f32.gmra.mrb[0].mxu0 %v1385
      %v1387 = vpop.f32.mrb[0].mxu0
      %v1388 = vadd.f32 %v1109, %v1387
      %v1389 = vpop.f32.mrb[0].mxu0
      %1390 = vmatprep.mubr.f32.mxu0 0.0
      %v1391 = vand.u32 %v497, 4294901760
      %v1392 = vsub.f32 %v497, %v1391
      %1393 = vmatmul.mubr.f32.gmra.mrb[0].mxu0 %v1392
      %v1394 = vpop.f32.mrb[0].mxu0
      %v1395 = vadd.f32 %v1115, %v1394
      %v1396 = vpop.f32.mrb[0].mxu0
      %1397 = vmatprep.mubr.f32.mxu0 0.0
      %v1398 = vand.u32 %v500, 4294901760
      %v1399 = vsub.f32 %v500, %v1398
      %1400 = vmatmul.mubr.f32.gmra.mrb[0].mxu0 %v1399
      %v1401 = vpop.f32.mrb[0].mxu0
      %v1402 = vadd.f32 %v1121, %v1401
      %v1403 = vpop.f32.mrb[0].mxu0
      %1404 = vmatprep.mubr.f32.mxu0 0.0
      %v1405 = vand.u32 %v503, 4294901760
      %v1406 = vsub.f32 %v503, %v1405
      %1407 = vmatmul.mubr.f32.gmra.mrb[0].mxu0 %v1406
      %v1408 = vpop.f32.mrb[0].mxu0
      %v1409 = vadd.f32 %v1127, %v1408
      %v1410 = vpop.f32.mrb[0].mxu0
      %1411 = vmatprep.mubr.f32.mxu0 0.0
      %v1412 = vand.u32 %v506, 4294901760
      %v1413 = vsub.f32 %v506, %v1412
      %1414 = vmatmul.mubr.f32.gmra.mrb[0].mxu0 %v1413
      %v1415 = vpop.f32.mrb[0].mxu0
      %v1416 = vadd.f32 %v1133, %v1415
      %v1417 = vpop.f32.mrb[0].mxu0
      %1418 = vmatprep.mubr.f32.mxu0 0.0
      %v1419 = vand.u32 %v509, 4294901760
      %v1420 = vsub.f32 %v509, %v1419
      %1421 = vmatmul.mubr.f32.gmra.mrb[0].mxu0 %v1420
      %v1422 = vpop.f32.mrb[0].mxu0
      %v1423 = vadd.f32 %v1139, %v1422
      %v1424 = vpop.f32.mrb[0].mxu0
      %1425 = vmatprep.mubr.f32.mxu0 0.0
      %v1426 = vand.u32 %v512, 4294901760
      %v1427 = vsub.f32 %v512, %v1426
      %1428 = vmatmul.mubr.f32.gmra.mrb[0].mxu0 %v1427
      %v1429 = vpop.f32.mrb[0].mxu0
      %v1430 = vadd.f32 %v1145, %v1429
      %v1431 = vpop.f32.mrb[0].mxu0
      %1432 = vmatprep.mubr.f32.mxu0 0.0
      %v1433 = vand.u32 %v515, 4294901760
      %v1434 = vsub.f32 %v515, %v1433
      %1435 = vmatmul.mubr.f32.gmra.mrb[0].mxu0 %v1434
      %v1436 = vpop.f32.mrb[0].mxu0
      %v1437 = vadd.f32 %v1151, %v1436
      %v1438 = vpop.f32.mrb[0].mxu0
      %1439 = vmatprep.mubr.f32.mxu0 0.0
      %v1440 = vand.u32 %v518, 4294901760
      %v1441 = vsub.f32 %v518, %v1440
      %1442 = vmatmul.mubr.f32.gmra.mrb[0].mxu0 %v1441
      %v1443 = vpop.f32.mrb[0].mxu0
      %v1444 = vadd.f32 %v1157, %v1443
      %v1445 = vpop.f32.mrb[0].mxu0
      %1446 = vmatprep.mubr.f32.mxu0 0.0
      %v1447 = vand.u32 %v521, 4294901760
      %v1448 = vsub.f32 %v521, %v1447
      %1449 = vmatmul.mubr.f32.gmra.mrb[0].mxu0 %v1448
      %v1450 = vpop.f32.mrb[0].mxu0
      %v1451 = vadd.f32 %v1163, %v1450
      %v1452 = vpop.f32.mrb[0].mxu0
      %1453 = vmatprep.mubr.f32.mxu0 0.0
      %v1454 = vand.u32 %v524, 4294901760
      %v1455 = vsub.f32 %v524, %v1454
      %1456 = vmatmul.mubr.f32.gmra.mrb[0].mxu0 %v1455
      %v1457 = vpop.f32.mrb[0].mxu0
      %v1458 = vadd.f32 %v1169, %v1457
      %v1459 = vpop.f32.mrb[0].mxu0
      %1460 = vmatprep.mubr.f32.mxu0 0.0
      %v1461 = vand.u32 %v527, 4294901760
      %v1462 = vsub.f32 %v527, %v1461
      %1463 = vmatmul.mubr.f32.gmra.mrb[0].mxu0 %v1462
      %v1464 = vpop.f32.mrb[0].mxu0
      %v1465 = vadd.f32 %v1175, %v1464
      %v1466 = vpop.f32.mrb[0].mxu0
      %1467 = vmatprep.mubr.f32.mxu0 0.0
      %v1468 = vand.u32 %v530, 4294901760
      %v1469 = vsub.f32 %v530, %v1468
      %1470 = vmatmul.mubr.f32.gmra.mrb[0].mxu0 %v1469
      %v1471 = vpop.f32.mrb[0].mxu0
      %v1472 = vadd.f32 %v1181, %v1471
      %v1473 = vpop.f32.mrb[0].mxu0
      %1474 = vdwg.mxu0
      %1475 = vmatprep.subr.mxu0 0.0
      %v1476 = vand.u32 %v534, 4294901760
      %1477 = vmatpush1.msra.mxu0 %v1476
      %1478 = vmatprep.subr.mxu0 0.0
      %1479 = vmatpush1.msra.mxu0 0.0
      %1480 = vmatprep.subr.mxu0 0.0
      %1481 = vmatpush1.msra.mxu0 0.0
      %1482 = vmatprep.subr.mxu0 0.0
      %1483 = vmatpush1.msra.mxu0 0.0
      %1484 = vmatprep.subr.mxu0 0.0
      %1485 = vmatpush1.msra.mxu0 0.0
      %1486 = vmatprep.subr.mxu0 0.0
      %1487 = vmatpush1.msra.mxu0 0.0
      %1488 = vmatprep.subr.mxu0 0.0
      %1489 = vmatpush1.msra.mxu0 0.0
      %1490 = vmatprep.subr.mxu0 0.0
      %1491 = vmatpush1.msra.mxu0 0.0
      %1492 = vmatprep.subr.mxu0 0.0
      %1493 = vmatpush1.msra.mxu0 0.0
      %1494 = vmatprep.subr.mxu0 0.0
      %1495 = vmatpush1.msra.mxu0 0.0
      %1496 = vmatprep.subr.mxu0 0.0
      %1497 = vmatpush1.msra.mxu0 0.0
      %1498 = vmatprep.subr.mxu0 0.0
      %1499 = vmatpush1.msra.mxu0 0.0
      %1500 = vmatprep.subr.mxu0 0.0
      %1501 = vmatpush1.msra.mxu0 0.0
      %1502 = vmatprep.subr.mxu0 0.0
      %1503 = vmatpush1.msra.mxu0 0.0
      %1504 = vmatprep.subr.mxu0 0.0
      %1505 = vmatpush1.msra.mxu0 0.0
      %1506 = vmatprep.subr.mxu0 0.0
      %1507 = vmatpush1.msra.mxu0 0.0
      %1508 = vmatprep.subr.mxu0 0.0
      %1509 = vmatpush1.msra.mxu0 0.0
      %1510 = vmatprep.subr.mxu0 0.0
      %1511 = vmatpush1.msra.mxu0 0.0
      %1512 = vmatprep.subr.mxu0 0.0
      %1513 = vmatpush1.msra.mxu0 0.0
      %1514 = vmatprep.subr.mxu0 0.0
      %1515 = vmatpush1.msra.mxu0 0.0
      %1516 = vmatprep.subr.mxu0 0.0
      %1517 = vmatpush1.msra.mxu0 0.0
      %1518 = vmatprep.subr.mxu0 0.0
      %1519 = vmatpush1.msra.mxu0 0.0
      %1520 = vmatprep.subr.mxu0 0.0
      %1521 = vmatpush1.msra.mxu0 0.0
      %1522 = vmatprep.subr.mxu0 0.0
      %1523 = vmatpush1.msra.mxu0 0.0
      %1524 = vmatprep.subr.mxu0 0.0
      %1525 = vmatpush1.msra.mxu0 0.0
      %1526 = vmatprep.subr.mxu0 0.0
      %1527 = vmatpush1.msra.mxu0 0.0
      %1528 = vmatprep.subr.mxu0 0.0
      %1529 = vmatpush1.msra.mxu0 0.0
      %1530 = vmatprep.subr.mxu0 0.0
      %1531 = vmatpush1.msra.mxu0 0.0
      %1532 = vmatprep.subr.mxu0 0.0
      %1533 = vmatpush1.msra.mxu0 0.0
      %1534 = vmatprep.subr.mxu0 0.0
      %1535 = vmatpush1.msra.mxu0 0.0
      %1536 = vmatprep.subr.mxu0 0.0
      %1537 = vmatpush1.msra.mxu0 0.0
      %1538 = vmatprep.subr.mxu0 0.0
      %1539 = vmatpush1.msra.mxu0 0.0
      %1540 = vmatprep.mubr.f32.mxu0 0.0
      %v1541 = vand.u32 %v437, 4294901760
      %v1542 = vsub.f32 %v437, %v1541
      %v1543 = vand.u32 %v1542, 4294901760
      %1544 = vmatmul.mubr.f32.gmra.mrb[0].mxu0 %v1543
      %v1545 = vpop.f32.mrb[0].mxu0
      %v1546 = vadd.f32 %v1255, %v1545
      %v1547 = vpop.f32.mrb[0].mxu0
      %1548 = vmatprep.mubr.f32.mxu0 0.0
      %v1549 = vand.u32 %v440, 4294901760
      %v1550 = vsub.f32 %v440, %v1549
      %v1551 = vand.u32 %v1550, 4294901760
      %1552 = vmatmul.mubr.f32.gmra.mrb[0].mxu0 %v1551
      %v1553 = vpop.f32.mrb[0].mxu0
      %v1554 = vadd.f32 %v1262, %v1553
      %v1555 = vpop.f32.mrb[0].mxu0
      %1556 = vmatprep.mubr.f32.mxu0 0.0
      %v1557 = vand.u32 %v443, 4294901760
      %v1558 = vsub.f32 %v443, %v1557
      %v1559 = vand.u32 %v1558, 4294901760
      %1560 = vmatmul.mubr.f32.gmra.mrb[0].mxu0 %v1559
      %v1561 = vpop.f32.mrb[0].mxu0
      %v1562 = vadd.f32 %v1269, %v1561
      %v1563 = vpop.f32.mrb[0].mxu0
      %1564 = vmatprep.mubr.f32.mxu0 0.0
      %v1565 = vand.u32 %v446, 4294901760
      %v1566 = vsub.f32 %v446, %v1565
      %v1567 = vand.u32 %v1566, 4294901760
      %1568 = vmatmul.mubr.f32.gmra.mrb[0].mxu0 %v1567
      %v1569 = vpop.f32.mrb[0].mxu0
      %v1570 = vadd.f32 %v1276, %v1569
      %v1571 = vpop.f32.mrb[0].mxu0
      %1572 = vmatprep.mubr.f32.mxu0 0.0
      %v1573 = vand.u32 %v449, 4294901760
      %v1574 = vsub.f32 %v449, %v1573
      %v1575 = vand.u32 %v1574, 4294901760
      %1576 = vmatmul.mubr.f32.gmra.mrb[0].mxu0 %v1575
      %v1577 = vpop.f32.mrb[0].mxu0
      %v1578 = vadd.f32 %v1283, %v1577
      %v1579 = vpop.f32.mrb[0].mxu0
      %1580 = vmatprep.mubr.f32.mxu0 0.0
      %v1581 = vand.u32 %v452, 4294901760
      %v1582 = vsub.f32 %v452, %v1581
      %v1583 = vand.u32 %v1582, 4294901760
      %1584 = vmatmul.mubr.f32.gmra.mrb[0].mxu0 %v1583
      %v1585 = vpop.f32.mrb[0].mxu0
      %v1586 = vadd.f32 %v1290, %v1585
      %v1587 = vpop.f32.mrb[0].mxu0
      %1588 = vmatprep.mubr.f32.mxu0 0.0
      %v1589 = vand.u32 %v455, 4294901760
      %v1590 = vsub.f32 %v455, %v1589
      %v1591 = vand.u32 %v1590, 4294901760
      %1592 = vmatmul.mubr.f32.gmra.mrb[0].mxu0 %v1591
      %v1593 = vpop.f32.mrb[0].mxu0
      %v1594 = vadd.f32 %v1297, %v1593
      %v1595 = vpop.f32.mrb[0].mxu0
      %1596 = vmatprep.mubr.f32.mxu0 0.0
      %v1597 = vand.u32 %v458, 4294901760
      %v1598 = vsub.f32 %v458, %v1597
      %v1599 = vand.u32 %v1598, 4294901760
      %1600 = vmatmul.mubr.f32.gmra.mrb[0].mxu0 %v1599
      %v1601 = vpop.f32.mrb[0].mxu0
      %v1602 = vadd.f32 %v1304, %v1601
      %v1603 = vpop.f32.mrb[0].mxu0
      %1604 = vmatprep.mubr.f32.mxu0 0.0
      %v1605 = vand.u32 %v461, 4294901760
      %v1606 = vsub.f32 %v461, %v1605
      %v1607 = vand.u32 %v1606, 4294901760
      %1608 = vmatmul.mubr.f32.gmra.mrb[0].mxu0 %v1607
      %v1609 = vpop.f32.mrb[0].mxu0
      %v1610 = vadd.f32 %v1311, %v1609
      %v1611 = vpop.f32.mrb[0].mxu0
      %1612 = vmatprep.mubr.f32.mxu0 0.0
      %v1613 = vand.u32 %v464, 4294901760
      %v1614 = vsub.f32 %v464, %v1613
      %v1615 = vand.u32 %v1614, 4294901760
      %1616 = vmatmul.mubr.f32.gmra.mrb[0].mxu0 %v1615
      %v1617 = vpop.f32.mrb[0].mxu0
      %v1618 = vadd.f32 %v1318, %v1617
      %v1619 = vpop.f32.mrb[0].mxu0
      %1620 = vmatprep.mubr.f32.mxu0 0.0
      %v1621 = vand.u32 %v467, 4294901760
      %v1622 = vsub.f32 %v467, %v1621
      %v1623 = vand.u32 %v1622, 4294901760
      %1624 = vmatmul.mubr.f32.gmra.mrb[0].mxu0 %v1623
      %v1625 = vpop.f32.mrb[0].mxu0
      %v1626 = vadd.f32 %v1325, %v1625
      %v1627 = vpop.f32.mrb[0].mxu0
      %1628 = vmatprep.mubr.f32.mxu0 0.0
      %v1629 = vand.u32 %v470, 4294901760
      %v1630 = vsub.f32 %v470, %v1629
      %v1631 = vand.u32 %v1630, 4294901760
      %1632 = vmatmul.mubr.f32.gmra.mrb[0].mxu0 %v1631
      %v1633 = vpop.f32.mrb[0].mxu0
      %v1634 = vadd.f32 %v1332, %v1633
      %v1635 = vpop.f32.mrb[0].mxu0
      %1636 = vmatprep.mubr.f32.mxu0 0.0
      %v1637 = vand.u32 %v473, 4294901760
      %v1638 = vsub.f32 %v473, %v1637
      %v1639 = vand.u32 %v1638, 4294901760
      %1640 = vmatmul.mubr.f32.gmra.mrb[0].mxu0 %v1639
      %v1641 = vpop.f32.mrb[0].mxu0
      %v1642 = vadd.f32 %v1339, %v1641
      %v1643 = vpop.f32.mrb[0].mxu0
      %1644 = vmatprep.mubr.f32.mxu0 0.0
      %v1645 = vand.u32 %v476, 4294901760
      %v1646 = vsub.f32 %v476, %v1645
      %v1647 = vand.u32 %v1646, 4294901760
      %1648 = vmatmul.mubr.f32.gmra.mrb[0].mxu0 %v1647
      %v1649 = vpop.f32.mrb[0].mxu0
      %v1650 = vadd.f32 %v1346, %v1649
      %v1651 = vpop.f32.mrb[0].mxu0
      %1652 = vmatprep.mubr.f32.mxu0 0.0
      %v1653 = vand.u32 %v479, 4294901760
      %v1654 = vsub.f32 %v479, %v1653
      %v1655 = vand.u32 %v1654, 4294901760
      %1656 = vmatmul.mubr.f32.gmra.mrb[0].mxu0 %v1655
      %v1657 = vpop.f32.mrb[0].mxu0
      %v1658 = vadd.f32 %v1353, %v1657
      %v1659 = vpop.f32.mrb[0].mxu0
      %1660 = vmatprep.mubr.f32.mxu0 0.0
      %v1661 = vand.u32 %v482, 4294901760
      %v1662 = vsub.f32 %v482, %v1661
      %v1663 = vand.u32 %v1662, 4294901760
      %1664 = vmatmul.mubr.f32.gmra.mrb[0].mxu0 %v1663
      %v1665 = vpop.f32.mrb[0].mxu0
      %v1666 = vadd.f32 %v1360, %v1665
      %v1667 = vpop.f32.mrb[0].mxu0
      %1668 = vmatprep.mubr.f32.mxu0 0.0
      %v1669 = vand.u32 %v485, 4294901760
      %v1670 = vsub.f32 %v485, %v1669
      %v1671 = vand.u32 %v1670, 4294901760
      %1672 = vmatmul.mubr.f32.gmra.mrb[0].mxu0 %v1671
      %v1673 = vpop.f32.mrb[0].mxu0
      %v1674 = vadd.f32 %v1367, %v1673
      %v1675 = vpop.f32.mrb[0].mxu0
      %1676 = vmatprep.mubr.f32.mxu0 0.0
      %v1677 = vand.u32 %v488, 4294901760
      %v1678 = vsub.f32 %v488, %v1677
      %v1679 = vand.u32 %v1678, 4294901760
      %1680 = vmatmul.mubr.f32.gmra.mrb[0].mxu0 %v1679
      %v1681 = vpop.f32.mrb[0].mxu0
      %v1682 = vadd.f32 %v1374, %v1681
      %v1683 = vpop.f32.mrb[0].mxu0
      %1684 = vmatprep.mubr.f32.mxu0 0.0
      %v1685 = vand.u32 %v491, 4294901760
      %v1686 = vsub.f32 %v491, %v1685
      %v1687 = vand.u32 %v1686, 4294901760
      %1688 = vmatmul.mubr.f32.gmra.mrb[0].mxu0 %v1687
      %v1689 = vpop.f32.mrb[0].mxu0
      %v1690 = vadd.f32 %v1381, %v1689
      %v1691 = vpop.f32.mrb[0].mxu0
      %1692 = vmatprep.mubr.f32.mxu0 0.0
      %v1693 = vand.u32 %v494, 4294901760
      %v1694 = vsub.f32 %v494, %v1693
      %v1695 = vand.u32 %v1694, 4294901760
      %1696 = vmatmul.mubr.f32.gmra.mrb[0].mxu0 %v1695
      %v1697 = vpop.f32.mrb[0].mxu0
      %v1698 = vadd.f32 %v1388, %v1697
      %v1699 = vpop.f32.mrb[0].mxu0
      %1700 = vmatprep.mubr.f32.mxu0 0.0
      %v1701 = vand.u32 %v497, 4294901760
      %v1702 = vsub.f32 %v497, %v1701
      %v1703 = vand.u32 %v1702, 4294901760
      %1704 = vmatmul.mubr.f32.gmra.mrb[0].mxu0 %v1703
      %v1705 = vpop.f32.mrb[0].mxu0
      %v1706 = vadd.f32 %v1395, %v1705
      %v1707 = vpop.f32.mrb[0].mxu0
      %1708 = vmatprep.mubr.f32.mxu0 0.0
      %v1709 = vand.u32 %v500, 4294901760
      %v1710 = vsub.f32 %v500, %v1709
      %v1711 = vand.u32 %v1710, 4294901760
      %1712 = vmatmul.mubr.f32.gmra.mrb[0].mxu0 %v1711
      %v1713 = vpop.f32.mrb[0].mxu0
      %v1714 = vadd.f32 %v1402, %v1713
      %v1715 = vpop.f32.mrb[0].mxu0
      %1716 = vmatprep.mubr.f32.mxu0 0.0
      %v1717 = vand.u32 %v503, 4294901760
      %v1718 = vsub.f32 %v503, %v1717
      %v1719 = vand.u32 %v1718, 4294901760
      %1720 = vmatmul.mubr.f32.gmra.mrb[0].mxu0 %v1719
      %v1721 = vpop.f32.mrb[0].mxu0
      %v1722 = vadd.f32 %v1409, %v1721
      %v1723 = vpop.f32.mrb[0].mxu0
      %1724 = vmatprep.mubr.f32.mxu0 0.0
      %v1725 = vand.u32 %v506, 4294901760
      %v1726 = vsub.f32 %v506, %v1725
      %v1727 = vand.u32 %v1726, 4294901760
      %1728 = vmatmul.mubr.f32.gmra.mrb[0].mxu0 %v1727
      %v1729 = vpop.f32.mrb[0].mxu0
      %v1730 = vadd.f32 %v1416, %v1729
      %v1731 = vpop.f32.mrb[0].mxu0
      %1732 = vmatprep.mubr.f32.mxu0 0.0
      %v1733 = vand.u32 %v509, 4294901760
      %v1734 = vsub.f32 %v509, %v1733
      %v1735 = vand.u32 %v1734, 4294901760
      %1736 = vmatmul.mubr.f32.gmra.mrb[0].mxu0 %v1735
      %v1737 = vpop.f32.mrb[0].mxu0
      %v1738 = vadd.f32 %v1423, %v1737
      %v1739 = vpop.f32.mrb[0].mxu0
      %1740 = vmatprep.mubr.f32.mxu0 0.0
      %v1741 = vand.u32 %v512, 4294901760
      %v1742 = vsub.f32 %v512, %v1741
      %v1743 = vand.u32 %v1742, 4294901760
      %1744 = vmatmul.mubr.f32.gmra.mrb[0].mxu0 %v1743
      %v1745 = vpop.f32.mrb[0].mxu0
      %v1746 = vadd.f32 %v1430, %v1745
      %v1747 = vpop.f32.mrb[0].mxu0
      %1748 = vmatprep.mubr.f32.mxu0 0.0
      %v1749 = vand.u32 %v515, 4294901760
      %v1750 = vsub.f32 %v515, %v1749
      %v1751 = vand.u32 %v1750, 4294901760
      %1752 = vmatmul.mubr.f32.gmra.mrb[0].mxu0 %v1751
      %v1753 = vpop.f32.mrb[0].mxu0
      %v1754 = vadd.f32 %v1437, %v1753
      %v1755 = vpop.f32.mrb[0].mxu0
      %1756 = vmatprep.mubr.f32.mxu0 0.0
      %v1757 = vand.u32 %v518, 4294901760
      %v1758 = vsub.f32 %v518, %v1757
      %v1759 = vand.u32 %v1758, 4294901760
      %1760 = vmatmul.mubr.f32.gmra.mrb[0].mxu0 %v1759
      %v1761 = vpop.f32.mrb[0].mxu0
      %v1762 = vadd.f32 %v1444, %v1761
      %v1763 = vpop.f32.mrb[0].mxu0
      %1764 = vmatprep.mubr.f32.mxu0 0.0
      %v1765 = vand.u32 %v521, 4294901760
      %v1766 = vsub.f32 %v521, %v1765
      %v1767 = vand.u32 %v1766, 4294901760
      %1768 = vmatmul.mubr.f32.gmra.mrb[0].mxu0 %v1767
      %v1769 = vpop.f32.mrb[0].mxu0
      %v1770 = vadd.f32 %v1451, %v1769
      %v1771 = vpop.f32.mrb[0].mxu0
      %1772 = vmatprep.mubr.f32.mxu0 0.0
      %v1773 = vand.u32 %v524, 4294901760
      %v1774 = vsub.f32 %v524, %v1773
      %v1775 = vand.u32 %v1774, 4294901760
      %1776 = vmatmul.mubr.f32.gmra.mrb[0].mxu0 %v1775
      %v1777 = vpop.f32.mrb[0].mxu0
      %v1778 = vadd.f32 %v1458, %v1777
      %v1779 = vpop.f32.mrb[0].mxu0
      %1780 = vmatprep.mubr.f32.mxu0 0.0
      %v1781 = vand.u32 %v527, 4294901760
      %v1782 = vsub.f32 %v527, %v1781
      %v1783 = vand.u32 %v1782, 4294901760
      %1784 = vmatmul.mubr.f32.gmra.mrb[0].mxu0 %v1783
      %v1785 = vpop.f32.mrb[0].mxu0
      %v1786 = vadd.f32 %v1465, %v1785
      %v1787 = vpop.f32.mrb[0].mxu0
      %1788 = vmatprep.mubr.f32.mxu0 0.0
      %v1789 = vand.u32 %v530, 4294901760
      %v1790 = vsub.f32 %v530, %v1789
      %v1791 = vand.u32 %v1790, 4294901760
      %1792 = vmatmul.mubr.f32.gmra.mrb[0].mxu0 %v1791
      %v1793 = vpop.f32.mrb[0].mxu0
      %v1794 = vadd.f32 %v1472, %v1793
      %v1795 = vpop.f32.mrb[0].mxu0
      %1796 = vdwg.mxu0
      %1797 = vmatprep.subr.mxu0 0.0
      %v1798 = vand.u32 %v534, 4294901760
      %v1799 = vsub.f32 %v534, %v1798
      %v1800 = vand.u32 %v1799, 4294901760
      %1801 = vmatpush1.msra.mxu0 %v1800
      %1802 = vmatprep.subr.mxu0 0.0
      %1803 = vmatpush1.msra.mxu0 0.0
      %1804 = vmatprep.subr.mxu0 0.0
      %1805 = vmatpush1.msra.mxu0 0.0
      %1806 = vmatprep.subr.mxu0 0.0
      %1807 = vmatpush1.msra.mxu0 0.0
      %1808 = vmatprep.subr.mxu0 0.0
      %1809 = vmatpush1.msra.mxu0 0.0
      %1810 = vmatprep.subr.mxu0 0.0
      %1811 = vmatpush1.msra.mxu0 0.0
      %1812 = vmatprep.subr.mxu0 0.0
      %1813 = vmatpush1.msra.mxu0 0.0
      %1814 = vmatprep.subr.mxu0 0.0
      %1815 = vmatpush1.msra.mxu0 0.0
      %1816 = vmatprep.subr.mxu0 0.0
      %1817 = vmatpush1.msra.mxu0 0.0
      %1818 = vmatprep.subr.mxu0 0.0
      %1819 = vmatpush1.msra.mxu0 0.0
      %1820 = vmatprep.subr.mxu0 0.0
      %1821 = vmatpush1.msra.mxu0 0.0
      %1822 = vmatprep.subr.mxu0 0.0
      %1823 = vmatpush1.msra.mxu0 0.0
      %1824 = vmatprep.subr.mxu0 0.0
      %1825 = vmatpush1.msra.mxu0 0.0
      %1826 = vmatprep.subr.mxu0 0.0
      %1827 = vmatpush1.msra.mxu0 0.0
      %1828 = vmatprep.subr.mxu0 0.0
      %1829 = vmatpush1.msra.mxu0 0.0
      %1830 = vmatprep.subr.mxu0 0.0
      %1831 = vmatpush1.msra.mxu0 0.0
      %1832 = vmatprep.subr.mxu0 0.0
      %1833 = vmatpush1.msra.mxu0 0.0
      %1834 = vmatprep.subr.mxu0 0.0
      %1835 = vmatpush1.msra.mxu0 0.0
      %1836 = vmatprep.subr.mxu0 0.0
      %1837 = vmatpush1.msra.mxu0 0.0
      %1838 = vmatprep.subr.mxu0 0.0
      %1839 = vmatpush1.msra.mxu0 0.0
      %1840 = vmatprep.subr.mxu0 0.0
      %1841 = vmatpush1.msra.mxu0 0.0
      %1842 = vmatprep.subr.mxu0 0.0
      %1843 = vmatpush1.msra.mxu0 0.0
      %1844 = vmatprep.subr.mxu0 0.0
      %1845 = vmatpush1.msra.mxu0 0.0
      %1846 = vmatprep.subr.mxu0 0.0
      %1847 = vmatpush1.msra.mxu0 0.0
      %1848 = vmatprep.subr.mxu0 0.0
      %1849 = vmatpush1.msra.mxu0 0.0
      %1850 = vmatprep.subr.mxu0 0.0
      %1851 = vmatpush1.msra.mxu0 0.0
      %1852 = vmatprep.subr.mxu0 0.0
      %1853 = vmatpush1.msra.mxu0 0.0
      %1854 = vmatprep.subr.mxu0 0.0
      %1855 = vmatpush1.msra.mxu0 0.0
      %1856 = vmatprep.subr.mxu0 0.0
      %1857 = vmatpush1.msra.mxu0 0.0
      %1858 = vmatprep.subr.mxu0 0.0
      %1859 = vmatpush1.msra.mxu0 0.0
      %1860 = vmatprep.subr.mxu0 0.0
      %1861 = vmatpush1.msra.mxu0 0.0
      %1862 = vmatprep.subr.mxu0 0.0
      %1863 = vmatpush1.msra.mxu0 0.0
      %1864 = vmatprep.mubr.f32.mxu0 0.0
      %v1865 = vand.u32 %v437, 4294901760
      %1866 = vmatmul.mubr.f32.gmra.mrb[0].mxu0 %v1865
      %v1867 = vpop.f32.mrb[0].mxu0
      %v1868 = vadd.f32 %v1546, %v1867
      %v1869 = vpop.f32.mrb[0].mxu0
      %1870 = vmatprep.mubr.f32.mxu0 0.0
      %v1871 = vand.u32 %v440, 4294901760
      %1872 = vmatmul.mubr.f32.gmra.mrb[0].mxu0 %v1871
      %v1873 = vpop.f32.mrb[0].mxu0
      %v1874 = vadd.f32 %v1554, %v1873
      %v1875 = vpop.f32.mrb[0].mxu0
      %1876 = vmatprep.mubr.f32.mxu0 0.0
      %v1877 = vand.u32 %v443, 4294901760
      %1878 = vmatmul.mubr.f32.gmra.mrb[0].mxu0 %v1877
      %v1879 = vpop.f32.mrb[0].mxu0
      %v1880 = vadd.f32 %v1562, %v1879
      %v1881 = vpop.f32.mrb[0].mxu0
      %1882 = vmatprep.mubr.f32.mxu0 0.0
      %v1883 = vand.u32 %v446, 4294901760
      %1884 = vmatmul.mubr.f32.gmra.mrb[0].mxu0 %v1883
      %v1885 = vpop.f32.mrb[0].mxu0
      %v1886 = vadd.f32 %v1570, %v1885
      %v1887 = vpop.f32.mrb[0].mxu0
      %1888 = vmatprep.mubr.f32.mxu0 0.0
      %v1889 = vand.u32 %v449, 4294901760
      %1890 = vmatmul.mubr.f32.gmra.mrb[0].mxu0 %v1889
      %v1891 = vpop.f32.mrb[0].mxu0
      %v1892 = vadd.f32 %v1578, %v1891
      %v1893 = vpop.f32.mrb[0].mxu0
      %1894 = vmatprep.mubr.f32.mxu0 0.0
      %v1895 = vand.u32 %v452, 4294901760
      %1896 = vmatmul.mubr.f32.gmra.mrb[0].mxu0 %v1895
      %v1897 = vpop.f32.mrb[0].mxu0
      %v1898 = vadd.f32 %v1586, %v1897
      %v1899 = vpop.f32.mrb[0].mxu0
      %1900 = vmatprep.mubr.f32.mxu0 0.0
      %v1901 = vand.u32 %v455, 4294901760
      %1902 = vmatmul.mubr.f32.gmra.mrb[0].mxu0 %v1901
      %v1903 = vpop.f32.mrb[0].mxu0
      %v1904 = vadd.f32 %v1594, %v1903
      %v1905 = vpop.f32.mrb[0].mxu0
      %1906 = vmatprep.mubr.f32.mxu0 0.0
      %v1907 = vand.u32 %v458, 4294901760
      %1908 = vmatmul.mubr.f32.gmra.mrb[0].mxu0 %v1907
      %v1909 = vpop.f32.mrb[0].mxu0
      %v1910 = vadd.f32 %v1602, %v1909
      %v1911 = vpop.f32.mrb[0].mxu0
      %1912 = vmatprep.mubr.f32.mxu0 0.0
      %v1913 = vand.u32 %v461, 4294901760
      %1914 = vmatmul.mubr.f32.gmra.mrb[0].mxu0 %v1913
      %v1915 = vpop.f32.mrb[0].mxu0
      %v1916 = vadd.f32 %v1610, %v1915
      %v1917 = vpop.f32.mrb[0].mxu0
      %1918 = vmatprep.mubr.f32.mxu0 0.0
      %v1919 = vand.u32 %v464, 4294901760
      %1920 = vmatmul.mubr.f32.gmra.mrb[0].mxu0 %v1919
      %v1921 = vpop.f32.mrb[0].mxu0
      %v1922 = vadd.f32 %v1618, %v1921
      %v1923 = vpop.f32.mrb[0].mxu0
      %1924 = vmatprep.mubr.f32.mxu0 0.0
      %v1925 = vand.u32 %v467, 4294901760
      %1926 = vmatmul.mubr.f32.gmra.mrb[0].mxu0 %v1925
      %v1927 = vpop.f32.mrb[0].mxu0
      %v1928 = vadd.f32 %v1626, %v1927
      %v1929 = vpop.f32.mrb[0].mxu0
      %1930 = vmatprep.mubr.f32.mxu0 0.0
      %v1931 = vand.u32 %v470, 4294901760
      %1932 = vmatmul.mubr.f32.gmra.mrb[0].mxu0 %v1931
      %v1933 = vpop.f32.mrb[0].mxu0
      %v1934 = vadd.f32 %v1634, %v1933
      %v1935 = vpop.f32.mrb[0].mxu0
      %1936 = vmatprep.mubr.f32.mxu0 0.0
      %v1937 = vand.u32 %v473, 4294901760
      %1938 = vmatmul.mubr.f32.gmra.mrb[0].mxu0 %v1937
      %v1939 = vpop.f32.mrb[0].mxu0
      %v1940 = vadd.f32 %v1642, %v1939
      %v1941 = vpop.f32.mrb[0].mxu0
      %1942 = vmatprep.mubr.f32.mxu0 0.0
      %v1943 = vand.u32 %v476, 4294901760
      %1944 = vmatmul.mubr.f32.gmra.mrb[0].mxu0 %v1943
      %v1945 = vpop.f32.mrb[0].mxu0
      %v1946 = vadd.f32 %v1650, %v1945
      %v1947 = vpop.f32.mrb[0].mxu0
      %1948 = vmatprep.mubr.f32.mxu0 0.0
      %v1949 = vand.u32 %v479, 4294901760
      %1950 = vmatmul.mubr.f32.gmra.mrb[0].mxu0 %v1949
      %v1951 = vpop.f32.mrb[0].mxu0
      %v1952 = vadd.f32 %v1658, %v1951
      %v1953 = vpop.f32.mrb[0].mxu0
      %1954 = vmatprep.mubr.f32.mxu0 0.0
      %v1955 = vand.u32 %v482, 4294901760
      %1956 = vmatmul.mubr.f32.gmra.mrb[0].mxu0 %v1955
      %v1957 = vpop.f32.mrb[0].mxu0
      %v1958 = vadd.f32 %v1666, %v1957
      %v1959 = vpop.f32.mrb[0].mxu0
      %1960 = vmatprep.mubr.f32.mxu0 0.0
      %v1961 = vand.u32 %v485, 4294901760
      %1962 = vmatmul.mubr.f32.gmra.mrb[0].mxu0 %v1961
      %v1963 = vpop.f32.mrb[0].mxu0
      %v1964 = vadd.f32 %v1674, %v1963
      %v1965 = vpop.f32.mrb[0].mxu0
      %1966 = vmatprep.mubr.f32.mxu0 0.0
      %v1967 = vand.u32 %v488, 4294901760
      %1968 = vmatmul.mubr.f32.gmra.mrb[0].mxu0 %v1967
      %v1969 = vpop.f32.mrb[0].mxu0
      %v1970 = vadd.f32 %v1682, %v1969
      %v1971 = vpop.f32.mrb[0].mxu0
      %1972 = vmatprep.mubr.f32.mxu0 0.0
      %v1973 = vand.u32 %v491, 4294901760
      %1974 = vmatmul.mubr.f32.gmra.mrb[0].mxu0 %v1973
      %v1975 = vpop.f32.mrb[0].mxu0
      %v1976 = vadd.f32 %v1690, %v1975
      %v1977 = vpop.f32.mrb[0].mxu0
      %1978 = vmatprep.mubr.f32.mxu0 0.0
      %v1979 = vand.u32 %v494, 4294901760
      %1980 = vmatmul.mubr.f32.gmra.mrb[0].mxu0 %v1979
      %v1981 = vpop.f32.mrb[0].mxu0
      %v1982 = vadd.f32 %v1698, %v1981
      %v1983 = vpop.f32.mrb[0].mxu0
      %1984 = vmatprep.mubr.f32.mxu0 0.0
      %v1985 = vand.u32 %v497, 4294901760
      %1986 = vmatmul.mubr.f32.gmra.mrb[0].mxu0 %v1985
      %v1987 = vpop.f32.mrb[0].mxu0
      %v1988 = vadd.f32 %v1706, %v1987
      %v1989 = vpop.f32.mrb[0].mxu0
      %1990 = vmatprep.mubr.f32.mxu0 0.0
      %v1991 = vand.u32 %v500, 4294901760
      %1992 = vmatmul.mubr.f32.gmra.mrb[0].mxu0 %v1991
      %v1993 = vpop.f32.mrb[0].mxu0
      %v1994 = vadd.f32 %v1714, %v1993
      %v1995 = vpop.f32.mrb[0].mxu0
      %1996 = vmatprep.mubr.f32.mxu0 0.0
      %v1997 = vand.u32 %v503, 4294901760
      %1998 = vmatmul.mubr.f32.gmra.mrb[0].mxu0 %v1997
      %v1999 = vpop.f32.mrb[0].mxu0
      %v2000 = vadd.f32 %v1722, %v1999
      %v2001 = vpop.f32.mrb[0].mxu0
      %2002 = vmatprep.mubr.f32.mxu0 0.0
      %v2003 = vand.u32 %v506, 4294901760
      %2004 = vmatmul.mubr.f32.gmra.mrb[0].mxu0 %v2003
      %v2005 = vpop.f32.mrb[0].mxu0
      %v2006 = vadd.f32 %v1730, %v2005
      %v2007 = vpop.f32.mrb[0].mxu0
      %2008 = vmatprep.mubr.f32.mxu0 0.0
      %v2009 = vand.u32 %v509, 4294901760
      %2010 = vmatmul.mubr.f32.gmra.mrb[0].mxu0 %v2009
      %v2011 = vpop.f32.mrb[0].mxu0
      %v2012 = vadd.f32 %v1738, %v2011
      %v2013 = vpop.f32.mrb[0].mxu0
      %2014 = vmatprep.mubr.f32.mxu0 0.0
      %v2015 = vand.u32 %v512, 4294901760
      %2016 = vmatmul.mubr.f32.gmra.mrb[0].mxu0 %v2015
      %v2017 = vpop.f32.mrb[0].mxu0
      %v2018 = vadd.f32 %v1746, %v2017
      %v2019 = vpop.f32.mrb[0].mxu0
      %2020 = vmatprep.mubr.f32.mxu0 0.0
      %v2021 = vand.u32 %v515, 4294901760
      %2022 = vmatmul.mubr.f32.gmra.mrb[0].mxu0 %v2021
      %v2023 = vpop.f32.mrb[0].mxu0
      %v2024 = vadd.f32 %v1754, %v2023
      %v2025 = vpop.f32.mrb[0].mxu0
      %2026 = vmatprep.mubr.f32.mxu0 0.0
      %v2027 = vand.u32 %v518, 4294901760
      %2028 = vmatmul.mubr.f32.gmra.mrb[0].mxu0 %v2027
      %v2029 = vpop.f32.mrb[0].mxu0
      %v2030 = vadd.f32 %v1762, %v2029
      %v2031 = vpop.f32.mrb[0].mxu0
      %2032 = vmatprep.mubr.f32.mxu0 0.0
      %v2033 = vand.u32 %v521, 4294901760
      %2034 = vmatmul.mubr.f32.gmra.mrb[0].mxu0 %v2033
      %v2035 = vpop.f32.mrb[0].mxu0
      %v2036 = vadd.f32 %v1770, %v2035
      %v2037 = vpop.f32.mrb[0].mxu0
      %2038 = vmatprep.mubr.f32.mxu0 0.0
      %v2039 = vand.u32 %v524, 4294901760
      %2040 = vmatmul.mubr.f32.gmra.mrb[0].mxu0 %v2039
      %v2041 = vpop.f32.mrb[0].mxu0
      %v2042 = vadd.f32 %v1778, %v2041
      %v2043 = vpop.f32.mrb[0].mxu0
      %2044 = vmatprep.mubr.f32.mxu0 0.0
      %v2045 = vand.u32 %v527, 4294901760
      %2046 = vmatmul.mubr.f32.gmra.mrb[0].mxu0 %v2045
      %v2047 = vpop.f32.mrb[0].mxu0
      %v2048 = vadd.f32 %v1786, %v2047
      %v2049 = vpop.f32.mrb[0].mxu0
      %2050 = vmatprep.mubr.f32.mxu0 0.0
      %v2051 = vand.u32 %v530, 4294901760
      %2052 = vmatmul.mubr.f32.gmra.mrb[0].mxu0 %v2051
      %v2053 = vpop.f32.mrb[0].mxu0
      %v2054 = vadd.f32 %v1794, %v2053
      %v2055 = vpop.f32.mrb[0].mxu0
      %2056 = vdwg.mxu0
      %2057 = vmatprep.subr.mxu0 0.0
      %v2058 = vand.u32 %v534, 4294901760
      %2059 = vmatpush1.msra.mxu0 %v2058
      %2060 = vmatprep.subr.mxu0 0.0
      %2061 = vmatpush1.msra.mxu0 0.0
      %2062 = vmatprep.subr.mxu0 0.0
      %2063 = vmatpush1.msra.mxu0 0.0
      %2064 = vmatprep.subr.mxu0 0.0
      %2065 = vmatpush1.msra.mxu0 0.0
      %2066 = vmatprep.subr.mxu0 0.0
      %2067 = vmatpush1.msra.mxu0 0.0
      %2068 = vmatprep.subr.mxu0 0.0
      %2069 = vmatpush1.msra.mxu0 0.0
      %2070 = vmatprep.subr.mxu0 0.0
      %2071 = vmatpush1.msra.mxu0 0.0
      %2072 = vmatprep.subr.mxu0 0.0
      %2073 = vmatpush1.msra.mxu0 0.0
      %2074 = vmatprep.subr.mxu0 0.0
      %2075 = vmatpush1.msra.mxu0 0.0
      %2076 = vmatprep.subr.mxu0 0.0
      %2077 = vmatpush1.msra.mxu0 0.0
      %2078 = vmatprep.subr.mxu0 0.0
      %2079 = vmatpush1.msra.mxu0 0.0
      %2080 = vmatprep.subr.mxu0 0.0
      %2081 = vmatpush1.msra.mxu0 0.0
      %2082 = vmatprep.subr.mxu0 0.0
      %2083 = vmatpush1.msra.mxu0 0.0
      %2084 = vmatprep.subr.mxu0 0.0
      %2085 = vmatpush1.msra.mxu0 0.0
      %2086 = vmatprep.subr.mxu0 0.0
      %2087 = vmatpush1.msra.mxu0 0.0
      %2088 = vmatprep.subr.mxu0 0.0
      %2089 = vmatpush1.msra.mxu0 0.0
      %2090 = vmatprep.subr.mxu0 0.0
      %2091 = vmatpush1.msra.mxu0 0.0
      %2092 = vmatprep.subr.mxu0 0.0
      %2093 = vmatpush1.msra.mxu0 0.0
      %2094 = vmatprep.subr.mxu0 0.0
      %2095 = vmatpush1.msra.mxu0 0.0
      %2096 = vmatprep.subr.mxu0 0.0
      %2097 = vmatpush1.msra.mxu0 0.0
      %2098 = vmatprep.subr.mxu0 0.0
      %2099 = vmatpush1.msra.mxu0 0.0
      %2100 = vmatprep.subr.mxu0 0.0
      %2101 = vmatpush1.msra.mxu0 0.0
      %2102 = vmatprep.subr.mxu0 0.0
      %2103 = vmatpush1.msra.mxu0 0.0
      %2104 = vmatprep.subr.mxu0 0.0
      %2105 = vmatpush1.msra.mxu0 0.0
      %2106 = vmatprep.subr.mxu0 0.0
      %2107 = vmatpush1.msra.mxu0 0.0
      %2108 = vmatprep.subr.mxu0 0.0
      %2109 = vmatpush1.msra.mxu0 0.0
      %2110 = vmatprep.subr.mxu0 0.0
      %2111 = vmatpush1.msra.mxu0 0.0
      %2112 = vmatprep.subr.mxu0 0.0
      %2113 = vmatpush1.msra.mxu0 0.0
      %2114 = vmatprep.subr.mxu0 0.0
      %2115 = vmatpush1.msra.mxu0 0.0
      %2116 = vmatprep.subr.mxu0 0.0
      %2117 = vmatpush1.msra.mxu0 0.0
      %2118 = vmatprep.subr.mxu0 0.0
      %2119 = vmatpush1.msra.mxu0 0.0
      %2120 = vmatprep.subr.mxu0 0.0
      %2121 = vmatpush1.msra.mxu0 0.0
      %2122 = vmatprep.mubr.f32.mxu0 0.0
      %v2123 = vand.u32 %v437, 4294901760
      %2124 = vmatmul.mubr.f32.gmra.mrb[0].mxu0 %v2123
      %v2125 = vpop.f32.mrb[0].mxu0
      %v2126 = vadd.f32 %v1868, %v2125
      %v2127 = vpop.f32.mrb[0].mxu0
      %2128 = vmatprep.mubr.f32.mxu0 0.0
      %v2129 = vand.u32 %v440, 4294901760
      %2130 = vmatmul.mubr.f32.gmra.mrb[0].mxu0 %v2129
      %v2131 = vpop.f32.mrb[0].mxu0
      %v2132 = vadd.f32 %v1874, %v2131
      %v2133 = vpop.f32.mrb[0].mxu0
      %2134 = vmatprep.mubr.f32.mxu0 0.0
      %v2135 = vand.u32 %v443, 4294901760
      %2136 = vmatmul.mubr.f32.gmra.mrb[0].mxu0 %v2135
      %v2137 = vpop.f32.mrb[0].mxu0
      %v2138 = vadd.f32 %v1880, %v2137
      %v2139 = vpop.f32.mrb[0].mxu0
      %2140 = vmatprep.mubr.f32.mxu0 0.0
      %v2141 = vand.u32 %v446, 4294901760
      %2142 = vmatmul.mubr.f32.gmra.mrb[0].mxu0 %v2141
      %v2143 = vpop.f32.mrb[0].mxu0
      %v2144 = vadd.f32 %v1886, %v2143
      %v2145 = vpop.f32.mrb[0].mxu0
      %2146 = vmatprep.mubr.f32.mxu0 0.0
      %v2147 = vand.u32 %v449, 4294901760
      %2148 = vmatmul.mubr.f32.gmra.mrb[0].mxu0 %v2147
      %v2149 = vpop.f32.mrb[0].mxu0
      %v2150 = vadd.f32 %v1892, %v2149
      %v2151 = vpop.f32.mrb[0].mxu0
      %2152 = vmatprep.mubr.f32.mxu0 0.0
      %v2153 = vand.u32 %v452, 4294901760
      %2154 = vmatmul.mubr.f32.gmra.mrb[0].mxu0 %v2153
      %v2155 = vpop.f32.mrb[0].mxu0
      %v2156 = vadd.f32 %v1898, %v2155
      %v2157 = vpop.f32.mrb[0].mxu0
      %2158 = vmatprep.mubr.f32.mxu0 0.0
      %v2159 = vand.u32 %v455, 4294901760
      %2160 = vmatmul.mubr.f32.gmra.mrb[0].mxu0 %v2159
      %v2161 = vpop.f32.mrb[0].mxu0
      %v2162 = vadd.f32 %v1904, %v2161
      %v2163 = vpop.f32.mrb[0].mxu0
      %2164 = vmatprep.mubr.f32.mxu0 0.0
      %v2165 = vand.u32 %v458, 4294901760
      %2166 = vmatmul.mubr.f32.gmra.mrb[0].mxu0 %v2165
      %v2167 = vpop.f32.mrb[0].mxu0
      %v2168 = vadd.f32 %v1910, %v2167
      %v2169 = vpop.f32.mrb[0].mxu0
      %2170 = vmatprep.mubr.f32.mxu0 0.0
      %v2171 = vand.u32 %v461, 4294901760
      %2172 = vmatmul.mubr.f32.gmra.mrb[0].mxu0 %v2171
      %v2173 = vpop.f32.mrb[0].mxu0
      %v2174 = vadd.f32 %v1916, %v2173
      %v2175 = vpop.f32.mrb[0].mxu0
      %2176 = vmatprep.mubr.f32.mxu0 0.0
      %v2177 = vand.u32 %v464, 4294901760
      %2178 = vmatmul.mubr.f32.gmra.mrb[0].mxu0 %v2177
      %v2179 = vpop.f32.mrb[0].mxu0
      %v2180 = vadd.f32 %v1922, %v2179
      %v2181 = vpop.f32.mrb[0].mxu0
      %2182 = vmatprep.mubr.f32.mxu0 0.0
      %v2183 = vand.u32 %v467, 4294901760
      %2184 = vmatmul.mubr.f32.gmra.mrb[0].mxu0 %v2183
      %v2185 = vpop.f32.mrb[0].mxu0
      %v2186 = vadd.f32 %v1928, %v2185
      %v2187 = vpop.f32.mrb[0].mxu0
      %2188 = vmatprep.mubr.f32.mxu0 0.0
      %v2189 = vand.u32 %v470, 4294901760
      %2190 = vmatmul.mubr.f32.gmra.mrb[0].mxu0 %v2189
      %v2191 = vpop.f32.mrb[0].mxu0
      %v2192 = vadd.f32 %v1934, %v2191
      %v2193 = vpop.f32.mrb[0].mxu0
      %2194 = vmatprep.mubr.f32.mxu0 0.0
      %v2195 = vand.u32 %v473, 4294901760
      %2196 = vmatmul.mubr.f32.gmra.mrb[0].mxu0 %v2195
      %v2197 = vpop.f32.mrb[0].mxu0
      %v2198 = vadd.f32 %v1940, %v2197
      %v2199 = vpop.f32.mrb[0].mxu0
      %2200 = vmatprep.mubr.f32.mxu0 0.0
      %v2201 = vand.u32 %v476, 4294901760
      %2202 = vmatmul.mubr.f32.gmra.mrb[0].mxu0 %v2201
      %v2203 = vpop.f32.mrb[0].mxu0
      %v2204 = vadd.f32 %v1946, %v2203
      %v2205 = vpop.f32.mrb[0].mxu0
      %2206 = vmatprep.mubr.f32.mxu0 0.0
      %v2207 = vand.u32 %v479, 4294901760
      %2208 = vmatmul.mubr.f32.gmra.mrb[0].mxu0 %v2207
      %v2209 = vpop.f32.mrb[0].mxu0
      %v2210 = vadd.f32 %v1952, %v2209
      %v2211 = vpop.f32.mrb[0].mxu0
      %2212 = vmatprep.mubr.f32.mxu0 0.0
      %v2213 = vand.u32 %v482, 4294901760
      %2214 = vmatmul.mubr.f32.gmra.mrb[0].mxu0 %v2213
      %v2215 = vpop.f32.mrb[0].mxu0
      %v2216 = vadd.f32 %v1958, %v2215
      %v2217 = vpop.f32.mrb[0].mxu0
      %2218 = vmatprep.mubr.f32.mxu0 0.0
      %v2219 = vand.u32 %v485, 4294901760
      %2220 = vmatmul.mubr.f32.gmra.mrb[0].mxu0 %v2219
      %v2221 = vpop.f32.mrb[0].mxu0
      %v2222 = vadd.f32 %v1964, %v2221
      %v2223 = vpop.f32.mrb[0].mxu0
      %2224 = vmatprep.mubr.f32.mxu0 0.0
      %v2225 = vand.u32 %v488, 4294901760
      %2226 = vmatmul.mubr.f32.gmra.mrb[0].mxu0 %v2225
      %v2227 = vpop.f32.mrb[0].mxu0
      %v2228 = vadd.f32 %v1970, %v2227
      %v2229 = vpop.f32.mrb[0].mxu0
      %2230 = vmatprep.mubr.f32.mxu0 0.0
      %v2231 = vand.u32 %v491, 4294901760
      %2232 = vmatmul.mubr.f32.gmra.mrb[0].mxu0 %v2231
      %v2233 = vpop.f32.mrb[0].mxu0
      %v2234 = vadd.f32 %v1976, %v2233
      %v2235 = vpop.f32.mrb[0].mxu0
      %2236 = vmatprep.mubr.f32.mxu0 0.0
      %v2237 = vand.u32 %v494, 4294901760
      %2238 = vmatmul.mubr.f32.gmra.mrb[0].mxu0 %v2237
      %v2239 = vpop.f32.mrb[0].mxu0
      %v2240 = vadd.f32 %v1982, %v2239
      %v2241 = vpop.f32.mrb[0].mxu0
      %2242 = vmatprep.mubr.f32.mxu0 0.0
      %v2243 = vand.u32 %v497, 4294901760
      %2244 = vmatmul.mubr.f32.gmra.mrb[0].mxu0 %v2243
      %v2245 = vpop.f32.mrb[0].mxu0
      %v2246 = vadd.f32 %v1988, %v2245
      %v2247 = vpop.f32.mrb[0].mxu0
      %2248 = vmatprep.mubr.f32.mxu0 0.0
      %v2249 = vand.u32 %v500, 4294901760
      %2250 = vmatmul.mubr.f32.gmra.mrb[0].mxu0 %v2249
      %v2251 = vpop.f32.mrb[0].mxu0
      %v2252 = vadd.f32 %v1994, %v2251
      %v2253 = vpop.f32.mrb[0].mxu0
      %2254 = vmatprep.mubr.f32.mxu0 0.0
      %v2255 = vand.u32 %v503, 4294901760
      %2256 = vmatmul.mubr.f32.gmra.mrb[0].mxu0 %v2255
      %v2257 = vpop.f32.mrb[0].mxu0
      %v2258 = vadd.f32 %v2000, %v2257
      %v2259 = vpop.f32.mrb[0].mxu0
      %2260 = vmatprep.mubr.f32.mxu0 0.0
      %v2261 = vand.u32 %v506, 4294901760
      %2262 = vmatmul.mubr.f32.gmra.mrb[0].mxu0 %v2261
      %v2263 = vpop.f32.mrb[0].mxu0
      %v2264 = vadd.f32 %v2006, %v2263
      %v2265 = vpop.f32.mrb[0].mxu0
      %2266 = vmatprep.mubr.f32.mxu0 0.0
      %v2267 = vand.u32 %v509, 4294901760
      %2268 = vmatmul.mubr.f32.gmra.mrb[0].mxu0 %v2267
      %v2269 = vpop.f32.mrb[0].mxu0
      %v2270 = vadd.f32 %v2012, %v2269
      %v2271 = vpop.f32.mrb[0].mxu0
      %2272 = vmatprep.mubr.f32.mxu0 0.0
      %v2273 = vand.u32 %v512, 4294901760
      %2274 = vmatmul.mubr.f32.gmra.mrb[0].mxu0 %v2273
      %v2275 = vpop.f32.mrb[0].mxu0
      %v2276 = vadd.f32 %v2018, %v2275
      %v2277 = vpop.f32.mrb[0].mxu0
      %2278 = vmatprep.mubr.f32.mxu0 0.0
      %v2279 = vand.u32 %v515, 4294901760
      %2280 = vmatmul.mubr.f32.gmra.mrb[0].mxu0 %v2279
      %v2281 = vpop.f32.mrb[0].mxu0
      %v2282 = vadd.f32 %v2024, %v2281
      %v2283 = vpop.f32.mrb[0].mxu0
      %2284 = vmatprep.mubr.f32.mxu0 0.0
      %v2285 = vand.u32 %v518, 4294901760
      %2286 = vmatmul.mubr.f32.gmra.mrb[0].mxu0 %v2285
      %v2287 = vpop.f32.mrb[0].mxu0
      %v2288 = vadd.f32 %v2030, %v2287
      %v2289 = vpop.f32.mrb[0].mxu0
      %2290 = vmatprep.mubr.f32.mxu0 0.0
      %v2291 = vand.u32 %v521, 4294901760
      %2292 = vmatmul.mubr.f32.gmra.mrb[0].mxu0 %v2291
      %v2293 = vpop.f32.mrb[0].mxu0
      %v2294 = vadd.f32 %v2036, %v2293
      %v2295 = vpop.f32.mrb[0].mxu0
      %2296 = vmatprep.mubr.f32.mxu0 0.0
      %v2297 = vand.u32 %v524, 4294901760
      %2298 = vmatmul.mubr.f32.gmra.mrb[0].mxu0 %v2297
      %v2299 = vpop.f32.mrb[0].mxu0
      %v2300 = vadd.f32 %v2042, %v2299
      %v2301 = vpop.f32.mrb[0].mxu0
      %2302 = vmatprep.mubr.f32.mxu0 0.0
      %v2303 = vand.u32 %v527, 4294901760
      %2304 = vmatmul.mubr.f32.gmra.mrb[0].mxu0 %v2303
      %v2305 = vpop.f32.mrb[0].mxu0
      %v2306 = vadd.f32 %v2048, %v2305
      %v2307 = vpop.f32.mrb[0].mxu0
      %2308 = vmatprep.mubr.f32.mxu0 0.0
      %v2309 = vand.u32 %v530, 4294901760
      %2310 = vmatmul.mubr.f32.gmra.mrb[0].mxu0 %v2309
      %v2311 = vpop.f32.mrb[0].mxu0
      %v2312 = vadd.f32 %v2054, %v2311
      %v2313 = vpop.f32.mrb[0].mxu0
      %2314 = vdwg.mxu0
      %v2315 = vmax.f32 %v2126, 0.0
      %v2316 = vmax.f32 %v2132, 0.0
      %v2317 = vmax.f32 %v2138, 0.0
      %v2318 = vmax.f32 %v2144, 0.0
      %v2319 = vmax.f32 %v2150, 0.0
      %v2320 = vmax.f32 %v2156, 0.0
      %v2321 = vmax.f32 %v2162, 0.0
      %v2322 = vmax.f32 %v2168, 0.0
      %v2323 = vmax.f32 %v2174, 0.0
      %v2324 = vmax.f32 %v2180, 0.0
      %v2325 = vmax.f32 %v2186, 0.0
      %v2326 = vmax.f32 %v2192, 0.0
      %v2327 = vmax.f32 %v2198, 0.0
      %v2328 = vmax.f32 %v2204, 0.0
      %v2329 = vmax.f32 %v2210, 0.0
      %v2330 = vmax.f32 %v2216, 0.0
      %v2331 = vmax.f32 %v2222, 0.0
      %v2332 = vmax.f32 %v2228, 0.0
      %v2333 = vmax.f32 %v2234, 0.0
      %v2334 = vmax.f32 %v2240, 0.0
      %v2335 = vmax.f32 %v2246, 0.0
      %v2336 = vmax.f32 %v2252, 0.0
      %v2337 = vmax.f32 %v2258, 0.0
      %v2338 = vmax.f32 %v2264, 0.0
      %v2339 = vmax.f32 %v2270, 0.0
      %v2340 = vmax.f32 %v2276, 0.0
      %v2341 = vmax.f32 %v2282, 0.0
      %v2342 = vmax.f32 %v2288, 0.0
      %v2343 = vmax.f32 %v2294, 0.0
      %v2344 = vmax.f32 %v2300, 0.0
      %v2345 = vmax.f32 %v2306, 0.0
      %v2346 = vmax.f32 %v2312, 0.0
      %v2347 = vld [vmem:[%s4] sm:$0xff]
      %v2348 = vld [vmem:[%s5] sm:$0x1]
      %v2350 = vlaneseq
      %v2351 = vshrl.u32 %v2350, 7
      %v2352 = vsub.s32 0, %v2351
      %v2353 = vrot.slane %v2348, %v2352
      %vm2355 = vcmask 64512
      %v2357 = vsel %vm2355, %v2315, 0
      %v2360 = vsel %vm2355, %v2316, 0
      %v2363 = vsel %vm2355, %v2317, 0
      %v2366 = vsel %vm2355, %v2318, 0
      %v2369 = vsel %vm2355, %v2319, 0
      %v2372 = vsel %vm2355, %v2320, 0
      %v2375 = vsel %vm2355, %v2321, 0
      %v2378 = vsel %vm2355, %v2322, 0
      %v2381 = vsel %vm2355, %v2323, 0
      %v2384 = vsel %vm2355, %v2324, 0
      %v2387 = vsel %vm2355, %v2325, 0
      %v2390 = vsel %vm2355, %v2326, 0
      %v2393 = vsel %vm2355, %v2327, 0
      %v2396 = vsel %vm2355, %v2328, 0
      %v2399 = vsel %vm2355, %v2329, 0
      %v2402 = vsel %vm2355, %v2330, 0
      %v2405 = vsel %vm2355, %v2331, 0
      %v2408 = vsel %vm2355, %v2332, 0
      %v2411 = vsel %vm2355, %v2333, 0
      %v2414 = vsel %vm2355, %v2334, 0
      %v2417 = vsel %vm2355, %v2335, 0
      %v2420 = vsel %vm2355, %v2336, 0
      %v2423 = vsel %vm2355, %v2337, 0
      %v2426 = vsel %vm2355, %v2338, 0
      %v2429 = vsel %vm2355, %v2339, 0
      %v2432 = vsel %vm2355, %v2340, 0
      %v2435 = vsel %vm2355, %v2341, 0
      %v2438 = vsel %vm2355, %v2342, 0
      %v2441 = vsel %vm2355, %v2343, 0
      %v2444 = vsel %vm2355, %v2344, 0
      %v2447 = vsel %vm2355, %v2345, 0
      %v2450 = vsel %vm2355, %v2346, 0
      %2452 = vmatprep.subr.mxu0 0.0
      %v2453 = vand.u32 %v2347, 4294901760
      %2454 = vmatpush1.msra.mxu0 %v2453
      %2455 = vmatprep.subr.mxu0 0.0
      %2456 = vmatpush1.msra.mxu0 0.0
      %2457 = vmatprep.subr.mxu0 0.0
      %2458 = vmatpush1.msra.mxu0 0.0
      %2459 = vmatprep.subr.mxu0 0.0
      %2460 = vmatpush1.msra.mxu0 0.0
      %2461 = vmatprep.subr.mxu0 0.0
      %2462 = vmatpush1.msra.mxu0 0.0
      %2463 = vmatprep.subr.mxu0 0.0
      %2464 = vmatpush1.msra.mxu0 0.0
      %2465 = vmatprep.subr.mxu0 0.0
      %2466 = vmatpush1.msra.mxu0 0.0
      %2467 = vmatprep.subr.mxu0 0.0
      %2468 = vmatpush1.msra.mxu0 0.0
      %2469 = vmatprep.subr.mxu0 0.0
      %2470 = vmatpush1.msra.mxu0 0.0
      %2471 = vmatprep.subr.mxu0 0.0
      %2472 = vmatpush1.msra.mxu0 0.0
      %2473 = vmatprep.subr.mxu0 0.0
      %2474 = vmatpush1.msra.mxu0 0.0
      %2475 = vmatprep.subr.mxu0 0.0
      %2476 = vmatpush1.msra.mxu0 0.0
      %2477 = vmatprep.subr.mxu0 0.0
      %2478 = vmatpush1.msra.mxu0 0.0
      %2479 = vmatprep.subr.mxu0 0.0
      %2480 = vmatpush1.msra.mxu0 0.0
      %2481 = vmatprep.subr.mxu0 0.0
      %2482 = vmatpush1.msra.mxu0 0.0
      %2483 = vmatprep.subr.mxu0 0.0
      %2484 = vmatpush1.msra.mxu0 0.0
      %2485 = vmatprep.subr.mxu0 0.0
      %2486 = vmatpush1.msra.mxu0 0.0
      %2487 = vmatprep.subr.mxu0 0.0
      %2488 = vmatpush1.msra.mxu0 0.0
      %2489 = vmatprep.subr.mxu0 0.0
      %2490 = vmatpush1.msra.mxu0 0.0
      %2491 = vmatprep.subr.mxu0 0.0
      %2492 = vmatpush1.msra.mxu0 0.0
      %2493 = vmatprep.subr.mxu0 0.0
      %2494 = vmatpush1.msra.mxu0 0.0
      %2495 = vmatprep.subr.mxu0 0.0
      %2496 = vmatpush1.msra.mxu0 0.0
      %2497 = vmatprep.subr.mxu0 0.0
      %2498 = vmatpush1.msra.mxu0 0.0
      %2499 = vmatprep.subr.mxu0 0.0
      %2500 = vmatpush1.msra.mxu0 0.0
      %2501 = vmatprep.subr.mxu0 0.0
      %2502 = vmatpush1.msra.mxu0 0.0
      %2503 = vmatprep.subr.mxu0 0.0
      %2504 = vmatpush1.msra.mxu0 0.0
      %2505 = vmatprep.subr.mxu0 0.0
      %2506 = vmatpush1.msra.mxu0 0.0
      %2507 = vmatprep.subr.mxu0 0.0
      %2508 = vmatpush1.msra.mxu0 0.0
      %2509 = vmatprep.subr.mxu0 0.0
      %2510 = vmatpush1.msra.mxu0 0.0
      %2511 = vmatprep.subr.mxu0 0.0
      %2512 = vmatpush1.msra.mxu0 0.0
      %2513 = vmatprep.subr.mxu0 0.0
      %2514 = vmatpush1.msra.mxu0 0.0
      %2515 = vmatprep.subr.mxu0 0.0
      %2516 = vmatpush1.msra.mxu0 0.0
      %2517 = vmatprep.mubr.f32.mxu0 0.0
      %v2518 = vand.u32 %v2357, 4294901760
      %v2519 = vsub.f32 %v2357, %v2518
      %v2520 = vand.u32 %v2519, 4294901760
      %v2521 = vsub.f32 %v2519, %v2520
      %v2522 = vand.u32 %v2521, 4294901760
      %2523 = vmatmul.mubr.f32.gmra.mrb[0].mxu0 %v2522
      %v2524 = vpop.f32.mrb[0].mxu0
      %v2525 = vadd.f32 %v2353, %v2524
      %v2526 = vpop.f32.mrb[0].mxu0
      %2527 = vmatprep.mubr.f32.mxu0 0.0
      %v2528 = vand.u32 %v2360, 4294901760
      %v2529 = vsub.f32 %v2360, %v2528
      %v2530 = vand.u32 %v2529, 4294901760
      %v2531 = vsub.f32 %v2529, %v2530
      %v2532 = vand.u32 %v2531, 4294901760
      %2533 = vmatmul.mubr.f32.gmra.mrb[0].mxu0 %v2532
      %v2534 = vpop.f32.mrb[0].mxu0
      %v2535 = vadd.f32 %v2353, %v2534
      %v2536 = vpop.f32.mrb[0].mxu0
      %2537 = vmatprep.mubr.f32.mxu0 0.0
      %v2538 = vand.u32 %v2363, 4294901760
      %v2539 = vsub.f32 %v2363, %v2538
      %v2540 = vand.u32 %v2539, 4294901760
      %v2541 = vsub.f32 %v2539, %v2540
      %v2542 = vand.u32 %v2541, 4294901760
      %2543 = vmatmul.mubr.f32.gmra.mrb[0].mxu0 %v2542
      %v2544 = vpop.f32.mrb[0].mxu0
      %v2545 = vadd.f32 %v2353, %v2544
      %v2546 = vpop.f32.mrb[0].mxu0
      %2547 = vmatprep.mubr.f32.mxu0 0.0
      %v2548 = vand.u32 %v2366, 4294901760
      %v2549 = vsub.f32 %v2366, %v2548
      %v2550 = vand.u32 %v2549, 4294901760
      %v2551 = vsub.f32 %v2549, %v2550
      %v2552 = vand.u32 %v2551, 4294901760
      %2553 = vmatmul.mubr.f32.gmra.mrb[0].mxu0 %v2552
      %v2554 = vpop.f32.mrb[0].mxu0
      %v2555 = vadd.f32 %v2353, %v2554
      %v2556 = vpop.f32.mrb[0].mxu0
      %2557 = vmatprep.mubr.f32.mxu0 0.0
      %v2558 = vand.u32 %v2369, 4294901760
      %v2559 = vsub.f32 %v2369, %v2558
      %v2560 = vand.u32 %v2559, 4294901760
      %v2561 = vsub.f32 %v2559, %v2560
      %v2562 = vand.u32 %v2561, 4294901760
      %2563 = vmatmul.mubr.f32.gmra.mrb[0].mxu0 %v2562
      %v2564 = vpop.f32.mrb[0].mxu0
      %v2565 = vadd.f32 %v2353, %v2564
      %v2566 = vpop.f32.mrb[0].mxu0
      %2567 = vmatprep.mubr.f32.mxu0 0.0
      %v2568 = vand.u32 %v2372, 4294901760
      %v2569 = vsub.f32 %v2372, %v2568
      %v2570 = vand.u32 %v2569, 4294901760
      %v2571 = vsub.f32 %v2569, %v2570
      %v2572 = vand.u32 %v2571, 4294901760
      %2573 = vmatmul.mubr.f32.gmra.mrb[0].mxu0 %v2572
      %v2574 = vpop.f32.mrb[0].mxu0
      %v2575 = vadd.f32 %v2353, %v2574
      %v2576 = vpop.f32.mrb[0].mxu0
      %2577 = vmatprep.mubr.f32.mxu0 0.0
      %v2578 = vand.u32 %v2375, 4294901760
      %v2579 = vsub.f32 %v2375, %v2578
      %v2580 = vand.u32 %v2579, 4294901760
      %v2581 = vsub.f32 %v2579, %v2580
      %v2582 = vand.u32 %v2581, 4294901760
      %2583 = vmatmul.mubr.f32.gmra.mrb[0].mxu0 %v2582
      %v2584 = vpop.f32.mrb[0].mxu0
      %v2585 = vadd.f32 %v2353, %v2584
      %v2586 = vpop.f32.mrb[0].mxu0
      %2587 = vmatprep.mubr.f32.mxu0 0.0
      %v2588 = vand.u32 %v2378, 4294901760
      %v2589 = vsub.f32 %v2378, %v2588
      %v2590 = vand.u32 %v2589, 4294901760
      %v2591 = vsub.f32 %v2589, %v2590
      %v2592 = vand.u32 %v2591, 4294901760
      %2593 = vmatmul.mubr.f32.gmra.mrb[0].mxu0 %v2592
      %v2594 = vpop.f32.mrb[0].mxu0
      %v2595 = vadd.f32 %v2353, %v2594
      %v2596 = vpop.f32.mrb[0].mxu0
      %2597 = vmatprep.mubr.f32.mxu0 0.0
      %v2598 = vand.u32 %v2381, 4294901760
      %v2599 = vsub.f32 %v2381, %v2598
      %v2600 = vand.u32 %v2599, 4294901760
      %v2601 = vsub.f32 %v2599, %v2600
      %v2602 = vand.u32 %v2601, 4294901760
      %2603 = vmatmul.mubr.f32.gmra.mrb[0].mxu0 %v2602
      %v2604 = vpop.f32.mrb[0].mxu0
      %v2605 = vadd.f32 %v2353, %v2604
      %v2606 = vpop.f32.mrb[0].mxu0
      %2607 = vmatprep.mubr.f32.mxu0 0.0
      %v2608 = vand.u32 %v2384, 4294901760
      %v2609 = vsub.f32 %v2384, %v2608
      %v2610 = vand.u32 %v2609, 4294901760
      %v2611 = vsub.f32 %v2609, %v2610
      %v2612 = vand.u32 %v2611, 4294901760
      %2613 = vmatmul.mubr.f32.gmra.mrb[0].mxu0 %v2612
      %v2614 = vpop.f32.mrb[0].mxu0
      %v2615 = vadd.f32 %v2353, %v2614
      %v2616 = vpop.f32.mrb[0].mxu0
      %2617 = vmatprep.mubr.f32.mxu0 0.0
      %v2618 = vand.u32 %v2387, 4294901760
      %v2619 = vsub.f32 %v2387, %v2618
      %v2620 = vand.u32 %v2619, 4294901760
      %v2621 = vsub.f32 %v2619, %v2620
      %v2622 = vand.u32 %v2621, 4294901760
      %2623 = vmatmul.mubr.f32.gmra.mrb[0].mxu0 %v2622
      %v2624 = vpop.f32.mrb[0].mxu0
      %v2625 = vadd.f32 %v2353, %v2624
      %v2626 = vpop.f32.mrb[0].mxu0
      %2627 = vmatprep.mubr.f32.mxu0 0.0
      %v2628 = vand.u32 %v2390, 4294901760
      %v2629 = vsub.f32 %v2390, %v2628
      %v2630 = vand.u32 %v2629, 4294901760
      %v2631 = vsub.f32 %v2629, %v2630
      %v2632 = vand.u32 %v2631, 4294901760
      %2633 = vmatmul.mubr.f32.gmra.mrb[0].mxu0 %v2632
      %v2634 = vpop.f32.mrb[0].mxu0
      %v2635 = vadd.f32 %v2353, %v2634
      %v2636 = vpop.f32.mrb[0].mxu0
      %2637 = vmatprep.mubr.f32.mxu0 0.0
      %v2638 = vand.u32 %v2393, 4294901760
      %v2639 = vsub.f32 %v2393, %v2638
      %v2640 = vand.u32 %v2639, 4294901760
      %v2641 = vsub.f32 %v2639, %v2640
      %v2642 = vand.u32 %v2641, 4294901760
      %2643 = vmatmul.mubr.f32.gmra.mrb[0].mxu0 %v2642
      %v2644 = vpop.f32.mrb[0].mxu0
      %v2645 = vadd.f32 %v2353, %v2644
      %v2646 = vpop.f32.mrb[0].mxu0
      %2647 = vmatprep.mubr.f32.mxu0 0.0
      %v2648 = vand.u32 %v2396, 4294901760
      %v2649 = vsub.f32 %v2396, %v2648
      %v2650 = vand.u32 %v2649, 4294901760
      %v2651 = vsub.f32 %v2649, %v2650
      %v2652 = vand.u32 %v2651, 4294901760
      %2653 = vmatmul.mubr.f32.gmra.mrb[0].mxu0 %v2652
      %v2654 = vpop.f32.mrb[0].mxu0
      %v2655 = vadd.f32 %v2353, %v2654
      %v2656 = vpop.f32.mrb[0].mxu0
      %2657 = vmatprep.mubr.f32.mxu0 0.0
      %v2658 = vand.u32 %v2399, 4294901760
      %v2659 = vsub.f32 %v2399, %v2658
      %v2660 = vand.u32 %v2659, 4294901760
      %v2661 = vsub.f32 %v2659, %v2660
      %v2662 = vand.u32 %v2661, 4294901760
      %2663 = vmatmul.mubr.f32.gmra.mrb[0].mxu0 %v2662
      %v2664 = vpop.f32.mrb[0].mxu0
      %v2665 = vadd.f32 %v2353, %v2664
      %v2666 = vpop.f32.mrb[0].mxu0
      %2667 = vmatprep.mubr.f32.mxu0 0.0
      %v2668 = vand.u32 %v2402, 4294901760
      %v2669 = vsub.f32 %v2402, %v2668
      %v2670 = vand.u32 %v2669, 4294901760
      %v2671 = vsub.f32 %v2669, %v2670
      %v2672 = vand.u32 %v2671, 4294901760
      %2673 = vmatmul.mubr.f32.gmra.mrb[0].mxu0 %v2672
      %v2674 = vpop.f32.mrb[0].mxu0
      %v2675 = vadd.f32 %v2353, %v2674
      %v2676 = vpop.f32.mrb[0].mxu0
      %2677 = vmatprep.mubr.f32.mxu0 0.0
      %v2678 = vand.u32 %v2405, 4294901760
      %v2679 = vsub.f32 %v2405, %v2678
      %v2680 = vand.u32 %v2679, 4294901760
      %v2681 = vsub.f32 %v2679, %v2680
      %v2682 = vand.u32 %v2681, 4294901760
      %2683 = vmatmul.mubr.f32.gmra.mrb[0].mxu0 %v2682
      %v2684 = vpop.f32.mrb[0].mxu0
      %v2685 = vadd.f32 %v2353, %v2684
      %v2686 = vpop.f32.mrb[0].mxu0
      %2687 = vmatprep.mubr.f32.mxu0 0.0
      %v2688 = vand.u32 %v2408, 4294901760
      %v2689 = vsub.f32 %v2408, %v2688
      %v2690 = vand.u32 %v2689, 4294901760
      %v2691 = vsub.f32 %v2689, %v2690
      %v2692 = vand.u32 %v2691, 4294901760
      %2693 = vmatmul.mubr.f32.gmra.mrb[0].mxu0 %v2692
      %v2694 = vpop.f32.mrb[0].mxu0
      %v2695 = vadd.f32 %v2353, %v2694
      %v2696 = vpop.f32.mrb[0].mxu0
      %2697 = vmatprep.mubr.f32.mxu0 0.0
      %v2698 = vand.u32 %v2411, 4294901760
      %v2699 = vsub.f32 %v2411, %v2698
      %v2700 = vand.u32 %v2699, 4294901760
      %v2701 = vsub.f32 %v2699, %v2700
      %v2702 = vand.u32 %v2701, 4294901760
      %2703 = vmatmul.mubr.f32.gmra.mrb[0].mxu0 %v2702
      %v2704 = vpop.f32.mrb[0].mxu0
      %v2705 = vadd.f32 %v2353, %v2704
      %v2706 = vpop.f32.mrb[0].mxu0
      %2707 = vmatprep.mubr.f32.mxu0 0.0
      %v2708 = vand.u32 %v2414, 4294901760
      %v2709 = vsub.f32 %v2414, %v2708
      %v2710 = vand.u32 %v2709, 4294901760
      %v2711 = vsub.f32 %v2709, %v2710
      %v2712 = vand.u32 %v2711, 4294901760
      %2713 = vmatmul.mubr.f32.gmra.mrb[0].mxu0 %v2712
      %v2714 = vpop.f32.mrb[0].mxu0
      %v2715 = vadd.f32 %v2353, %v2714
      %v2716 = vpop.f32.mrb[0].mxu0
      %2717 = vmatprep.mubr.f32.mxu0 0.0
      %v2718 = vand.u32 %v2417, 4294901760
      %v2719 = vsub.f32 %v2417, %v2718
      %v2720 = vand.u32 %v2719, 4294901760
      %v2721 = vsub.f32 %v2719, %v2720
      %v2722 = vand.u32 %v2721, 4294901760
      %2723 = vmatmul.mubr.f32.gmra.mrb[0].mxu0 %v2722
      %v2724 = vpop.f32.mrb[0].mxu0
      %v2725 = vadd.f32 %v2353, %v2724
      %v2726 = vpop.f32.mrb[0].mxu0
      %2727 = vmatprep.mubr.f32.mxu0 0.0
      %v2728 = vand.u32 %v2420, 4294901760
      %v2729 = vsub.f32 %v2420, %v2728
      %v2730 = vand.u32 %v2729, 4294901760
      %v2731 = vsub.f32 %v2729, %v2730
      %v2732 = vand.u32 %v2731, 4294901760
      %2733 = vmatmul.mubr.f32.gmra.mrb[0].mxu0 %v2732
      %v2734 = vpop.f32.mrb[0].mxu0
      %v2735 = vadd.f32 %v2353, %v2734
      %v2736 = vpop.f32.mrb[0].mxu0
      %2737 = vmatprep.mubr.f32.mxu0 0.0
      %v2738 = vand.u32 %v2423, 4294901760
      %v2739 = vsub.f32 %v2423, %v2738
      %v2740 = vand.u32 %v2739, 4294901760
      %v2741 = vsub.f32 %v2739, %v2740
      %v2742 = vand.u32 %v2741, 4294901760
      %2743 = vmatmul.mubr.f32.gmra.mrb[0].mxu0 %v2742
      %v2744 = vpop.f32.mrb[0].mxu0
      %v2745 = vadd.f32 %v2353, %v2744
      %v2746 = vpop.f32.mrb[0].mxu0
      %2747 = vmatprep.mubr.f32.mxu0 0.0
      %v2748 = vand.u32 %v2426, 4294901760
      %v2749 = vsub.f32 %v2426, %v2748
      %v2750 = vand.u32 %v2749, 4294901760
      %v2751 = vsub.f32 %v2749, %v2750
      %v2752 = vand.u32 %v2751, 4294901760
      %2753 = vmatmul.mubr.f32.gmra.mrb[0].mxu0 %v2752
      %v2754 = vpop.f32.mrb[0].mxu0
      %v2755 = vadd.f32 %v2353, %v2754
      %v2756 = vpop.f32.mrb[0].mxu0
      %2757 = vmatprep.mubr.f32.mxu0 0.0
      %v2758 = vand.u32 %v2429, 4294901760
      %v2759 = vsub.f32 %v2429, %v2758
      %v2760 = vand.u32 %v2759, 4294901760
      %v2761 = vsub.f32 %v2759, %v2760
      %v2762 = vand.u32 %v2761, 4294901760
      %2763 = vmatmul.mubr.f32.gmra.mrb[0].mxu0 %v2762
      %v2764 = vpop.f32.mrb[0].mxu0
      %v2765 = vadd.f32 %v2353, %v2764
      %v2766 = vpop.f32.mrb[0].mxu0
      %2767 = vmatprep.mubr.f32.mxu0 0.0
      %v2768 = vand.u32 %v2432, 4294901760
      %v2769 = vsub.f32 %v2432, %v2768
      %v2770 = vand.u32 %v2769, 4294901760
      %v2771 = vsub.f32 %v2769, %v2770
      %v2772 = vand.u32 %v2771, 4294901760
      %2773 = vmatmul.mubr.f32.gmra.mrb[0].mxu0 %v2772
      %v2774 = vpop.f32.mrb[0].mxu0
      %v2775 = vadd.f32 %v2353, %v2774
      %v2776 = vpop.f32.mrb[0].mxu0
      %2777 = vmatprep.mubr.f32.mxu0 0.0
      %v2778 = vand.u32 %v2435, 4294901760
      %v2779 = vsub.f32 %v2435, %v2778
      %v2780 = vand.u32 %v2779, 4294901760
      %v2781 = vsub.f32 %v2779, %v2780
      %v2782 = vand.u32 %v2781, 4294901760
      %2783 = vmatmul.mubr.f32.gmra.mrb[0].mxu0 %v2782
      %v2784 = vpop.f32.mrb[0].mxu0
      %v2785 = vadd.f32 %v2353, %v2784
      %v2786 = vpop.f32.mrb[0].mxu0
      %2787 = vmatprep.mubr.f32.mxu0 0.0
      %v2788 = vand.u32 %v2438, 4294901760
      %v2789 = vsub.f32 %v2438, %v2788
      %v2790 = vand.u32 %v2789, 4294901760
      %v2791 = vsub.f32 %v2789, %v2790
      %v2792 = vand.u32 %v2791, 4294901760
      %2793 = vmatmul.mubr.f32.gmra.mrb[0].mxu0 %v2792
      %v2794 = vpop.f32.mrb[0].mxu0
      %v2795 = vadd.f32 %v2353, %v2794
      %v2796 = vpop.f32.mrb[0].mxu0
      %2797 = vmatprep.mubr.f32.mxu0 0.0
      %v2798 = vand.u32 %v2441, 4294901760
      %v2799 = vsub.f32 %v2441, %v2798
      %v2800 = vand.u32 %v2799, 4294901760
      %v2801 = vsub.f32 %v2799, %v2800
      %v2802 = vand.u32 %v2801, 4294901760
      %2803 = vmatmul.mubr.f32.gmra.mrb[0].mxu0 %v2802
      %v2804 = vpop.f32.mrb[0].mxu0
      %v2805 = vadd.f32 %v2353, %v2804
      %v2806 = vpop.f32.mrb[0].mxu0
      %2807 = vmatprep.mubr.f32.mxu0 0.0
      %v2808 = vand.u32 %v2444, 4294901760
      %v2809 = vsub.f32 %v2444, %v2808
      %v2810 = vand.u32 %v2809, 4294901760
      %v2811 = vsub.f32 %v2809, %v2810
      %v2812 = vand.u32 %v2811, 4294901760
      %2813 = vmatmul.mubr.f32.gmra.mrb[0].mxu0 %v2812
      %v2814 = vpop.f32.mrb[0].mxu0
      %v2815 = vadd.f32 %v2353, %v2814
      %v2816 = vpop.f32.mrb[0].mxu0
      %2817 = vmatprep.mubr.f32.mxu0 0.0
      %v2818 = vand.u32 %v2447, 4294901760
      %v2819 = vsub.f32 %v2447, %v2818
      %v2820 = vand.u32 %v2819, 4294901760
      %v2821 = vsub.f32 %v2819, %v2820
      %v2822 = vand.u32 %v2821, 4294901760
      %2823 = vmatmul.mubr.f32.gmra.mrb[0].mxu0 %v2822
      %v2824 = vpop.f32.mrb[0].mxu0
      %v2825 = vadd.f32 %v2353, %v2824
      %v2826 = vpop.f32.mrb[0].mxu0
      %2827 = vmatprep.mubr.f32.mxu0 0.0
      %v2828 = vand.u32 %v2450, 4294901760
      %v2829 = vsub.f32 %v2450, %v2828
      %v2830 = vand.u32 %v2829, 4294901760
      %v2831 = vsub.f32 %v2829, %v2830
      %v2832 = vand.u32 %v2831, 4294901760
      %2833 = vmatmul.mubr.f32.gmra.mrb[0].mxu0 %v2832
      %v2834 = vpop.f32.mrb[0].mxu0
      %v2835 = vadd.f32 %v2353, %v2834
      %v2836 = vpop.f32.mrb[0].mxu0
      %2837 = vdwg.mxu0
      %2838 = vmatprep.subr.mxu0 0.0
      %v2839 = vand.u32 %v2347, 4294901760
      %v2840 = vsub.f32 %v2347, %v2839
      %v2841 = vand.u32 %v2840, 4294901760
      %v2842 = vsub.f32 %v2840, %v2841
      %v2843 = vand.u32 %v2842, 4294901760
      %2844 = vmatpush1.msra.mxu0 %v2843
      %2845 = vmatprep.subr.mxu0 0.0
      %2846 = vmatpush1.msra.mxu0 0.0
      %2847 = vmatprep.subr.mxu0 0.0
      %2848 = vmatpush1.msra.mxu0 0.0
      %2849 = vmatprep.subr.mxu0 0.0
      %2850 = vmatpush1.msra.mxu0 0.0
      %2851 = vmatprep.subr.mxu0 0.0
      %2852 = vmatpush1.msra.mxu0 0.0
      %2853 = vmatprep.subr.mxu0 0.0
      %2854 = vmatpush1.msra.mxu0 0.0
      %2855 = vmatprep.subr.mxu0 0.0
      %2856 = vmatpush1.msra.mxu0 0.0
      %2857 = vmatprep.subr.mxu0 0.0
      %2858 = vmatpush1.msra.mxu0 0.0
      %2859 = vmatprep.subr.mxu0 0.0
      %2860 = vmatpush1.msra.mxu0 0.0
      %2861 = vmatprep.subr.mxu0 0.0
      %2862 = vmatpush1.msra.mxu0 0.0
      %2863 = vmatprep.subr.mxu0 0.0
      %2864 = vmatpush1.msra.mxu0 0.0
      %2865 = vmatprep.subr.mxu0 0.0
      %2866 = vmatpush1.msra.mxu0 0.0
      %2867 = vmatprep.subr.mxu0 0.0
      %2868 = vmatpush1.msra.mxu0 0.0
      %2869 = vmatprep.subr.mxu0 0.0
      %2870 = vmatpush1.msra.mxu0 0.0
      %2871 = vmatprep.subr.mxu0 0.0
      %2872 = vmatpush1.msra.mxu0 0.0
      %2873 = vmatprep.subr.mxu0 0.0
      %2874 = vmatpush1.msra.mxu0 0.0
      %2875 = vmatprep.subr.mxu0 0.0
      %2876 = vmatpush1.msra.mxu0 0.0
      %2877 = vmatprep.subr.mxu0 0.0
      %2878 = vmatpush1.msra.mxu0 0.0
      %2879 = vmatprep.subr.mxu0 0.0
      %2880 = vmatpush1.msra.mxu0 0.0
      %2881 = vmatprep.subr.mxu0 0.0
      %2882 = vmatpush1.msra.mxu0 0.0
      %2883 = vmatprep.subr.mxu0 0.0
      %2884 = vmatpush1.msra.mxu0 0.0
      %2885 = vmatprep.subr.mxu0 0.0
      %2886 = vmatpush1.msra.mxu0 0.0
      %2887 = vmatprep.subr.mxu0 0.0
      %2888 = vmatpush1.msra.mxu0 0.0
      %2889 = vmatprep.subr.mxu0 0.0
      %2890 = vmatpush1.msra.mxu0 0.0
      %2891 = vmatprep.subr.mxu0 0.0
      %2892 = vmatpush1.msra.mxu0 0.0
      %2893 = vmatprep.subr.mxu0 0.0
      %2894 = vmatpush1.msra.mxu0 0.0
      %2895 = vmatprep.subr.mxu0 0.0
      %2896 = vmatpush1.msra.mxu0 0.0
      %2897 = vmatprep.subr.mxu0 0.0
      %2898 = vmatpush1.msra.mxu0 0.0
      %2899 = vmatprep.subr.mxu0 0.0
      %2900 = vmatpush1.msra.mxu0 0.0
      %2901 = vmatprep.subr.mxu0 0.0
      %2902 = vmatpush1.msra.mxu0 0.0
      %2903 = vmatprep.subr.mxu0 0.0
      %2904 = vmatpush1.msra.mxu0 0.0
      %2905 = vmatprep.subr.mxu0 0.0
      %2906 = vmatpush1.msra.mxu0 0.0
      %2907 = vmatprep.mubr.f32.mxu0 0.0
      %v2908 = vand.u32 %v2357, 4294901760
      %2909 = vmatmul.mubr.f32.gmra.mrb[0].mxu0 %v2908
      %v2910 = vpop.f32.mrb[0].mxu0
      %v2911 = vadd.f32 %v2525, %v2910
      %v2912 = vpop.f32.mrb[0].mxu0
      %2913 = vmatprep.mubr.f32.mxu0 0.0
      %v2914 = vand.u32 %v2360, 4294901760
      %2915 = vmatmul.mubr.f32.gmra.mrb[0].mxu0 %v2914
      %v2916 = vpop.f32.mrb[0].mxu0
      %v2917 = vadd.f32 %v2535, %v2916
      %v2918 = vpop.f32.mrb[0].mxu0
      %2919 = vmatprep.mubr.f32.mxu0 0.0
      %v2920 = vand.u32 %v2363, 4294901760
      %2921 = vmatmul.mubr.f32.gmra.mrb[0].mxu0 %v2920
      %v2922 = vpop.f32.mrb[0].mxu0
      %v2923 = vadd.f32 %v2545, %v2922
      %v2924 = vpop.f32.mrb[0].mxu0
      %2925 = vmatprep.mubr.f32.mxu0 0.0
      %v2926 = vand.u32 %v2366, 4294901760
      %2927 = vmatmul.mubr.f32.gmra.mrb[0].mxu0 %v2926
      %v2928 = vpop.f32.mrb[0].mxu0
      %v2929 = vadd.f32 %v2555, %v2928
      %v2930 = vpop.f32.mrb[0].mxu0
      %2931 = vmatprep.mubr.f32.mxu0 0.0
      %v2932 = vand.u32 %v2369, 4294901760
      %2933 = vmatmul.mubr.f32.gmra.mrb[0].mxu0 %v2932
      %v2934 = vpop.f32.mrb[0].mxu0
      %v2935 = vadd.f32 %v2565, %v2934
      %v2936 = vpop.f32.mrb[0].mxu0
      %2937 = vmatprep.mubr.f32.mxu0 0.0
      %v2938 = vand.u32 %v2372, 4294901760
      %2939 = vmatmul.mubr.f32.gmra.mrb[0].mxu0 %v2938
      %v2940 = vpop.f32.mrb[0].mxu0
      %v2941 = vadd.f32 %v2575, %v2940
      %v2942 = vpop.f32.mrb[0].mxu0
      %2943 = vmatprep.mubr.f32.mxu0 0.0
      %v2944 = vand.u32 %v2375, 4294901760
      %2945 = vmatmul.mubr.f32.gmra.mrb[0].mxu0 %v2944
      %v2946 = vpop.f32.mrb[0].mxu0
      %v2947 = vadd.f32 %v2585, %v2946
      %v2948 = vpop.f32.mrb[0].mxu0
      %2949 = vmatprep.mubr.f32.mxu0 0.0
      %v2950 = vand.u32 %v2378, 4294901760
      %2951 = vmatmul.mubr.f32.gmra.mrb[0].mxu0 %v2950
      %v2952 = vpop.f32.mrb[0].mxu0
      %v2953 = vadd.f32 %v2595, %v2952
      %v2954 = vpop.f32.mrb[0].mxu0
      %2955 = vmatprep.mubr.f32.mxu0 0.0
      %v2956 = vand.u32 %v2381, 4294901760
      %2957 = vmatmul.mubr.f32.gmra.mrb[0].mxu0 %v2956
      %v2958 = vpop.f32.mrb[0].mxu0
      %v2959 = vadd.f32 %v2605, %v2958
      %v2960 = vpop.f32.mrb[0].mxu0
      %2961 = vmatprep.mubr.f32.mxu0 0.0
      %v2962 = vand.u32 %v2384, 4294901760
      %2963 = vmatmul.mubr.f32.gmra.mrb[0].mxu0 %v2962
      %v2964 = vpop.f32.mrb[0].mxu0
      %v2965 = vadd.f32 %v2615, %v2964
      %v2966 = vpop.f32.mrb[0].mxu0
      %2967 = vmatprep.mubr.f32.mxu0 0.0
      %v2968 = vand.u32 %v2387, 4294901760
      %2969 = vmatmul.mubr.f32.gmra.mrb[0].mxu0 %v2968
      %v2970 = vpop.f32.mrb[0].mxu0
      %v2971 = vadd.f32 %v2625, %v2970
      %v2972 = vpop.f32.mrb[0].mxu0
      %2973 = vmatprep.mubr.f32.mxu0 0.0
      %v2974 = vand.u32 %v2390, 4294901760
      %2975 = vmatmul.mubr.f32.gmra.mrb[0].mxu0 %v2974
      %v2976 = vpop.f32.mrb[0].mxu0
      %v2977 = vadd.f32 %v2635, %v2976
      %v2978 = vpop.f32.mrb[0].mxu0
      %2979 = vmatprep.mubr.f32.mxu0 0.0
      %v2980 = vand.u32 %v2393, 4294901760
      %2981 = vmatmul.mubr.f32.gmra.mrb[0].mxu0 %v2980
      %v2982 = vpop.f32.mrb[0].mxu0
      %v2983 = vadd.f32 %v2645, %v2982
      %v2984 = vpop.f32.mrb[0].mxu0
      %2985 = vmatprep.mubr.f32.mxu0 0.0
      %v2986 = vand.u32 %v2396, 4294901760
      %2987 = vmatmul.mubr.f32.gmra.mrb[0].mxu0 %v2986
      %v2988 = vpop.f32.mrb[0].mxu0
      %v2989 = vadd.f32 %v2655, %v2988
      %v2990 = vpop.f32.mrb[0].mxu0
      %2991 = vmatprep.mubr.f32.mxu0 0.0
      %v2992 = vand.u32 %v2399, 4294901760
      %2993 = vmatmul.mubr.f32.gmra.mrb[0].mxu0 %v2992
      %v2994 = vpop.f32.mrb[0].mxu0
      %v2995 = vadd.f32 %v2665, %v2994
      %v2996 = vpop.f32.mrb[0].mxu0
      %2997 = vmatprep.mubr.f32.mxu0 0.0
      %v2998 = vand.u32 %v2402, 4294901760
      %2999 = vmatmul.mubr.f32.gmra.mrb[0].mxu0 %v2998
      %v3000 = vpop.f32.mrb[0].mxu0
      %v3001 = vadd.f32 %v2675, %v3000
      %v3002 = vpop.f32.mrb[0].mxu0
      %3003 = vmatprep.mubr.f32.mxu0 0.0
      %v3004 = vand.u32 %v2405, 4294901760
      %3005 = vmatmul.mubr.f32.gmra.mrb[0].mxu0 %v3004
      %v3006 = vpop.f32.mrb[0].mxu0
      %v3007 = vadd.f32 %v2685, %v3006
      %v3008 = vpop.f32.mrb[0].mxu0
      %3009 = vmatprep.mubr.f32.mxu0 0.0
      %v3010 = vand.u32 %v2408, 4294901760
      %3011 = vmatmul.mubr.f32.gmra.mrb[0].mxu0 %v3010
      %v3012 = vpop.f32.mrb[0].mxu0
      %v3013 = vadd.f32 %v2695, %v3012
      %v3014 = vpop.f32.mrb[0].mxu0
      %3015 = vmatprep.mubr.f32.mxu0 0.0
      %v3016 = vand.u32 %v2411, 4294901760
      %3017 = vmatmul.mubr.f32.gmra.mrb[0].mxu0 %v3016
      %v3018 = vpop.f32.mrb[0].mxu0
      %v3019 = vadd.f32 %v2705, %v3018
      %v3020 = vpop.f32.mrb[0].mxu0
      %3021 = vmatprep.mubr.f32.mxu0 0.0
      %v3022 = vand.u32 %v2414, 4294901760
      %3023 = vmatmul.mubr.f32.gmra.mrb[0].mxu0 %v3022
      %v3024 = vpop.f32.mrb[0].mxu0
      %v3025 = vadd.f32 %v2715, %v3024
      %v3026 = vpop.f32.mrb[0].mxu0
      %3027 = vmatprep.mubr.f32.mxu0 0.0
      %v3028 = vand.u32 %v2417, 4294901760
      %3029 = vmatmul.mubr.f32.gmra.mrb[0].mxu0 %v3028
      %v3030 = vpop.f32.mrb[0].mxu0
      %v3031 = vadd.f32 %v2725, %v3030
      %v3032 = vpop.f32.mrb[0].mxu0
      %3033 = vmatprep.mubr.f32.mxu0 0.0
      %v3034 = vand.u32 %v2420, 4294901760
      %3035 = vmatmul.mubr.f32.gmra.mrb[0].mxu0 %v3034
      %v3036 = vpop.f32.mrb[0].mxu0
      %v3037 = vadd.f32 %v2735, %v3036
      %v3038 = vpop.f32.mrb[0].mxu0
      %3039 = vmatprep.mubr.f32.mxu0 0.0
      %v3040 = vand.u32 %v2423, 4294901760
      %3041 = vmatmul.mubr.f32.gmra.mrb[0].mxu0 %v3040
      %v3042 = vpop.f32.mrb[0].mxu0
      %v3043 = vadd.f32 %v2745, %v3042
      %v3044 = vpop.f32.mrb[0].mxu0
      %3045 = vmatprep.mubr.f32.mxu0 0.0
      %v3046 = vand.u32 %v2426, 4294901760
      %3047 = vmatmul.mubr.f32.gmra.mrb[0].mxu0 %v3046
      %v3048 = vpop.f32.mrb[0].mxu0
      %v3049 = vadd.f32 %v2755, %v3048
      %v3050 = vpop.f32.mrb[0].mxu0
      %3051 = vmatprep.mubr.f32.mxu0 0.0
      %v3052 = vand.u32 %v2429, 4294901760
      %3053 = vmatmul.mubr.f32.gmra.mrb[0].mxu0 %v3052
      %v3054 = vpop.f32.mrb[0].mxu0
      %v3055 = vadd.f32 %v2765, %v3054
      %v3056 = vpop.f32.mrb[0].mxu0
      %3057 = vmatprep.mubr.f32.mxu0 0.0
      %v3058 = vand.u32 %v2432, 4294901760
      %3059 = vmatmul.mubr.f32.gmra.mrb[0].mxu0 %v3058
      %v3060 = vpop.f32.mrb[0].mxu0
      %v3061 = vadd.f32 %v2775, %v3060
      %v3062 = vpop.f32.mrb[0].mxu0
      %3063 = vmatprep.mubr.f32.mxu0 0.0
      %v3064 = vand.u32 %v2435, 4294901760
      %3065 = vmatmul.mubr.f32.gmra.mrb[0].mxu0 %v3064
      %v3066 = vpop.f32.mrb[0].mxu0
      %v3067 = vadd.f32 %v2785, %v3066
      %v3068 = vpop.f32.mrb[0].mxu0
      %3069 = vmatprep.mubr.f32.mxu0 0.0
      %v3070 = vand.u32 %v2438, 4294901760
      %3071 = vmatmul.mubr.f32.gmra.mrb[0].mxu0 %v3070
      %v3072 = vpop.f32.mrb[0].mxu0
      %v3073 = vadd.f32 %v2795, %v3072
      %v3074 = vpop.f32.mrb[0].mxu0
      %3075 = vmatprep.mubr.f32.mxu0 0.0
      %v3076 = vand.u32 %v2441, 4294901760
      %3077 = vmatmul.mubr.f32.gmra.mrb[0].mxu0 %v3076
      %v3078 = vpop.f32.mrb[0].mxu0
      %v3079 = vadd.f32 %v2805, %v3078
      %v3080 = vpop.f32.mrb[0].mxu0
      %3081 = vmatprep.mubr.f32.mxu0 0.0
      %v3082 = vand.u32 %v2444, 4294901760
      %3083 = vmatmul.mubr.f32.gmra.mrb[0].mxu0 %v3082
      %v3084 = vpop.f32.mrb[0].mxu0
      %v3085 = vadd.f32 %v2815, %v3084
      %v3086 = vpop.f32.mrb[0].mxu0
      %3087 = vmatprep.mubr.f32.mxu0 0.0
      %v3088 = vand.u32 %v2447, 4294901760
      %3089 = vmatmul.mubr.f32.gmra.mrb[0].mxu0 %v3088
      %v3090 = vpop.f32.mrb[0].mxu0
      %v3091 = vadd.f32 %v2825, %v3090
      %v3092 = vpop.f32.mrb[0].mxu0
      %3093 = vmatprep.mubr.f32.mxu0 0.0
      %v3094 = vand.u32 %v2450, 4294901760
      %3095 = vmatmul.mubr.f32.gmra.mrb[0].mxu0 %v3094
      %v3096 = vpop.f32.mrb[0].mxu0
      %v3097 = vadd.f32 %v2835, %v3096
      %v3098 = vpop.f32.mrb[0].mxu0
      %3099 = vdwg.mxu0
      %3100 = vmatprep.subr.mxu0 0.0
      %v3101 = vand.u32 %v2347, 4294901760
      %v3102 = vsub.f32 %v2347, %v3101
      %3103 = vmatpush1.msra.mxu0 %v3102
      %3104 = vmatprep.subr.mxu0 0.0
      %3105 = vmatpush1.msra.mxu0 0.0
      %3106 = vmatprep.subr.mxu0 0.0
      %3107 = vmatpush1.msra.mxu0 0.0
      %3108 = vmatprep.subr.mxu0 0.0
      %3109 = vmatpush1.msra.mxu0 0.0
      %3110 = vmatprep.subr.mxu0 0.0
      %3111 = vmatpush1.msra.mxu0 0.0
      %3112 = vmatprep.subr.mxu0 0.0
      %3113 = vmatpush1.msra.mxu0 0.0
      %3114 = vmatprep.subr.mxu0 0.0
      %3115 = vmatpush1.msra.mxu0 0.0
      %3116 = vmatprep.subr.mxu0 0.0
      %3117 = vmatpush1.msra.mxu0 0.0
      %3118 = vmatprep.subr.mxu0 0.0
      %3119 = vmatpush1.msra.mxu0 0.0
      %3120 = vmatprep.subr.mxu0 0.0
      %3121 = vmatpush1.msra.mxu0 0.0
      %3122 = vmatprep.subr.mxu0 0.0
      %3123 = vmatpush1.msra.mxu0 0.0
      %3124 = vmatprep.subr.mxu0 0.0
      %3125 = vmatpush1.msra.mxu0 0.0
      %3126 = vmatprep.subr.mxu0 0.0
      %3127 = vmatpush1.msra.mxu0 0.0
      %3128 = vmatprep.subr.mxu0 0.0
      %3129 = vmatpush1.msra.mxu0 0.0
      %3130 = vmatprep.subr.mxu0 0.0
      %3131 = vmatpush1.msra.mxu0 0.0
      %3132 = vmatprep.subr.mxu0 0.0
      %3133 = vmatpush1.msra.mxu0 0.0
      %3134 = vmatprep.subr.mxu0 0.0
      %3135 = vmatpush1.msra.mxu0 0.0
      %3136 = vmatprep.subr.mxu0 0.0
      %3137 = vmatpush1.msra.mxu0 0.0
      %3138 = vmatprep.subr.mxu0 0.0
      %3139 = vmatpush1.msra.mxu0 0.0
      %3140 = vmatprep.subr.mxu0 0.0
      %3141 = vmatpush1.msra.mxu0 0.0
      %3142 = vmatprep.subr.mxu0 0.0
      %3143 = vmatpush1.msra.mxu0 0.0
      %3144 = vmatprep.subr.mxu0 0.0
      %3145 = vmatpush1.msra.mxu0 0.0
      %3146 = vmatprep.subr.mxu0 0.0
      %3147 = vmatpush1.msra.mxu0 0.0
      %3148 = vmatprep.subr.mxu0 0.0
      %3149 = vmatpush1.msra.mxu0 0.0
      %3150 = vmatprep.subr.mxu0 0.0
      %3151 = vmatpush1.msra.mxu0 0.0
      %3152 = vmatprep.subr.mxu0 0.0
      %3153 = vmatpush1.msra.mxu0 0.0
      %3154 = vmatprep.subr.mxu0 0.0
      %3155 = vmatpush1.msra.mxu0 0.0
      %3156 = vmatprep.subr.mxu0 0.0
      %3157 = vmatpush1.msra.mxu0 0.0
      %3158 = vmatprep.subr.mxu0 0.0
      %3159 = vmatpush1.msra.mxu0 0.0
      %3160 = vmatprep.subr.mxu0 0.0
      %3161 = vmatpush1.msra.mxu0 0.0
      %3162 = vmatprep.subr.mxu0 0.0
      %3163 = vmatpush1.msra.mxu0 0.0
      %3164 = vmatprep.subr.mxu0 0.0
      %3165 = vmatpush1.msra.mxu0 0.0
      %3166 = vmatprep.mubr.f32.mxu0 0.0
      %v3167 = vand.u32 %v2357, 4294901760
      %v3168 = vsub.f32 %v2357, %v3167
      %3169 = vmatmul.mubr.f32.gmra.mrb[0].mxu0 %v3168
      %v3170 = vpop.f32.mrb[0].mxu0
      %v3171 = vadd.f32 %v2911, %v3170
      %v3172 = vpop.f32.mrb[0].mxu0
      %3173 = vmatprep.mubr.f32.mxu0 0.0
      %v3174 = vand.u32 %v2360, 4294901760
      %v3175 = vsub.f32 %v2360, %v3174
      %3176 = vmatmul.mubr.f32.gmra.mrb[0].mxu0 %v3175
      %v3177 = vpop.f32.mrb[0].mxu0
      %v3178 = vadd.f32 %v2917, %v3177
      %v3179 = vpop.f32.mrb[0].mxu0
      %3180 = vmatprep.mubr.f32.mxu0 0.0
      %v3181 = vand.u32 %v2363, 4294901760
      %v3182 = vsub.f32 %v2363, %v3181
      %3183 = vmatmul.mubr.f32.gmra.mrb[0].mxu0 %v3182
      %v3184 = vpop.f32.mrb[0].mxu0
      %v3185 = vadd.f32 %v2923, %v3184
      %v3186 = vpop.f32.mrb[0].mxu0
      %3187 = vmatprep.mubr.f32.mxu0 0.0
      %v3188 = vand.u32 %v2366, 4294901760
      %v3189 = vsub.f32 %v2366, %v3188
      %3190 = vmatmul.mubr.f32.gmra.mrb[0].mxu0 %v3189
      %v3191 = vpop.f32.mrb[0].mxu0
      %v3192 = vadd.f32 %v2929, %v3191
      %v3193 = vpop.f32.mrb[0].mxu0
      %3194 = vmatprep.mubr.f32.mxu0 0.0
      %v3195 = vand.u32 %v2369, 4294901760
      %v3196 = vsub.f32 %v2369, %v3195
      %3197 = vmatmul.mubr.f32.gmra.mrb[0].mxu0 %v3196
      %v3198 = vpop.f32.mrb[0].mxu0
      %v3199 = vadd.f32 %v2935, %v3198
      %v3200 = vpop.f32.mrb[0].mxu0
      %3201 = vmatprep.mubr.f32.mxu0 0.0
      %v3202 = vand.u32 %v2372, 4294901760
      %v3203 = vsub.f32 %v2372, %v3202
      %3204 = vmatmul.mubr.f32.gmra.mrb[0].mxu0 %v3203
      %v3205 = vpop.f32.mrb[0].mxu0
      %v3206 = vadd.f32 %v2941, %v3205
      %v3207 = vpop.f32.mrb[0].mxu0
      %3208 = vmatprep.mubr.f32.mxu0 0.0
      %v3209 = vand.u32 %v2375, 4294901760
      %v3210 = vsub.f32 %v2375, %v3209
      %3211 = vmatmul.mubr.f32.gmra.mrb[0].mxu0 %v3210
      %v3212 = vpop.f32.mrb[0].mxu0
      %v3213 = vadd.f32 %v2947, %v3212
      %v3214 = vpop.f32.mrb[0].mxu0
      %3215 = vmatprep.mubr.f32.mxu0 0.0
      %v3216 = vand.u32 %v2378, 4294901760
      %v3217 = vsub.f32 %v2378, %v3216
      %3218 = vmatmul.mubr.f32.gmra.mrb[0].mxu0 %v3217
      %v3219 = vpop.f32.mrb[0].mxu0
      %v3220 = vadd.f32 %v2953, %v3219
      %v3221 = vpop.f32.mrb[0].mxu0
      %3222 = vmatprep.mubr.f32.mxu0 0.0
      %v3223 = vand.u32 %v2381, 4294901760
      %v3224 = vsub.f32 %v2381, %v3223
      %3225 = vmatmul.mubr.f32.gmra.mrb[0].mxu0 %v3224
      %v3226 = vpop.f32.mrb[0].mxu0
      %v3227 = vadd.f32 %v2959, %v3226
      %v3228 = vpop.f32.mrb[0].mxu0
      %3229 = vmatprep.mubr.f32.mxu0 0.0
      %v3230 = vand.u32 %v2384, 4294901760
      %v3231 = vsub.f32 %v2384, %v3230
      %3232 = vmatmul.mubr.f32.gmra.mrb[0].mxu0 %v3231
      %v3233 = vpop.f32.mrb[0].mxu0
      %v3234 = vadd.f32 %v2965, %v3233
      %v3235 = vpop.f32.mrb[0].mxu0
      %3236 = vmatprep.mubr.f32.mxu0 0.0
      %v3237 = vand.u32 %v2387, 4294901760
      %v3238 = vsub.f32 %v2387, %v3237
      %3239 = vmatmul.mubr.f32.gmra.mrb[0].mxu0 %v3238
      %v3240 = vpop.f32.mrb[0].mxu0
      %v3241 = vadd.f32 %v2971, %v3240
      %v3242 = vpop.f32.mrb[0].mxu0
      %3243 = vmatprep.mubr.f32.mxu0 0.0
      %v3244 = vand.u32 %v2390, 4294901760
      %v3245 = vsub.f32 %v2390, %v3244
      %3246 = vmatmul.mubr.f32.gmra.mrb[0].mxu0 %v3245
      %v3247 = vpop.f32.mrb[0].mxu0
      %v3248 = vadd.f32 %v2977, %v3247
      %v3249 = vpop.f32.mrb[0].mxu0
      %3250 = vmatprep.mubr.f32.mxu0 0.0
      %v3251 = vand.u32 %v2393, 4294901760
      %v3252 = vsub.f32 %v2393, %v3251
      %3253 = vmatmul.mubr.f32.gmra.mrb[0].mxu0 %v3252
      %v3254 = vpop.f32.mrb[0].mxu0
      %v3255 = vadd.f32 %v2983, %v3254
      %v3256 = vpop.f32.mrb[0].mxu0
      %3257 = vmatprep.mubr.f32.mxu0 0.0
      %v3258 = vand.u32 %v2396, 4294901760
      %v3259 = vsub.f32 %v2396, %v3258
      %3260 = vmatmul.mubr.f32.gmra.mrb[0].mxu0 %v3259
      %v3261 = vpop.f32.mrb[0].mxu0
      %v3262 = vadd.f32 %v2989, %v3261
      %v3263 = vpop.f32.mrb[0].mxu0
      %3264 = vmatprep.mubr.f32.mxu0 0.0
      %v3265 = vand.u32 %v2399, 4294901760
      %v3266 = vsub.f32 %v2399, %v3265
      %3267 = vmatmul.mubr.f32.gmra.mrb[0].mxu0 %v3266
      %v3268 = vpop.f32.mrb[0].mxu0
      %v3269 = vadd.f32 %v2995, %v3268
      %v3270 = vpop.f32.mrb[0].mxu0
      %3271 = vmatprep.mubr.f32.mxu0 0.0
      %v3272 = vand.u32 %v2402, 4294901760
      %v3273 = vsub.f32 %v2402, %v3272
      %3274 = vmatmul.mubr.f32.gmra.mrb[0].mxu0 %v3273
      %v3275 = vpop.f32.mrb[0].mxu0
      %v3276 = vadd.f32 %v3001, %v3275
      %v3277 = vpop.f32.mrb[0].mxu0
      %3278 = vmatprep.mubr.f32.mxu0 0.0
      %v3279 = vand.u32 %v2405, 4294901760
      %v3280 = vsub.f32 %v2405, %v3279
      %3281 = vmatmul.mubr.f32.gmra.mrb[0].mxu0 %v3280
      %v3282 = vpop.f32.mrb[0].mxu0
      %v3283 = vadd.f32 %v3007, %v3282
      %v3284 = vpop.f32.mrb[0].mxu0
      %3285 = vmatprep.mubr.f32.mxu0 0.0
      %v3286 = vand.u32 %v2408, 4294901760
      %v3287 = vsub.f32 %v2408, %v3286
      %3288 = vmatmul.mubr.f32.gmra.mrb[0].mxu0 %v3287
      %v3289 = vpop.f32.mrb[0].mxu0
      %v3290 = vadd.f32 %v3013, %v3289
      %v3291 = vpop.f32.mrb[0].mxu0
      %3292 = vmatprep.mubr.f32.mxu0 0.0
      %v3293 = vand.u32 %v2411, 4294901760
      %v3294 = vsub.f32 %v2411, %v3293
      %3295 = vmatmul.mubr.f32.gmra.mrb[0].mxu0 %v3294
      %v3296 = vpop.f32.mrb[0].mxu0
      %v3297 = vadd.f32 %v3019, %v3296
      %v3298 = vpop.f32.mrb[0].mxu0
      %3299 = vmatprep.mubr.f32.mxu0 0.0
      %v3300 = vand.u32 %v2414, 4294901760
      %v3301 = vsub.f32 %v2414, %v3300
      %3302 = vmatmul.mubr.f32.gmra.mrb[0].mxu0 %v3301
      %v3303 = vpop.f32.mrb[0].mxu0
      %v3304 = vadd.f32 %v3025, %v3303
      %v3305 = vpop.f32.mrb[0].mxu0
      %3306 = vmatprep.mubr.f32.mxu0 0.0
      %v3307 = vand.u32 %v2417, 4294901760
      %v3308 = vsub.f32 %v2417, %v3307
      %3309 = vmatmul.mubr.f32.gmra.mrb[0].mxu0 %v3308
      %v3310 = vpop.f32.mrb[0].mxu0
      %v3311 = vadd.f32 %v3031, %v3310
      %v3312 = vpop.f32.mrb[0].mxu0
      %3313 = vmatprep.mubr.f32.mxu0 0.0
      %v3314 = vand.u32 %v2420, 4294901760
      %v3315 = vsub.f32 %v2420, %v3314
      %3316 = vmatmul.mubr.f32.gmra.mrb[0].mxu0 %v3315
      %v3317 = vpop.f32.mrb[0].mxu0
      %v3318 = vadd.f32 %v3037, %v3317
      %v3319 = vpop.f32.mrb[0].mxu0
      %3320 = vmatprep.mubr.f32.mxu0 0.0
      %v3321 = vand.u32 %v2423, 4294901760
      %v3322 = vsub.f32 %v2423, %v3321
      %3323 = vmatmul.mubr.f32.gmra.mrb[0].mxu0 %v3322
      %v3324 = vpop.f32.mrb[0].mxu0
      %v3325 = vadd.f32 %v3043, %v3324
      %v3326 = vpop.f32.mrb[0].mxu0
      %3327 = vmatprep.mubr.f32.mxu0 0.0
      %v3328 = vand.u32 %v2426, 4294901760
      %v3329 = vsub.f32 %v2426, %v3328
      %3330 = vmatmul.mubr.f32.gmra.mrb[0].mxu0 %v3329
      %v3331 = vpop.f32.mrb[0].mxu0
      %v3332 = vadd.f32 %v3049, %v3331
      %v3333 = vpop.f32.mrb[0].mxu0
      %3334 = vmatprep.mubr.f32.mxu0 0.0
      %v3335 = vand.u32 %v2429, 4294901760
      %v3336 = vsub.f32 %v2429, %v3335
      %3337 = vmatmul.mubr.f32.gmra.mrb[0].mxu0 %v3336
      %v3338 = vpop.f32.mrb[0].mxu0
      %v3339 = vadd.f32 %v3055, %v3338
      %v3340 = vpop.f32.mrb[0].mxu0
      %3341 = vmatprep.mubr.f32.mxu0 0.0
      %v3342 = vand.u32 %v2432, 4294901760
      %v3343 = vsub.f32 %v2432, %v3342
      %3344 = vmatmul.mubr.f32.gmra.mrb[0].mxu0 %v3343
      %v3345 = vpop.f32.mrb[0].mxu0
      %v3346 = vadd.f32 %v3061, %v3345
      %v3347 = vpop.f32.mrb[0].mxu0
      %3348 = vmatprep.mubr.f32.mxu0 0.0
      %v3349 = vand.u32 %v2435, 4294901760
      %v3350 = vsub.f32 %v2435, %v3349
      %3351 = vmatmul.mubr.f32.gmra.mrb[0].mxu0 %v3350
      %v3352 = vpop.f32.mrb[0].mxu0
      %v3353 = vadd.f32 %v3067, %v3352
      %v3354 = vpop.f32.mrb[0].mxu0
      %3355 = vmatprep.mubr.f32.mxu0 0.0
      %v3356 = vand.u32 %v2438, 4294901760
      %v3357 = vsub.f32 %v2438, %v3356
      %3358 = vmatmul.mubr.f32.gmra.mrb[0].mxu0 %v3357
      %v3359 = vpop.f32.mrb[0].mxu0
      %v3360 = vadd.f32 %v3073, %v3359
      %v3361 = vpop.f32.mrb[0].mxu0
      %3362 = vmatprep.mubr.f32.mxu0 0.0
      %v3363 = vand.u32 %v2441, 4294901760
      %v3364 = vsub.f32 %v2441, %v3363
      %3365 = vmatmul.mubr.f32.gmra.mrb[0].mxu0 %v3364
      %v3366 = vpop.f32.mrb[0].mxu0
      %v3367 = vadd.f32 %v3079, %v3366
      %v3368 = vpop.f32.mrb[0].mxu0
      %3369 = vmatprep.mubr.f32.mxu0 0.0
      %v3370 = vand.u32 %v2444, 4294901760
      %v3371 = vsub.f32 %v2444, %v3370
      %3372 = vmatmul.mubr.f32.gmra.mrb[0].mxu0 %v3371
      %v3373 = vpop.f32.mrb[0].mxu0
      %v3374 = vadd.f32 %v3085, %v3373
      %v3375 = vpop.f32.mrb[0].mxu0
      %3376 = vmatprep.mubr.f32.mxu0 0.0
      %v3377 = vand.u32 %v2447, 4294901760
      %v3378 = vsub.f32 %v2447, %v3377
      %3379 = vmatmul.mubr.f32.gmra.mrb[0].mxu0 %v3378
      %v3380 = vpop.f32.mrb[0].mxu0
      %v3381 = vadd.f32 %v3091, %v3380
      %v3382 = vpop.f32.mrb[0].mxu0
      %3383 = vmatprep.mubr.f32.mxu0 0.0
      %v3384 = vand.u32 %v2450, 4294901760
      %v3385 = vsub.f32 %v2450, %v3384
      %3386 = vmatmul.mubr.f32.gmra.mrb[0].mxu0 %v3385
      %v3387 = vpop.f32.mrb[0].mxu0
      %v3388 = vadd.f32 %v3097, %v3387
      %v3389 = vpop.f32.mrb[0].mxu0
      %3390 = vdwg.mxu0
      %3391 = vmatprep.subr.mxu0 0.0
      %v3392 = vand.u32 %v2347, 4294901760
      %3393 = vmatpush1.msra.mxu0 %v3392
      %3394 = vmatprep.subr.mxu0 0.0
      %3395 = vmatpush1.msra.mxu0 0.0
      %3396 = vmatprep.subr.mxu0 0.0
      %3397 = vmatpush1.msra.mxu0 0.0
      %3398 = vmatprep.subr.mxu0 0.0
      %3399 = vmatpush1.msra.mxu0 0.0
      %3400 = vmatprep.subr.mxu0 0.0
      %3401 = vmatpush1.msra.mxu0 0.0
      %3402 = vmatprep.subr.mxu0 0.0
      %3403 = vmatpush1.msra.mxu0 0.0
      %3404 = vmatprep.subr.mxu0 0.0
      %3405 = vmatpush1.msra.mxu0 0.0
      %3406 = vmatprep.subr.mxu0 0.0
      %3407 = vmatpush1.msra.mxu0 0.0
      %3408 = vmatprep.subr.mxu0 0.0
      %3409 = vmatpush1.msra.mxu0 0.0
      %3410 = vmatprep.subr.mxu0 0.0
      %3411 = vmatpush1.msra.mxu0 0.0
      %3412 = vmatprep.subr.mxu0 0.0
      %3413 = vmatpush1.msra.mxu0 0.0
      %3414 = vmatprep.subr.mxu0 0.0
      %3415 = vmatpush1.msra.mxu0 0.0
      %3416 = vmatprep.subr.mxu0 0.0
      %3417 = vmatpush1.msra.mxu0 0.0
      %3418 = vmatprep.subr.mxu0 0.0
      %3419 = vmatpush1.msra.mxu0 0.0
      %3420 = vmatprep.subr.mxu0 0.0
      %3421 = vmatpush1.msra.mxu0 0.0
      %3422 = vmatprep.subr.mxu0 0.0
      %3423 = vmatpush1.msra.mxu0 0.0
      %3424 = vmatprep.subr.mxu0 0.0
      %3425 = vmatpush1.msra.mxu0 0.0
      %3426 = vmatprep.subr.mxu0 0.0
      %3427 = vmatpush1.msra.mxu0 0.0
      %3428 = vmatprep.subr.mxu0 0.0
      %3429 = vmatpush1.msra.mxu0 0.0
      %3430 = vmatprep.subr.mxu0 0.0
      %3431 = vmatpush1.msra.mxu0 0.0
      %3432 = vmatprep.subr.mxu0 0.0
      %3433 = vmatpush1.msra.mxu0 0.0
      %3434 = vmatprep.subr.mxu0 0.0
      %3435 = vmatpush1.msra.mxu0 0.0
      %3436 = vmatprep.subr.mxu0 0.0
      %3437 = vmatpush1.msra.mxu0 0.0
      %3438 = vmatprep.subr.mxu0 0.0
      %3439 = vmatpush1.msra.mxu0 0.0
      %3440 = vmatprep.subr.mxu0 0.0
      %3441 = vmatpush1.msra.mxu0 0.0
      %3442 = vmatprep.subr.mxu0 0.0
      %3443 = vmatpush1.msra.mxu0 0.0
      %3444 = vmatprep.subr.mxu0 0.0
      %3445 = vmatpush1.msra.mxu0 0.0
      %3446 = vmatprep.subr.mxu0 0.0
      %3447 = vmatpush1.msra.mxu0 0.0
      %3448 = vmatprep.subr.mxu0 0.0
      %3449 = vmatpush1.msra.mxu0 0.0
      %3450 = vmatprep.subr.mxu0 0.0
      %3451 = vmatpush1.msra.mxu0 0.0
      %3452 = vmatprep.subr.mxu0 0.0
      %3453 = vmatpush1.msra.mxu0 0.0
      %3454 = vmatprep.subr.mxu0 0.0
      %3455 = vmatpush1.msra.mxu0 0.0
      %3456 = vmatprep.mubr.f32.mxu0 0.0
      %v3457 = vand.u32 %v2357, 4294901760
      %v3458 = vsub.f32 %v2357, %v3457
      %v3459 = vand.u32 %v3458, 4294901760
      %3460 = vmatmul.mubr.f32.gmra.mrb[0].mxu0 %v3459
      %v3461 = vpop.f32.mrb[0].mxu0
      %v3462 = vadd.f32 %v3171, %v3461
      %v3463 = vpop.f32.mrb[0].mxu0
      %3464 = vmatprep.mubr.f32.mxu0 0.0
      %v3465 = vand.u32 %v2360, 4294901760
      %v3466 = vsub.f32 %v2360, %v3465
      %v3467 = vand.u32 %v3466, 4294901760
      %3468 = vmatmul.mubr.f32.gmra.mrb[0].mxu0 %v3467
      %v3469 = vpop.f32.mrb[0].mxu0
      %v3470 = vadd.f32 %v3178, %v3469
      %v3471 = vpop.f32.mrb[0].mxu0
      %3472 = vmatprep.mubr.f32.mxu0 0.0
      %v3473 = vand.u32 %v2363, 4294901760
      %v3474 = vsub.f32 %v2363, %v3473
      %v3475 = vand.u32 %v3474, 4294901760
      %3476 = vmatmul.mubr.f32.gmra.mrb[0].mxu0 %v3475
      %v3477 = vpop.f32.mrb[0].mxu0
      %v3478 = vadd.f32 %v3185, %v3477
      %v3479 = vpop.f32.mrb[0].mxu0
      %3480 = vmatprep.mubr.f32.mxu0 0.0
      %v3481 = vand.u32 %v2366, 4294901760
      %v3482 = vsub.f32 %v2366, %v3481
      %v3483 = vand.u32 %v3482, 4294901760
      %3484 = vmatmul.mubr.f32.gmra.mrb[0].mxu0 %v3483
      %v3485 = vpop.f32.mrb[0].mxu0
      %v3486 = vadd.f32 %v3192, %v3485
      %v3487 = vpop.f32.mrb[0].mxu0
      %3488 = vmatprep.mubr.f32.mxu0 0.0
      %v3489 = vand.u32 %v2369, 4294901760
      %v3490 = vsub.f32 %v2369, %v3489
      %v3491 = vand.u32 %v3490, 4294901760
      %3492 = vmatmul.mubr.f32.gmra.mrb[0].mxu0 %v3491
      %v3493 = vpop.f32.mrb[0].mxu0
      %v3494 = vadd.f32 %v3199, %v3493
      %v3495 = vpop.f32.mrb[0].mxu0
      %3496 = vmatprep.mubr.f32.mxu0 0.0
      %v3497 = vand.u32 %v2372, 4294901760
      %v3498 = vsub.f32 %v2372, %v3497
      %v3499 = vand.u32 %v3498, 4294901760
      %3500 = vmatmul.mubr.f32.gmra.mrb[0].mxu0 %v3499
      %v3501 = vpop.f32.mrb[0].mxu0
      %v3502 = vadd.f32 %v3206, %v3501
      %v3503 = vpop.f32.mrb[0].mxu0
      %3504 = vmatprep.mubr.f32.mxu0 0.0
      %v3505 = vand.u32 %v2375, 4294901760
      %v3506 = vsub.f32 %v2375, %v3505
      %v3507 = vand.u32 %v3506, 4294901760
      %3508 = vmatmul.mubr.f32.gmra.mrb[0].mxu0 %v3507
      %v3509 = vpop.f32.mrb[0].mxu0
      %v3510 = vadd.f32 %v3213, %v3509
      %v3511 = vpop.f32.mrb[0].mxu0
      %3512 = vmatprep.mubr.f32.mxu0 0.0
      %v3513 = vand.u32 %v2378, 4294901760
      %v3514 = vsub.f32 %v2378, %v3513
      %v3515 = vand.u32 %v3514, 4294901760
      %3516 = vmatmul.mubr.f32.gmra.mrb[0].mxu0 %v3515
      %v3517 = vpop.f32.mrb[0].mxu0
      %v3518 = vadd.f32 %v3220, %v3517
      %v3519 = vpop.f32.mrb[0].mxu0
      %3520 = vmatprep.mubr.f32.mxu0 0.0
      %v3521 = vand.u32 %v2381, 4294901760
      %v3522 = vsub.f32 %v2381, %v3521
      %v3523 = vand.u32 %v3522, 4294901760
      %3524 = vmatmul.mubr.f32.gmra.mrb[0].mxu0 %v3523
      %v3525 = vpop.f32.mrb[0].mxu0
      %v3526 = vadd.f32 %v3227, %v3525
      %v3527 = vpop.f32.mrb[0].mxu0
      %3528 = vmatprep.mubr.f32.mxu0 0.0
      %v3529 = vand.u32 %v2384, 4294901760
      %v3530 = vsub.f32 %v2384, %v3529
      %v3531 = vand.u32 %v3530, 4294901760
      %3532 = vmatmul.mubr.f32.gmra.mrb[0].mxu0 %v3531
      %v3533 = vpop.f32.mrb[0].mxu0
      %v3534 = vadd.f32 %v3234, %v3533
      %v3535 = vpop.f32.mrb[0].mxu0
      %3536 = vmatprep.mubr.f32.mxu0 0.0
      %v3537 = vand.u32 %v2387, 4294901760
      %v3538 = vsub.f32 %v2387, %v3537
      %v3539 = vand.u32 %v3538, 4294901760
      %3540 = vmatmul.mubr.f32.gmra.mrb[0].mxu0 %v3539
      %v3541 = vpop.f32.mrb[0].mxu0
      %v3542 = vadd.f32 %v3241, %v3541
      %v3543 = vpop.f32.mrb[0].mxu0
      %3544 = vmatprep.mubr.f32.mxu0 0.0
      %v3545 = vand.u32 %v2390, 4294901760
      %v3546 = vsub.f32 %v2390, %v3545
      %v3547 = vand.u32 %v3546, 4294901760
      %3548 = vmatmul.mubr.f32.gmra.mrb[0].mxu0 %v3547
      %v3549 = vpop.f32.mrb[0].mxu0
      %v3550 = vadd.f32 %v3248, %v3549
      %v3551 = vpop.f32.mrb[0].mxu0
      %3552 = vmatprep.mubr.f32.mxu0 0.0
      %v3553 = vand.u32 %v2393, 4294901760
      %v3554 = vsub.f32 %v2393, %v3553
      %v3555 = vand.u32 %v3554, 4294901760
      %3556 = vmatmul.mubr.f32.gmra.mrb[0].mxu0 %v3555
      %v3557 = vpop.f32.mrb[0].mxu0
      %v3558 = vadd.f32 %v3255, %v3557
      %v3559 = vpop.f32.mrb[0].mxu0
      %3560 = vmatprep.mubr.f32.mxu0 0.0
      %v3561 = vand.u32 %v2396, 4294901760
      %v3562 = vsub.f32 %v2396, %v3561
      %v3563 = vand.u32 %v3562, 4294901760
      %3564 = vmatmul.mubr.f32.gmra.mrb[0].mxu0 %v3563
      %v3565 = vpop.f32.mrb[0].mxu0
      %v3566 = vadd.f32 %v3262, %v3565
      %v3567 = vpop.f32.mrb[0].mxu0
      %3568 = vmatprep.mubr.f32.mxu0 0.0
      %v3569 = vand.u32 %v2399, 4294901760
      %v3570 = vsub.f32 %v2399, %v3569
      %v3571 = vand.u32 %v3570, 4294901760
      %3572 = vmatmul.mubr.f32.gmra.mrb[0].mxu0 %v3571
      %v3573 = vpop.f32.mrb[0].mxu0
      %v3574 = vadd.f32 %v3269, %v3573
      %v3575 = vpop.f32.mrb[0].mxu0
      %3576 = vmatprep.mubr.f32.mxu0 0.0
      %v3577 = vand.u32 %v2402, 4294901760
      %v3578 = vsub.f32 %v2402, %v3577
      %v3579 = vand.u32 %v3578, 4294901760
      %3580 = vmatmul.mubr.f32.gmra.mrb[0].mxu0 %v3579
      %v3581 = vpop.f32.mrb[0].mxu0
      %v3582 = vadd.f32 %v3276, %v3581
      %v3583 = vpop.f32.mrb[0].mxu0
      %3584 = vmatprep.mubr.f32.mxu0 0.0
      %v3585 = vand.u32 %v2405, 4294901760
      %v3586 = vsub.f32 %v2405, %v3585
      %v3587 = vand.u32 %v3586, 4294901760
      %3588 = vmatmul.mubr.f32.gmra.mrb[0].mxu0 %v3587
      %v3589 = vpop.f32.mrb[0].mxu0
      %v3590 = vadd.f32 %v3283, %v3589
      %v3591 = vpop.f32.mrb[0].mxu0
      %3592 = vmatprep.mubr.f32.mxu0 0.0
      %v3593 = vand.u32 %v2408, 4294901760
      %v3594 = vsub.f32 %v2408, %v3593
      %v3595 = vand.u32 %v3594, 4294901760
      %3596 = vmatmul.mubr.f32.gmra.mrb[0].mxu0 %v3595
      %v3597 = vpop.f32.mrb[0].mxu0
      %v3598 = vadd.f32 %v3290, %v3597
      %v3599 = vpop.f32.mrb[0].mxu0
      %3600 = vmatprep.mubr.f32.mxu0 0.0
      %v3601 = vand.u32 %v2411, 4294901760
      %v3602 = vsub.f32 %v2411, %v3601
      %v3603 = vand.u32 %v3602, 4294901760
      %3604 = vmatmul.mubr.f32.gmra.mrb[0].mxu0 %v3603
      %v3605 = vpop.f32.mrb[0].mxu0
      %v3606 = vadd.f32 %v3297, %v3605
      %v3607 = vpop.f32.mrb[0].mxu0
      %3608 = vmatprep.mubr.f32.mxu0 0.0
      %v3609 = vand.u32 %v2414, 4294901760
      %v3610 = vsub.f32 %v2414, %v3609
      %v3611 = vand.u32 %v3610, 4294901760
      %3612 = vmatmul.mubr.f32.gmra.mrb[0].mxu0 %v3611
      %v3613 = vpop.f32.mrb[0].mxu0
      %v3614 = vadd.f32 %v3304, %v3613
      %v3615 = vpop.f32.mrb[0].mxu0
      %3616 = vmatprep.mubr.f32.mxu0 0.0
      %v3617 = vand.u32 %v2417, 4294901760
      %v3618 = vsub.f32 %v2417, %v3617
      %v3619 = vand.u32 %v3618, 4294901760
      %3620 = vmatmul.mubr.f32.gmra.mrb[0].mxu0 %v3619
      %v3621 = vpop.f32.mrb[0].mxu0
      %v3622 = vadd.f32 %v3311, %v3621
      %v3623 = vpop.f32.mrb[0].mxu0
      %3624 = vmatprep.mubr.f32.mxu0 0.0
      %v3625 = vand.u32 %v2420, 4294901760
      %v3626 = vsub.f32 %v2420, %v3625
      %v3627 = vand.u32 %v3626, 4294901760
      %3628 = vmatmul.mubr.f32.gmra.mrb[0].mxu0 %v3627
      %v3629 = vpop.f32.mrb[0].mxu0
      %v3630 = vadd.f32 %v3318, %v3629
      %v3631 = vpop.f32.mrb[0].mxu0
      %3632 = vmatprep.mubr.f32.mxu0 0.0
      %v3633 = vand.u32 %v2423, 4294901760
      %v3634 = vsub.f32 %v2423, %v3633
      %v3635 = vand.u32 %v3634, 4294901760
      %3636 = vmatmul.mubr.f32.gmra.mrb[0].mxu0 %v3635
      %v3637 = vpop.f32.mrb[0].mxu0
      %v3638 = vadd.f32 %v3325, %v3637
      %v3639 = vpop.f32.mrb[0].mxu0
      %3640 = vmatprep.mubr.f32.mxu0 0.0
      %v3641 = vand.u32 %v2426, 4294901760
      %v3642 = vsub.f32 %v2426, %v3641
      %v3643 = vand.u32 %v3642, 4294901760
      %3644 = vmatmul.mubr.f32.gmra.mrb[0].mxu0 %v3643
      %v3645 = vpop.f32.mrb[0].mxu0
      %v3646 = vadd.f32 %v3332, %v3645
      %v3647 = vpop.f32.mrb[0].mxu0
      %3648 = vmatprep.mubr.f32.mxu0 0.0
      %v3649 = vand.u32 %v2429, 4294901760
      %v3650 = vsub.f32 %v2429, %v3649
      %v3651 = vand.u32 %v3650, 4294901760
      %3652 = vmatmul.mubr.f32.gmra.mrb[0].mxu0 %v3651
      %v3653 = vpop.f32.mrb[0].mxu0
      %v3654 = vadd.f32 %v3339, %v3653
      %v3655 = vpop.f32.mrb[0].mxu0
      %3656 = vmatprep.mubr.f32.mxu0 0.0
      %v3657 = vand.u32 %v2432, 4294901760
      %v3658 = vsub.f32 %v2432, %v3657
      %v3659 = vand.u32 %v3658, 4294901760
      %3660 = vmatmul.mubr.f32.gmra.mrb[0].mxu0 %v3659
      %v3661 = vpop.f32.mrb[0].mxu0
      %v3662 = vadd.f32 %v3346, %v3661
      %v3663 = vpop.f32.mrb[0].mxu0
      %3664 = vmatprep.mubr.f32.mxu0 0.0
      %v3665 = vand.u32 %v2435, 4294901760
      %v3666 = vsub.f32 %v2435, %v3665
      %v3667 = vand.u32 %v3666, 4294901760
      %3668 = vmatmul.mubr.f32.gmra.mrb[0].mxu0 %v3667
      %v3669 = vpop.f32.mrb[0].mxu0
      %v3670 = vadd.f32 %v3353, %v3669
      %v3671 = vpop.f32.mrb[0].mxu0
      %3672 = vmatprep.mubr.f32.mxu0 0.0
      %v3673 = vand.u32 %v2438, 4294901760
      %v3674 = vsub.f32 %v2438, %v3673
      %v3675 = vand.u32 %v3674, 4294901760
      %3676 = vmatmul.mubr.f32.gmra.mrb[0].mxu0 %v3675
      %v3677 = vpop.f32.mrb[0].mxu0
      %v3678 = vadd.f32 %v3360, %v3677
      %v3679 = vpop.f32.mrb[0].mxu0
      %3680 = vmatprep.mubr.f32.mxu0 0.0
      %v3681 = vand.u32 %v2441, 4294901760
      %v3682 = vsub.f32 %v2441, %v3681
      %v3683 = vand.u32 %v3682, 4294901760
      %3684 = vmatmul.mubr.f32.gmra.mrb[0].mxu0 %v3683
      %v3685 = vpop.f32.mrb[0].mxu0
      %v3686 = vadd.f32 %v3367, %v3685
      %v3687 = vpop.f32.mrb[0].mxu0
      %3688 = vmatprep.mubr.f32.mxu0 0.0
      %v3689 = vand.u32 %v2444, 4294901760
      %v3690 = vsub.f32 %v2444, %v3689
      %v3691 = vand.u32 %v3690, 4294901760
      %3692 = vmatmul.mubr.f32.gmra.mrb[0].mxu0 %v3691
      %v3693 = vpop.f32.mrb[0].mxu0
      %v3694 = vadd.f32 %v3374, %v3693
      %v3695 = vpop.f32.mrb[0].mxu0
      %3696 = vmatprep.mubr.f32.mxu0 0.0
      %v3697 = vand.u32 %v2447, 4294901760
      %v3698 = vsub.f32 %v2447, %v3697
      %v3699 = vand.u32 %v3698, 4294901760
      %3700 = vmatmul.mubr.f32.gmra.mrb[0].mxu0 %v3699
      %v3701 = vpop.f32.mrb[0].mxu0
      %v3702 = vadd.f32 %v3381, %v3701
      %v3703 = vpop.f32.mrb[0].mxu0
      %3704 = vmatprep.mubr.f32.mxu0 0.0
      %v3705 = vand.u32 %v2450, 4294901760
      %v3706 = vsub.f32 %v2450, %v3705
      %v3707 = vand.u32 %v3706, 4294901760
      %3708 = vmatmul.mubr.f32.gmra.mrb[0].mxu0 %v3707
      %v3709 = vpop.f32.mrb[0].mxu0
      %v3710 = vadd.f32 %v3388, %v3709
      %v3711 = vpop.f32.mrb[0].mxu0
      %3712 = vdwg.mxu0
      %3713 = vmatprep.subr.mxu0 0.0
      %v3714 = vand.u32 %v2347, 4294901760
      %v3715 = vsub.f32 %v2347, %v3714
      %v3716 = vand.u32 %v3715, 4294901760
      %3717 = vmatpush1.msra.mxu0 %v3716
      %3718 = vmatprep.subr.mxu0 0.0
      %3719 = vmatpush1.msra.mxu0 0.0
      %3720 = vmatprep.subr.mxu0 0.0
      %3721 = vmatpush1.msra.mxu0 0.0
      %3722 = vmatprep.subr.mxu0 0.0
      %3723 = vmatpush1.msra.mxu0 0.0
      %3724 = vmatprep.subr.mxu0 0.0
      %3725 = vmatpush1.msra.mxu0 0.0
      %3726 = vmatprep.subr.mxu0 0.0
      %3727 = vmatpush1.msra.mxu0 0.0
      %3728 = vmatprep.subr.mxu0 0.0
      %3729 = vmatpush1.msra.mxu0 0.0
      %3730 = vmatprep.subr.mxu0 0.0
      %3731 = vmatpush1.msra.mxu0 0.0
      %3732 = vmatprep.subr.mxu0 0.0
      %3733 = vmatpush1.msra.mxu0 0.0
      %3734 = vmatprep.subr.mxu0 0.0
      %3735 = vmatpush1.msra.mxu0 0.0
      %3736 = vmatprep.subr.mxu0 0.0
      %3737 = vmatpush1.msra.mxu0 0.0
      %3738 = vmatprep.subr.mxu0 0.0
      %3739 = vmatpush1.msra.mxu0 0.0
      %3740 = vmatprep.subr.mxu0 0.0
      %3741 = vmatpush1.msra.mxu0 0.0
      %3742 = vmatprep.subr.mxu0 0.0
      %3743 = vmatpush1.msra.mxu0 0.0
      %3744 = vmatprep.subr.mxu0 0.0
      %3745 = vmatpush1.msra.mxu0 0.0
      %3746 = vmatprep.subr.mxu0 0.0
      %3747 = vmatpush1.msra.mxu0 0.0
      %3748 = vmatprep.subr.mxu0 0.0
      %3749 = vmatpush1.msra.mxu0 0.0
      %3750 = vmatprep.subr.mxu0 0.0
      %3751 = vmatpush1.msra.mxu0 0.0
      %3752 = vmatprep.subr.mxu0 0.0
      %3753 = vmatpush1.msra.mxu0 0.0
      %3754 = vmatprep.subr.mxu0 0.0
      %3755 = vmatpush1.msra.mxu0 0.0
      %3756 = vmatprep.subr.mxu0 0.0
      %3757 = vmatpush1.msra.mxu0 0.0
      %3758 = vmatprep.subr.mxu0 0.0
      %3759 = vmatpush1.msra.mxu0 0.0
      %3760 = vmatprep.subr.mxu0 0.0
      %3761 = vmatpush1.msra.mxu0 0.0
      %3762 = vmatprep.subr.mxu0 0.0
      %3763 = vmatpush1.msra.mxu0 0.0
      %3764 = vmatprep.subr.mxu0 0.0
      %3765 = vmatpush1.msra.mxu0 0.0
      %3766 = vmatprep.subr.mxu0 0.0
      %3767 = vmatpush1.msra.mxu0 0.0
      %3768 = vmatprep.subr.mxu0 0.0
      %3769 = vmatpush1.msra.mxu0 0.0
      %3770 = vmatprep.subr.mxu0 0.0
      %3771 = vmatpush1.msra.mxu0 0.0
      %3772 = vmatprep.subr.mxu0 0.0
      %3773 = vmatpush1.msra.mxu0 0.0
      %3774 = vmatprep.subr.mxu0 0.0
      %3775 = vmatpush1.msra.mxu0 0.0
      %3776 = vmatprep.subr.mxu0 0.0
      %3777 = vmatpush1.msra.mxu0 0.0
      %3778 = vmatprep.subr.mxu0 0.0
      %3779 = vmatpush1.msra.mxu0 0.0
      %3780 = vmatprep.mubr.f32.mxu0 0.0
      %v3781 = vand.u32 %v2357, 4294901760
      %3782 = vmatmul.mubr.f32.gmra.mrb[0].mxu0 %v3781
      %v3783 = vpop.f32.mrb[0].mxu0
      %v3784 = vadd.f32 %v3462, %v3783
      %v3785 = vpop.f32.mrb[0].mxu0
      %3786 = vmatprep.mubr.f32.mxu0 0.0
      %v3787 = vand.u32 %v2360, 4294901760
      %3788 = vmatmul.mubr.f32.gmra.mrb[0].mxu0 %v3787
      %v3789 = vpop.f32.mrb[0].mxu0
      %v3790 = vadd.f32 %v3470, %v3789
      %v3791 = vpop.f32.mrb[0].mxu0
      %3792 = vmatprep.mubr.f32.mxu0 0.0
      %v3793 = vand.u32 %v2363, 4294901760
      %3794 = vmatmul.mubr.f32.gmra.mrb[0].mxu0 %v3793
      %v3795 = vpop.f32.mrb[0].mxu0
      %v3796 = vadd.f32 %v3478, %v3795
      %v3797 = vpop.f32.mrb[0].mxu0
      %3798 = vmatprep.mubr.f32.mxu0 0.0
      %v3799 = vand.u32 %v2366, 4294901760
      %3800 = vmatmul.mubr.f32.gmra.mrb[0].mxu0 %v3799
      %v3801 = vpop.f32.mrb[0].mxu0
      %v3802 = vadd.f32 %v3486, %v3801
      %v3803 = vpop.f32.mrb[0].mxu0
      %3804 = vmatprep.mubr.f32.mxu0 0.0
      %v3805 = vand.u32 %v2369, 4294901760
      %3806 = vmatmul.mubr.f32.gmra.mrb[0].mxu0 %v3805
      %v3807 = vpop.f32.mrb[0].mxu0
      %v3808 = vadd.f32 %v3494, %v3807
      %v3809 = vpop.f32.mrb[0].mxu0
      %3810 = vmatprep.mubr.f32.mxu0 0.0
      %v3811 = vand.u32 %v2372, 4294901760
      %3812 = vmatmul.mubr.f32.gmra.mrb[0].mxu0 %v3811
      %v3813 = vpop.f32.mrb[0].mxu0
      %v3814 = vadd.f32 %v3502, %v3813
      %v3815 = vpop.f32.mrb[0].mxu0
      %3816 = vmatprep.mubr.f32.mxu0 0.0
      %v3817 = vand.u32 %v2375, 4294901760
      %3818 = vmatmul.mubr.f32.gmra.mrb[0].mxu0 %v3817
      %v3819 = vpop.f32.mrb[0].mxu0
      %v3820 = vadd.f32 %v3510, %v3819
      %v3821 = vpop.f32.mrb[0].mxu0
      %3822 = vmatprep.mubr.f32.mxu0 0.0
      %v3823 = vand.u32 %v2378, 4294901760
      %3824 = vmatmul.mubr.f32.gmra.mrb[0].mxu0 %v3823
      %v3825 = vpop.f32.mrb[0].mxu0
      %v3826 = vadd.f32 %v3518, %v3825
      %v3827 = vpop.f32.mrb[0].mxu0
      %3828 = vmatprep.mubr.f32.mxu0 0.0
      %v3829 = vand.u32 %v2381, 4294901760
      %3830 = vmatmul.mubr.f32.gmra.mrb[0].mxu0 %v3829
      %v3831 = vpop.f32.mrb[0].mxu0
      %v3832 = vadd.f32 %v3526, %v3831
      %v3833 = vpop.f32.mrb[0].mxu0
      %3834 = vmatprep.mubr.f32.mxu0 0.0
      %v3835 = vand.u32 %v2384, 4294901760
      %3836 = vmatmul.mubr.f32.gmra.mrb[0].mxu0 %v3835
      %v3837 = vpop.f32.mrb[0].mxu0
      %v3838 = vadd.f32 %v3534, %v3837
      %v3839 = vpop.f32.mrb[0].mxu0
      %3840 = vmatprep.mubr.f32.mxu0 0.0
      %v3841 = vand.u32 %v2387, 4294901760
      %3842 = vmatmul.mubr.f32.gmra.mrb[0].mxu0 %v3841
      %v3843 = vpop.f32.mrb[0].mxu0
      %v3844 = vadd.f32 %v3542, %v3843
      %v3845 = vpop.f32.mrb[0].mxu0
      %3846 = vmatprep.mubr.f32.mxu0 0.0
      %v3847 = vand.u32 %v2390, 4294901760
      %3848 = vmatmul.mubr.f32.gmra.mrb[0].mxu0 %v3847
      %v3849 = vpop.f32.mrb[0].mxu0
      %v3850 = vadd.f32 %v3550, %v3849
      %v3851 = vpop.f32.mrb[0].mxu0
      %3852 = vmatprep.mubr.f32.mxu0 0.0
      %v3853 = vand.u32 %v2393, 4294901760
      %3854 = vmatmul.mubr.f32.gmra.mrb[0].mxu0 %v3853
      %v3855 = vpop.f32.mrb[0].mxu0
      %v3856 = vadd.f32 %v3558, %v3855
      %v3857 = vpop.f32.mrb[0].mxu0
      %3858 = vmatprep.mubr.f32.mxu0 0.0
      %v3859 = vand.u32 %v2396, 4294901760
      %3860 = vmatmul.mubr.f32.gmra.mrb[0].mxu0 %v3859
      %v3861 = vpop.f32.mrb[0].mxu0
      %v3862 = vadd.f32 %v3566, %v3861
      %v3863 = vpop.f32.mrb[0].mxu0
      %3864 = vmatprep.mubr.f32.mxu0 0.0
      %v3865 = vand.u32 %v2399, 4294901760
      %3866 = vmatmul.mubr.f32.gmra.mrb[0].mxu0 %v3865
      %v3867 = vpop.f32.mrb[0].mxu0
      %v3868 = vadd.f32 %v3574, %v3867
      %v3869 = vpop.f32.mrb[0].mxu0
      %3870 = vmatprep.mubr.f32.mxu0 0.0
      %v3871 = vand.u32 %v2402, 4294901760
      %3872 = vmatmul.mubr.f32.gmra.mrb[0].mxu0 %v3871
      %v3873 = vpop.f32.mrb[0].mxu0
      %v3874 = vadd.f32 %v3582, %v3873
      %v3875 = vpop.f32.mrb[0].mxu0
      %3876 = vmatprep.mubr.f32.mxu0 0.0
      %v3877 = vand.u32 %v2405, 4294901760
      %3878 = vmatmul.mubr.f32.gmra.mrb[0].mxu0 %v3877
      %v3879 = vpop.f32.mrb[0].mxu0
      %v3880 = vadd.f32 %v3590, %v3879
      %v3881 = vpop.f32.mrb[0].mxu0
      %3882 = vmatprep.mubr.f32.mxu0 0.0
      %v3883 = vand.u32 %v2408, 4294901760
      %3884 = vmatmul.mubr.f32.gmra.mrb[0].mxu0 %v3883
      %v3885 = vpop.f32.mrb[0].mxu0
      %v3886 = vadd.f32 %v3598, %v3885
      %v3887 = vpop.f32.mrb[0].mxu0
      %3888 = vmatprep.mubr.f32.mxu0 0.0
      %v3889 = vand.u32 %v2411, 4294901760
      %3890 = vmatmul.mubr.f32.gmra.mrb[0].mxu0 %v3889
      %v3891 = vpop.f32.mrb[0].mxu0
      %v3892 = vadd.f32 %v3606, %v3891
      %v3893 = vpop.f32.mrb[0].mxu0
      %3894 = vmatprep.mubr.f32.mxu0 0.0
      %v3895 = vand.u32 %v2414, 4294901760
      %3896 = vmatmul.mubr.f32.gmra.mrb[0].mxu0 %v3895
      %v3897 = vpop.f32.mrb[0].mxu0
      %v3898 = vadd.f32 %v3614, %v3897
      %v3899 = vpop.f32.mrb[0].mxu0
      %3900 = vmatprep.mubr.f32.mxu0 0.0
      %v3901 = vand.u32 %v2417, 4294901760
      %3902 = vmatmul.mubr.f32.gmra.mrb[0].mxu0 %v3901
      %v3903 = vpop.f32.mrb[0].mxu0
      %v3904 = vadd.f32 %v3622, %v3903
      %v3905 = vpop.f32.mrb[0].mxu0
      %3906 = vmatprep.mubr.f32.mxu0 0.0
      %v3907 = vand.u32 %v2420, 4294901760
      %3908 = vmatmul.mubr.f32.gmra.mrb[0].mxu0 %v3907
      %v3909 = vpop.f32.mrb[0].mxu0
      %v3910 = vadd.f32 %v3630, %v3909
      %v3911 = vpop.f32.mrb[0].mxu0
      %3912 = vmatprep.mubr.f32.mxu0 0.0
      %v3913 = vand.u32 %v2423, 4294901760
      %3914 = vmatmul.mubr.f32.gmra.mrb[0].mxu0 %v3913
      %v3915 = vpop.f32.mrb[0].mxu0
      %v3916 = vadd.f32 %v3638, %v3915
      %v3917 = vpop.f32.mrb[0].mxu0
      %3918 = vmatprep.mubr.f32.mxu0 0.0
      %v3919 = vand.u32 %v2426, 4294901760
      %3920 = vmatmul.mubr.f32.gmra.mrb[0].mxu0 %v3919
      %v3921 = vpop.f32.mrb[0].mxu0
      %v3922 = vadd.f32 %v3646, %v3921
      %v3923 = vpop.f32.mrb[0].mxu0
      %3924 = vmatprep.mubr.f32.mxu0 0.0
      %v3925 = vand.u32 %v2429, 4294901760
      %3926 = vmatmul.mubr.f32.gmra.mrb[0].mxu0 %v3925
      %v3927 = vpop.f32.mrb[0].mxu0
      %v3928 = vadd.f32 %v3654, %v3927
      %v3929 = vpop.f32.mrb[0].mxu0
      %3930 = vmatprep.mubr.f32.mxu0 0.0
      %v3931 = vand.u32 %v2432, 4294901760
      %3932 = vmatmul.mubr.f32.gmra.mrb[0].mxu0 %v3931
      %v3933 = vpop.f32.mrb[0].mxu0
      %v3934 = vadd.f32 %v3662, %v3933
      %v3935 = vpop.f32.mrb[0].mxu0
      %3936 = vmatprep.mubr.f32.mxu0 0.0
      %v3937 = vand.u32 %v2435, 4294901760
      %3938 = vmatmul.mubr.f32.gmra.mrb[0].mxu0 %v3937
      %v3939 = vpop.f32.mrb[0].mxu0
      %v3940 = vadd.f32 %v3670, %v3939
      %v3941 = vpop.f32.mrb[0].mxu0
      %3942 = vmatprep.mubr.f32.mxu0 0.0
      %v3943 = vand.u32 %v2438, 4294901760
      %3944 = vmatmul.mubr.f32.gmra.mrb[0].mxu0 %v3943
      %v3945 = vpop.f32.mrb[0].mxu0
      %v3946 = vadd.f32 %v3678, %v3945
      %v3947 = vpop.f32.mrb[0].mxu0
      %3948 = vmatprep.mubr.f32.mxu0 0.0
      %v3949 = vand.u32 %v2441, 4294901760
      %3950 = vmatmul.mubr.f32.gmra.mrb[0].mxu0 %v3949
      %v3951 = vpop.f32.mrb[0].mxu0
      %v3952 = vadd.f32 %v3686, %v3951
      %v3953 = vpop.f32.mrb[0].mxu0
      %3954 = vmatprep.mubr.f32.mxu0 0.0
      %v3955 = vand.u32 %v2444, 4294901760
      %3956 = vmatmul.mubr.f32.gmra.mrb[0].mxu0 %v3955
      %v3957 = vpop.f32.mrb[0].mxu0
      %v3958 = vadd.f32 %v3694, %v3957
      %v3959 = vpop.f32.mrb[0].mxu0
      %3960 = vmatprep.mubr.f32.mxu0 0.0
      %v3961 = vand.u32 %v2447, 4294901760
      %3962 = vmatmul.mubr.f32.gmra.mrb[0].mxu0 %v3961
      %v3963 = vpop.f32.mrb[0].mxu0
      %v3964 = vadd.f32 %v3702, %v3963
      %v3965 = vpop.f32.mrb[0].mxu0
      %3966 = vmatprep.mubr.f32.mxu0 0.0
      %v3967 = vand.u32 %v2450, 4294901760
      %3968 = vmatmul.mubr.f32.gmra.mrb[0].mxu0 %v3967
      %v3969 = vpop.f32.mrb[0].mxu0
      %v3970 = vadd.f32 %v3710, %v3969
      %v3971 = vpop.f32.mrb[0].mxu0
      %3972 = vdwg.mxu0
      %3973 = vmatprep.subr.mxu0 0.0
      %v3974 = vand.u32 %v2347, 4294901760
      %3975 = vmatpush1.msra.mxu0 %v3974
      %3976 = vmatprep.subr.mxu0 0.0
      %3977 = vmatpush1.msra.mxu0 0.0
      %3978 = vmatprep.subr.mxu0 0.0
      %3979 = vmatpush1.msra.mxu0 0.0
      %3980 = vmatprep.subr.mxu0 0.0
      %3981 = vmatpush1.msra.mxu0 0.0
      %3982 = vmatprep.subr.mxu0 0.0
      %3983 = vmatpush1.msra.mxu0 0.0
      %3984 = vmatprep.subr.mxu0 0.0
      %3985 = vmatpush1.msra.mxu0 0.0
      %3986 = vmatprep.subr.mxu0 0.0
      %3987 = vmatpush1.msra.mxu0 0.0
      %3988 = vmatprep.subr.mxu0 0.0
      %3989 = vmatpush1.msra.mxu0 0.0
      %3990 = vmatprep.subr.mxu0 0.0
      %3991 = vmatpush1.msra.mxu0 0.0
      %3992 = vmatprep.subr.mxu0 0.0
      %3993 = vmatpush1.msra.mxu0 0.0
      %3994 = vmatprep.subr.mxu0 0.0
      %3995 = vmatpush1.msra.mxu0 0.0
      %3996 = vmatprep.subr.mxu0 0.0
      %3997 = vmatpush1.msra.mxu0 0.0
      %3998 = vmatprep.subr.mxu0 0.0
      %3999 = vmatpush1.msra.mxu0 0.0
      %4000 = vmatprep.subr.mxu0 0.0
      %4001 = vmatpush1.msra.mxu0 0.0
      %4002 = vmatprep.subr.mxu0 0.0
      %4003 = vmatpush1.msra.mxu0 0.0
      %4004 = vmatprep.subr.mxu0 0.0
      %4005 = vmatpush1.msra.mxu0 0.0
      %4006 = vmatprep.subr.mxu0 0.0
      %4007 = vmatpush1.msra.mxu0 0.0
      %4008 = vmatprep.subr.mxu0 0.0
      %4009 = vmatpush1.msra.mxu0 0.0
      %4010 = vmatprep.subr.mxu0 0.0
      %4011 = vmatpush1.msra.mxu0 0.0
      %4012 = vmatprep.subr.mxu0 0.0
      %4013 = vmatpush1.msra.mxu0 0.0
      %4014 = vmatprep.subr.mxu0 0.0
      %4015 = vmatpush1.msra.mxu0 0.0
      %4016 = vmatprep.subr.mxu0 0.0
      %4017 = vmatpush1.msra.mxu0 0.0
      %4018 = vmatprep.subr.mxu0 0.0
      %4019 = vmatpush1.msra.mxu0 0.0
      %4020 = vmatprep.subr.mxu0 0.0
      %4021 = vmatpush1.msra.mxu0 0.0
      %4022 = vmatprep.subr.mxu0 0.0
      %4023 = vmatpush1.msra.mxu0 0.0
      %4024 = vmatprep.subr.mxu0 0.0
      %4025 = vmatpush1.msra.mxu0 0.0
      %4026 = vmatprep.subr.mxu0 0.0
      %4027 = vmatpush1.msra.mxu0 0.0
      %4028 = vmatprep.subr.mxu0 0.0
      %4029 = vmatpush1.msra.mxu0 0.0
      %4030 = vmatprep.subr.mxu0 0.0
      %4031 = vmatpush1.msra.mxu0 0.0
      %4032 = vmatprep.subr.mxu0 0.0
      %4033 = vmatpush1.msra.mxu0 0.0
      %4034 = vmatprep.subr.mxu0 0.0
      %4035 = vmatpush1.msra.mxu0 0.0
      %4036 = vmatprep.subr.mxu0 0.0
      %4037 = vmatpush1.msra.mxu0 0.0
      %4038 = vmatprep.mubr.f32.mxu0 0.0
      %v4039 = vand.u32 %v2357, 4294901760
      %4040 = vmatmul.mubr.f32.gmra.mrb[0].mxu0 %v4039
      %v4041 = vpop.f32.mrb[0].mxu0
      %v4042 = vadd.f32 %v3784, %v4041
      %v4043 = vpop.f32.mrb[0].mxu0
      %4044 = vmatprep.mubr.f32.mxu0 0.0
      %v4045 = vand.u32 %v2360, 4294901760
      %4046 = vmatmul.mubr.f32.gmra.mrb[0].mxu0 %v4045
      %v4047 = vpop.f32.mrb[0].mxu0
      %v4048 = vadd.f32 %v3790, %v4047
      %v4049 = vpop.f32.mrb[0].mxu0
      %4050 = vmatprep.mubr.f32.mxu0 0.0
      %v4051 = vand.u32 %v2363, 4294901760
      %4052 = vmatmul.mubr.f32.gmra.mrb[0].mxu0 %v4051
      %v4053 = vpop.f32.mrb[0].mxu0
      %v4054 = vadd.f32 %v3796, %v4053
      %v4055 = vpop.f32.mrb[0].mxu0
      %4056 = vmatprep.mubr.f32.mxu0 0.0
      %v4057 = vand.u32 %v2366, 4294901760
      %4058 = vmatmul.mubr.f32.gmra.mrb[0].mxu0 %v4057
      %v4059 = vpop.f32.mrb[0].mxu0
      %v4060 = vadd.f32 %v3802, %v4059
      %v4061 = vpop.f32.mrb[0].mxu0
      %4062 = vmatprep.mubr.f32.mxu0 0.0
      %v4063 = vand.u32 %v2369, 4294901760
      %4064 = vmatmul.mubr.f32.gmra.mrb[0].mxu0 %v4063
      %v4065 = vpop.f32.mrb[0].mxu0
      %v4066 = vadd.f32 %v3808, %v4065
      %v4067 = vpop.f32.mrb[0].mxu0
      %4068 = vmatprep.mubr.f32.mxu0 0.0
      %v4069 = vand.u32 %v2372, 4294901760
      %4070 = vmatmul.mubr.f32.gmra.mrb[0].mxu0 %v4069
      %v4071 = vpop.f32.mrb[0].mxu0
      %v4072 = vadd.f32 %v3814, %v4071
      %v4073 = vpop.f32.mrb[0].mxu0
      %4074 = vmatprep.mubr.f32.mxu0 0.0
      %v4075 = vand.u32 %v2375, 4294901760
      %4076 = vmatmul.mubr.f32.gmra.mrb[0].mxu0 %v4075
      %v4077 = vpop.f32.mrb[0].mxu0
      %v4078 = vadd.f32 %v3820, %v4077
      %v4079 = vpop.f32.mrb[0].mxu0
      %4080 = vmatprep.mubr.f32.mxu0 0.0
      %v4081 = vand.u32 %v2378, 4294901760
      %4082 = vmatmul.mubr.f32.gmra.mrb[0].mxu0 %v4081
      %v4083 = vpop.f32.mrb[0].mxu0
      %v4084 = vadd.f32 %v3826, %v4083
      %v4085 = vpop.f32.mrb[0].mxu0
      %4086 = vmatprep.mubr.f32.mxu0 0.0
      %v4087 = vand.u32 %v2381, 4294901760
      %4088 = vmatmul.mubr.f32.gmra.mrb[0].mxu0 %v4087
      %v4089 = vpop.f32.mrb[0].mxu0
      %v4090 = vadd.f32 %v3832, %v4089
      %v4091 = vpop.f32.mrb[0].mxu0
      %4092 = vmatprep.mubr.f32.mxu0 0.0
      %v4093 = vand.u32 %v2384, 4294901760
      %4094 = vmatmul.mubr.f32.gmra.mrb[0].mxu0 %v4093
      %v4095 = vpop.f32.mrb[0].mxu0
      %v4096 = vadd.f32 %v3838, %v4095
      %v4097 = vpop.f32.mrb[0].mxu0
      %4098 = vmatprep.mubr.f32.mxu0 0.0
      %v4099 = vand.u32 %v2387, 4294901760
      %4100 = vmatmul.mubr.f32.gmra.mrb[0].mxu0 %v4099
      %v4101 = vpop.f32.mrb[0].mxu0
      %v4102 = vadd.f32 %v3844, %v4101
      %v4103 = vpop.f32.mrb[0].mxu0
      %4104 = vmatprep.mubr.f32.mxu0 0.0
      %v4105 = vand.u32 %v2390, 4294901760
      %4106 = vmatmul.mubr.f32.gmra.mrb[0].mxu0 %v4105
      %v4107 = vpop.f32.mrb[0].mxu0
      %v4108 = vadd.f32 %v3850, %v4107
      %v4109 = vpop.f32.mrb[0].mxu0
      %4110 = vmatprep.mubr.f32.mxu0 0.0
      %v4111 = vand.u32 %v2393, 4294901760
      %4112 = vmatmul.mubr.f32.gmra.mrb[0].mxu0 %v4111
      %v4113 = vpop.f32.mrb[0].mxu0
      %v4114 = vadd.f32 %v3856, %v4113
      %v4115 = vpop.f32.mrb[0].mxu0
      %4116 = vmatprep.mubr.f32.mxu0 0.0
      %v4117 = vand.u32 %v2396, 4294901760
      %4118 = vmatmul.mubr.f32.gmra.mrb[0].mxu0 %v4117
      %v4119 = vpop.f32.mrb[0].mxu0
      %v4120 = vadd.f32 %v3862, %v4119
      %v4121 = vpop.f32.mrb[0].mxu0
      %4122 = vmatprep.mubr.f32.mxu0 0.0
      %v4123 = vand.u32 %v2399, 4294901760
      %4124 = vmatmul.mubr.f32.gmra.mrb[0].mxu0 %v4123
      %v4125 = vpop.f32.mrb[0].mxu0
      %v4126 = vadd.f32 %v3868, %v4125
      %v4127 = vpop.f32.mrb[0].mxu0
      %4128 = vmatprep.mubr.f32.mxu0 0.0
      %v4129 = vand.u32 %v2402, 4294901760
      %4130 = vmatmul.mubr.f32.gmra.mrb[0].mxu0 %v4129
      %v4131 = vpop.f32.mrb[0].mxu0
      %v4132 = vadd.f32 %v3874, %v4131
      %v4133 = vpop.f32.mrb[0].mxu0
      %4134 = vmatprep.mubr.f32.mxu0 0.0
      %v4135 = vand.u32 %v2405, 4294901760
      %4136 = vmatmul.mubr.f32.gmra.mrb[0].mxu0 %v4135
      %v4137 = vpop.f32.mrb[0].mxu0
      %v4138 = vadd.f32 %v3880, %v4137
      %v4139 = vpop.f32.mrb[0].mxu0
      %4140 = vmatprep.mubr.f32.mxu0 0.0
      %v4141 = vand.u32 %v2408, 4294901760
      %4142 = vmatmul.mubr.f32.gmra.mrb[0].mxu0 %v4141
      %v4143 = vpop.f32.mrb[0].mxu0
      %v4144 = vadd.f32 %v3886, %v4143
      %v4145 = vpop.f32.mrb[0].mxu0
      %4146 = vmatprep.mubr.f32.mxu0 0.0
      %v4147 = vand.u32 %v2411, 4294901760
      %4148 = vmatmul.mubr.f32.gmra.mrb[0].mxu0 %v4147
      %v4149 = vpop.f32.mrb[0].mxu0
      %v4150 = vadd.f32 %v3892, %v4149
      %v4151 = vpop.f32.mrb[0].mxu0
      %4152 = vmatprep.mubr.f32.mxu0 0.0
      %v4153 = vand.u32 %v2414, 4294901760
      %4154 = vmatmul.mubr.f32.gmra.mrb[0].mxu0 %v4153
      %v4155 = vpop.f32.mrb[0].mxu0
      %v4156 = vadd.f32 %v3898, %v4155
      %v4157 = vpop.f32.mrb[0].mxu0
      %4158 = vmatprep.mubr.f32.mxu0 0.0
      %v4159 = vand.u32 %v2417, 4294901760
      %4160 = vmatmul.mubr.f32.gmra.mrb[0].mxu0 %v4159
      %v4161 = vpop.f32.mrb[0].mxu0
      %v4162 = vadd.f32 %v3904, %v4161
      %v4163 = vpop.f32.mrb[0].mxu0
      %4164 = vmatprep.mubr.f32.mxu0 0.0
      %v4165 = vand.u32 %v2420, 4294901760
      %4166 = vmatmul.mubr.f32.gmra.mrb[0].mxu0 %v4165
      %v4167 = vpop.f32.mrb[0].mxu0
      %v4168 = vadd.f32 %v3910, %v4167
      %v4169 = vpop.f32.mrb[0].mxu0
      %4170 = vmatprep.mubr.f32.mxu0 0.0
      %v4171 = vand.u32 %v2423, 4294901760
      %4172 = vmatmul.mubr.f32.gmra.mrb[0].mxu0 %v4171
      %v4173 = vpop.f32.mrb[0].mxu0
      %v4174 = vadd.f32 %v3916, %v4173
      %v4175 = vpop.f32.mrb[0].mxu0
      %4176 = vmatprep.mubr.f32.mxu0 0.0
      %v4177 = vand.u32 %v2426, 4294901760
      %4178 = vmatmul.mubr.f32.gmra.mrb[0].mxu0 %v4177
      %v4179 = vpop.f32.mrb[0].mxu0
      %v4180 = vadd.f32 %v3922, %v4179
      %v4181 = vpop.f32.mrb[0].mxu0
      %4182 = vmatprep.mubr.f32.mxu0 0.0
      %v4183 = vand.u32 %v2429, 4294901760
      %4184 = vmatmul.mubr.f32.gmra.mrb[0].mxu0 %v4183
      %v4185 = vpop.f32.mrb[0].mxu0
      %v4186 = vadd.f32 %v3928, %v4185
      %v4187 = vpop.f32.mrb[0].mxu0
      %4188 = vmatprep.mubr.f32.mxu0 0.0
      %v4189 = vand.u32 %v2432, 4294901760
      %4190 = vmatmul.mubr.f32.gmra.mrb[0].mxu0 %v4189
      %v4191 = vpop.f32.mrb[0].mxu0
      %v4192 = vadd.f32 %v3934, %v4191
      %v4193 = vpop.f32.mrb[0].mxu0
      %4194 = vmatprep.mubr.f32.mxu0 0.0
      %v4195 = vand.u32 %v2435, 4294901760
      %4196 = vmatmul.mubr.f32.gmra.mrb[0].mxu0 %v4195
      %v4197 = vpop.f32.mrb[0].mxu0
      %v4198 = vadd.f32 %v3940, %v4197
      %v4199 = vpop.f32.mrb[0].mxu0
      %4200 = vmatprep.mubr.f32.mxu0 0.0
      %v4201 = vand.u32 %v2438, 4294901760
      %4202 = vmatmul.mubr.f32.gmra.mrb[0].mxu0 %v4201
      %v4203 = vpop.f32.mrb[0].mxu0
      %v4204 = vadd.f32 %v3946, %v4203
      %v4205 = vpop.f32.mrb[0].mxu0
      %4206 = vmatprep.mubr.f32.mxu0 0.0
      %v4207 = vand.u32 %v2441, 4294901760
      %4208 = vmatmul.mubr.f32.gmra.mrb[0].mxu0 %v4207
      %v4209 = vpop.f32.mrb[0].mxu0
      %v4210 = vadd.f32 %v3952, %v4209
      %v4211 = vpop.f32.mrb[0].mxu0
      %4212 = vmatprep.mubr.f32.mxu0 0.0
      %v4213 = vand.u32 %v2444, 4294901760
      %4214 = vmatmul.mubr.f32.gmra.mrb[0].mxu0 %v4213
      %v4215 = vpop.f32.mrb[0].mxu0
      %v4216 = vadd.f32 %v3958, %v4215
      %v4217 = vpop.f32.mrb[0].mxu0
      %4218 = vmatprep.mubr.f32.mxu0 0.0
      %v4219 = vand.u32 %v2447, 4294901760
      %4220 = vmatmul.mubr.f32.gmra.mrb[0].mxu0 %v4219
      %v4221 = vpop.f32.mrb[0].mxu0
      %v4222 = vadd.f32 %v3964, %v4221
      %v4223 = vpop.f32.mrb[0].mxu0
      %4224 = vmatprep.mubr.f32.mxu0 0.0
      %v4225 = vand.u32 %v2450, 4294901760
      %4226 = vmatmul.mubr.f32.gmra.mrb[0].mxu0 %v4225
      %v4227 = vpop.f32.mrb[0].mxu0
      %v4228 = vadd.f32 %v3970, %v4227
      %v4229 = vpop.f32.mrb[0].mxu0
      %4230 = vdwg.mxu0
      %v4231 = vld [vmem:[%s6] sm:$0xff]
      %v4232 = vld [vmem:[%s7] sm:$0x1]
      %v4234 = vlaneseq
      %v4235 = vshrl.u32 %v4234, 7
      %v4236 = vsub.s32 0, %v4235
      %v4237 = vrot.slane %v4232, %v4236
      %4239 = vrot.lane.b32.xlu0 %v2315, 120
      %v4240 = vpop.permute.xlu0 %4239
      %4241 = vrot.lane.b32.xlu0 %v2316, 120
      %v4242 = vpop.permute.xlu0 %4241
      %4243 = vrot.lane.b32.xlu0 %v2317, 120
      %v4244 = vpop.permute.xlu0 %4243
      %4245 = vrot.lane.b32.xlu0 %v2318, 120
      %v4246 = vpop.permute.xlu0 %4245
      %4247 = vrot.lane.b32.xlu0 %v2319, 120
      %v4248 = vpop.permute.xlu0 %4247
      %4249 = vrot.lane.b32.xlu0 %v2320, 120
      %v4250 = vpop.permute.xlu0 %4249
      %4251 = vrot.lane.b32.xlu0 %v2321, 120
      %v4252 = vpop.permute.xlu0 %4251
      %4253 = vrot.lane.b32.xlu0 %v2322, 120
      %v4254 = vpop.permute.xlu0 %4253
      %4255 = vrot.lane.b32.xlu0 %v2323, 120
      %v4256 = vpop.permute.xlu0 %4255
      %4257 = vrot.lane.b32.xlu0 %v2324, 120
      %v4258 = vpop.permute.xlu0 %4257
      %4259 = vrot.lane.b32.xlu0 %v2325, 120
      %v4260 = vpop.permute.xlu0 %4259
      %4261 = vrot.lane.b32.xlu0 %v2326, 120
      %v4262 = vpop.permute.xlu0 %4261
      %4263 = vrot.lane.b32.xlu0 %v2327, 120
      %v4264 = vpop.permute.xlu0 %4263
      %4265 = vrot.lane.b32.xlu0 %v2328, 120
      %v4266 = vpop.permute.xlu0 %4265
      %4267 = vrot.lane.b32.xlu0 %v2329, 120
      %v4268 = vpop.permute.xlu0 %4267
      %4269 = vrot.lane.b32.xlu0 %v2330, 120
      %v4270 = vpop.permute.xlu0 %4269
      %4271 = vrot.lane.b32.xlu0 %v2331, 120
      %v4272 = vpop.permute.xlu0 %4271
      %4273 = vrot.lane.b32.xlu0 %v2332, 120
      %v4274 = vpop.permute.xlu0 %4273
      %4275 = vrot.lane.b32.xlu0 %v2333, 120
      %v4276 = vpop.permute.xlu0 %4275
      %4277 = vrot.lane.b32.xlu0 %v2334, 120
      %v4278 = vpop.permute.xlu0 %4277
      %4279 = vrot.lane.b32.xlu0 %v2335, 120
      %v4280 = vpop.permute.xlu0 %4279
      %4281 = vrot.lane.b32.xlu0 %v2336, 120
      %v4282 = vpop.permute.xlu0 %4281
      %4283 = vrot.lane.b32.xlu0 %v2337, 120
      %v4284 = vpop.permute.xlu0 %4283
      %4285 = vrot.lane.b32.xlu0 %v2338, 120
      %v4286 = vpop.permute.xlu0 %4285
      %4287 = vrot.lane.b32.xlu0 %v2339, 120
      %v4288 = vpop.permute.xlu0 %4287
      %4289 = vrot.lane.b32.xlu0 %v2340, 120
      %v4290 = vpop.permute.xlu0 %4289
      %4291 = vrot.lane.b32.xlu0 %v2341, 120
      %v4292 = vpop.permute.xlu0 %4291
      %4293 = vrot.lane.b32.xlu0 %v2342, 120
      %v4294 = vpop.permute.xlu0 %4293
      %4295 = vrot.lane.b32.xlu0 %v2343, 120
      %v4296 = vpop.permute.xlu0 %4295
      %4297 = vrot.lane.b32.xlu0 %v2344, 120
      %v4298 = vpop.permute.xlu0 %4297
      %4299 = vrot.lane.b32.xlu0 %v2345, 120
      %v4300 = vpop.permute.xlu0 %4299
      %4301 = vrot.lane.b32.xlu0 %v2346, 120
      %v4302 = vpop.permute.xlu0 %4301
      %v4303 = vsel %vm2355, %v4240, 0
      %v4305 = vsel %vm2355, %v4242, 0
      %v4307 = vsel %vm2355, %v4244, 0
      %v4309 = vsel %vm2355, %v4246, 0
      %v4311 = vsel %vm2355, %v4248, 0
      %v4313 = vsel %vm2355, %v4250, 0
      %v4315 = vsel %vm2355, %v4252, 0
      %v4317 = vsel %vm2355, %v4254, 0
      %v4319 = vsel %vm2355, %v4256, 0
      %v4321 = vsel %vm2355, %v4258, 0
      %v4323 = vsel %vm2355, %v4260, 0
      %v4325 = vsel %vm2355, %v4262, 0
      %v4327 = vsel %vm2355, %v4264, 0
      %v4329 = vsel %vm2355, %v4266, 0
      %v4331 = vsel %vm2355, %v4268, 0
      %v4333 = vsel %vm2355, %v4270, 0
      %v4335 = vsel %vm2355, %v4272, 0
      %v4337 = vsel %vm2355, %v4274, 0
      %v4339 = vsel %vm2355, %v4276, 0
      %v4341 = vsel %vm2355, %v4278, 0
      %v4343 = vsel %vm2355, %v4280, 0
      %v4345 = vsel %vm2355, %v4282, 0
      %v4347 = vsel %vm2355, %v4284, 0
      %v4349 = vsel %vm2355, %v4286, 0
      %v4351 = vsel %vm2355, %v4288, 0
      %v4353 = vsel %vm2355, %v4290, 0
      %v4355 = vsel %vm2355, %v4292, 0
      %v4357 = vsel %vm2355, %v4294, 0
      %v4359 = vsel %vm2355, %v4296, 0
      %v4361 = vsel %vm2355, %v4298, 0
      %v4363 = vsel %vm2355, %v4300, 0
      %v4365 = vsel %vm2355, %v4302, 0
      %4367 = vmatprep.subr.mxu0 0.0
      %v4368 = vand.u32 %v4231, 4294901760
      %4369 = vmatpush1.msra.mxu0 %v4368
      %4370 = vmatprep.subr.mxu0 0.0
      %4371 = vmatpush1.msra.mxu0 0.0
      %4372 = vmatprep.subr.mxu0 0.0
      %4373 = vmatpush1.msra.mxu0 0.0
      %4374 = vmatprep.subr.mxu0 0.0
      %4375 = vmatpush1.msra.mxu0 0.0
      %4376 = vmatprep.subr.mxu0 0.0
      %4377 = vmatpush1.msra.mxu0 0.0
      %4378 = vmatprep.subr.mxu0 0.0
      %4379 = vmatpush1.msra.mxu0 0.0
      %4380 = vmatprep.subr.mxu0 0.0
      %4381 = vmatpush1.msra.mxu0 0.0
      %4382 = vmatprep.subr.mxu0 0.0
      %4383 = vmatpush1.msra.mxu0 0.0
      %4384 = vmatprep.subr.mxu0 0.0
      %4385 = vmatpush1.msra.mxu0 0.0
      %4386 = vmatprep.subr.mxu0 0.0
      %4387 = vmatpush1.msra.mxu0 0.0
      %4388 = vmatprep.subr.mxu0 0.0
      %4389 = vmatpush1.msra.mxu0 0.0
      %4390 = vmatprep.subr.mxu0 0.0
      %4391 = vmatpush1.msra.mxu0 0.0
      %4392 = vmatprep.subr.mxu0 0.0
      %4393 = vmatpush1.msra.mxu0 0.0
      %4394 = vmatprep.subr.mxu0 0.0
      %4395 = vmatpush1.msra.mxu0 0.0
      %4396 = vmatprep.subr.mxu0 0.0
      %4397 = vmatpush1.msra.mxu0 0.0
      %4398 = vmatprep.subr.mxu0 0.0
      %4399 = vmatpush1.msra.mxu0 0.0
      %4400 = vmatprep.subr.mxu0 0.0
      %4401 = vmatpush1.msra.mxu0 0.0
      %4402 = vmatprep.subr.mxu0 0.0
      %4403 = vmatpush1.msra.mxu0 0.0
      %4404 = vmatprep.subr.mxu0 0.0
      %4405 = vmatpush1.msra.mxu0 0.0
      %4406 = vmatprep.subr.mxu0 0.0
      %4407 = vmatpush1.msra.mxu0 0.0
      %4408 = vmatprep.subr.mxu0 0.0
      %4409 = vmatpush1.msra.mxu0 0.0
      %4410 = vmatprep.subr.mxu0 0.0
      %4411 = vmatpush1.msra.mxu0 0.0
      %4412 = vmatprep.subr.mxu0 0.0
      %4413 = vmatpush1.msra.mxu0 0.0
      %4414 = vmatprep.subr.mxu0 0.0
      %4415 = vmatpush1.msra.mxu0 0.0
      %4416 = vmatprep.subr.mxu0 0.0
      %4417 = vmatpush1.msra.mxu0 0.0
      %4418 = vmatprep.subr.mxu0 0.0
      %4419 = vmatpush1.msra.mxu0 0.0
      %4420 = vmatprep.subr.mxu0 0.0
      %4421 = vmatpush1.msra.mxu0 0.0
      %4422 = vmatprep.subr.mxu0 0.0
      %4423 = vmatpush1.msra.mxu0 0.0
      %4424 = vmatprep.subr.mxu0 0.0
      %4425 = vmatpush1.msra.mxu0 0.0
      %4426 = vmatprep.subr.mxu0 0.0
      %4427 = vmatpush1.msra.mxu0 0.0
      %4428 = vmatprep.subr.mxu0 0.0
      %4429 = vmatpush1.msra.mxu0 0.0
      %4430 = vmatprep.subr.mxu0 0.0
      %4431 = vmatpush1.msra.mxu0 0.0
      %4432 = vmatprep.mubr.f32.mxu0 0.0
      %v4433 = vand.u32 %v4303, 4294901760
      %v4434 = vsub.f32 %v4303, %v4433
      %v4435 = vand.u32 %v4434, 4294901760
      %v4436 = vsub.f32 %v4434, %v4435
      %v4437 = vand.u32 %v4436, 4294901760
      %4438 = vmatmul.mubr.f32.gmra.mrb[0].mxu0 %v4437
      %v4439 = vpop.f32.mrb[0].mxu0
      %v4440 = vadd.f32 %v4237, %v4439
      %v4441 = vpop.f32.mrb[0].mxu0
      %4442 = vmatprep.mubr.f32.mxu0 0.0
      %v4443 = vand.u32 %v4305, 4294901760
      %v4444 = vsub.f32 %v4305, %v4443
      %v4445 = vand.u32 %v4444, 4294901760
      %v4446 = vsub.f32 %v4444, %v4445
      %v4447 = vand.u32 %v4446, 4294901760
      %4448 = vmatmul.mubr.f32.gmra.mrb[0].mxu0 %v4447
      %v4449 = vpop.f32.mrb[0].mxu0
      %v4450 = vadd.f32 %v4237, %v4449
      %v4451 = vpop.f32.mrb[0].mxu0
      %4452 = vmatprep.mubr.f32.mxu0 0.0
      %v4453 = vand.u32 %v4307, 4294901760
      %v4454 = vsub.f32 %v4307, %v4453
      %v4455 = vand.u32 %v4454, 4294901760
      %v4456 = vsub.f32 %v4454, %v4455
      %v4457 = vand.u32 %v4456, 4294901760
      %4458 = vmatmul.mubr.f32.gmra.mrb[0].mxu0 %v4457
      %v4459 = vpop.f32.mrb[0].mxu0
      %v4460 = vadd.f32 %v4237, %v4459
      %v4461 = vpop.f32.mrb[0].mxu0
      %4462 = vmatprep.mubr.f32.mxu0 0.0
      %v4463 = vand.u32 %v4309, 4294901760
      %v4464 = vsub.f32 %v4309, %v4463
      %v4465 = vand.u32 %v4464, 4294901760
      %v4466 = vsub.f32 %v4464, %v4465
      %v4467 = vand.u32 %v4466, 4294901760
      %4468 = vmatmul.mubr.f32.gmra.mrb[0].mxu0 %v4467
      %v4469 = vpop.f32.mrb[0].mxu0
      %v4470 = vadd.f32 %v4237, %v4469
      %v4471 = vpop.f32.mrb[0].mxu0
      %4472 = vmatprep.mubr.f32.mxu0 0.0
      %v4473 = vand.u32 %v4311, 4294901760
      %v4474 = vsub.f32 %v4311, %v4473
      %v4475 = vand.u32 %v4474, 4294901760
      %v4476 = vsub.f32 %v4474, %v4475
      %v4477 = vand.u32 %v4476, 4294901760
      %4478 = vmatmul.mubr.f32.gmra.mrb[0].mxu0 %v4477
      %v4479 = vpop.f32.mrb[0].mxu0
      %v4480 = vadd.f32 %v4237, %v4479
      %v4481 = vpop.f32.mrb[0].mxu0
      %4482 = vmatprep.mubr.f32.mxu0 0.0
      %v4483 = vand.u32 %v4313, 4294901760
      %v4484 = vsub.f32 %v4313, %v4483
      %v4485 = vand.u32 %v4484, 4294901760
      %v4486 = vsub.f32 %v4484, %v4485
      %v4487 = vand.u32 %v4486, 4294901760
      %4488 = vmatmul.mubr.f32.gmra.mrb[0].mxu0 %v4487
      %v4489 = vpop.f32.mrb[0].mxu0
      %v4490 = vadd.f32 %v4237, %v4489
      %v4491 = vpop.f32.mrb[0].mxu0
      %4492 = vmatprep.mubr.f32.mxu0 0.0
      %v4493 = vand.u32 %v4315, 4294901760
      %v4494 = vsub.f32 %v4315, %v4493
      %v4495 = vand.u32 %v4494, 4294901760
      %v4496 = vsub.f32 %v4494, %v4495
      %v4497 = vand.u32 %v4496, 4294901760
      %4498 = vmatmul.mubr.f32.gmra.mrb[0].mxu0 %v4497
      %v4499 = vpop.f32.mrb[0].mxu0
      %v4500 = vadd.f32 %v4237, %v4499
      %v4501 = vpop.f32.mrb[0].mxu0
      %4502 = vmatprep.mubr.f32.mxu0 0.0
      %v4503 = vand.u32 %v4317, 4294901760
      %v4504 = vsub.f32 %v4317, %v4503
      %v4505 = vand.u32 %v4504, 4294901760
      %v4506 = vsub.f32 %v4504, %v4505
      %v4507 = vand.u32 %v4506, 4294901760
      %4508 = vmatmul.mubr.f32.gmra.mrb[0].mxu0 %v4507
      %v4509 = vpop.f32.mrb[0].mxu0
      %v4510 = vadd.f32 %v4237, %v4509
      %v4511 = vpop.f32.mrb[0].mxu0
      %4512 = vmatprep.mubr.f32.mxu0 0.0
      %v4513 = vand.u32 %v4319, 4294901760
      %v4514 = vsub.f32 %v4319, %v4513
      %v4515 = vand.u32 %v4514, 4294901760
      %v4516 = vsub.f32 %v4514, %v4515
      %v4517 = vand.u32 %v4516, 4294901760
      %4518 = vmatmul.mubr.f32.gmra.mrb[0].mxu0 %v4517
      %v4519 = vpop.f32.mrb[0].mxu0
      %v4520 = vadd.f32 %v4237, %v4519
      %v4521 = vpop.f32.mrb[0].mxu0
      %4522 = vmatprep.mubr.f32.mxu0 0.0
      %v4523 = vand.u32 %v4321, 4294901760
      %v4524 = vsub.f32 %v4321, %v4523
      %v4525 = vand.u32 %v4524, 4294901760
      %v4526 = vsub.f32 %v4524, %v4525
      %v4527 = vand.u32 %v4526, 4294901760
      %4528 = vmatmul.mubr.f32.gmra.mrb[0].mxu0 %v4527
      %v4529 = vpop.f32.mrb[0].mxu0
      %v4530 = vadd.f32 %v4237, %v4529
      %v4531 = vpop.f32.mrb[0].mxu0
      %4532 = vmatprep.mubr.f32.mxu0 0.0
      %v4533 = vand.u32 %v4323, 4294901760
      %v4534 = vsub.f32 %v4323, %v4533
      %v4535 = vand.u32 %v4534, 4294901760
      %v4536 = vsub.f32 %v4534, %v4535
      %v4537 = vand.u32 %v4536, 4294901760
      %4538 = vmatmul.mubr.f32.gmra.mrb[0].mxu0 %v4537
      %v4539 = vpop.f32.mrb[0].mxu0
      %v4540 = vadd.f32 %v4237, %v4539
      %v4541 = vpop.f32.mrb[0].mxu0
      %4542 = vmatprep.mubr.f32.mxu0 0.0
      %v4543 = vand.u32 %v4325, 4294901760
      %v4544 = vsub.f32 %v4325, %v4543
      %v4545 = vand.u32 %v4544, 4294901760
      %v4546 = vsub.f32 %v4544, %v4545
      %v4547 = vand.u32 %v4546, 4294901760
      %4548 = vmatmul.mubr.f32.gmra.mrb[0].mxu0 %v4547
      %v4549 = vpop.f32.mrb[0].mxu0
      %v4550 = vadd.f32 %v4237, %v4549
      %v4551 = vpop.f32.mrb[0].mxu0
      %4552 = vmatprep.mubr.f32.mxu0 0.0
      %v4553 = vand.u32 %v4327, 4294901760
      %v4554 = vsub.f32 %v4327, %v4553
      %v4555 = vand.u32 %v4554, 4294901760
      %v4556 = vsub.f32 %v4554, %v4555
      %v4557 = vand.u32 %v4556, 4294901760
      %4558 = vmatmul.mubr.f32.gmra.mrb[0].mxu0 %v4557
      %v4559 = vpop.f32.mrb[0].mxu0
      %v4560 = vadd.f32 %v4237, %v4559
      %v4561 = vpop.f32.mrb[0].mxu0
      %4562 = vmatprep.mubr.f32.mxu0 0.0
      %v4563 = vand.u32 %v4329, 4294901760
      %v4564 = vsub.f32 %v4329, %v4563
      %v4565 = vand.u32 %v4564, 4294901760
      %v4566 = vsub.f32 %v4564, %v4565
      %v4567 = vand.u32 %v4566, 4294901760
      %4568 = vmatmul.mubr.f32.gmra.mrb[0].mxu0 %v4567
      %v4569 = vpop.f32.mrb[0].mxu0
      %v4570 = vadd.f32 %v4237, %v4569
      %v4571 = vpop.f32.mrb[0].mxu0
      %4572 = vmatprep.mubr.f32.mxu0 0.0
      %v4573 = vand.u32 %v4331, 4294901760
      %v4574 = vsub.f32 %v4331, %v4573
      %v4575 = vand.u32 %v4574, 4294901760
      %v4576 = vsub.f32 %v4574, %v4575
      %v4577 = vand.u32 %v4576, 4294901760
      %4578 = vmatmul.mubr.f32.gmra.mrb[0].mxu0 %v4577
      %v4579 = vpop.f32.mrb[0].mxu0
      %v4580 = vadd.f32 %v4237, %v4579
      %v4581 = vpop.f32.mrb[0].mxu0
      %4582 = vmatprep.mubr.f32.mxu0 0.0
      %v4583 = vand.u32 %v4333, 4294901760
      %v4584 = vsub.f32 %v4333, %v4583
      %v4585 = vand.u32 %v4584, 4294901760
      %v4586 = vsub.f32 %v4584, %v4585
      %v4587 = vand.u32 %v4586, 4294901760
      %4588 = vmatmul.mubr.f32.gmra.mrb[0].mxu0 %v4587
      %v4589 = vpop.f32.mrb[0].mxu0
      %v4590 = vadd.f32 %v4237, %v4589
      %v4591 = vpop.f32.mrb[0].mxu0
      %4592 = vmatprep.mubr.f32.mxu0 0.0
      %v4593 = vand.u32 %v4335, 4294901760
      %v4594 = vsub.f32 %v4335, %v4593
      %v4595 = vand.u32 %v4594, 4294901760
      %v4596 = vsub.f32 %v4594, %v4595
      %v4597 = vand.u32 %v4596, 4294901760
      %4598 = vmatmul.mubr.f32.gmra.mrb[0].mxu0 %v4597
      %v4599 = vpop.f32.mrb[0].mxu0
      %v4600 = vadd.f32 %v4237, %v4599
      %v4601 = vpop.f32.mrb[0].mxu0
      %4602 = vmatprep.mubr.f32.mxu0 0.0
      %v4603 = vand.u32 %v4337, 4294901760
      %v4604 = vsub.f32 %v4337, %v4603
      %v4605 = vand.u32 %v4604, 4294901760
      %v4606 = vsub.f32 %v4604, %v4605
      %v4607 = vand.u32 %v4606, 4294901760
      %4608 = vmatmul.mubr.f32.gmra.mrb[0].mxu0 %v4607
      %v4609 = vpop.f32.mrb[0].mxu0
      %v4610 = vadd.f32 %v4237, %v4609
      %v4611 = vpop.f32.mrb[0].mxu0
      %4612 = vmatprep.mubr.f32.mxu0 0.0
      %v4613 = vand.u32 %v4339, 4294901760
      %v4614 = vsub.f32 %v4339, %v4613
      %v4615 = vand.u32 %v4614, 4294901760
      %v4616 = vsub.f32 %v4614, %v4615
      %v4617 = vand.u32 %v4616, 4294901760
      %4618 = vmatmul.mubr.f32.gmra.mrb[0].mxu0 %v4617
      %v4619 = vpop.f32.mrb[0].mxu0
      %v4620 = vadd.f32 %v4237, %v4619
      %v4621 = vpop.f32.mrb[0].mxu0
      %4622 = vmatprep.mubr.f32.mxu0 0.0
      %v4623 = vand.u32 %v4341, 4294901760
      %v4624 = vsub.f32 %v4341, %v4623
      %v4625 = vand.u32 %v4624, 4294901760
      %v4626 = vsub.f32 %v4624, %v4625
      %v4627 = vand.u32 %v4626, 4294901760
      %4628 = vmatmul.mubr.f32.gmra.mrb[0].mxu0 %v4627
      %v4629 = vpop.f32.mrb[0].mxu0
      %v4630 = vadd.f32 %v4237, %v4629
      %v4631 = vpop.f32.mrb[0].mxu0
      %4632 = vmatprep.mubr.f32.mxu0 0.0
      %v4633 = vand.u32 %v4343, 4294901760
      %v4634 = vsub.f32 %v4343, %v4633
      %v4635 = vand.u32 %v4634, 4294901760
      %v4636 = vsub.f32 %v4634, %v4635
      %v4637 = vand.u32 %v4636, 4294901760
      %4638 = vmatmul.mubr.f32.gmra.mrb[0].mxu0 %v4637
      %v4639 = vpop.f32.mrb[0].mxu0
      %v4640 = vadd.f32 %v4237, %v4639
      %v4641 = vpop.f32.mrb[0].mxu0
      %4642 = vmatprep.mubr.f32.mxu0 0.0
      %v4643 = vand.u32 %v4345, 4294901760
      %v4644 = vsub.f32 %v4345, %v4643
      %v4645 = vand.u32 %v4644, 4294901760
      %v4646 = vsub.f32 %v4644, %v4645
      %v4647 = vand.u32 %v4646, 4294901760
      %4648 = vmatmul.mubr.f32.gmra.mrb[0].mxu0 %v4647
      %v4649 = vpop.f32.mrb[0].mxu0
      %v4650 = vadd.f32 %v4237, %v4649
      %v4651 = vpop.f32.mrb[0].mxu0
      %4652 = vmatprep.mubr.f32.mxu0 0.0
      %v4653 = vand.u32 %v4347, 4294901760
      %v4654 = vsub.f32 %v4347, %v4653
      %v4655 = vand.u32 %v4654, 4294901760
      %v4656 = vsub.f32 %v4654, %v4655
      %v4657 = vand.u32 %v4656, 4294901760
      %4658 = vmatmul.mubr.f32.gmra.mrb[0].mxu0 %v4657
      %v4659 = vpop.f32.mrb[0].mxu0
      %v4660 = vadd.f32 %v4237, %v4659
      %v4661 = vpop.f32.mrb[0].mxu0
      %4662 = vmatprep.mubr.f32.mxu0 0.0
      %v4663 = vand.u32 %v4349, 4294901760
      %v4664 = vsub.f32 %v4349, %v4663
      %v4665 = vand.u32 %v4664, 4294901760
      %v4666 = vsub.f32 %v4664, %v4665
      %v4667 = vand.u32 %v4666, 4294901760
      %4668 = vmatmul.mubr.f32.gmra.mrb[0].mxu0 %v4667
      %v4669 = vpop.f32.mrb[0].mxu0
      %v4670 = vadd.f32 %v4237, %v4669
      %v4671 = vpop.f32.mrb[0].mxu0
      %4672 = vmatprep.mubr.f32.mxu0 0.0
      %v4673 = vand.u32 %v4351, 4294901760
      %v4674 = vsub.f32 %v4351, %v4673
      %v4675 = vand.u32 %v4674, 4294901760
      %v4676 = vsub.f32 %v4674, %v4675
      %v4677 = vand.u32 %v4676, 4294901760
      %4678 = vmatmul.mubr.f32.gmra.mrb[0].mxu0 %v4677
      %v4679 = vpop.f32.mrb[0].mxu0
      %v4680 = vadd.f32 %v4237, %v4679
      %v4681 = vpop.f32.mrb[0].mxu0
      %4682 = vmatprep.mubr.f32.mxu0 0.0
      %v4683 = vand.u32 %v4353, 4294901760
      %v4684 = vsub.f32 %v4353, %v4683
      %v4685 = vand.u32 %v4684, 4294901760
      %v4686 = vsub.f32 %v4684, %v4685
      %v4687 = vand.u32 %v4686, 4294901760
      %4688 = vmatmul.mubr.f32.gmra.mrb[0].mxu0 %v4687
      %v4689 = vpop.f32.mrb[0].mxu0
      %v4690 = vadd.f32 %v4237, %v4689
      %v4691 = vpop.f32.mrb[0].mxu0
      %4692 = vmatprep.mubr.f32.mxu0 0.0
      %v4693 = vand.u32 %v4355, 4294901760
      %v4694 = vsub.f32 %v4355, %v4693
      %v4695 = vand.u32 %v4694, 4294901760
      %v4696 = vsub.f32 %v4694, %v4695
      %v4697 = vand.u32 %v4696, 4294901760
      %4698 = vmatmul.mubr.f32.gmra.mrb[0].mxu0 %v4697
      %v4699 = vpop.f32.mrb[0].mxu0
      %v4700 = vadd.f32 %v4237, %v4699
      %v4701 = vpop.f32.mrb[0].mxu0
      %4702 = vmatprep.mubr.f32.mxu0 0.0
      %v4703 = vand.u32 %v4357, 4294901760
      %v4704 = vsub.f32 %v4357, %v4703
      %v4705 = vand.u32 %v4704, 4294901760
      %v4706 = vsub.f32 %v4704, %v4705
      %v4707 = vand.u32 %v4706, 4294901760
      %4708 = vmatmul.mubr.f32.gmra.mrb[0].mxu0 %v4707
      %v4709 = vpop.f32.mrb[0].mxu0
      %v4710 = vadd.f32 %v4237, %v4709
      %v4711 = vpop.f32.mrb[0].mxu0
      %4712 = vmatprep.mubr.f32.mxu0 0.0
      %v4713 = vand.u32 %v4359, 4294901760
      %v4714 = vsub.f32 %v4359, %v4713
      %v4715 = vand.u32 %v4714, 4294901760
      %v4716 = vsub.f32 %v4714, %v4715
      %v4717 = vand.u32 %v4716, 4294901760
      %4718 = vmatmul.mubr.f32.gmra.mrb[0].mxu0 %v4717
      %v4719 = vpop.f32.mrb[0].mxu0
      %v4720 = vadd.f32 %v4237, %v4719
      %v4721 = vpop.f32.mrb[0].mxu0
      %4722 = vmatprep.mubr.f32.mxu0 0.0
      %v4723 = vand.u32 %v4361, 4294901760
      %v4724 = vsub.f32 %v4361, %v4723
      %v4725 = vand.u32 %v4724, 4294901760
      %v4726 = vsub.f32 %v4724, %v4725
      %v4727 = vand.u32 %v4726, 4294901760
      %4728 = vmatmul.mubr.f32.gmra.mrb[0].mxu0 %v4727
      %v4729 = vpop.f32.mrb[0].mxu0
      %v4730 = vadd.f32 %v4237, %v4729
      %v4731 = vpop.f32.mrb[0].mxu0
      %4732 = vmatprep.mubr.f32.mxu0 0.0
      %v4733 = vand.u32 %v4363, 4294901760
      %v4734 = vsub.f32 %v4363, %v4733
      %v4735 = vand.u32 %v4734, 4294901760
      %v4736 = vsub.f32 %v4734, %v4735
      %v4737 = vand.u32 %v4736, 4294901760
      %4738 = vmatmul.mubr.f32.gmra.mrb[0].mxu0 %v4737
      %v4739 = vpop.f32.mrb[0].mxu0
      %v4740 = vadd.f32 %v4237, %v4739
      %v4741 = vpop.f32.mrb[0].mxu0
      %4742 = vmatprep.mubr.f32.mxu0 0.0
      %v4743 = vand.u32 %v4365, 4294901760
      %v4744 = vsub.f32 %v4365, %v4743
      %v4745 = vand.u32 %v4744, 4294901760
      %v4746 = vsub.f32 %v4744, %v4745
      %v4747 = vand.u32 %v4746, 4294901760
      %4748 = vmatmul.mubr.f32.gmra.mrb[0].mxu0 %v4747
      %v4749 = vpop.f32.mrb[0].mxu0
      %v4750 = vadd.f32 %v4237, %v4749
      %v4751 = vpop.f32.mrb[0].mxu0
      %4752 = vdwg.mxu0
      %4753 = vmatprep.subr.mxu0 0.0
      %v4754 = vand.u32 %v4231, 4294901760
      %v4755 = vsub.f32 %v4231, %v4754
      %v4756 = vand.u32 %v4755, 4294901760
      %v4757 = vsub.f32 %v4755, %v4756
      %v4758 = vand.u32 %v4757, 4294901760
      %4759 = vmatpush1.msra.mxu0 %v4758
      %4760 = vmatprep.subr.mxu0 0.0
      %4761 = vmatpush1.msra.mxu0 0.0
      %4762 = vmatprep.subr.mxu0 0.0
      %4763 = vmatpush1.msra.mxu0 0.0
      %4764 = vmatprep.subr.mxu0 0.0
      %4765 = vmatpush1.msra.mxu0 0.0
      %4766 = vmatprep.subr.mxu0 0.0
      %4767 = vmatpush1.msra.mxu0 0.0
      %4768 = vmatprep.subr.mxu0 0.0
      %4769 = vmatpush1.msra.mxu0 0.0
      %4770 = vmatprep.subr.mxu0 0.0
      %4771 = vmatpush1.msra.mxu0 0.0
      %4772 = vmatprep.subr.mxu0 0.0
      %4773 = vmatpush1.msra.mxu0 0.0
      %4774 = vmatprep.subr.mxu0 0.0
      %4775 = vmatpush1.msra.mxu0 0.0
      %4776 = vmatprep.subr.mxu0 0.0
      %4777 = vmatpush1.msra.mxu0 0.0
      %4778 = vmatprep.subr.mxu0 0.0
      %4779 = vmatpush1.msra.mxu0 0.0
      %4780 = vmatprep.subr.mxu0 0.0
      %4781 = vmatpush1.msra.mxu0 0.0
      %4782 = vmatprep.subr.mxu0 0.0
      %4783 = vmatpush1.msra.mxu0 0.0
      %4784 = vmatprep.subr.mxu0 0.0
      %4785 = vmatpush1.msra.mxu0 0.0
      %4786 = vmatprep.subr.mxu0 0.0
      %4787 = vmatpush1.msra.mxu0 0.0
      %4788 = vmatprep.subr.mxu0 0.0
      %4789 = vmatpush1.msra.mxu0 0.0
      %4790 = vmatprep.subr.mxu0 0.0
      %4791 = vmatpush1.msra.mxu0 0.0
      %4792 = vmatprep.subr.mxu0 0.0
      %4793 = vmatpush1.msra.mxu0 0.0
      %4794 = vmatprep.subr.mxu0 0.0
      %4795 = vmatpush1.msra.mxu0 0.0
      %4796 = vmatprep.subr.mxu0 0.0
      %4797 = vmatpush1.msra.mxu0 0.0
      %4798 = vmatprep.subr.mxu0 0.0
      %4799 = vmatpush1.msra.mxu0 0.0
      %4800 = vmatprep.subr.mxu0 0.0
      %4801 = vmatpush1.msra.mxu0 0.0
      %4802 = vmatprep.subr.mxu0 0.0
      %4803 = vmatpush1.msra.mxu0 0.0
      %4804 = vmatprep.subr.mxu0 0.0
      %4805 = vmatpush1.msra.mxu0 0.0
      %4806 = vmatprep.subr.mxu0 0.0
      %4807 = vmatpush1.msra.mxu0 0.0
      %4808 = vmatprep.subr.mxu0 0.0
      %4809 = vmatpush1.msra.mxu0 0.0
      %4810 = vmatprep.subr.mxu0 0.0
      %4811 = vmatpush1.msra.mxu0 0.0
      %4812 = vmatprep.subr.mxu0 0.0
      %4813 = vmatpush1.msra.mxu0 0.0
      %4814 = vmatprep.subr.mxu0 0.0
      %4815 = vmatpush1.msra.mxu0 0.0
      %4816 = vmatprep.subr.mxu0 0.0
      %4817 = vmatpush1.msra.mxu0 0.0
      %4818 = vmatprep.subr.mxu0 0.0
      %4819 = vmatpush1.msra.mxu0 0.0
      %4820 = vmatprep.subr.mxu0 0.0
      %4821 = vmatpush1.msra.mxu0 0.0
      %4822 = vmatprep.mubr.f32.mxu0 0.0
      %v4823 = vand.u32 %v4303, 4294901760
      %4824 = vmatmul.mubr.f32.gmra.mrb[0].mxu0 %v4823
      %v4825 = vpop.f32.mrb[0].mxu0
      %v4826 = vadd.f32 %v4440, %v4825
      %v4827 = vpop.f32.mrb[0].mxu0
      %4828 = vmatprep.mubr.f32.mxu0 0.0
      %v4829 = vand.u32 %v4305, 4294901760
      %4830 = vmatmul.mubr.f32.gmra.mrb[0].mxu0 %v4829
      %v4831 = vpop.f32.mrb[0].mxu0
      %v4832 = vadd.f32 %v4450, %v4831
      %v4833 = vpop.f32.mrb[0].mxu0
      %4834 = vmatprep.mubr.f32.mxu0 0.0
      %v4835 = vand.u32 %v4307, 4294901760
      %4836 = vmatmul.mubr.f32.gmra.mrb[0].mxu0 %v4835
      %v4837 = vpop.f32.mrb[0].mxu0
      %v4838 = vadd.f32 %v4460, %v4837
      %v4839 = vpop.f32.mrb[0].mxu0
      %4840 = vmatprep.mubr.f32.mxu0 0.0
      %v4841 = vand.u32 %v4309, 4294901760
      %4842 = vmatmul.mubr.f32.gmra.mrb[0].mxu0 %v4841
      %v4843 = vpop.f32.mrb[0].mxu0
      %v4844 = vadd.f32 %v4470, %v4843
      %v4845 = vpop.f32.mrb[0].mxu0
      %4846 = vmatprep.mubr.f32.mxu0 0.0
      %v4847 = vand.u32 %v4311, 4294901760
      %4848 = vmatmul.mubr.f32.gmra.mrb[0].mxu0 %v4847
      %v4849 = vpop.f32.mrb[0].mxu0
      %v4850 = vadd.f32 %v4480, %v4849
      %v4851 = vpop.f32.mrb[0].mxu0
      %4852 = vmatprep.mubr.f32.mxu0 0.0
      %v4853 = vand.u32 %v4313, 4294901760
      %4854 = vmatmul.mubr.f32.gmra.mrb[0].mxu0 %v4853
      %v4855 = vpop.f32.mrb[0].mxu0
      %v4856 = vadd.f32 %v4490, %v4855
      %v4857 = vpop.f32.mrb[0].mxu0
      %4858 = vmatprep.mubr.f32.mxu0 0.0
      %v4859 = vand.u32 %v4315, 4294901760
      %4860 = vmatmul.mubr.f32.gmra.mrb[0].mxu0 %v4859
      %v4861 = vpop.f32.mrb[0].mxu0
      %v4862 = vadd.f32 %v4500, %v4861
      %v4863 = vpop.f32.mrb[0].mxu0
      %4864 = vmatprep.mubr.f32.mxu0 0.0
      %v4865 = vand.u32 %v4317, 4294901760
      %4866 = vmatmul.mubr.f32.gmra.mrb[0].mxu0 %v4865
      %v4867 = vpop.f32.mrb[0].mxu0
      %v4868 = vadd.f32 %v4510, %v4867
      %v4869 = vpop.f32.mrb[0].mxu0
      %4870 = vmatprep.mubr.f32.mxu0 0.0
      %v4871 = vand.u32 %v4319, 4294901760
      %4872 = vmatmul.mubr.f32.gmra.mrb[0].mxu0 %v4871
      %v4873 = vpop.f32.mrb[0].mxu0
      %v4874 = vadd.f32 %v4520, %v4873
      %v4875 = vpop.f32.mrb[0].mxu0
      %4876 = vmatprep.mubr.f32.mxu0 0.0
      %v4877 = vand.u32 %v4321, 4294901760
      %4878 = vmatmul.mubr.f32.gmra.mrb[0].mxu0 %v4877
      %v4879 = vpop.f32.mrb[0].mxu0
      %v4880 = vadd.f32 %v4530, %v4879
      %v4881 = vpop.f32.mrb[0].mxu0
      %4882 = vmatprep.mubr.f32.mxu0 0.0
      %v4883 = vand.u32 %v4323, 4294901760
      %4884 = vmatmul.mubr.f32.gmra.mrb[0].mxu0 %v4883
      %v4885 = vpop.f32.mrb[0].mxu0
      %v4886 = vadd.f32 %v4540, %v4885
      %v4887 = vpop.f32.mrb[0].mxu0
      %4888 = vmatprep.mubr.f32.mxu0 0.0
      %v4889 = vand.u32 %v4325, 4294901760
      %4890 = vmatmul.mubr.f32.gmra.mrb[0].mxu0 %v4889
      %v4891 = vpop.f32.mrb[0].mxu0
      %v4892 = vadd.f32 %v4550, %v4891
      %v4893 = vpop.f32.mrb[0].mxu0
      %4894 = vmatprep.mubr.f32.mxu0 0.0
      %v4895 = vand.u32 %v4327, 4294901760
      %4896 = vmatmul.mubr.f32.gmra.mrb[0].mxu0 %v4895
      %v4897 = vpop.f32.mrb[0].mxu0
      %v4898 = vadd.f32 %v4560, %v4897
      %v4899 = vpop.f32.mrb[0].mxu0
      %4900 = vmatprep.mubr.f32.mxu0 0.0
      %v4901 = vand.u32 %v4329, 4294901760
      %4902 = vmatmul.mubr.f32.gmra.mrb[0].mxu0 %v4901
      %v4903 = vpop.f32.mrb[0].mxu0
      %v4904 = vadd.f32 %v4570, %v4903
      %v4905 = vpop.f32.mrb[0].mxu0
      %4906 = vmatprep.mubr.f32.mxu0 0.0
      %v4907 = vand.u32 %v4331, 4294901760
      %4908 = vmatmul.mubr.f32.gmra.mrb[0].mxu0 %v4907
      %v4909 = vpop.f32.mrb[0].mxu0
      %v4910 = vadd.f32 %v4580, %v4909
      %v4911 = vpop.f32.mrb[0].mxu0
      %4912 = vmatprep.mubr.f32.mxu0 0.0
      %v4913 = vand.u32 %v4333, 4294901760
      %4914 = vmatmul.mubr.f32.gmra.mrb[0].mxu0 %v4913
      %v4915 = vpop.f32.mrb[0].mxu0
      %v4916 = vadd.f32 %v4590, %v4915
      %v4917 = vpop.f32.mrb[0].mxu0
      %4918 = vmatprep.mubr.f32.mxu0 0.0
      %v4919 = vand.u32 %v4335, 4294901760
      %4920 = vmatmul.mubr.f32.gmra.mrb[0].mxu0 %v4919
      %v4921 = vpop.f32.mrb[0].mxu0
      %v4922 = vadd.f32 %v4600, %v4921
      %v4923 = vpop.f32.mrb[0].mxu0
      %4924 = vmatprep.mubr.f32.mxu0 0.0
      %v4925 = vand.u32 %v4337, 4294901760
      %4926 = vmatmul.mubr.f32.gmra.mrb[0].mxu0 %v4925
      %v4927 = vpop.f32.mrb[0].mxu0
      %v4928 = vadd.f32 %v4610, %v4927
      %v4929 = vpop.f32.mrb[0].mxu0
      %4930 = vmatprep.mubr.f32.mxu0 0.0
      %v4931 = vand.u32 %v4339, 4294901760
      %4932 = vmatmul.mubr.f32.gmra.mrb[0].mxu0 %v4931
      %v4933 = vpop.f32.mrb[0].mxu0
      %v4934 = vadd.f32 %v4620, %v4933
      %v4935 = vpop.f32.mrb[0].mxu0
      %4936 = vmatprep.mubr.f32.mxu0 0.0
      %v4937 = vand.u32 %v4341, 4294901760
      %4938 = vmatmul.mubr.f32.gmra.mrb[0].mxu0 %v4937
      %v4939 = vpop.f32.mrb[0].mxu0
      %v4940 = vadd.f32 %v4630, %v4939
      %v4941 = vpop.f32.mrb[0].mxu0
      %4942 = vmatprep.mubr.f32.mxu0 0.0
      %v4943 = vand.u32 %v4343, 4294901760
      %4944 = vmatmul.mubr.f32.gmra.mrb[0].mxu0 %v4943
      %v4945 = vpop.f32.mrb[0].mxu0
      %v4946 = vadd.f32 %v4640, %v4945
      %v4947 = vpop.f32.mrb[0].mxu0
      %4948 = vmatprep.mubr.f32.mxu0 0.0
      %v4949 = vand.u32 %v4345, 4294901760
      %4950 = vmatmul.mubr.f32.gmra.mrb[0].mxu0 %v4949
      %v4951 = vpop.f32.mrb[0].mxu0
      %v4952 = vadd.f32 %v4650, %v4951
      %v4953 = vpop.f32.mrb[0].mxu0
      %4954 = vmatprep.mubr.f32.mxu0 0.0
      %v4955 = vand.u32 %v4347, 4294901760
      %4956 = vmatmul.mubr.f32.gmra.mrb[0].mxu0 %v4955
      %v4957 = vpop.f32.mrb[0].mxu0
      %v4958 = vadd.f32 %v4660, %v4957
      %v4959 = vpop.f32.mrb[0].mxu0
      %4960 = vmatprep.mubr.f32.mxu0 0.0
      %v4961 = vand.u32 %v4349, 4294901760
      %4962 = vmatmul.mubr.f32.gmra.mrb[0].mxu0 %v4961
      %v4963 = vpop.f32.mrb[0].mxu0
      %v4964 = vadd.f32 %v4670, %v4963
      %v4965 = vpop.f32.mrb[0].mxu0
      %4966 = vmatprep.mubr.f32.mxu0 0.0
      %v4967 = vand.u32 %v4351, 4294901760
      %4968 = vmatmul.mubr.f32.gmra.mrb[0].mxu0 %v4967
      %v4969 = vpop.f32.mrb[0].mxu0
      %v4970 = vadd.f32 %v4680, %v4969
      %v4971 = vpop.f32.mrb[0].mxu0
      %4972 = vmatprep.mubr.f32.mxu0 0.0
      %v4973 = vand.u32 %v4353, 4294901760
      %4974 = vmatmul.mubr.f32.gmra.mrb[0].mxu0 %v4973
      %v4975 = vpop.f32.mrb[0].mxu0
      %v4976 = vadd.f32 %v4690, %v4975
      %v4977 = vpop.f32.mrb[0].mxu0
      %4978 = vmatprep.mubr.f32.mxu0 0.0
      %v4979 = vand.u32 %v4355, 4294901760
      %4980 = vmatmul.mubr.f32.gmra.mrb[0].mxu0 %v4979
      %v4981 = vpop.f32.mrb[0].mxu0
      %v4982 = vadd.f32 %v4700, %v4981
      %v4983 = vpop.f32.mrb[0].mxu0
      %4984 = vmatprep.mubr.f32.mxu0 0.0
      %v4985 = vand.u32 %v4357, 4294901760
      %4986 = vmatmul.mubr.f32.gmra.mrb[0].mxu0 %v4985
      %v4987 = vpop.f32.mrb[0].mxu0
      %v4988 = vadd.f32 %v4710, %v4987
      %v4989 = vpop.f32.mrb[0].mxu0
      %4990 = vmatprep.mubr.f32.mxu0 0.0
      %v4991 = vand.u32 %v4359, 4294901760
      %4992 = vmatmul.mubr.f32.gmra.mrb[0].mxu0 %v4991
      %v4993 = vpop.f32.mrb[0].mxu0
      %v4994 = vadd.f32 %v4720, %v4993
      %v4995 = vpop.f32.mrb[0].mxu0
      %4996 = vmatprep.mubr.f32.mxu0 0.0
      %v4997 = vand.u32 %v4361, 4294901760
      %4998 = vmatmul.mubr.f32.gmra.mrb[0].mxu0 %v4997
      %v4999 = vpop.f32.mrb[0].mxu0
      %v5000 = vadd.f32 %v4730, %v4999
      %v5001 = vpop.f32.mrb[0].mxu0
      %5002 = vmatprep.mubr.f32.mxu0 0.0
      %v5003 = vand.u32 %v4363, 4294901760
      %5004 = vmatmul.mubr.f32.gmra.mrb[0].mxu0 %v5003
      %v5005 = vpop.f32.mrb[0].mxu0
      %v5006 = vadd.f32 %v4740, %v5005
      %v5007 = vpop.f32.mrb[0].mxu0
      %5008 = vmatprep.mubr.f32.mxu0 0.0
      %v5009 = vand.u32 %v4365, 4294901760
      %5010 = vmatmul.mubr.f32.gmra.mrb[0].mxu0 %v5009
      %v5011 = vpop.f32.mrb[0].mxu0
      %v5012 = vadd.f32 %v4750, %v5011
      %v5013 = vpop.f32.mrb[0].mxu0
      %5014 = vdwg.mxu0
      %5015 = vmatprep.subr.mxu0 0.0
      %v5016 = vand.u32 %v4231, 4294901760
      %v5017 = vsub.f32 %v4231, %v5016
      %5018 = vmatpush1.msra.mxu0 %v5017
      %5019 = vmatprep.subr.mxu0 0.0
      %5020 = vmatpush1.msra.mxu0 0.0
      %5021 = vmatprep.subr.mxu0 0.0
      %5022 = vmatpush1.msra.mxu0 0.0
      %5023 = vmatprep.subr.mxu0 0.0
      %5024 = vmatpush1.msra.mxu0 0.0
      %5025 = vmatprep.subr.mxu0 0.0
      %5026 = vmatpush1.msra.mxu0 0.0
      %5027 = vmatprep.subr.mxu0 0.0
      %5028 = vmatpush1.msra.mxu0 0.0
      %5029 = vmatprep.subr.mxu0 0.0
      %5030 = vmatpush1.msra.mxu0 0.0
      %5031 = vmatprep.subr.mxu0 0.0
      %5032 = vmatpush1.msra.mxu0 0.0
      %5033 = vmatprep.subr.mxu0 0.0
      %5034 = vmatpush1.msra.mxu0 0.0
      %5035 = vmatprep.subr.mxu0 0.0
      %5036 = vmatpush1.msra.mxu0 0.0
      %5037 = vmatprep.subr.mxu0 0.0
      %5038 = vmatpush1.msra.mxu0 0.0
      %5039 = vmatprep.subr.mxu0 0.0
      %5040 = vmatpush1.msra.mxu0 0.0
      %5041 = vmatprep.subr.mxu0 0.0
      %5042 = vmatpush1.msra.mxu0 0.0
      %5043 = vmatprep.subr.mxu0 0.0
      %5044 = vmatpush1.msra.mxu0 0.0
      %5045 = vmatprep.subr.mxu0 0.0
      %5046 = vmatpush1.msra.mxu0 0.0
      %5047 = vmatprep.subr.mxu0 0.0
      %5048 = vmatpush1.msra.mxu0 0.0
      %5049 = vmatprep.subr.mxu0 0.0
      %5050 = vmatpush1.msra.mxu0 0.0
      %5051 = vmatprep.subr.mxu0 0.0
      %5052 = vmatpush1.msra.mxu0 0.0
      %5053 = vmatprep.subr.mxu0 0.0
      %5054 = vmatpush1.msra.mxu0 0.0
      %5055 = vmatprep.subr.mxu0 0.0
      %5056 = vmatpush1.msra.mxu0 0.0
      %5057 = vmatprep.subr.mxu0 0.0
      %5058 = vmatpush1.msra.mxu0 0.0
      %5059 = vmatprep.subr.mxu0 0.0
      %5060 = vmatpush1.msra.mxu0 0.0
      %5061 = vmatprep.subr.mxu0 0.0
      %5062 = vmatpush1.msra.mxu0 0.0
      %5063 = vmatprep.subr.mxu0 0.0
      %5064 = vmatpush1.msra.mxu0 0.0
      %5065 = vmatprep.subr.mxu0 0.0
      %5066 = vmatpush1.msra.mxu0 0.0
      %5067 = vmatprep.subr.mxu0 0.0
      %5068 = vmatpush1.msra.mxu0 0.0
      %5069 = vmatprep.subr.mxu0 0.0
      %5070 = vmatpush1.msra.mxu0 0.0
      %5071 = vmatprep.subr.mxu0 0.0
      %5072 = vmatpush1.msra.mxu0 0.0
      %5073 = vmatprep.subr.mxu0 0.0
      %5074 = vmatpush1.msra.mxu0 0.0
      %5075 = vmatprep.subr.mxu0 0.0
      %5076 = vmatpush1.msra.mxu0 0.0
      %5077 = vmatprep.subr.mxu0 0.0
      %5078 = vmatpush1.msra.mxu0 0.0
      %5079 = vmatprep.subr.mxu0 0.0
      %5080 = vmatpush1.msra.mxu0 0.0
      %5081 = vmatprep.mubr.f32.mxu0 0.0
      %v5082 = vand.u32 %v4303, 4294901760
      %v5083 = vsub.f32 %v4303, %v5082
      %5084 = vmatmul.mubr.f32.gmra.mrb[0].mxu0 %v5083
      %v5085 = vpop.f32.mrb[0].mxu0
      %v5086 = vadd.f32 %v4826, %v5085
      %v5087 = vpop.f32.mrb[0].mxu0
      %5088 = vmatprep.mubr.f32.mxu0 0.0
      %v5089 = vand.u32 %v4305, 4294901760
      %v5090 = vsub.f32 %v4305, %v5089
      %5091 = vmatmul.mubr.f32.gmra.mrb[0].mxu0 %v5090
      %v5092 = vpop.f32.mrb[0].mxu0
      %v5093 = vadd.f32 %v4832, %v5092
      %v5094 = vpop.f32.mrb[0].mxu0
      %5095 = vmatprep.mubr.f32.mxu0 0.0
      %v5096 = vand.u32 %v4307, 4294901760
      %v5097 = vsub.f32 %v4307, %v5096
      %5098 = vmatmul.mubr.f32.gmra.mrb[0].mxu0 %v5097
      %v5099 = vpop.f32.mrb[0].mxu0
      %v5100 = vadd.f32 %v4838, %v5099
      %v5101 = vpop.f32.mrb[0].mxu0
      %5102 = vmatprep.mubr.f32.mxu0 0.0
      %v5103 = vand.u32 %v4309, 4294901760
      %v5104 = vsub.f32 %v4309, %v5103
      %5105 = vmatmul.mubr.f32.gmra.mrb[0].mxu0 %v5104
      %v5106 = vpop.f32.mrb[0].mxu0
      %v5107 = vadd.f32 %v4844, %v5106
      %v5108 = vpop.f32.mrb[0].mxu0
      %5109 = vmatprep.mubr.f32.mxu0 0.0
      %v5110 = vand.u32 %v4311, 4294901760
      %v5111 = vsub.f32 %v4311, %v5110
      %5112 = vmatmul.mubr.f32.gmra.mrb[0].mxu0 %v5111
      %v5113 = vpop.f32.mrb[0].mxu0
      %v5114 = vadd.f32 %v4850, %v5113
      %v5115 = vpop.f32.mrb[0].mxu0
      %5116 = vmatprep.mubr.f32.mxu0 0.0
      %v5117 = vand.u32 %v4313, 4294901760
      %v5118 = vsub.f32 %v4313, %v5117
      %5119 = vmatmul.mubr.f32.gmra.mrb[0].mxu0 %v5118
      %v5120 = vpop.f32.mrb[0].mxu0
      %v5121 = vadd.f32 %v4856, %v5120
      %v5122 = vpop.f32.mrb[0].mxu0
      %5123 = vmatprep.mubr.f32.mxu0 0.0
      %v5124 = vand.u32 %v4315, 4294901760
      %v5125 = vsub.f32 %v4315, %v5124
      %5126 = vmatmul.mubr.f32.gmra.mrb[0].mxu0 %v5125
      %v5127 = vpop.f32.mrb[0].mxu0
      %v5128 = vadd.f32 %v4862, %v5127
      %v5129 = vpop.f32.mrb[0].mxu0
      %5130 = vmatprep.mubr.f32.mxu0 0.0
      %v5131 = vand.u32 %v4317, 4294901760
      %v5132 = vsub.f32 %v4317, %v5131
      %5133 = vmatmul.mubr.f32.gmra.mrb[0].mxu0 %v5132
      %v5134 = vpop.f32.mrb[0].mxu0
      %v5135 = vadd.f32 %v4868, %v5134
      %v5136 = vpop.f32.mrb[0].mxu0
      %5137 = vmatprep.mubr.f32.mxu0 0.0
      %v5138 = vand.u32 %v4319, 4294901760
      %v5139 = vsub.f32 %v4319, %v5138
      %5140 = vmatmul.mubr.f32.gmra.mrb[0].mxu0 %v5139
      %v5141 = vpop.f32.mrb[0].mxu0
      %v5142 = vadd.f32 %v4874, %v5141
      %v5143 = vpop.f32.mrb[0].mxu0
      %5144 = vmatprep.mubr.f32.mxu0 0.0
      %v5145 = vand.u32 %v4321, 4294901760
      %v5146 = vsub.f32 %v4321, %v5145
      %5147 = vmatmul.mubr.f32.gmra.mrb[0].mxu0 %v5146
      %v5148 = vpop.f32.mrb[0].mxu0
      %v5149 = vadd.f32 %v4880, %v5148
      %v5150 = vpop.f32.mrb[0].mxu0
      %5151 = vmatprep.mubr.f32.mxu0 0.0
      %v5152 = vand.u32 %v4323, 4294901760
      %v5153 = vsub.f32 %v4323, %v5152
      %5154 = vmatmul.mubr.f32.gmra.mrb[0].mxu0 %v5153
      %v5155 = vpop.f32.mrb[0].mxu0
      %v5156 = vadd.f32 %v4886, %v5155
      %v5157 = vpop.f32.mrb[0].mxu0
      %5158 = vmatprep.mubr.f32.mxu0 0.0
      %v5159 = vand.u32 %v4325, 4294901760
      %v5160 = vsub.f32 %v4325, %v5159
      %5161 = vmatmul.mubr.f32.gmra.mrb[0].mxu0 %v5160
      %v5162 = vpop.f32.mrb[0].mxu0
      %v5163 = vadd.f32 %v4892, %v5162
      %v5164 = vpop.f32.mrb[0].mxu0
      %5165 = vmatprep.mubr.f32.mxu0 0.0
      %v5166 = vand.u32 %v4327, 4294901760
      %v5167 = vsub.f32 %v4327, %v5166
      %5168 = vmatmul.mubr.f32.gmra.mrb[0].mxu0 %v5167
      %v5169 = vpop.f32.mrb[0].mxu0
      %v5170 = vadd.f32 %v4898, %v5169
      %v5171 = vpop.f32.mrb[0].mxu0
      %5172 = vmatprep.mubr.f32.mxu0 0.0
      %v5173 = vand.u32 %v4329, 4294901760
      %v5174 = vsub.f32 %v4329, %v5173
      %5175 = vmatmul.mubr.f32.gmra.mrb[0].mxu0 %v5174
      %v5176 = vpop.f32.mrb[0].mxu0
      %v5177 = vadd.f32 %v4904, %v5176
      %v5178 = vpop.f32.mrb[0].mxu0
      %5179 = vmatprep.mubr.f32.mxu0 0.0
      %v5180 = vand.u32 %v4331, 4294901760
      %v5181 = vsub.f32 %v4331, %v5180
      %5182 = vmatmul.mubr.f32.gmra.mrb[0].mxu0 %v5181
      %v5183 = vpop.f32.mrb[0].mxu0
      %v5184 = vadd.f32 %v4910, %v5183
      %v5185 = vpop.f32.mrb[0].mxu0
      %5186 = vmatprep.mubr.f32.mxu0 0.0
      %v5187 = vand.u32 %v4333, 4294901760
      %v5188 = vsub.f32 %v4333, %v5187
      %5189 = vmatmul.mubr.f32.gmra.mrb[0].mxu0 %v5188
      %v5190 = vpop.f32.mrb[0].mxu0
      %v5191 = vadd.f32 %v4916, %v5190
      %v5192 = vpop.f32.mrb[0].mxu0
      %5193 = vmatprep.mubr.f32.mxu0 0.0
      %v5194 = vand.u32 %v4335, 4294901760
      %v5195 = vsub.f32 %v4335, %v5194
      %5196 = vmatmul.mubr.f32.gmra.mrb[0].mxu0 %v5195
      %v5197 = vpop.f32.mrb[0].mxu0
      %v5198 = vadd.f32 %v4922, %v5197
      %v5199 = vpop.f32.mrb[0].mxu0
      %5200 = vmatprep.mubr.f32.mxu0 0.0
      %v5201 = vand.u32 %v4337, 4294901760
      %v5202 = vsub.f32 %v4337, %v5201
      %5203 = vmatmul.mubr.f32.gmra.mrb[0].mxu0 %v5202
      %v5204 = vpop.f32.mrb[0].mxu0
      %v5205 = vadd.f32 %v4928, %v5204
      %v5206 = vpop.f32.mrb[0].mxu0
      %5207 = vmatprep.mubr.f32.mxu0 0.0
      %v5208 = vand.u32 %v4339, 4294901760
      %v5209 = vsub.f32 %v4339, %v5208
      %5210 = vmatmul.mubr.f32.gmra.mrb[0].mxu0 %v5209
      %v5211 = vpop.f32.mrb[0].mxu0
      %v5212 = vadd.f32 %v4934, %v5211
      %v5213 = vpop.f32.mrb[0].mxu0
      %5214 = vmatprep.mubr.f32.mxu0 0.0
      %v5215 = vand.u32 %v4341, 4294901760
      %v5216 = vsub.f32 %v4341, %v5215
      %5217 = vmatmul.mubr.f32.gmra.mrb[0].mxu0 %v5216
      %v5218 = vpop.f32.mrb[0].mxu0
      %v5219 = vadd.f32 %v4940, %v5218
      %v5220 = vpop.f32.mrb[0].mxu0
      %5221 = vmatprep.mubr.f32.mxu0 0.0
      %v5222 = vand.u32 %v4343, 4294901760
      %v5223 = vsub.f32 %v4343, %v5222
      %5224 = vmatmul.mubr.f32.gmra.mrb[0].mxu0 %v5223
      %v5225 = vpop.f32.mrb[0].mxu0
      %v5226 = vadd.f32 %v4946, %v5225
      %v5227 = vpop.f32.mrb[0].mxu0
      %5228 = vmatprep.mubr.f32.mxu0 0.0
      %v5229 = vand.u32 %v4345, 4294901760
      %v5230 = vsub.f32 %v4345, %v5229
      %5231 = vmatmul.mubr.f32.gmra.mrb[0].mxu0 %v5230
      %v5232 = vpop.f32.mrb[0].mxu0
      %v5233 = vadd.f32 %v4952, %v5232
      %v5234 = vpop.f32.mrb[0].mxu0
      %5235 = vmatprep.mubr.f32.mxu0 0.0
      %v5236 = vand.u32 %v4347, 4294901760
      %v5237 = vsub.f32 %v4347, %v5236
      %5238 = vmatmul.mubr.f32.gmra.mrb[0].mxu0 %v5237
      %v5239 = vpop.f32.mrb[0].mxu0
      %v5240 = vadd.f32 %v4958, %v5239
      %v5241 = vpop.f32.mrb[0].mxu0
      %5242 = vmatprep.mubr.f32.mxu0 0.0
      %v5243 = vand.u32 %v4349, 4294901760
      %v5244 = vsub.f32 %v4349, %v5243
      %5245 = vmatmul.mubr.f32.gmra.mrb[0].mxu0 %v5244
      %v5246 = vpop.f32.mrb[0].mxu0
      %v5247 = vadd.f32 %v4964, %v5246
      %v5248 = vpop.f32.mrb[0].mxu0
      %5249 = vmatprep.mubr.f32.mxu0 0.0
      %v5250 = vand.u32 %v4351, 4294901760
      %v5251 = vsub.f32 %v4351, %v5250
      %5252 = vmatmul.mubr.f32.gmra.mrb[0].mxu0 %v5251
      %v5253 = vpop.f32.mrb[0].mxu0
      %v5254 = vadd.f32 %v4970, %v5253
      %v5255 = vpop.f32.mrb[0].mxu0
      %5256 = vmatprep.mubr.f32.mxu0 0.0
      %v5257 = vand.u32 %v4353, 4294901760
      %v5258 = vsub.f32 %v4353, %v5257
      %5259 = vmatmul.mubr.f32.gmra.mrb[0].mxu0 %v5258
      %v5260 = vpop.f32.mrb[0].mxu0
      %v5261 = vadd.f32 %v4976, %v5260
      %v5262 = vpop.f32.mrb[0].mxu0
      %5263 = vmatprep.mubr.f32.mxu0 0.0
      %v5264 = vand.u32 %v4355, 4294901760
      %v5265 = vsub.f32 %v4355, %v5264
      %5266 = vmatmul.mubr.f32.gmra.mrb[0].mxu0 %v5265
      %v5267 = vpop.f32.mrb[0].mxu0
      %v5268 = vadd.f32 %v4982, %v5267
      %v5269 = vpop.f32.mrb[0].mxu0
      %5270 = vmatprep.mubr.f32.mxu0 0.0
      %v5271 = vand.u32 %v4357, 4294901760
      %v5272 = vsub.f32 %v4357, %v5271
      %5273 = vmatmul.mubr.f32.gmra.mrb[0].mxu0 %v5272
      %v5274 = vpop.f32.mrb[0].mxu0
      %v5275 = vadd.f32 %v4988, %v5274
      %v5276 = vpop.f32.mrb[0].mxu0
      %5277 = vmatprep.mubr.f32.mxu0 0.0
      %v5278 = vand.u32 %v4359, 4294901760
      %v5279 = vsub.f32 %v4359, %v5278
      %5280 = vmatmul.mubr.f32.gmra.mrb[0].mxu0 %v5279
      %v5281 = vpop.f32.mrb[0].mxu0
      %v5282 = vadd.f32 %v4994, %v5281
      %v5283 = vpop.f32.mrb[0].mxu0
      %5284 = vmatprep.mubr.f32.mxu0 0.0
      %v5285 = vand.u32 %v4361, 4294901760
      %v5286 = vsub.f32 %v4361, %v5285
      %5287 = vmatmul.mubr.f32.gmra.mrb[0].mxu0 %v5286
      %v5288 = vpop.f32.mrb[0].mxu0
      %v5289 = vadd.f32 %v5000, %v5288
      %v5290 = vpop.f32.mrb[0].mxu0
      %5291 = vmatprep.mubr.f32.mxu0 0.0
      %v5292 = vand.u32 %v4363, 4294901760
      %v5293 = vsub.f32 %v4363, %v5292
      %5294 = vmatmul.mubr.f32.gmra.mrb[0].mxu0 %v5293
      %v5295 = vpop.f32.mrb[0].mxu0
      %v5296 = vadd.f32 %v5006, %v5295
      %v5297 = vpop.f32.mrb[0].mxu0
      %5298 = vmatprep.mubr.f32.mxu0 0.0
      %v5299 = vand.u32 %v4365, 4294901760
      %v5300 = vsub.f32 %v4365, %v5299
      %5301 = vmatmul.mubr.f32.gmra.mrb[0].mxu0 %v5300
      %v5302 = vpop.f32.mrb[0].mxu0
      %v5303 = vadd.f32 %v5012, %v5302
      %v5304 = vpop.f32.mrb[0].mxu0
      %5305 = vdwg.mxu0
      %5306 = vmatprep.subr.mxu0 0.0
      %v5307 = vand.u32 %v4231, 4294901760
      %5308 = vmatpush1.msra.mxu0 %v5307
      %5309 = vmatprep.subr.mxu0 0.0
      %5310 = vmatpush1.msra.mxu0 0.0
      %5311 = vmatprep.subr.mxu0 0.0
      %5312 = vmatpush1.msra.mxu0 0.0
      %5313 = vmatprep.subr.mxu0 0.0
      %5314 = vmatpush1.msra.mxu0 0.0
      %5315 = vmatprep.subr.mxu0 0.0
      %5316 = vmatpush1.msra.mxu0 0.0
      %5317 = vmatprep.subr.mxu0 0.0
      %5318 = vmatpush1.msra.mxu0 0.0
      %5319 = vmatprep.subr.mxu0 0.0
      %5320 = vmatpush1.msra.mxu0 0.0
      %5321 = vmatprep.subr.mxu0 0.0
      %5322 = vmatpush1.msra.mxu0 0.0
      %5323 = vmatprep.subr.mxu0 0.0
      %5324 = vmatpush1.msra.mxu0 0.0
      %5325 = vmatprep.subr.mxu0 0.0
      %5326 = vmatpush1.msra.mxu0 0.0
      %5327 = vmatprep.subr.mxu0 0.0
      %5328 = vmatpush1.msra.mxu0 0.0
      %5329 = vmatprep.subr.mxu0 0.0
      %5330 = vmatpush1.msra.mxu0 0.0
      %5331 = vmatprep.subr.mxu0 0.0
      %5332 = vmatpush1.msra.mxu0 0.0
      %5333 = vmatprep.subr.mxu0 0.0
      %5334 = vmatpush1.msra.mxu0 0.0
      %5335 = vmatprep.subr.mxu0 0.0
      %5336 = vmatpush1.msra.mxu0 0.0
      %5337 = vmatprep.subr.mxu0 0.0
      %5338 = vmatpush1.msra.mxu0 0.0
      %5339 = vmatprep.subr.mxu0 0.0
      %5340 = vmatpush1.msra.mxu0 0.0
      %5341 = vmatprep.subr.mxu0 0.0
      %5342 = vmatpush1.msra.mxu0 0.0
      %5343 = vmatprep.subr.mxu0 0.0
      %5344 = vmatpush1.msra.mxu0 0.0
      %5345 = vmatprep.subr.mxu0 0.0
      %5346 = vmatpush1.msra.mxu0 0.0
      %5347 = vmatprep.subr.mxu0 0.0
      %5348 = vmatpush1.msra.mxu0 0.0
      %5349 = vmatprep.subr.mxu0 0.0
      %5350 = vmatpush1.msra.mxu0 0.0
      %5351 = vmatprep.subr.mxu0 0.0
      %5352 = vmatpush1.msra.mxu0 0.0
      %5353 = vmatprep.subr.mxu0 0.0
      %5354 = vmatpush1.msra.mxu0 0.0
      %5355 = vmatprep.subr.mxu0 0.0
      %5356 = vmatpush1.msra.mxu0 0.0
      %5357 = vmatprep.subr.mxu0 0.0
      %5358 = vmatpush1.msra.mxu0 0.0
      %5359 = vmatprep.subr.mxu0 0.0
      %5360 = vmatpush1.msra.mxu0 0.0
      %5361 = vmatprep.subr.mxu0 0.0
      %5362 = vmatpush1.msra.mxu0 0.0
      %5363 = vmatprep.subr.mxu0 0.0
      %5364 = vmatpush1.msra.mxu0 0.0
      %5365 = vmatprep.subr.mxu0 0.0
      %5366 = vmatpush1.msra.mxu0 0.0
      %5367 = vmatprep.subr.mxu0 0.0
      %5368 = vmatpush1.msra.mxu0 0.0
      %5369 = vmatprep.subr.mxu0 0.0
      %5370 = vmatpush1.msra.mxu0 0.0
      %5371 = vmatprep.mubr.f32.mxu0 0.0
      %v5372 = vand.u32 %v4303, 4294901760
      %v5373 = vsub.f32 %v4303, %v5372
      %v5374 = vand.u32 %v5373, 4294901760
      %5375 = vmatmul.mubr.f32.gmra.mrb[0].mxu0 %v5374
      %v5376 = vpop.f32.mrb[0].mxu0
      %v5377 = vadd.f32 %v5086, %v5376
      %v5378 = vpop.f32.mrb[0].mxu0
      %5379 = vmatprep.mubr.f32.mxu0 0.0
      %v5380 = vand.u32 %v4305, 4294901760
      %v5381 = vsub.f32 %v4305, %v5380
      %v5382 = vand.u32 %v5381, 4294901760
      %5383 = vmatmul.mubr.f32.gmra.mrb[0].mxu0 %v5382
      %v5384 = vpop.f32.mrb[0].mxu0
      %v5385 = vadd.f32 %v5093, %v5384
      %v5386 = vpop.f32.mrb[0].mxu0
      %5387 = vmatprep.mubr.f32.mxu0 0.0
      %v5388 = vand.u32 %v4307, 4294901760
      %v5389 = vsub.f32 %v4307, %v5388
      %v5390 = vand.u32 %v5389, 4294901760
      %5391 = vmatmul.mubr.f32.gmra.mrb[0].mxu0 %v5390
      %v5392 = vpop.f32.mrb[0].mxu0
      %v5393 = vadd.f32 %v5100, %v5392
      %v5394 = vpop.f32.mrb[0].mxu0
      %5395 = vmatprep.mubr.f32.mxu0 0.0
      %v5396 = vand.u32 %v4309, 4294901760
      %v5397 = vsub.f32 %v4309, %v5396
      %v5398 = vand.u32 %v5397, 4294901760
      %5399 = vmatmul.mubr.f32.gmra.mrb[0].mxu0 %v5398
      %v5400 = vpop.f32.mrb[0].mxu0
      %v5401 = vadd.f32 %v5107, %v5400
      %v5402 = vpop.f32.mrb[0].mxu0
      %5403 = vmatprep.mubr.f32.mxu0 0.0
      %v5404 = vand.u32 %v4311, 4294901760
      %v5405 = vsub.f32 %v4311, %v5404
      %v5406 = vand.u32 %v5405, 4294901760
      %5407 = vmatmul.mubr.f32.gmra.mrb[0].mxu0 %v5406
      %v5408 = vpop.f32.mrb[0].mxu0
      %v5409 = vadd.f32 %v5114, %v5408
      %v5410 = vpop.f32.mrb[0].mxu0
      %5411 = vmatprep.mubr.f32.mxu0 0.0
      %v5412 = vand.u32 %v4313, 4294901760
      %v5413 = vsub.f32 %v4313, %v5412
      %v5414 = vand.u32 %v5413, 4294901760
      %5415 = vmatmul.mubr.f32.gmra.mrb[0].mxu0 %v5414
      %v5416 = vpop.f32.mrb[0].mxu0
      %v5417 = vadd.f32 %v5121, %v5416
      %v5418 = vpop.f32.mrb[0].mxu0
      %5419 = vmatprep.mubr.f32.mxu0 0.0
      %v5420 = vand.u32 %v4315, 4294901760
      %v5421 = vsub.f32 %v4315, %v5420
      %v5422 = vand.u32 %v5421, 4294901760
      %5423 = vmatmul.mubr.f32.gmra.mrb[0].mxu0 %v5422
      %v5424 = vpop.f32.mrb[0].mxu0
      %v5425 = vadd.f32 %v5128, %v5424
      %v5426 = vpop.f32.mrb[0].mxu0
      %5427 = vmatprep.mubr.f32.mxu0 0.0
      %v5428 = vand.u32 %v4317, 4294901760
      %v5429 = vsub.f32 %v4317, %v5428
      %v5430 = vand.u32 %v5429, 4294901760
      %5431 = vmatmul.mubr.f32.gmra.mrb[0].mxu0 %v5430
      %v5432 = vpop.f32.mrb[0].mxu0
      %v5433 = vadd.f32 %v5135, %v5432
      %v5434 = vpop.f32.mrb[0].mxu0
      %5435 = vmatprep.mubr.f32.mxu0 0.0
      %v5436 = vand.u32 %v4319, 4294901760
      %v5437 = vsub.f32 %v4319, %v5436
      %v5438 = vand.u32 %v5437, 4294901760
      %5439 = vmatmul.mubr.f32.gmra.mrb[0].mxu0 %v5438
      %v5440 = vpop.f32.mrb[0].mxu0
      %v5441 = vadd.f32 %v5142, %v5440
      %v5442 = vpop.f32.mrb[0].mxu0
      %5443 = vmatprep.mubr.f32.mxu0 0.0
      %v5444 = vand.u32 %v4321, 4294901760
      %v5445 = vsub.f32 %v4321, %v5444
      %v5446 = vand.u32 %v5445, 4294901760
      %5447 = vmatmul.mubr.f32.gmra.mrb[0].mxu0 %v5446
      %v5448 = vpop.f32.mrb[0].mxu0
      %v5449 = vadd.f32 %v5149, %v5448
      %v5450 = vpop.f32.mrb[0].mxu0
      %5451 = vmatprep.mubr.f32.mxu0 0.0
      %v5452 = vand.u32 %v4323, 4294901760
      %v5453 = vsub.f32 %v4323, %v5452
      %v5454 = vand.u32 %v5453, 4294901760
      %5455 = vmatmul.mubr.f32.gmra.mrb[0].mxu0 %v5454
      %v5456 = vpop.f32.mrb[0].mxu0
      %v5457 = vadd.f32 %v5156, %v5456
      %v5458 = vpop.f32.mrb[0].mxu0
      %5459 = vmatprep.mubr.f32.mxu0 0.0
      %v5460 = vand.u32 %v4325, 4294901760
      %v5461 = vsub.f32 %v4325, %v5460
      %v5462 = vand.u32 %v5461, 4294901760
      %5463 = vmatmul.mubr.f32.gmra.mrb[0].mxu0 %v5462
      %v5464 = vpop.f32.mrb[0].mxu0
      %v5465 = vadd.f32 %v5163, %v5464
      %v5466 = vpop.f32.mrb[0].mxu0
      %5467 = vmatprep.mubr.f32.mxu0 0.0
      %v5468 = vand.u32 %v4327, 4294901760
      %v5469 = vsub.f32 %v4327, %v5468
      %v5470 = vand.u32 %v5469, 4294901760
      %5471 = vmatmul.mubr.f32.gmra.mrb[0].mxu0 %v5470
      %v5472 = vpop.f32.mrb[0].mxu0
      %v5473 = vadd.f32 %v5170, %v5472
      %v5474 = vpop.f32.mrb[0].mxu0
      %5475 = vmatprep.mubr.f32.mxu0 0.0
      %v5476 = vand.u32 %v4329, 4294901760
      %v5477 = vsub.f32 %v4329, %v5476
      %v5478 = vand.u32 %v5477, 4294901760
      %5479 = vmatmul.mubr.f32.gmra.mrb[0].mxu0 %v5478
      %v5480 = vpop.f32.mrb[0].mxu0
      %v5481 = vadd.f32 %v5177, %v5480
      %v5482 = vpop.f32.mrb[0].mxu0
      %5483 = vmatprep.mubr.f32.mxu0 0.0
      %v5484 = vand.u32 %v4331, 4294901760
      %v5485 = vsub.f32 %v4331, %v5484
      %v5486 = vand.u32 %v5485, 4294901760
      %5487 = vmatmul.mubr.f32.gmra.mrb[0].mxu0 %v5486
      %v5488 = vpop.f32.mrb[0].mxu0
      %v5489 = vadd.f32 %v5184, %v5488
      %v5490 = vpop.f32.mrb[0].mxu0
      %5491 = vmatprep.mubr.f32.mxu0 0.0
      %v5492 = vand.u32 %v4333, 4294901760
      %v5493 = vsub.f32 %v4333, %v5492
      %v5494 = vand.u32 %v5493, 4294901760
      %5495 = vmatmul.mubr.f32.gmra.mrb[0].mxu0 %v5494
      %v5496 = vpop.f32.mrb[0].mxu0
      %v5497 = vadd.f32 %v5191, %v5496
      %v5498 = vpop.f32.mrb[0].mxu0
      %5499 = vmatprep.mubr.f32.mxu0 0.0
      %v5500 = vand.u32 %v4335, 4294901760
      %v5501 = vsub.f32 %v4335, %v5500
      %v5502 = vand.u32 %v5501, 4294901760
      %5503 = vmatmul.mubr.f32.gmra.mrb[0].mxu0 %v5502
      %v5504 = vpop.f32.mrb[0].mxu0
      %v5505 = vadd.f32 %v5198, %v5504
      %v5506 = vpop.f32.mrb[0].mxu0
      %5507 = vmatprep.mubr.f32.mxu0 0.0
      %v5508 = vand.u32 %v4337, 4294901760
      %v5509 = vsub.f32 %v4337, %v5508
      %v5510 = vand.u32 %v5509, 4294901760
      %5511 = vmatmul.mubr.f32.gmra.mrb[0].mxu0 %v5510
      %v5512 = vpop.f32.mrb[0].mxu0
      %v5513 = vadd.f32 %v5205, %v5512
      %v5514 = vpop.f32.mrb[0].mxu0
      %5515 = vmatprep.mubr.f32.mxu0 0.0
      %v5516 = vand.u32 %v4339, 4294901760
      %v5517 = vsub.f32 %v4339, %v5516
      %v5518 = vand.u32 %v5517, 4294901760
      %5519 = vmatmul.mubr.f32.gmra.mrb[0].mxu0 %v5518
      %v5520 = vpop.f32.mrb[0].mxu0
      %v5521 = vadd.f32 %v5212, %v5520
      %v5522 = vpop.f32.mrb[0].mxu0
      %5523 = vmatprep.mubr.f32.mxu0 0.0
      %v5524 = vand.u32 %v4341, 4294901760
      %v5525 = vsub.f32 %v4341, %v5524
      %v5526 = vand.u32 %v5525, 4294901760
      %5527 = vmatmul.mubr.f32.gmra.mrb[0].mxu0 %v5526
      %v5528 = vpop.f32.mrb[0].mxu0
      %v5529 = vadd.f32 %v5219, %v5528
      %v5530 = vpop.f32.mrb[0].mxu0
      %5531 = vmatprep.mubr.f32.mxu0 0.0
      %v5532 = vand.u32 %v4343, 4294901760
      %v5533 = vsub.f32 %v4343, %v5532
      %v5534 = vand.u32 %v5533, 4294901760
      %5535 = vmatmul.mubr.f32.gmra.mrb[0].mxu0 %v5534
      %v5536 = vpop.f32.mrb[0].mxu0
      %v5537 = vadd.f32 %v5226, %v5536
      %v5538 = vpop.f32.mrb[0].mxu0
      %5539 = vmatprep.mubr.f32.mxu0 0.0
      %v5540 = vand.u32 %v4345, 4294901760
      %v5541 = vsub.f32 %v4345, %v5540
      %v5542 = vand.u32 %v5541, 4294901760
      %5543 = vmatmul.mubr.f32.gmra.mrb[0].mxu0 %v5542
      %v5544 = vpop.f32.mrb[0].mxu0
      %v5545 = vadd.f32 %v5233, %v5544
      %v5546 = vpop.f32.mrb[0].mxu0
      %5547 = vmatprep.mubr.f32.mxu0 0.0
      %v5548 = vand.u32 %v4347, 4294901760
      %v5549 = vsub.f32 %v4347, %v5548
      %v5550 = vand.u32 %v5549, 4294901760
      %5551 = vmatmul.mubr.f32.gmra.mrb[0].mxu0 %v5550
      %v5552 = vpop.f32.mrb[0].mxu0
      %v5553 = vadd.f32 %v5240, %v5552
      %v5554 = vpop.f32.mrb[0].mxu0
      %5555 = vmatprep.mubr.f32.mxu0 0.0
      %v5556 = vand.u32 %v4349, 4294901760
      %v5557 = vsub.f32 %v4349, %v5556
      %v5558 = vand.u32 %v5557, 4294901760
      %5559 = vmatmul.mubr.f32.gmra.mrb[0].mxu0 %v5558
      %v5560 = vpop.f32.mrb[0].mxu0
      %v5561 = vadd.f32 %v5247, %v5560
      %v5562 = vpop.f32.mrb[0].mxu0
      %5563 = vmatprep.mubr.f32.mxu0 0.0
      %v5564 = vand.u32 %v4351, 4294901760
      %v5565 = vsub.f32 %v4351, %v5564
      %v5566 = vand.u32 %v5565, 4294901760
      %5567 = vmatmul.mubr.f32.gmra.mrb[0].mxu0 %v5566
      %v5568 = vpop.f32.mrb[0].mxu0
      %v5569 = vadd.f32 %v5254, %v5568
      %v5570 = vpop.f32.mrb[0].mxu0
      %5571 = vmatprep.mubr.f32.mxu0 0.0
      %v5572 = vand.u32 %v4353, 4294901760
      %v5573 = vsub.f32 %v4353, %v5572
      %v5574 = vand.u32 %v5573, 4294901760
      %5575 = vmatmul.mubr.f32.gmra.mrb[0].mxu0 %v5574
      %v5576 = vpop.f32.mrb[0].mxu0
      %v5577 = vadd.f32 %v5261, %v5576
      %v5578 = vpop.f32.mrb[0].mxu0
      %5579 = vmatprep.mubr.f32.mxu0 0.0
      %v5580 = vand.u32 %v4355, 4294901760
      %v5581 = vsub.f32 %v4355, %v5580
      %v5582 = vand.u32 %v5581, 4294901760
      %5583 = vmatmul.mubr.f32.gmra.mrb[0].mxu0 %v5582
      %v5584 = vpop.f32.mrb[0].mxu0
      %v5585 = vadd.f32 %v5268, %v5584
      %v5586 = vpop.f32.mrb[0].mxu0
      %5587 = vmatprep.mubr.f32.mxu0 0.0
      %v5588 = vand.u32 %v4357, 4294901760
      %v5589 = vsub.f32 %v4357, %v5588
      %v5590 = vand.u32 %v5589, 4294901760
      %5591 = vmatmul.mubr.f32.gmra.mrb[0].mxu0 %v5590
      %v5592 = vpop.f32.mrb[0].mxu0
      %v5593 = vadd.f32 %v5275, %v5592
      %v5594 = vpop.f32.mrb[0].mxu0
      %5595 = vmatprep.mubr.f32.mxu0 0.0
      %v5596 = vand.u32 %v4359, 4294901760
      %v5597 = vsub.f32 %v4359, %v5596
      %v5598 = vand.u32 %v5597, 4294901760
      %5599 = vmatmul.mubr.f32.gmra.mrb[0].mxu0 %v5598
      %v5600 = vpop.f32.mrb[0].mxu0
      %v5601 = vadd.f32 %v5282, %v5600
      %v5602 = vpop.f32.mrb[0].mxu0
      %5603 = vmatprep.mubr.f32.mxu0 0.0
      %v5604 = vand.u32 %v4361, 4294901760
      %v5605 = vsub.f32 %v4361, %v5604
      %v5606 = vand.u32 %v5605, 4294901760
      %5607 = vmatmul.mubr.f32.gmra.mrb[0].mxu0 %v5606
      %v5608 = vpop.f32.mrb[0].mxu0
      %v5609 = vadd.f32 %v5289, %v5608
      %v5610 = vpop.f32.mrb[0].mxu0
      %5611 = vmatprep.mubr.f32.mxu0 0.0
      %v5612 = vand.u32 %v4363, 4294901760
      %v5613 = vsub.f32 %v4363, %v5612
      %v5614 = vand.u32 %v5613, 4294901760
      %5615 = vmatmul.mubr.f32.gmra.mrb[0].mxu0 %v5614
      %v5616 = vpop.f32.mrb[0].mxu0
      %v5617 = vadd.f32 %v5296, %v5616
      %v5618 = vpop.f32.mrb[0].mxu0
      %5619 = vmatprep.mubr.f32.mxu0 0.0
      %v5620 = vand.u32 %v4365, 4294901760
      %v5621 = vsub.f32 %v4365, %v5620
      %v5622 = vand.u32 %v5621, 4294901760
      %5623 = vmatmul.mubr.f32.gmra.mrb[0].mxu0 %v5622
      %v5624 = vpop.f32.mrb[0].mxu0
      %v5625 = vadd.f32 %v5303, %v5624
      %v5626 = vpop.f32.mrb[0].mxu0
      %5627 = vdwg.mxu0
      %5628 = vmatprep.subr.mxu0 0.0
      %v5629 = vand.u32 %v4231, 4294901760
      %v5630 = vsub.f32 %v4231, %v5629
      %v5631 = vand.u32 %v5630, 4294901760
      %5632 = vmatpush1.msra.mxu0 %v5631
      %5633 = vmatprep.subr.mxu0 0.0
      %5634 = vmatpush1.msra.mxu0 0.0
      %5635 = vmatprep.subr.mxu0 0.0
      %5636 = vmatpush1.msra.mxu0 0.0
      %5637 = vmatprep.subr.mxu0 0.0
      %5638 = vmatpush1.msra.mxu0 0.0
      %5639 = vmatprep.subr.mxu0 0.0
      %5640 = vmatpush1.msra.mxu0 0.0
      %5641 = vmatprep.subr.mxu0 0.0
      %5642 = vmatpush1.msra.mxu0 0.0
      %5643 = vmatprep.subr.mxu0 0.0
      %5644 = vmatpush1.msra.mxu0 0.0
      %5645 = vmatprep.subr.mxu0 0.0
      %5646 = vmatpush1.msra.mxu0 0.0
      %5647 = vmatprep.subr.mxu0 0.0
      %5648 = vmatpush1.msra.mxu0 0.0
      %5649 = vmatprep.subr.mxu0 0.0
      %5650 = vmatpush1.msra.mxu0 0.0
      %5651 = vmatprep.subr.mxu0 0.0
      %5652 = vmatpush1.msra.mxu0 0.0
      %5653 = vmatprep.subr.mxu0 0.0
      %5654 = vmatpush1.msra.mxu0 0.0
      %5655 = vmatprep.subr.mxu0 0.0
      %5656 = vmatpush1.msra.mxu0 0.0
      %5657 = vmatprep.subr.mxu0 0.0
      %5658 = vmatpush1.msra.mxu0 0.0
      %5659 = vmatprep.subr.mxu0 0.0
      %5660 = vmatpush1.msra.mxu0 0.0
      %5661 = vmatprep.subr.mxu0 0.0
      %5662 = vmatpush1.msra.mxu0 0.0
      %5663 = vmatprep.subr.mxu0 0.0
      %5664 = vmatpush1.msra.mxu0 0.0
      %5665 = vmatprep.subr.mxu0 0.0
      %5666 = vmatpush1.msra.mxu0 0.0
      %5667 = vmatprep.subr.mxu0 0.0
      %5668 = vmatpush1.msra.mxu0 0.0
      %5669 = vmatprep.subr.mxu0 0.0
      %5670 = vmatpush1.msra.mxu0 0.0
      %5671 = vmatprep.subr.mxu0 0.0
      %5672 = vmatpush1.msra.mxu0 0.0
      %5673 = vmatprep.subr.mxu0 0.0
      %5674 = vmatpush1.msra.mxu0 0.0
      %5675 = vmatprep.subr.mxu0 0.0
      %5676 = vmatpush1.msra.mxu0 0.0
      %5677 = vmatprep.subr.mxu0 0.0
      %5678 = vmatpush1.msra.mxu0 0.0
      %5679 = vmatprep.subr.mxu0 0.0
      %5680 = vmatpush1.msra.mxu0 0.0
      %5681 = vmatprep.subr.mxu0 0.0
      %5682 = vmatpush1.msra.mxu0 0.0
      %5683 = vmatprep.subr.mxu0 0.0
      %5684 = vmatpush1.msra.mxu0 0.0
      %5685 = vmatprep.subr.mxu0 0.0
      %5686 = vmatpush1.msra.mxu0 0.0
      %5687 = vmatprep.subr.mxu0 0.0
      %5688 = vmatpush1.msra.mxu0 0.0
      %5689 = vmatprep.subr.mxu0 0.0
      %5690 = vmatpush1.msra.mxu0 0.0
      %5691 = vmatprep.subr.mxu0 0.0
      %5692 = vmatpush1.msra.mxu0 0.0
      %5693 = vmatprep.subr.mxu0 0.0
      %5694 = vmatpush1.msra.mxu0 0.0
      %5695 = vmatprep.mubr.f32.mxu0 0.0
      %v5696 = vand.u32 %v4303, 4294901760
      %5697 = vmatmul.mubr.f32.gmra.mrb[0].mxu0 %v5696
      %v5698 = vpop.f32.mrb[0].mxu0
      %v5699 = vadd.f32 %v5377, %v5698
      %v5700 = vpop.f32.mrb[0].mxu0
      %5701 = vmatprep.mubr.f32.mxu0 0.0
      %v5702 = vand.u32 %v4305, 4294901760
      %5703 = vmatmul.mubr.f32.gmra.mrb[0].mxu0 %v5702
      %v5704 = vpop.f32.mrb[0].mxu0
      %v5705 = vadd.f32 %v5385, %v5704
      %v5706 = vpop.f32.mrb[0].mxu0
      %5707 = vmatprep.mubr.f32.mxu0 0.0
      %v5708 = vand.u32 %v4307, 4294901760
      %5709 = vmatmul.mubr.f32.gmra.mrb[0].mxu0 %v5708
      %v5710 = vpop.f32.mrb[0].mxu0
      %v5711 = vadd.f32 %v5393, %v5710
      %v5712 = vpop.f32.mrb[0].mxu0
      %5713 = vmatprep.mubr.f32.mxu0 0.0
      %v5714 = vand.u32 %v4309, 4294901760
      %5715 = vmatmul.mubr.f32.gmra.mrb[0].mxu0 %v5714
      %v5716 = vpop.f32.mrb[0].mxu0
      %v5717 = vadd.f32 %v5401, %v5716
      %v5718 = vpop.f32.mrb[0].mxu0
      %5719 = vmatprep.mubr.f32.mxu0 0.0
      %v5720 = vand.u32 %v4311, 4294901760
      %5721 = vmatmul.mubr.f32.gmra.mrb[0].mxu0 %v5720
      %v5722 = vpop.f32.mrb[0].mxu0
      %v5723 = vadd.f32 %v5409, %v5722
      %v5724 = vpop.f32.mrb[0].mxu0
      %5725 = vmatprep.mubr.f32.mxu0 0.0
      %v5726 = vand.u32 %v4313, 4294901760
      %5727 = vmatmul.mubr.f32.gmra.mrb[0].mxu0 %v5726
      %v5728 = vpop.f32.mrb[0].mxu0
      %v5729 = vadd.f32 %v5417, %v5728
      %v5730 = vpop.f32.mrb[0].mxu0
      %5731 = vmatprep.mubr.f32.mxu0 0.0
      %v5732 = vand.u32 %v4315, 4294901760
      %5733 = vmatmul.mubr.f32.gmra.mrb[0].mxu0 %v5732
      %v5734 = vpop.f32.mrb[0].mxu0
      %v5735 = vadd.f32 %v5425, %v5734
      %v5736 = vpop.f32.mrb[0].mxu0
      %5737 = vmatprep.mubr.f32.mxu0 0.0
      %v5738 = vand.u32 %v4317, 4294901760
      %5739 = vmatmul.mubr.f32.gmra.mrb[0].mxu0 %v5738
      %v5740 = vpop.f32.mrb[0].mxu0
      %v5741 = vadd.f32 %v5433, %v5740
      %v5742 = vpop.f32.mrb[0].mxu0
      %5743 = vmatprep.mubr.f32.mxu0 0.0
      %v5744 = vand.u32 %v4319, 4294901760
      %5745 = vmatmul.mubr.f32.gmra.mrb[0].mxu0 %v5744
      %v5746 = vpop.f32.mrb[0].mxu0
      %v5747 = vadd.f32 %v5441, %v5746
      %v5748 = vpop.f32.mrb[0].mxu0
      %5749 = vmatprep.mubr.f32.mxu0 0.0
      %v5750 = vand.u32 %v4321, 4294901760
      %5751 = vmatmul.mubr.f32.gmra.mrb[0].mxu0 %v5750
      %v5752 = vpop.f32.mrb[0].mxu0
      %v5753 = vadd.f32 %v5449, %v5752
      %v5754 = vpop.f32.mrb[0].mxu0
      %5755 = vmatprep.mubr.f32.mxu0 0.0
      %v5756 = vand.u32 %v4323, 4294901760
      %5757 = vmatmul.mubr.f32.gmra.mrb[0].mxu0 %v5756
      %v5758 = vpop.f32.mrb[0].mxu0
      %v5759 = vadd.f32 %v5457, %v5758
      %v5760 = vpop.f32.mrb[0].mxu0
      %5761 = vmatprep.mubr.f32.mxu0 0.0
      %v5762 = vand.u32 %v4325, 4294901760
      %5763 = vmatmul.mubr.f32.gmra.mrb[0].mxu0 %v5762
      %v5764 = vpop.f32.mrb[0].mxu0
      %v5765 = vadd.f32 %v5465, %v5764
      %v5766 = vpop.f32.mrb[0].mxu0
      %5767 = vmatprep.mubr.f32.mxu0 0.0
      %v5768 = vand.u32 %v4327, 4294901760
      %5769 = vmatmul.mubr.f32.gmra.mrb[0].mxu0 %v5768
      %v5770 = vpop.f32.mrb[0].mxu0
      %v5771 = vadd.f32 %v5473, %v5770
      %v5772 = vpop.f32.mrb[0].mxu0
      %5773 = vmatprep.mubr.f32.mxu0 0.0
      %v5774 = vand.u32 %v4329, 4294901760
      %5775 = vmatmul.mubr.f32.gmra.mrb[0].mxu0 %v5774
      %v5776 = vpop.f32.mrb[0].mxu0
      %v5777 = vadd.f32 %v5481, %v5776
      %v5778 = vpop.f32.mrb[0].mxu0
      %5779 = vmatprep.mubr.f32.mxu0 0.0
      %v5780 = vand.u32 %v4331, 4294901760
      %5781 = vmatmul.mubr.f32.gmra.mrb[0].mxu0 %v5780
      %v5782 = vpop.f32.mrb[0].mxu0
      %v5783 = vadd.f32 %v5489, %v5782
      %v5784 = vpop.f32.mrb[0].mxu0
      %5785 = vmatprep.mubr.f32.mxu0 0.0
      %v5786 = vand.u32 %v4333, 4294901760
      %5787 = vmatmul.mubr.f32.gmra.mrb[0].mxu0 %v5786
      %v5788 = vpop.f32.mrb[0].mxu0
      %v5789 = vadd.f32 %v5497, %v5788
      %v5790 = vpop.f32.mrb[0].mxu0
      %5791 = vmatprep.mubr.f32.mxu0 0.0
      %v5792 = vand.u32 %v4335, 4294901760
      %5793 = vmatmul.mubr.f32.gmra.mrb[0].mxu0 %v5792
      %v5794 = vpop.f32.mrb[0].mxu0
      %v5795 = vadd.f32 %v5505, %v5794
      %v5796 = vpop.f32.mrb[0].mxu0
      %5797 = vmatprep.mubr.f32.mxu0 0.0
      %v5798 = vand.u32 %v4337, 4294901760
      %5799 = vmatmul.mubr.f32.gmra.mrb[0].mxu0 %v5798
      %v5800 = vpop.f32.mrb[0].mxu0
      %v5801 = vadd.f32 %v5513, %v5800
      %v5802 = vpop.f32.mrb[0].mxu0
      %5803 = vmatprep.mubr.f32.mxu0 0.0
      %v5804 = vand.u32 %v4339, 4294901760
      %5805 = vmatmul.mubr.f32.gmra.mrb[0].mxu0 %v5804
      %v5806 = vpop.f32.mrb[0].mxu0
      %v5807 = vadd.f32 %v5521, %v5806
      %v5808 = vpop.f32.mrb[0].mxu0
      %5809 = vmatprep.mubr.f32.mxu0 0.0
      %v5810 = vand.u32 %v4341, 4294901760
      %5811 = vmatmul.mubr.f32.gmra.mrb[0].mxu0 %v5810
      %v5812 = vpop.f32.mrb[0].mxu0
      %v5813 = vadd.f32 %v5529, %v5812
      %v5814 = vpop.f32.mrb[0].mxu0
      %5815 = vmatprep.mubr.f32.mxu0 0.0
      %v5816 = vand.u32 %v4343, 4294901760
      %5817 = vmatmul.mubr.f32.gmra.mrb[0].mxu0 %v5816
      %v5818 = vpop.f32.mrb[0].mxu0
      %v5819 = vadd.f32 %v5537, %v5818
      %v5820 = vpop.f32.mrb[0].mxu0
      %5821 = vmatprep.mubr.f32.mxu0 0.0
      %v5822 = vand.u32 %v4345, 4294901760
      %5823 = vmatmul.mubr.f32.gmra.mrb[0].mxu0 %v5822
      %v5824 = vpop.f32.mrb[0].mxu0
      %v5825 = vadd.f32 %v5545, %v5824
      %v5826 = vpop.f32.mrb[0].mxu0
      %5827 = vmatprep.mubr.f32.mxu0 0.0
      %v5828 = vand.u32 %v4347, 4294901760
      %5829 = vmatmul.mubr.f32.gmra.mrb[0].mxu0 %v5828
      %v5830 = vpop.f32.mrb[0].mxu0
      %v5831 = vadd.f32 %v5553, %v5830
      %v5832 = vpop.f32.mrb[0].mxu0
      %5833 = vmatprep.mubr.f32.mxu0 0.0
      %v5834 = vand.u32 %v4349, 4294901760
      %5835 = vmatmul.mubr.f32.gmra.mrb[0].mxu0 %v5834
      %v5836 = vpop.f32.mrb[0].mxu0
      %v5837 = vadd.f32 %v5561, %v5836
      %v5838 = vpop.f32.mrb[0].mxu0
      %5839 = vmatprep.mubr.f32.mxu0 0.0
      %v5840 = vand.u32 %v4351, 4294901760
      %5841 = vmatmul.mubr.f32.gmra.mrb[0].mxu0 %v5840
      %v5842 = vpop.f32.mrb[0].mxu0
      %v5843 = vadd.f32 %v5569, %v5842
      %v5844 = vpop.f32.mrb[0].mxu0
      %5845 = vmatprep.mubr.f32.mxu0 0.0
      %v5846 = vand.u32 %v4353, 4294901760
      %5847 = vmatmul.mubr.f32.gmra.mrb[0].mxu0 %v5846
      %v5848 = vpop.f32.mrb[0].mxu0
      %v5849 = vadd.f32 %v5577, %v5848
      %v5850 = vpop.f32.mrb[0].mxu0
      %5851 = vmatprep.mubr.f32.mxu0 0.0
      %v5852 = vand.u32 %v4355, 4294901760
      %5853 = vmatmul.mubr.f32.gmra.mrb[0].mxu0 %v5852
      %v5854 = vpop.f32.mrb[0].mxu0
      %v5855 = vadd.f32 %v5585, %v5854
      %v5856 = vpop.f32.mrb[0].mxu0
      %5857 = vmatprep.mubr.f32.mxu0 0.0
      %v5858 = vand.u32 %v4357, 4294901760
      %5859 = vmatmul.mubr.f32.gmra.mrb[0].mxu0 %v5858
      %v5860 = vpop.f32.mrb[0].mxu0
      %v5861 = vadd.f32 %v5593, %v5860
      %v5862 = vpop.f32.mrb[0].mxu0
      %5863 = vmatprep.mubr.f32.mxu0 0.0
      %v5864 = vand.u32 %v4359, 4294901760
      %5865 = vmatmul.mubr.f32.gmra.mrb[0].mxu0 %v5864
      %v5866 = vpop.f32.mrb[0].mxu0
      %v5867 = vadd.f32 %v5601, %v5866
      %v5868 = vpop.f32.mrb[0].mxu0
      %5869 = vmatprep.mubr.f32.mxu0 0.0
      %v5870 = vand.u32 %v4361, 4294901760
      %5871 = vmatmul.mubr.f32.gmra.mrb[0].mxu0 %v5870
      %v5872 = vpop.f32.mrb[0].mxu0
      %v5873 = vadd.f32 %v5609, %v5872
      %v5874 = vpop.f32.mrb[0].mxu0
      %5875 = vmatprep.mubr.f32.mxu0 0.0
      %v5876 = vand.u32 %v4363, 4294901760
      %5877 = vmatmul.mubr.f32.gmra.mrb[0].mxu0 %v5876
      %v5878 = vpop.f32.mrb[0].mxu0
      %v5879 = vadd.f32 %v5617, %v5878
      %v5880 = vpop.f32.mrb[0].mxu0
      %5881 = vmatprep.mubr.f32.mxu0 0.0
      %v5882 = vand.u32 %v4365, 4294901760
      %5883 = vmatmul.mubr.f32.gmra.mrb[0].mxu0 %v5882
      %v5884 = vpop.f32.mrb[0].mxu0
      %v5885 = vadd.f32 %v5625, %v5884
      %v5886 = vpop.f32.mrb[0].mxu0
      %5887 = vdwg.mxu0
      %5888 = vmatprep.subr.mxu0 0.0
      %v5889 = vand.u32 %v4231, 4294901760
      %5890 = vmatpush1.msra.mxu0 %v5889
      %5891 = vmatprep.subr.mxu0 0.0
      %5892 = vmatpush1.msra.mxu0 0.0
      %5893 = vmatprep.subr.mxu0 0.0
      %5894 = vmatpush1.msra.mxu0 0.0
      %5895 = vmatprep.subr.mxu0 0.0
      %5896 = vmatpush1.msra.mxu0 0.0
      %5897 = vmatprep.subr.mxu0 0.0
      %5898 = vmatpush1.msra.mxu0 0.0
      %5899 = vmatprep.subr.mxu0 0.0
      %5900 = vmatpush1.msra.mxu0 0.0
      %5901 = vmatprep.subr.mxu0 0.0
      %5902 = vmatpush1.msra.mxu0 0.0
      %5903 = vmatprep.subr.mxu0 0.0
      %5904 = vmatpush1.msra.mxu0 0.0
      %5905 = vmatprep.subr.mxu0 0.0
      %5906 = vmatpush1.msra.mxu0 0.0
      %5907 = vmatprep.subr.mxu0 0.0
      %5908 = vmatpush1.msra.mxu0 0.0
      %5909 = vmatprep.subr.mxu0 0.0
      %5910 = vmatpush1.msra.mxu0 0.0
      %5911 = vmatprep.subr.mxu0 0.0
      %5912 = vmatpush1.msra.mxu0 0.0
      %5913 = vmatprep.subr.mxu0 0.0
      %5914 = vmatpush1.msra.mxu0 0.0
      %5915 = vmatprep.subr.mxu0 0.0
      %5916 = vmatpush1.msra.mxu0 0.0
      %5917 = vmatprep.subr.mxu0 0.0
      %5918 = vmatpush1.msra.mxu0 0.0
      %5919 = vmatprep.subr.mxu0 0.0
      %5920 = vmatpush1.msra.mxu0 0.0
      %5921 = vmatprep.subr.mxu0 0.0
      %5922 = vmatpush1.msra.mxu0 0.0
      %5923 = vmatprep.subr.mxu0 0.0
      %5924 = vmatpush1.msra.mxu0 0.0
      %5925 = vmatprep.subr.mxu0 0.0
      %5926 = vmatpush1.msra.mxu0 0.0
      %5927 = vmatprep.subr.mxu0 0.0
      %5928 = vmatpush1.msra.mxu0 0.0
      %5929 = vmatprep.subr.mxu0 0.0
      %5930 = vmatpush1.msra.mxu0 0.0
      %5931 = vmatprep.subr.mxu0 0.0
      %5932 = vmatpush1.msra.mxu0 0.0
      %5933 = vmatprep.subr.mxu0 0.0
      %5934 = vmatpush1.msra.mxu0 0.0
      %5935 = vmatprep.subr.mxu0 0.0
      %5936 = vmatpush1.msra.mxu0 0.0
      %5937 = vmatprep.subr.mxu0 0.0
      %5938 = vmatpush1.msra.mxu0 0.0
      %5939 = vmatprep.subr.mxu0 0.0
      %5940 = vmatpush1.msra.mxu0 0.0
      %5941 = vmatprep.subr.mxu0 0.0
      %5942 = vmatpush1.msra.mxu0 0.0
      %5943 = vmatprep.subr.mxu0 0.0
      %5944 = vmatpush1.msra.mxu0 0.0
      %5945 = vmatprep.subr.mxu0 0.0
      %5946 = vmatpush1.msra.mxu0 0.0
      %5947 = vmatprep.subr.mxu0 0.0
      %5948 = vmatpush1.msra.mxu0 0.0
      %5949 = vmatprep.subr.mxu0 0.0
      %5950 = vmatpush1.msra.mxu0 0.0
      %5951 = vmatprep.subr.mxu0 0.0
      %5952 = vmatpush1.msra.mxu0 0.0
      %5953 = vmatprep.mubr.f32.mxu0 0.0
      %v5954 = vand.u32 %v4303, 4294901760
      %5955 = vmatmul.mubr.f32.gmra.mrb[0].mxu0 %v5954
      %v5956 = vpop.f32.mrb[0].mxu0
      %v5957 = vadd.f32 %v5699, %v5956
      %v5958 = vpop.f32.mrb[0].mxu0
      %5959 = vmatprep.mubr.f32.mxu0 0.0
      %v5960 = vand.u32 %v4305, 4294901760
      %5961 = vmatmul.mubr.f32.gmra.mrb[0].mxu0 %v5960
      %v5962 = vpop.f32.mrb[0].mxu0
      %v5963 = vadd.f32 %v5705, %v5962
      %v5964 = vpop.f32.mrb[0].mxu0
      %5965 = vmatprep.mubr.f32.mxu0 0.0
      %v5966 = vand.u32 %v4307, 4294901760
      %5967 = vmatmul.mubr.f32.gmra.mrb[0].mxu0 %v5966
      %v5968 = vpop.f32.mrb[0].mxu0
      %v5969 = vadd.f32 %v5711, %v5968
      %v5970 = vpop.f32.mrb[0].mxu0
      %5971 = vmatprep.mubr.f32.mxu0 0.0
      %v5972 = vand.u32 %v4309, 4294901760
      %5973 = vmatmul.mubr.f32.gmra.mrb[0].mxu0 %v5972
      %v5974 = vpop.f32.mrb[0].mxu0
      %v5975 = vadd.f32 %v5717, %v5974
      %v5976 = vpop.f32.mrb[0].mxu0
      %5977 = vmatprep.mubr.f32.mxu0 0.0
      %v5978 = vand.u32 %v4311, 4294901760
      %5979 = vmatmul.mubr.f32.gmra.mrb[0].mxu0 %v5978
      %v5980 = vpop.f32.mrb[0].mxu0
      %v5981 = vadd.f32 %v5723, %v5980
      %v5982 = vpop.f32.mrb[0].mxu0
      %5983 = vmatprep.mubr.f32.mxu0 0.0
      %v5984 = vand.u32 %v4313, 4294901760
      %5985 = vmatmul.mubr.f32.gmra.mrb[0].mxu0 %v5984
      %v5986 = vpop.f32.mrb[0].mxu0
      %v5987 = vadd.f32 %v5729, %v5986
      %v5988 = vpop.f32.mrb[0].mxu0
      %5989 = vmatprep.mubr.f32.mxu0 0.0
      %v5990 = vand.u32 %v4315, 4294901760
      %5991 = vmatmul.mubr.f32.gmra.mrb[0].mxu0 %v5990
      %v5992 = vpop.f32.mrb[0].mxu0
      %v5993 = vadd.f32 %v5735, %v5992
      %v5994 = vpop.f32.mrb[0].mxu0
      %5995 = vmatprep.mubr.f32.mxu0 0.0
      %v5996 = vand.u32 %v4317, 4294901760
      %5997 = vmatmul.mubr.f32.gmra.mrb[0].mxu0 %v5996
      %v5998 = vpop.f32.mrb[0].mxu0
      %v5999 = vadd.f32 %v5741, %v5998
      %v6000 = vpop.f32.mrb[0].mxu0
      %6001 = vmatprep.mubr.f32.mxu0 0.0
      %v6002 = vand.u32 %v4319, 4294901760
      %6003 = vmatmul.mubr.f32.gmra.mrb[0].mxu0 %v6002
      %v6004 = vpop.f32.mrb[0].mxu0
      %v6005 = vadd.f32 %v5747, %v6004
      %v6006 = vpop.f32.mrb[0].mxu0
      %6007 = vmatprep.mubr.f32.mxu0 0.0
      %v6008 = vand.u32 %v4321, 4294901760
      %6009 = vmatmul.mubr.f32.gmra.mrb[0].mxu0 %v6008
      %v6010 = vpop.f32.mrb[0].mxu0
      %v6011 = vadd.f32 %v5753, %v6010
      %v6012 = vpop.f32.mrb[0].mxu0
      %6013 = vmatprep.mubr.f32.mxu0 0.0
      %v6014 = vand.u32 %v4323, 4294901760
      %6015 = vmatmul.mubr.f32.gmra.mrb[0].mxu0 %v6014
      %v6016 = vpop.f32.mrb[0].mxu0
      %v6017 = vadd.f32 %v5759, %v6016
      %v6018 = vpop.f32.mrb[0].mxu0
      %6019 = vmatprep.mubr.f32.mxu0 0.0
      %v6020 = vand.u32 %v4325, 4294901760
      %6021 = vmatmul.mubr.f32.gmra.mrb[0].mxu0 %v6020
      %v6022 = vpop.f32.mrb[0].mxu0
      %v6023 = vadd.f32 %v5765, %v6022
      %v6024 = vpop.f32.mrb[0].mxu0
      %6025 = vmatprep.mubr.f32.mxu0 0.0
      %v6026 = vand.u32 %v4327, 4294901760
      %6027 = vmatmul.mubr.f32.gmra.mrb[0].mxu0 %v6026
      %v6028 = vpop.f32.mrb[0].mxu0
      %v6029 = vadd.f32 %v5771, %v6028
      %v6030 = vpop.f32.mrb[0].mxu0
      %6031 = vmatprep.mubr.f32.mxu0 0.0
      %v6032 = vand.u32 %v4329, 4294901760
      %6033 = vmatmul.mubr.f32.gmra.mrb[0].mxu0 %v6032
      %v6034 = vpop.f32.mrb[0].mxu0
      %v6035 = vadd.f32 %v5777, %v6034
      %v6036 = vpop.f32.mrb[0].mxu0
      %6037 = vmatprep.mubr.f32.mxu0 0.0
      %v6038 = vand.u32 %v4331, 4294901760
      %6039 = vmatmul.mubr.f32.gmra.mrb[0].mxu0 %v6038
      %v6040 = vpop.f32.mrb[0].mxu0
      %v6041 = vadd.f32 %v5783, %v6040
      %v6042 = vpop.f32.mrb[0].mxu0
      %6043 = vmatprep.mubr.f32.mxu0 0.0
      %v6044 = vand.u32 %v4333, 4294901760
      %6045 = vmatmul.mubr.f32.gmra.mrb[0].mxu0 %v6044
      %v6046 = vpop.f32.mrb[0].mxu0
      %v6047 = vadd.f32 %v5789, %v6046
      %v6048 = vpop.f32.mrb[0].mxu0
      %6049 = vmatprep.mubr.f32.mxu0 0.0
      %v6050 = vand.u32 %v4335, 4294901760
      %6051 = vmatmul.mubr.f32.gmra.mrb[0].mxu0 %v6050
      %v6052 = vpop.f32.mrb[0].mxu0
      %v6053 = vadd.f32 %v5795, %v6052
      %v6054 = vpop.f32.mrb[0].mxu0
      %6055 = vmatprep.mubr.f32.mxu0 0.0
      %v6056 = vand.u32 %v4337, 4294901760
      %6057 = vmatmul.mubr.f32.gmra.mrb[0].mxu0 %v6056
      %v6058 = vpop.f32.mrb[0].mxu0
      %v6059 = vadd.f32 %v5801, %v6058
      %v6060 = vpop.f32.mrb[0].mxu0
      %6061 = vmatprep.mubr.f32.mxu0 0.0
      %v6062 = vand.u32 %v4339, 4294901760
      %6063 = vmatmul.mubr.f32.gmra.mrb[0].mxu0 %v6062
      %v6064 = vpop.f32.mrb[0].mxu0
      %v6065 = vadd.f32 %v5807, %v6064
      %v6066 = vpop.f32.mrb[0].mxu0
      %6067 = vmatprep.mubr.f32.mxu0 0.0
      %v6068 = vand.u32 %v4341, 4294901760
      %6069 = vmatmul.mubr.f32.gmra.mrb[0].mxu0 %v6068
      %v6070 = vpop.f32.mrb[0].mxu0
      %v6071 = vadd.f32 %v5813, %v6070
      %v6072 = vpop.f32.mrb[0].mxu0
      %6073 = vmatprep.mubr.f32.mxu0 0.0
      %v6074 = vand.u32 %v4343, 4294901760
      %6075 = vmatmul.mubr.f32.gmra.mrb[0].mxu0 %v6074
      %v6076 = vpop.f32.mrb[0].mxu0
      %v6077 = vadd.f32 %v5819, %v6076
      %v6078 = vpop.f32.mrb[0].mxu0
      %6079 = vmatprep.mubr.f32.mxu0 0.0
      %v6080 = vand.u32 %v4345, 4294901760
      %6081 = vmatmul.mubr.f32.gmra.mrb[0].mxu0 %v6080
      %v6082 = vpop.f32.mrb[0].mxu0
      %v6083 = vadd.f32 %v5825, %v6082
      %v6084 = vpop.f32.mrb[0].mxu0
      %6085 = vmatprep.mubr.f32.mxu0 0.0
      %v6086 = vand.u32 %v4347, 4294901760
      %6087 = vmatmul.mubr.f32.gmra.mrb[0].mxu0 %v6086
      %v6088 = vpop.f32.mrb[0].mxu0
      %v6089 = vadd.f32 %v5831, %v6088
      %v6090 = vpop.f32.mrb[0].mxu0
      %6091 = vmatprep.mubr.f32.mxu0 0.0
      %v6092 = vand.u32 %v4349, 4294901760
      %6093 = vmatmul.mubr.f32.gmra.mrb[0].mxu0 %v6092
      %v6094 = vpop.f32.mrb[0].mxu0
      %v6095 = vadd.f32 %v5837, %v6094
      %v6096 = vpop.f32.mrb[0].mxu0
      %6097 = vmatprep.mubr.f32.mxu0 0.0
      %v6098 = vand.u32 %v4351, 4294901760
      %6099 = vmatmul.mubr.f32.gmra.mrb[0].mxu0 %v6098
      %v6100 = vpop.f32.mrb[0].mxu0
      %v6101 = vadd.f32 %v5843, %v6100
      %v6102 = vpop.f32.mrb[0].mxu0
      %6103 = vmatprep.mubr.f32.mxu0 0.0
      %v6104 = vand.u32 %v4353, 4294901760
      %6105 = vmatmul.mubr.f32.gmra.mrb[0].mxu0 %v6104
      %v6106 = vpop.f32.mrb[0].mxu0
      %v6107 = vadd.f32 %v5849, %v6106
      %v6108 = vpop.f32.mrb[0].mxu0
      %6109 = vmatprep.mubr.f32.mxu0 0.0
      %v6110 = vand.u32 %v4355, 4294901760
      %6111 = vmatmul.mubr.f32.gmra.mrb[0].mxu0 %v6110
      %v6112 = vpop.f32.mrb[0].mxu0
      %v6113 = vadd.f32 %v5855, %v6112
      %v6114 = vpop.f32.mrb[0].mxu0
      %6115 = vmatprep.mubr.f32.mxu0 0.0
      %v6116 = vand.u32 %v4357, 4294901760
      %6117 = vmatmul.mubr.f32.gmra.mrb[0].mxu0 %v6116
      %v6118 = vpop.f32.mrb[0].mxu0
      %v6119 = vadd.f32 %v5861, %v6118
      %v6120 = vpop.f32.mrb[0].mxu0
      %6121 = vmatprep.mubr.f32.mxu0 0.0
      %v6122 = vand.u32 %v4359, 4294901760
      %6123 = vmatmul.mubr.f32.gmra.mrb[0].mxu0 %v6122
      %v6124 = vpop.f32.mrb[0].mxu0
      %v6125 = vadd.f32 %v5867, %v6124
      %v6126 = vpop.f32.mrb[0].mxu0
      %6127 = vmatprep.mubr.f32.mxu0 0.0
      %v6128 = vand.u32 %v4361, 4294901760
      %6129 = vmatmul.mubr.f32.gmra.mrb[0].mxu0 %v6128
      %v6130 = vpop.f32.mrb[0].mxu0
      %v6131 = vadd.f32 %v5873, %v6130
      %v6132 = vpop.f32.mrb[0].mxu0
      %6133 = vmatprep.mubr.f32.mxu0 0.0
      %v6134 = vand.u32 %v4363, 4294901760
      %6135 = vmatmul.mubr.f32.gmra.mrb[0].mxu0 %v6134
      %v6136 = vpop.f32.mrb[0].mxu0
      %v6137 = vadd.f32 %v5879, %v6136
      %v6138 = vpop.f32.mrb[0].mxu0
      %6139 = vmatprep.mubr.f32.mxu0 0.0
      %v6140 = vand.u32 %v4365, 4294901760
      %6141 = vmatmul.mubr.f32.gmra.mrb[0].mxu0 %v6140
      %v6142 = vpop.f32.mrb[0].mxu0
      %v6143 = vadd.f32 %v5885, %v6142
      %v6144 = vpop.f32.mrb[0].mxu0
      %6145 = vdwg.mxu0
      %6178 = vrot.lane.b32.xlu0 %v5957, 4
      %v6179 = vpop.permute.xlu0 %6178
      %6180 = vrot.lane.b32.xlu0 %v5963, 4
      %v6181 = vpop.permute.xlu0 %6180
      %6182 = vrot.lane.b32.xlu0 %v5969, 4
      %v6183 = vpop.permute.xlu0 %6182
      %6184 = vrot.lane.b32.xlu0 %v5975, 4
      %v6185 = vpop.permute.xlu0 %6184
      %6186 = vrot.lane.b32.xlu0 %v5981, 4
      %v6187 = vpop.permute.xlu0 %6186
      %6188 = vrot.lane.b32.xlu0 %v5987, 4
      %v6189 = vpop.permute.xlu0 %6188
      %6190 = vrot.lane.b32.xlu0 %v5993, 4
      %v6191 = vpop.permute.xlu0 %6190
      %6192 = vrot.lane.b32.xlu0 %v5999, 4
      %v6193 = vpop.permute.xlu0 %6192
      %6194 = vrot.lane.b32.xlu0 %v6005, 4
      %v6195 = vpop.permute.xlu0 %6194
      %6196 = vrot.lane.b32.xlu0 %v6011, 4
      %v6197 = vpop.permute.xlu0 %6196
      %6198 = vrot.lane.b32.xlu0 %v6017, 4
      %v6199 = vpop.permute.xlu0 %6198
      %6200 = vrot.lane.b32.xlu0 %v6023, 4
      %v6201 = vpop.permute.xlu0 %6200
      %6202 = vrot.lane.b32.xlu0 %v6029, 4
      %v6203 = vpop.permute.xlu0 %6202
      %6204 = vrot.lane.b32.xlu0 %v6035, 4
      %v6205 = vpop.permute.xlu0 %6204
      %6206 = vrot.lane.b32.xlu0 %v6041, 4
      %v6207 = vpop.permute.xlu0 %6206
      %6208 = vrot.lane.b32.xlu0 %v6047, 4
      %v6209 = vpop.permute.xlu0 %6208
      %6210 = vrot.lane.b32.xlu0 %v6053, 4
      %v6211 = vpop.permute.xlu0 %6210
      %6212 = vrot.lane.b32.xlu0 %v6059, 4
      %v6213 = vpop.permute.xlu0 %6212
      %6214 = vrot.lane.b32.xlu0 %v6065, 4
      %v6215 = vpop.permute.xlu0 %6214
      %6216 = vrot.lane.b32.xlu0 %v6071, 4
      %v6217 = vpop.permute.xlu0 %6216
      %6218 = vrot.lane.b32.xlu0 %v6077, 4
      %v6219 = vpop.permute.xlu0 %6218
      %6220 = vrot.lane.b32.xlu0 %v6083, 4
      %v6221 = vpop.permute.xlu0 %6220
      %6222 = vrot.lane.b32.xlu0 %v6089, 4
      %v6223 = vpop.permute.xlu0 %6222
      %6224 = vrot.lane.b32.xlu0 %v6095, 4
      %v6225 = vpop.permute.xlu0 %6224
      %6226 = vrot.lane.b32.xlu0 %v6101, 4
      %v6227 = vpop.permute.xlu0 %6226
      %6228 = vrot.lane.b32.xlu0 %v6107, 4
      %v6229 = vpop.permute.xlu0 %6228
      %6230 = vrot.lane.b32.xlu0 %v6113, 4
      %v6231 = vpop.permute.xlu0 %6230
      %6232 = vrot.lane.b32.xlu0 %v6119, 4
      %v6233 = vpop.permute.xlu0 %6232
      %6234 = vrot.lane.b32.xlu0 %v6125, 4
      %v6235 = vpop.permute.xlu0 %6234
      %6236 = vrot.lane.b32.xlu0 %v6131, 4
      %v6237 = vpop.permute.xlu0 %6236
      %6238 = vrot.lane.b32.xlu0 %v6137, 4
      %v6239 = vpop.permute.xlu0 %6238
      %6240 = vrot.lane.b32.xlu0 %v6143, 4
      %v6241 = vpop.permute.xlu0 %6240
      %v6274 = vsel %vm435, %v4042, %v6179
      %v6275 = vsel %vm435, %v4048, %v6181
      %v6276 = vsel %vm435, %v4054, %v6183
      %v6277 = vsel %vm435, %v4060, %v6185
      %v6278 = vsel %vm435, %v4066, %v6187
      %v6279 = vsel %vm435, %v4072, %v6189
      %v6280 = vsel %vm435, %v4078, %v6191
      %v6281 = vsel %vm435, %v4084, %v6193
      %v6282 = vsel %vm435, %v4090, %v6195
      %v6283 = vsel %vm435, %v4096, %v6197
      %v6284 = vsel %vm435, %v4102, %v6199
      %v6285 = vsel %vm435, %v4108, %v6201
      %v6286 = vsel %vm435, %v4114, %v6203
      %v6287 = vsel %vm435, %v4120, %v6205
      %v6288 = vsel %vm435, %v4126, %v6207
      %v6289 = vsel %vm435, %v4132, %v6209
      %v6290 = vsel %vm435, %v4138, %v6211
      %v6291 = vsel %vm435, %v4144, %v6213
      %v6292 = vsel %vm435, %v4150, %v6215
      %v6293 = vsel %vm435, %v4156, %v6217
      %v6294 = vsel %vm435, %v4162, %v6219
      %v6295 = vsel %vm435, %v4168, %v6221
      %v6296 = vsel %vm435, %v4174, %v6223
      %v6297 = vsel %vm435, %v4180, %v6225
      %v6298 = vsel %vm435, %v4186, %v6227
      %v6299 = vsel %vm435, %v4192, %v6229
      %v6300 = vsel %vm435, %v4198, %v6231
      %v6301 = vsel %vm435, %v4204, %v6233
      %v6302 = vsel %vm435, %v4210, %v6235
      %v6303 = vsel %vm435, %v4216, %v6237
      %v6304 = vsel %vm435, %v4222, %v6239
      %v6305 = vsel %vm435, %v4228, %v6241
      %6306 = vst.msk [vmem:[%s329] sm:$0xff] %vm2355, %v6274
      %6307 = vst.msk [vmem:[%s329 + $0x8] sm:$0xff] %vm2355, %v6275
      %6308 = vst.msk [vmem:[%s329 + $0x10] sm:$0xff] %vm2355, %v6276
      %6309 = vst.msk [vmem:[%s329 + $0x18] sm:$0xff] %vm2355, %v6277
      %6310 = vst.msk [vmem:[%s329 + $0x20] sm:$0xff] %vm2355, %v6278
      %6311 = vst.msk [vmem:[%s329 + $0x28] sm:$0xff] %vm2355, %v6279
      %6312 = vst.msk [vmem:[%s329 + $0x30] sm:$0xff] %vm2355, %v6280
      %6313 = vst.msk [vmem:[%s329 + $0x38] sm:$0xff] %vm2355, %v6281
      %6314 = vst.msk [vmem:[%s329 + $0x40] sm:$0xff] %vm2355, %v6282
      %6315 = vst.msk [vmem:[%s329 + $0x48] sm:$0xff] %vm2355, %v6283
      %6316 = vst.msk [vmem:[%s329 + $0x50] sm:$0xff] %vm2355, %v6284
      %6317 = vst.msk [vmem:[%s329 + $0x58] sm:$0xff] %vm2355, %v6285
      %6318 = vst.msk [vmem:[%s329 + $0x60] sm:$0xff] %vm2355, %v6286
      %6319 = vst.msk [vmem:[%s329 + $0x68] sm:$0xff] %vm2355, %v6287
      %6320 = vst.msk [vmem:[%s329 + $0x70] sm:$0xff] %vm2355, %v6288
      %6321 = vst.msk [vmem:[%s329 + $0x78] sm:$0xff] %vm2355, %v6289
      %6322 = vst.msk [vmem:[%s329 + $0x80] sm:$0xff] %vm2355, %v6290
      %6323 = vst.msk [vmem:[%s329 + $0x88] sm:$0xff] %vm2355, %v6291
      %6324 = vst.msk [vmem:[%s329 + $0x90] sm:$0xff] %vm2355, %v6292
      %6325 = vst.msk [vmem:[%s329 + $0x98] sm:$0xff] %vm2355, %v6293
      %6326 = vst.msk [vmem:[%s329 + $0xa0] sm:$0xff] %vm2355, %v6294
      %6327 = vst.msk [vmem:[%s329 + $0xa8] sm:$0xff] %vm2355, %v6295
      %6328 = vst.msk [vmem:[%s329 + $0xb0] sm:$0xff] %vm2355, %v6296
      %6329 = vst.msk [vmem:[%s329 + $0xb8] sm:$0xff] %vm2355, %v6297
      %6330 = vst.msk [vmem:[%s329 + $0xc0] sm:$0xff] %vm2355, %v6298
      %6331 = vst.msk [vmem:[%s329 + $0xc8] sm:$0xff] %vm2355, %v6299
      %6332 = vst.msk [vmem:[%s329 + $0xd0] sm:$0xff] %vm2355, %v6300
      %6333 = vst.msk [vmem:[%s329 + $0xd8] sm:$0xff] %vm2355, %v6301
      %6334 = vst.msk [vmem:[%s329 + $0xe0] sm:$0xff] %vm2355, %v6302
      %6335 = vst.msk [vmem:[%s329 + $0xe8] sm:$0xff] %vm2355, %v6303
      %6336 = vst.msk [vmem:[%s329 + $0xf0] sm:$0xff] %vm2355, %v6304
      %6337 = vst.msk [vmem:[%s329 + $0xf8] sm:$0xff] %vm2355, %v6305
      %s6338 = smul.u32 32, %s19
      %p6339 = scmp.lt.s32.totalorder %s6338, 63
      %s6340 = scalar_select %p6339, %s6338, 63
      %s6341 = smul.addr %s6340, 8
      %s6342 = scalar_lea.vmem %s8, %s6341
      // Predicated region
      $region53: #{spectral_conv2d_forward.3} parent=51 // pred_check
        %p6343 = pneg %p215
      $region54: #{spectral_conv2d_forward.3} parent=51 // pred_check_branch
        %6345 = sbr.rel (%p6343) target = $region56
      $region55: #{spectral_conv2d_forward.3} parent=51 // pred_region
        %s6346 = smul.u32 32, %s19
      $region56: #{spectral_conv2d_forward.3} parent=51 // pred_fallthru
        _
    $region52: #{spectral_conv2d_forward.3} parent=5 // pred_fallthru
      _
    %p6347 = scmp.le.s32.totalorder 2, %s14
    // Predicated region
    $region57: #{spectral_conv2d_forward.3} parent=5 // pred_check
      %p6348 = pneg %p6347
    $region58: #{spectral_conv2d_forward.3} parent=5 // pred_check_branch
      %6350 = sbr.rel (%p6348) target = $region60
    $region59: #{spectral_conv2d_forward.3} parent=5 // pred_region
      %s6351 = ssub.s32 %s14, 2
      // Predicated region
      $region61: #{spectral_conv2d_forward.3} parent=59 // pred_check
        %p6352 = pneg %p221
      $region62: #{spectral_conv2d_forward.3} parent=59 // pred_check_branch
        %6354 = sbr.rel (%p6352) target = $region64
      $region63: #{spectral_conv2d_forward.3} parent=59 // pred_region
        %s6355 = smul.u32 32, %s20
        %p6356 = scmp.lt.s32.totalorder %s6355, 63
        %s6357 = scalar_select %p6356, %s6355, 63
        %s6358 = smul.addr %s6357, 8
        %s6359 = scalar_lea.vmem %s8, %s6358
      $region64: #{spectral_conv2d_forward.3} parent=59 // pred_fallthru
        _
    $region60: #{spectral_conv2d_forward.3} parent=5 // pred_fallthru
      _
  $region6: #{spectral_conv2d_forward.3} parent=0 // loop_footer
    %s18 = sadd.s32 1, %s14
  $region7: #{spectral_conv2d_forward.3} parent=0 // loop_footer_branch
    %13 = sbr.rel target = $region3
  $region8: #{spectral_conv2d_forward.3} parent=0 // loop_exit
    _

</llo_original>
